<compile_context>
chip_gen: v7x
topology: tpu7x:2x2x1
jax: 0.10.0
libtpu: 0.0.40
codegen_flags: <defaults>
</compile_context>

<pallas_src>
import functools

import jax
import jax.numpy as jnp
from jax import lax
from jax.experimental import pallas as pl
from jax.experimental.pallas import tpu as pltpu

EPS = 1e-5          # BatchNorm eps (PyTorch default)
NEG_SLOPE = 0.01    # LeakyReLU negative_slope (PyTorch default)

GRID_W = 11                    # persistent spatial grid (input is 11x11)
GRID_HW = GRID_W * GRID_W      # 121 rows per image
MAX_SHIFT = 2 * GRID_W + 2     # largest 3x3 tap shift in flattened rows (24)

# ---------------------------------------------------------------------------
# Packed-weight layout (offsets are static Python ints baked into the kernel)
# ---------------------------------------------------------------------------
PACK_A_WIDTH = 64              # weights whose output width is 33..64
PACK_B_WIDTH = 8               # weights whose output width is <= 8

_PACK_A_SPEC = [               # (name, rows, cols)
    ("w1", 9, 32), ("b1", 1, 32), ("w3", 4, 32),
    ("w5", 36, 32), ("w7", 72, 64), ("b7", 1, 64),
]
_PACK_B_SPEC = [
    ("w2", 32, 4), ("b2", 1, 4), ("w4", 32, 4),
    ("w6", 288, 8), ("wf1", 576, 8),
    ("wf2", 8, 4), ("bf2", 1, 4), ("wf3", 4, 4),
    ("wf4", 4, 2), ("bf4", 1, 2),
]


def _round8(n):
    return (n + 7) // 8 * 8


def _build_layout(spec):
    layout, off = {}, 0
    for name, rows, cols in spec:
        layout[name] = (off, rows, cols)
        off += _round8(rows)          # keep every block 8-row aligned
    return layout, off


_LAYOUT_A, _ROWS_A = _build_layout(_PACK_A_SPEC)
_LAYOUT_B, _ROWS_B = _build_layout(_PACK_B_SPEC)


# ---------------------------------------------------------------------------
# In-kernel helper: training-mode BatchNorm (gamma=1, beta=0) + activation
# ---------------------------------------------------------------------------
def _bn_act(y, *, m_valid, mask, act):
    """One-reduction BN over the valid rows + activation + re-mask.

    `mask` is a (rows, 1) 0/1 column selecting the m_valid valid grid rows
    (None for the FC path where every row is valid).  Sum and sum-of-squares
    are obtained with a single axis-0 reduction over [y, y*y] concatenated on
    the lane axis (channels <= 64, so 2*C <= 128 lanes).
    """
    c = y.shape[1]
    ym = y if mask is None else y * mask
    s = jnp.sum(jnp.concatenate([ym, ym * ym], axis=1), axis=0, keepdims=True)
    inv_m = 1.0 / float(m_valid)
    mean = s[:, :c] * inv_m
    var = jnp.maximum(s[:, c:] * inv_m - mean * mean, 0.0)   # biased variance
    y = (y - mean) * lax.rsqrt(var + EPS)
    if act == "relu":
        y = jnp.maximum(y, 0.0)
    else:  # leaky relu
        y = jnp.where(y >= 0.0, y, NEG_SLOPE * y)
    if mask is not None:
        y = y * mask                  # keep invalid rows exactly zero
    return y


# ---------------------------------------------------------------------------
# Single fused kernel: whole NAC forward
# ---------------------------------------------------------------------------
def _nac_kernel(n, xm_ref, pa_ref, pb_ref, o_ref, grid_ref):
    f32 = jnp.float32
    R = n * GRID_HW                                    # rows on the 11x11 grid

    def A(name):
        off, r, c = _LAYOUT_A[name]
        return pa_ref[off:off + r, :c]

    def B(name):
        off, r, c = _LAYOUT_B[name]
        return pb_ref[off:off + r, :c]

    # Zero the grid scratch once: its tail rows (>= R) feed the shifted tap
    # reads and must be finite zeros (OOB-free, deterministic).
    grid_ref[...] = jnp.zeros(grid_ref.shape, f32)

    # Valid-region masks for 9x9 / 7x7 / 5x5 outputs on the 11x11 grid.
    mask9 = xm_ref[0:R, 1:2]
    mask7 = xm_ref[0:R, 2:3]
    mask5 = xm_ref[0:R, 3:4]

    def taps_from(ref, ncols):
        """im2col slab (R, 9*ncols): 9 contiguous shifted row-reads + lane concat."""
        pieces = []
        for dy in range(3):
            for dx in range(3):
                s = dy * GRID_W + dx
                pieces.append(ref[s:s + R, 0:ncols])
        return jnp.concatenate(pieces, axis=1)

    # conv1: 3x3, 1->32  (one (R,9) x (9,32) matmul), valid 9x9
    a = jnp.dot(taps_from(xm_ref, 1), A("w1"),
                preferred_element_type=f32) + A("b1")
    a = a * mask9                                                    # (R, 32)

    # conv2 (1x1, 32->4) + ReLU
    a = jnp.maximum(jnp.dot(a, B("w2"), preferred_element_type=f32) + B("b2"),
                    0.0) * mask9                                     # (R, 4)

    # conv3 (1x1, 4->32) + norm1 + LeakyReLU   (bias cancelled by BN)
    a = _bn_act(jnp.dot(a, A("w3"), preferred_element_type=f32),
                m_valid=n * 81, mask=mask9, act="leaky")             # (R, 32)

    # conv4 (1x1, 32->4) + norm2 + LeakyReLU
    a = _bn_act(jnp.dot(a, B("w4"), preferred_element_type=f32),
                m_valid=n * 81, mask=mask9, act="leaky")             # (R, 4)

    # conv5 (3x3, 4->32) + norm3 + LeakyReLU, valid 7x7
    grid_ref[0:R, 0:4] = a
    a = _bn_act(jnp.dot(taps_from(grid_ref, 4), A("w5"),
                        preferred_element_type=f32),
                m_valid=n * 49, mask=mask7, act="leaky")             # (R, 32)

    # conv6 (3x3, 32->8) + norm4 + LeakyReLU, valid 5x5
    grid_ref[0:R, 0:32] = a
    a = _bn_act(jnp.dot(taps_from(grid_ref, 32), B("w6"),
                        preferred_element_type=f32),
                m_valid=n * 25, mask=mask5, act="leaky")             # (R, 8)

    # conv7 (3x3, 8->64) + bias, valid 3x3 (no BN / activation)
    grid_ref[0:R, 0:8] = a
    a = jnp.dot(taps_from(grid_ref, 8), A("w7"),
                preferred_element_type=f32) + A("b7")                # (R, 64)

    # flatten(NCHW) + fc1 (576->8): gather the 3x3 valid block per image; the
    # NCHW flatten order is folded into the pre-permuted wf1 (576, 8).
    grid_ref[0:R, 0:64] = a
    pieces = []
    for hh in range(3):
        for ww in range(3):
            pos = hh * GRID_W + ww
            rows = [grid_ref[i * GRID_HW + pos:i * GRID_HW + pos + 1, 0:64]
                    for i in range(n)]
            pieces.append(jnp.concatenate(rows, axis=0) if n > 1 else rows[0])
    f_in = jnp.concatenate(pieces, axis=1)                           # (n, 576)

    # fc1 + norm5 + ReLU   (fc1 bias cancelled by BN)
    f = _bn_act(jnp.dot(f_in, B("wf1"), preferred_element_type=f32),
                m_valid=n, mask=None, act="relu")                    # (n, 8)

    # fc2 + LeakyReLU
    f = jnp.dot(f, B("wf2"), preferred_element_type=f32) + B("bf2")
    f = jnp.where(f >= 0.0, f, NEG_SLOPE * f)                        # (n, 4)

    # fc3 + norm6 + LeakyReLU   (bias cancelled by BN)
    f = _bn_act(jnp.dot(f, B("wf3"), preferred_element_type=f32),
                m_valid=n, mask=None, act="leaky")                   # (n, 4)

    # fc4
    o_ref[...] = (jnp.dot(f, B("wf4"), preferred_element_type=f32)
                  + B("bf4")).astype(o_ref.dtype)                    # (n, 2)


# ---------------------------------------------------------------------------
# Forward wrapper: one pallas_call, three VMEM-resident operands
# ---------------------------------------------------------------------------
def nac_forward(x_nchw, pp):
    n, c, h, w = x_nchw.shape
    assert (c, h, w) == (1, GRID_W, GRID_W), "NAC expects (N, 1, 11, 11) input"
    R = n * GRID_HW
    rows_pad = _round8(R + MAX_SHIFT)

    # Input slab (rows_pad, 4): col 0 = image rows (img, h, w row-major),
    # cols 1..3 = valid-region masks for 9x9 / 7x7 / 5x5; zero tail rows feed
    # the shifted tap reads of conv1.
    pos = jnp.arange(GRID_HW)
    hh, ww = pos // GRID_W, pos % GRID_W
    masks = jnp.stack(
        [((hh < k) & (ww < k)).astype(jnp.float32) for k in (9, 7, 5)], axis=1)
    xm = jnp.concatenate(
        [x_nchw.reshape(R, 1).astype(jnp.float32), jnp.tile(masks, (n, 1))],
        axis=1)
    xm = jnp.pad(xm, ((0, rows_pad - R), (0, 0)))

    vspec = pl.BlockSpec(memory_space=pltpu.MemorySpace.VMEM)
    cost = pl.CostEstimate(flops=4_200_000, transcendentals=128,
                           bytes_accessed=96_000)
    return pl.pallas_call(
        functools.partial(_nac_kernel, n),
        out_shape=jax.ShapeDtypeStruct((n, 2), jnp.float32),
        in_specs=[vspec, vspec, vspec],
        out_specs=vspec,
        scratch_shapes=[pltpu.VMEM((rows_pad, 64), jnp.float32)],
        cost_estimate=cost,
    )(xm, pp["packA"], pp["packB"])


# ---------------------------------------------------------------------------
# One-time weight preparation: pre-permute and pack into 2 tile-aligned buffers
# ---------------------------------------------------------------------------
def prepare_params(p):
    def c3(wt):   # (Cout, Cin, 3, 3) -> (9*Cin, Cout), row = (kh*3+kw)*Cin + cin
        return jnp.transpose(wt, (2, 3, 1, 0)).reshape(-1, wt.shape[0])

    def c1(wt):   # (Cout, Cin, 1, 1) -> (Cin, Cout)
        return wt.reshape(wt.shape[0], wt.shape[1]).T

    tensors = {
        "w1": c3(p["conv1_w"]), "b1": p["conv1_b"].reshape(1, -1),
        "w2": c1(p["conv2_w"]), "b2": p["conv2_b"].reshape(1, -1),
        "w3": c1(p["conv3_w"]),          # biases of BN-followed layers dropped
        "w4": c1(p["conv4_w"]),
        "w5": c3(p["conv5_w"]),
        "w6": c3(p["conv6_w"]),
        "w7": c3(p["conv7_w"]), "b7": p["conv7_b"].reshape(1, -1),
        # fc1 (8, 576) -> (576, 8): wf1[(h*3+w)*64 + c, o] = fc1_w[o, c*9+h*3+w]
        # (folds the NCHW flatten into the weight).
        "wf1": jnp.transpose(p["fc1_w"].reshape(8, 64, 3, 3),
                             (2, 3, 1, 0)).reshape(576, 8),
        "wf2": p["fc2_w"].T, "bf2": p["fc2_b"].reshape(1, -1),
        "wf3": p["fc3_w"].T,
        "wf4": p["fc4_w"].T, "bf4": p["fc4_b"].reshape(1, -1),
    }

    def build(spec, total_rows, width):
        buf = jnp.zeros((total_rows, width), jnp.float32)
        off = 0
        for name, r, c in spec:
            t = tensors[name].astype(jnp.float32)
            assert t.shape == (r, c), (name, t.shape, (r, c))
            buf = buf.at[off:off + r, :c].set(t)
            off += _round8(r)
        return buf

    return {"packA": build(_PACK_A_SPEC, _ROWS_A, PACK_A_WIDTH),
            "packB": build(_PACK_B_SPEC, _ROWS_B, PACK_B_WIDTH)}


# ---------------------------------------------------------------------------
# Deterministic parameter init (PyTorch-style uniform(-1/sqrt(fan_in), +))
# ---------------------------------------------------------------------------
def init_params(key):
    specs = {
        "conv1": ((32, 1, 3, 3), 1 * 9),
        "conv2": ((4, 32, 1, 1), 32),
        "conv3": ((32, 4, 1, 1), 4),
        "conv4": ((4, 32, 1, 1), 32),
        "conv5": ((32, 4, 3, 3), 4 * 9),
        "conv6": ((8, 32, 3, 3), 32 * 9),
        "conv7": ((64, 8, 3, 3), 8 * 9),
        "fc1": ((8, 576), 576),
        "fc2": ((4, 8), 8),
        "fc3": ((4, 4), 4),
        "fc4": ((2, 4), 4),
    }
    params = {}
    keys = jax.random.split(key, 2 * len(specs))
    for idx, (name, (shape, fan_in)) in enumerate(specs.items()):
        bound = 1.0 / float(fan_in) ** 0.5
        params[name + "_w"] = jax.random.uniform(
            keys[2 * idx], shape, jnp.float32, -bound, bound)
        params[name + "_b"] = jax.random.uniform(
            keys[2 * idx + 1], (shape[0],), jnp.float32, -bound, bound)
    # BatchNorm default init (gamma=1, beta=0) is folded into the kernel.
    return params


# ---------------------------------------------------------------------------
# Pure-JAX reference (same math as the PyTorch module in training mode)
# ---------------------------------------------------------------------------
def nac_reference(x, p):
    def conv(v, wt, b):
        y = lax.conv_general_dilated(
            v, wt, (1, 1), "VALID",
            dimension_numbers=("NCHW", "OIHW", "NCHW"))
        return y + b.reshape(1, -1, 1, 1)

    def bn2d(y):
        mean = jnp.mean(y, axis=(0, 2, 3), keepdims=True)
        var = jnp.mean((y - mean) ** 2, axis=(0, 2, 3), keepdims=True)
        return (y - mean) * lax.rsqrt(var + EPS)

    def bn1d(y):
        mean = jnp.mean(y, axis=0, keepdims=True)
        var = jnp.mean((y - mean) ** 2, axis=0, keepdims=True)
        return (y - mean) * lax.rsqrt(var + EPS)

    relu = lambda v: jnp.maximum(v, 0.0)
    lrelu = lambda v: jnp.where(v >= 0.0, v, NEG_SLOPE * v)

    y = conv(x, p["conv1_w"], p["conv1_b"])
    y = relu(conv(y, p["conv2_w"], p["conv2_b"]))
    y = lrelu(bn2d(conv(y, p["conv3_w"], p["conv3_b"])))
    y = lrelu(bn2d(conv(y, p["conv4_w"], p["conv4_b"])))
    y = lrelu(bn2d(conv(y, p["conv5_w"], p["conv5_b"])))
    y = lrelu(bn2d(conv(y, p["conv6_w"], p["conv6_b"])))
    y = conv(y, p["conv7_w"], p["conv7_b"])
    f = y.reshape(y.shape[0], -1)
    f = relu(bn1d(f @ p["fc1_w"].T + p["fc1_b"]))
    f = lrelu(f @ p["fc2_w"].T + p["fc2_b"])
    f = lrelu(bn1d(f @ p["fc3_w"].T + p["fc3_b"]))
    return f @ p["fc4_w"].T + p["fc4_b"]


if __name__ == "__main__":
    key = jax.random.PRNGKey(0)
    pkey, xkey = jax.random.split(key)
    params = init_params(pkey)
    pp = jax.tree_util.tree_map(jax.block_until_ready, prepare_params(params))

    # fc1 expects 576 = 64*3*3 features -> input spatial 11x11, 1 channel.
    # Batch=2: BatchNorm uses batch statistics (training-mode forward).
    x = jax.random.normal(xkey, (2, 1, 11, 11), jnp.float32)

    fwd = jax.jit(nac_forward)
    out = jax.block_until_ready(fwd(x, pp))
    assert out.shape == (2, 2), out.shape
    assert bool(jnp.all(jnp.isfinite(out)))

    ref = jax.block_until_ready(nac_reference(x, params))
    err = float(jnp.max(jnp.abs(out - ref)))
    scale = float(jnp.max(jnp.abs(ref)))
    assert err <= 0.05 + 0.05 * scale, (err, scale)

    print("KERNEL_OK")
</pallas_src>

<mosaic_0001>
module attributes {stable_mosaic.version = 11 : i64} {
  func.func @_nac_kernel(%arg0: memref<272x4xf32, #tpu.memory_space<vmem>>, %arg1: memref<152x64xf32, #tpu.memory_space<vmem>>, %arg2: memref<976x8xf32, #tpu.memory_space<vmem>>, %arg3: memref<2x2xf32, #tpu.memory_space<vmem>>, %arg4: memref<272x64xf32, #tpu.memory_space<vmem>>) attributes {dimension_semantics = [], scalar_prefetch = 0 : i64, scratch_operands = 1 : i64, tpu.core_type = #tpu.core_type<tc>} {
    %cst = arith.constant 0.000000e+00 : f32
    %0 = vector.broadcast %cst : f32 to vector<272x64xf32>
    %c0 = arith.constant 0 : index
    %c0_0 = arith.constant 0 : index
    %1 = vector.load %arg4[%c0, %c0_0] : memref<272x64xf32, #tpu.memory_space<vmem>>, vector<272x64xf32>
    tpu.vector_store %arg4[%c0, %c0_0], %0 {strides = array<i32>} : memref<272x64xf32, #tpu.memory_space<vmem>>, vector<272x64xf32>,
    %c0_1 = arith.constant 0 : index
    %c1 = arith.constant 1 : index
    %2 = vector.load %arg0[%c0_1, %c1] : memref<272x4xf32, #tpu.memory_space<vmem>>, vector<242x1xf32>
    %c0_2 = arith.constant 0 : index
    %c2 = arith.constant 2 : index
    %3 = vector.load %arg0[%c0_2, %c2] : memref<272x4xf32, #tpu.memory_space<vmem>>, vector<242x1xf32>
    %c0_3 = arith.constant 0 : index
    %c3 = arith.constant 3 : index
    %4 = vector.load %arg0[%c0_3, %c3] : memref<272x4xf32, #tpu.memory_space<vmem>>, vector<242x1xf32>
    %c0_4 = arith.constant 0 : index
    %c0_5 = arith.constant 0 : index
    %5 = vector.load %arg0[%c0_4, %c0_5] : memref<272x4xf32, #tpu.memory_space<vmem>>, vector<242x1xf32>
    %c1_6 = arith.constant 1 : index
    %c0_7 = arith.constant 0 : index
    %6 = vector.load %arg0[%c1_6, %c0_7] : memref<272x4xf32, #tpu.memory_space<vmem>>, vector<242x1xf32>
    %c2_8 = arith.constant 2 : index
    %c0_9 = arith.constant 0 : index
    %7 = vector.load %arg0[%c2_8, %c0_9] : memref<272x4xf32, #tpu.memory_space<vmem>>, vector<242x1xf32>
    %c11 = arith.constant 11 : index
    %c0_10 = arith.constant 0 : index
    %8 = vector.load %arg0[%c11, %c0_10] : memref<272x4xf32, #tpu.memory_space<vmem>>, vector<242x1xf32>
    %c12 = arith.constant 12 : index
    %c0_11 = arith.constant 0 : index
    %9 = vector.load %arg0[%c12, %c0_11] : memref<272x4xf32, #tpu.memory_space<vmem>>, vector<242x1xf32>
    %c13 = arith.constant 13 : index
    %c0_12 = arith.constant 0 : index
    %10 = vector.load %arg0[%c13, %c0_12] : memref<272x4xf32, #tpu.memory_space<vmem>>, vector<242x1xf32>
    %c22 = arith.constant 22 : index
    %c0_13 = arith.constant 0 : index
    %11 = vector.load %arg0[%c22, %c0_13] : memref<272x4xf32, #tpu.memory_space<vmem>>, vector<242x1xf32>
    %c23 = arith.constant 23 : index
    %c0_14 = arith.constant 0 : index
    %12 = vector.load %arg0[%c23, %c0_14] : memref<272x4xf32, #tpu.memory_space<vmem>>, vector<242x1xf32>
    %c24 = arith.constant 24 : index
    %c0_15 = arith.constant 0 : index
    %13 = vector.load %arg0[%c24, %c0_15] : memref<272x4xf32, #tpu.memory_space<vmem>>, vector<242x1xf32>
    %14 = tpu.concatenate %5, %6, %7, %8, %9, %10, %11, %12, %13 in 1 : vector<242x1xf32>, vector<242x1xf32>, vector<242x1xf32>, vector<242x1xf32>, vector<242x1xf32>, vector<242x1xf32>, vector<242x1xf32>, vector<242x1xf32>, vector<242x1xf32> -> vector<242x9xf32>
    %c0_16 = arith.constant 0 : index
    %c0_17 = arith.constant 0 : index
    %15 = vector.load %arg1[%c0_16, %c0_17] : memref<152x64xf32, #tpu.memory_space<vmem>>, vector<9x32xf32>
    %cst_18 = arith.constant dense<0.000000e+00> : vector<242x32xf32>
    %16 = tpu.matmul %14, %15, %cst_18 {dimension_numbers = #tpu.dot_dimension_numbers<[1], [0], [0], [1], [0, 0, 1, 1], [], []>} : vector<242x9xf32>, vector<9x32xf32>, vector<242x32xf32> -> vector<242x32xf32>
    %c16 = arith.constant 16 : index
    %c0_19 = arith.constant 0 : index
    %17 = vector.load %arg1[%c16, %c0_19] : memref<152x64xf32, #tpu.memory_space<vmem>>, vector<1x32xf32>
    %18 = vector.broadcast %17 : vector<1x32xf32> to vector<242x32xf32>
    %19 = arith.addf %16, %18 : vector<242x32xf32>
    %20 = vector.broadcast %2 : vector<242x1xf32> to vector<242x32xf32>
    %21 = arith.mulf %19, %20 : vector<242x32xf32>
    %c0_20 = arith.constant 0 : index
    %c0_21 = arith.constant 0 : index
    %22 = vector.load %arg2[%c0_20, %c0_21] : memref<976x8xf32, #tpu.memory_space<vmem>>, vector<32x4xf32>
    %cst_22 = arith.constant dense<0.000000e+00> : vector<242x4xf32>
    %23 = tpu.matmul %21, %22, %cst_22 {dimension_numbers = #tpu.dot_dimension_numbers<[1], [0], [0], [1], [0, 0, 1, 1], [], []>} : vector<242x32xf32>, vector<32x4xf32>, vector<242x4xf32> -> vector<242x4xf32>
    %c32 = arith.constant 32 : index
    %c0_23 = arith.constant 0 : index
    %24 = vector.load %arg2[%c32, %c0_23] : memref<976x8xf32, #tpu.memory_space<vmem>>, vector<1x4xf32>
    %25 = vector.broadcast %24 : vector<1x4xf32> to vector<242x4xf32>
    %26 = arith.addf %23, %25 : vector<242x4xf32>
    %cst_24 = arith.constant 0.000000e+00 : f32
    %27 = vector.broadcast %cst_24 : f32 to vector<242x4xf32>
    %28 = arith.maximumf %26, %27 : vector<242x4xf32>
    %29 = vector.broadcast %2 : vector<242x1xf32> to vector<242x4xf32>
    %30 = arith.mulf %28, %29 : vector<242x4xf32>
    %c24_25 = arith.constant 24 : index
    %c0_26 = arith.constant 0 : index
    %31 = vector.load %arg1[%c24_25, %c0_26] : memref<152x64xf32, #tpu.memory_space<vmem>>, vector<4x32xf32>
    %cst_27 = arith.constant dense<0.000000e+00> : vector<242x32xf32>
    %32 = tpu.matmul %30, %31, %cst_27 {dimension_numbers = #tpu.dot_dimension_numbers<[1], [0], [0], [1], [0, 0, 1, 1], [], []>} : vector<242x4xf32>, vector<4x32xf32>, vector<242x32xf32> -> vector<242x32xf32>
    %33 = vector.broadcast %2 : vector<242x1xf32> to vector<242x32xf32>
    %34 = arith.mulf %32, %33 : vector<242x32xf32>
    %35 = arith.mulf %34, %34 : vector<242x32xf32>
    %36 = tpu.concatenate %34, %35 in 1 : vector<242x32xf32>, vector<242x32xf32> -> vector<242x64xf32>
    %cst_28 = arith.constant dense<0.000000e+00> : vector<64xf32>
    %37 = vector.multi_reduction <add>, %36, %cst_28 [0] : vector<242x64xf32> to vector<64xf32>
    %38 = vector.shape_cast %37 : vector<64xf32> to vector<1x64xf32>
    %39 = vector.extract_strided_slice %38 {offsets = [0, 0], sizes = [1, 32], strides = [1, 1]} : vector<1x64xf32> to vector<1x32xf32>
    %cst_29 = arith.constant 0.00617283955 : f32
    %40 = vector.broadcast %cst_29 : f32 to vector<1x32xf32>
    %41 = arith.mulf %39, %40 : vector<1x32xf32>
    %42 = vector.extract_strided_slice %38 {offsets = [0, 32], sizes = [1, 32], strides = [1, 1]} : vector<1x64xf32> to vector<1x32xf32>
    %cst_30 = arith.constant 0.00617283955 : f32
    %43 = vector.broadcast %cst_30 : f32 to vector<1x32xf32>
    %44 = arith.mulf %42, %43 : vector<1x32xf32>
    %45 = arith.mulf %41, %41 : vector<1x32xf32>
    %46 = arith.subf %44, %45 : vector<1x32xf32>
    %cst_31 = arith.constant 0.000000e+00 : f32
    %47 = vector.broadcast %cst_31 : f32 to vector<1x32xf32>
    %48 = arith.maximumf %46, %47 : vector<1x32xf32>
    %49 = vector.broadcast %41 : vector<1x32xf32> to vector<242x32xf32>
    %50 = arith.subf %32, %49 : vector<242x32xf32>
    %cst_32 = arith.constant 9.99999974E-6 : f32
    %51 = vector.broadcast %cst_32 : f32 to vector<1x32xf32>
    %52 = arith.addf %48, %51 : vector<1x32xf32>
    %53 = math.rsqrt %52 : vector<1x32xf32>
    %54 = vector.broadcast %53 : vector<1x32xf32> to vector<242x32xf32>
    %55 = arith.mulf %50, %54 : vector<242x32xf32>
    %cst_33 = arith.constant 0.000000e+00 : f32
    %56 = vector.broadcast %cst_33 : f32 to vector<242x32xf32>
    %57 = arith.cmpf oge, %55, %56 : vector<242x32xf32>
    %cst_34 = arith.constant 0.00999999977 : f32
    %58 = vector.broadcast %cst_34 : f32 to vector<242x32xf32>
    %59 = arith.mulf %58, %55 : vector<242x32xf32>
    %60 = arith.select %57, %55, %59 : vector<242x32xi1>, vector<242x32xf32>
    %61 = vector.broadcast %2 : vector<242x1xf32> to vector<242x32xf32>
    %62 = arith.mulf %60, %61 : vector<242x32xf32>
    %c40 = arith.constant 40 : index
    %c0_35 = arith.constant 0 : index
    %63 = vector.load %arg2[%c40, %c0_35] : memref<976x8xf32, #tpu.memory_space<vmem>>, vector<32x4xf32>
    %cst_36 = arith.constant dense<0.000000e+00> : vector<242x4xf32>
    %64 = tpu.matmul %62, %63, %cst_36 {dimension_numbers = #tpu.dot_dimension_numbers<[1], [0], [0], [1], [0, 0, 1, 1], [], []>} : vector<242x32xf32>, vector<32x4xf32>, vector<242x4xf32> -> vector<242x4xf32>
    %65 = vector.broadcast %2 : vector<242x1xf32> to vector<242x4xf32>
    %66 = arith.mulf %64, %65 : vector<242x4xf32>
    %67 = arith.mulf %66, %66 : vector<242x4xf32>
    %68 = tpu.concatenate %66, %67 in 1 : vector<242x4xf32>, vector<242x4xf32> -> vector<242x8xf32>
    %cst_37 = arith.constant dense<0.000000e+00> : vector<8xf32>
    %69 = vector.multi_reduction <add>, %68, %cst_37 [0] : vector<242x8xf32> to vector<8xf32>
    %70 = vector.shape_cast %69 : vector<8xf32> to vector<1x8xf32>
    %71 = vector.extract_strided_slice %70 {offsets = [0, 0], sizes = [1, 4], strides = [1, 1]} : vector<1x8xf32> to vector<1x4xf32>
    %cst_38 = arith.constant 0.00617283955 : f32
    %72 = vector.broadcast %cst_38 : f32 to vector<1x4xf32>
    %73 = arith.mulf %71, %72 : vector<1x4xf32>
    %74 = vector.extract_strided_slice %70 {offsets = [0, 4], sizes = [1, 4], strides = [1, 1]} : vector<1x8xf32> to vector<1x4xf32>
    %cst_39 = arith.constant 0.00617283955 : f32
    %75 = vector.broadcast %cst_39 : f32 to vector<1x4xf32>
    %76 = arith.mulf %74, %75 : vector<1x4xf32>
    %77 = arith.mulf %73, %73 : vector<1x4xf32>
    %78 = arith.subf %76, %77 : vector<1x4xf32>
    %cst_40 = arith.constant 0.000000e+00 : f32
    %79 = vector.broadcast %cst_40 : f32 to vector<1x4xf32>
    %80 = arith.maximumf %78, %79 : vector<1x4xf32>
    %81 = vector.broadcast %73 : vector<1x4xf32> to vector<242x4xf32>
    %82 = arith.subf %64, %81 : vector<242x4xf32>
    %cst_41 = arith.constant 9.99999974E-6 : f32
    %83 = vector.broadcast %cst_41 : f32 to vector<1x4xf32>
    %84 = arith.addf %80, %83 : vector<1x4xf32>
    %85 = math.rsqrt %84 : vector<1x4xf32>
    %86 = vector.broadcast %85 : vector<1x4xf32> to vector<242x4xf32>
    %87 = arith.mulf %82, %86 : vector<242x4xf32>
    %cst_42 = arith.constant 0.000000e+00 : f32
    %88 = vector.broadcast %cst_42 : f32 to vector<242x4xf32>
    %89 = arith.cmpf oge, %87, %88 : vector<242x4xf32>
    %cst_43 = arith.constant 0.00999999977 : f32
    %90 = vector.broadcast %cst_43 : f32 to vector<242x4xf32>
    %91 = arith.mulf %90, %87 : vector<242x4xf32>
    %92 = arith.select %89, %87, %91 : vector<242x4xi1>, vector<242x4xf32>
    %93 = vector.broadcast %2 : vector<242x1xf32> to vector<242x4xf32>
    %94 = arith.mulf %92, %93 : vector<242x4xf32>
    %c0_44 = arith.constant 0 : index
    %c0_45 = arith.constant 0 : index
    %95 = vector.load %arg4[%c0_44, %c0_45] : memref<272x64xf32, #tpu.memory_space<vmem>>, vector<242x4xf32>
    tpu.vector_store %arg4[%c0_44, %c0_45], %94 {strides = array<i32>} : memref<272x64xf32, #tpu.memory_space<vmem>>, vector<242x4xf32>,
    %c0_46 = arith.constant 0 : index
    %c0_47 = arith.constant 0 : index
    %96 = vector.load %arg4[%c0_46, %c0_47] : memref<272x64xf32, #tpu.memory_space<vmem>>, vector<242x4xf32>
    %c1_48 = arith.constant 1 : index
    %c0_49 = arith.constant 0 : index
    %97 = vector.load %arg4[%c1_48, %c0_49] : memref<272x64xf32, #tpu.memory_space<vmem>>, vector<242x4xf32>
    %c2_50 = arith.constant 2 : index
    %c0_51 = arith.constant 0 : index
    %98 = vector.load %arg4[%c2_50, %c0_51] : memref<272x64xf32, #tpu.memory_space<vmem>>, vector<242x4xf32>
    %c11_52 = arith.constant 11 : index
    %c0_53 = arith.constant 0 : index
    %99 = vector.load %arg4[%c11_52, %c0_53] : memref<272x64xf32, #tpu.memory_space<vmem>>, vector<242x4xf32>
    %c12_54 = arith.constant 12 : index
    %c0_55 = arith.constant 0 : index
    %100 = vector.load %arg4[%c12_54, %c0_55] : memref<272x64xf32, #tpu.memory_space<vmem>>, vector<242x4xf32>
    %c13_56 = arith.constant 13 : index
    %c0_57 = arith.constant 0 : index
    %101 = vector.load %arg4[%c13_56, %c0_57] : memref<272x64xf32, #tpu.memory_space<vmem>>, vector<242x4xf32>
    %c22_58 = arith.constant 22 : index
    %c0_59 = arith.constant 0 : index
    %102 = vector.load %arg4[%c22_58, %c0_59] : memref<272x64xf32, #tpu.memory_space<vmem>>, vector<242x4xf32>
    %c23_60 = arith.constant 23 : index
    %c0_61 = arith.constant 0 : index
    %103 = vector.load %arg4[%c23_60, %c0_61] : memref<272x64xf32, #tpu.memory_space<vmem>>, vector<242x4xf32>
    %c24_62 = arith.constant 24 : index
    %c0_63 = arith.constant 0 : index
    %104 = vector.load %arg4[%c24_62, %c0_63] : memref<272x64xf32, #tpu.memory_space<vmem>>, vector<242x4xf32>
    %105 = tpu.concatenate %96, %97, %98, %99, %100, %101, %102, %103, %104 in 1 : vector<242x4xf32>, vector<242x4xf32>, vector<242x4xf32>, vector<242x4xf32>, vector<242x4xf32>, vector<242x4xf32>, vector<242x4xf32>, vector<242x4xf32>, vector<242x4xf32> -> vector<242x36xf32>
    %c32_64 = arith.constant 32 : index
    %c0_65 = arith.constant 0 : index
    %106 = vector.load %arg1[%c32_64, %c0_65] : memref<152x64xf32, #tpu.memory_space<vmem>>, vector<36x32xf32>
    %cst_66 = arith.constant dense<0.000000e+00> : vector<242x32xf32>
    %107 = tpu.matmul %105, %106, %cst_66 {dimension_numbers = #tpu.dot_dimension_numbers<[1], [0], [0], [1], [0, 0, 1, 1], [], []>} : vector<242x36xf32>, vector<36x32xf32>, vector<242x32xf32> -> vector<242x32xf32>
    %108 = vector.broadcast %3 : vector<242x1xf32> to vector<242x32xf32>
    %109 = arith.mulf %107, %108 : vector<242x32xf32>
    %110 = arith.mulf %109, %109 : vector<242x32xf32>
    %111 = tpu.concatenate %109, %110 in 1 : vector<242x32xf32>, vector<242x32xf32> -> vector<242x64xf32>
    %cst_67 = arith.constant dense<0.000000e+00> : vector<64xf32>
    %112 = vector.multi_reduction <add>, %111, %cst_67 [0] : vector<242x64xf32> to vector<64xf32>
    %113 = vector.shape_cast %112 : vector<64xf32> to vector<1x64xf32>
    %114 = vector.extract_strided_slice %113 {offsets = [0, 0], sizes = [1, 32], strides = [1, 1]} : vector<1x64xf32> to vector<1x32xf32>
    %cst_68 = arith.constant 0.0102040814 : f32
    %115 = vector.broadcast %cst_68 : f32 to vector<1x32xf32>
    %116 = arith.mulf %114, %115 : vector<1x32xf32>
    %117 = vector.extract_strided_slice %113 {offsets = [0, 32], sizes = [1, 32], strides = [1, 1]} : vector<1x64xf32> to vector<1x32xf32>
    %cst_69 = arith.constant 0.0102040814 : f32
    %118 = vector.broadcast %cst_69 : f32 to vector<1x32xf32>
    %119 = arith.mulf %117, %118 : vector<1x32xf32>
    %120 = arith.mulf %116, %116 : vector<1x32xf32>
    %121 = arith.subf %119, %120 : vector<1x32xf32>
    %cst_70 = arith.constant 0.000000e+00 : f32
    %122 = vector.broadcast %cst_70 : f32 to vector<1x32xf32>
    %123 = arith.maximumf %121, %122 : vector<1x32xf32>
    %124 = vector.broadcast %116 : vector<1x32xf32> to vector<242x32xf32>
    %125 = arith.subf %107, %124 : vector<242x32xf32>
    %cst_71 = arith.constant 9.99999974E-6 : f32
    %126 = vector.broadcast %cst_71 : f32 to vector<1x32xf32>
    %127 = arith.addf %123, %126 : vector<1x32xf32>
    %128 = math.rsqrt %127 : vector<1x32xf32>
    %129 = vector.broadcast %128 : vector<1x32xf32> to vector<242x32xf32>
    %130 = arith.mulf %125, %129 : vector<242x32xf32>
    %cst_72 = arith.constant 0.000000e+00 : f32
    %131 = vector.broadcast %cst_72 : f32 to vector<242x32xf32>
    %132 = arith.cmpf oge, %130, %131 : vector<242x32xf32>
    %cst_73 = arith.constant 0.00999999977 : f32
    %133 = vector.broadcast %cst_73 : f32 to vector<242x32xf32>
    %134 = arith.mulf %133, %130 : vector<242x32xf32>
    %135 = arith.select %132, %130, %134 : vector<242x32xi1>, vector<242x32xf32>
    %136 = vector.broadcast %3 : vector<242x1xf32> to vector<242x32xf32>
    %137 = arith.mulf %135, %136 : vector<242x32xf32>
    %c0_74 = arith.constant 0 : index
    %c0_75 = arith.constant 0 : index
    %138 = vector.load %arg4[%c0_74, %c0_75] : memref<272x64xf32, #tpu.memory_space<vmem>>, vector<242x32xf32>
    tpu.vector_store %arg4[%c0_74, %c0_75], %137 {strides = array<i32>} : memref<272x64xf32, #tpu.memory_space<vmem>>, vector<242x32xf32>,
    %c0_76 = arith.constant 0 : index
    %c0_77 = arith.constant 0 : index
    %139 = vector.load %arg4[%c0_76, %c0_77] : memref<272x64xf32, #tpu.memory_space<vmem>>, vector<242x32xf32>
    %c1_78 = arith.constant 1 : index
    %c0_79 = arith.constant 0 : index
    %140 = vector.load %arg4[%c1_78, %c0_79] : memref<272x64xf32, #tpu.memory_space<vmem>>, vector<242x32xf32>
    %c2_80 = arith.constant 2 : index
    %c0_81 = arith.constant 0 : index
    %141 = vector.load %arg4[%c2_80, %c0_81] : memref<272x64xf32, #tpu.memory_space<vmem>>, vector<242x32xf32>
    %c11_82 = arith.constant 11 : index
    %c0_83 = arith.constant 0 : index
    %142 = vector.load %arg4[%c11_82, %c0_83] : memref<272x64xf32, #tpu.memory_space<vmem>>, vector<242x32xf32>
    %c12_84 = arith.constant 12 : index
    %c0_85 = arith.constant 0 : index
    %143 = vector.load %arg4[%c12_84, %c0_85] : memref<272x64xf32, #tpu.memory_space<vmem>>, vector<242x32xf32>
    %c13_86 = arith.constant 13 : index
    %c0_87 = arith.constant 0 : index
    %144 = vector.load %arg4[%c13_86, %c0_87] : memref<272x64xf32, #tpu.memory_space<vmem>>, vector<242x32xf32>
    %c22_88 = arith.constant 22 : index
    %c0_89 = arith.constant 0 : index
    %145 = vector.load %arg4[%c22_88, %c0_89] : memref<272x64xf32, #tpu.memory_space<vmem>>, vector<242x32xf32>
    %c23_90 = arith.constant 23 : index
    %c0_91 = arith.constant 0 : index
    %146 = vector.load %arg4[%c23_90, %c0_91] : memref<272x64xf32, #tpu.memory_space<vmem>>, vector<242x32xf32>
    %c24_92 = arith.constant 24 : index
    %c0_93 = arith.constant 0 : index
    %147 = vector.load %arg4[%c24_92, %c0_93] : memref<272x64xf32, #tpu.memory_space<vmem>>, vector<242x32xf32>
    %148 = tpu.concatenate %139, %140, %141, %142, %143, %144, %145, %146, %147 in 1 : vector<242x32xf32>, vector<242x32xf32>, vector<242x32xf32>, vector<242x32xf32>, vector<242x32xf32>, vector<242x32xf32>, vector<242x32xf32>, vector<242x32xf32>, vector<242x32xf32> -> vector<242x288xf32>
    %c72 = arith.constant 72 : index
    %c0_94 = arith.constant 0 : index
    %149 = vector.load %arg2[%c72, %c0_94] : memref<976x8xf32, #tpu.memory_space<vmem>>, vector<288x8xf32>
    %cst_95 = arith.constant dense<0.000000e+00> : vector<242x8xf32>
    %150 = tpu.matmul %148, %149, %cst_95 {dimension_numbers = #tpu.dot_dimension_numbers<[1], [0], [0], [1], [0, 0, 1, 1], [], []>} : vector<242x288xf32>, vector<288x8xf32>, vector<242x8xf32> -> vector<242x8xf32>
    %151 = vector.broadcast %4 : vector<242x1xf32> to vector<242x8xf32>
    %152 = arith.mulf %150, %151 : vector<242x8xf32>
    %153 = arith.mulf %152, %152 : vector<242x8xf32>
    %154 = tpu.concatenate %152, %153 in 1 : vector<242x8xf32>, vector<242x8xf32> -> vector<242x16xf32>
    %cst_96 = arith.constant dense<0.000000e+00> : vector<16xf32>
    %155 = vector.multi_reduction <add>, %154, %cst_96 [0] : vector<242x16xf32> to vector<16xf32>
    %156 = vector.shape_cast %155 : vector<16xf32> to vector<1x16xf32>
    %157 = vector.extract_strided_slice %156 {offsets = [0, 0], sizes = [1, 8], strides = [1, 1]} : vector<1x16xf32> to vector<1x8xf32>
    %cst_97 = arith.constant 2.000000e-02 : f32
    %158 = vector.broadcast %cst_97 : f32 to vector<1x8xf32>
    %159 = arith.mulf %157, %158 : vector<1x8xf32>
    %160 = vector.extract_strided_slice %156 {offsets = [0, 8], sizes = [1, 8], strides = [1, 1]} : vector<1x16xf32> to vector<1x8xf32>
    %cst_98 = arith.constant 2.000000e-02 : f32
    %161 = vector.broadcast %cst_98 : f32 to vector<1x8xf32>
    %162 = arith.mulf %160, %161 : vector<1x8xf32>
    %163 = arith.mulf %159, %159 : vector<1x8xf32>
    %164 = arith.subf %162, %163 : vector<1x8xf32>
    %cst_99 = arith.constant 0.000000e+00 : f32
    %165 = vector.broadcast %cst_99 : f32 to vector<1x8xf32>
    %166 = arith.maximumf %164, %165 : vector<1x8xf32>
    %167 = vector.broadcast %159 : vector<1x8xf32> to vector<242x8xf32>
    %168 = arith.subf %150, %167 : vector<242x8xf32>
    %cst_100 = arith.constant 9.99999974E-6 : f32
    %169 = vector.broadcast %cst_100 : f32 to vector<1x8xf32>
    %170 = arith.addf %166, %169 : vector<1x8xf32>
    %171 = math.rsqrt %170 : vector<1x8xf32>
    %172 = vector.broadcast %171 : vector<1x8xf32> to vector<242x8xf32>
    %173 = arith.mulf %168, %172 : vector<242x8xf32>
    %cst_101 = arith.constant 0.000000e+00 : f32
    %174 = vector.broadcast %cst_101 : f32 to vector<242x8xf32>
    %175 = arith.cmpf oge, %173, %174 : vector<242x8xf32>
    %cst_102 = arith.constant 0.00999999977 : f32
    %176 = vector.broadcast %cst_102 : f32 to vector<242x8xf32>
    %177 = arith.mulf %176, %173 : vector<242x8xf32>
    %178 = arith.select %175, %173, %177 : vector<242x8xi1>, vector<242x8xf32>
    %179 = vector.broadcast %4 : vector<242x1xf32> to vector<242x8xf32>
    %180 = arith.mulf %178, %179 : vector<242x8xf32>
    %c0_103 = arith.constant 0 : index
    %c0_104 = arith.constant 0 : index
    %181 = vector.load %arg4[%c0_103, %c0_104] : memref<272x64xf32, #tpu.memory_space<vmem>>, vector<242x8xf32>
    tpu.vector_store %arg4[%c0_103, %c0_104], %180 {strides = array<i32>} : memref<272x64xf32, #tpu.memory_space<vmem>>, vector<242x8xf32>,
    %c0_105 = arith.constant 0 : index
    %c0_106 = arith.constant 0 : index
    %182 = vector.load %arg4[%c0_105, %c0_106] : memref<272x64xf32, #tpu.memory_space<vmem>>, vector<242x8xf32>
    %c1_107 = arith.constant 1 : index
    %c0_108 = arith.constant 0 : index
    %183 = vector.load %arg4[%c1_107, %c0_108] : memref<272x64xf32, #tpu.memory_space<vmem>>, vector<242x8xf32>
    %c2_109 = arith.constant 2 : index
    %c0_110 = arith.constant 0 : index
    %184 = vector.load %arg4[%c2_109, %c0_110] : memref<272x64xf32, #tpu.memory_space<vmem>>, vector<242x8xf32>
    %c11_111 = arith.constant 11 : index
    %c0_112 = arith.constant 0 : index
    %185 = vector.load %arg4[%c11_111, %c0_112] : memref<272x64xf32, #tpu.memory_space<vmem>>, vector<242x8xf32>
    %c12_113 = arith.constant 12 : index
    %c0_114 = arith.constant 0 : index
    %186 = vector.load %arg4[%c12_113, %c0_114] : memref<272x64xf32, #tpu.memory_space<vmem>>, vector<242x8xf32>
    %c13_115 = arith.constant 13 : index
    %c0_116 = arith.constant 0 : index
    %187 = vector.load %arg4[%c13_115, %c0_116] : memref<272x64xf32, #tpu.memory_space<vmem>>, vector<242x8xf32>
    %c22_117 = arith.constant 22 : index
    %c0_118 = arith.constant 0 : index
    %188 = vector.load %arg4[%c22_117, %c0_118] : memref<272x64xf32, #tpu.memory_space<vmem>>, vector<242x8xf32>
    %c23_119 = arith.constant 23 : index
    %c0_120 = arith.constant 0 : index
    %189 = vector.load %arg4[%c23_119, %c0_120] : memref<272x64xf32, #tpu.memory_space<vmem>>, vector<242x8xf32>
    %c24_121 = arith.constant 24 : index
    %c0_122 = arith.constant 0 : index
    %190 = vector.load %arg4[%c24_121, %c0_122] : memref<272x64xf32, #tpu.memory_space<vmem>>, vector<242x8xf32>
    %191 = tpu.concatenate %182, %183, %184, %185, %186, %187, %188, %189, %190 in 1 : vector<242x8xf32>, vector<242x8xf32>, vector<242x8xf32>, vector<242x8xf32>, vector<242x8xf32>, vector<242x8xf32>, vector<242x8xf32>, vector<242x8xf32>, vector<242x8xf32> -> vector<242x72xf32>
    %c72_123 = arith.constant 72 : index
    %c0_124 = arith.constant 0 : index
    %192 = vector.load %arg1[%c72_123, %c0_124] : memref<152x64xf32, #tpu.memory_space<vmem>>, vector<72x64xf32>
    %cst_125 = arith.constant dense<0.000000e+00> : vector<242x64xf32>
    %193 = tpu.matmul %191, %192, %cst_125 {dimension_numbers = #tpu.dot_dimension_numbers<[1], [0], [0], [1], [0, 0, 1, 1], [], []>} : vector<242x72xf32>, vector<72x64xf32>, vector<242x64xf32> -> vector<242x64xf32>
    %c144 = arith.constant 144 : index
    %c0_126 = arith.constant 0 : index
    %194 = vector.load %arg1[%c144, %c0_126] : memref<152x64xf32, #tpu.memory_space<vmem>>, vector<1x64xf32>
    %195 = vector.broadcast %194 : vector<1x64xf32> to vector<242x64xf32>
    %196 = arith.addf %193, %195 : vector<242x64xf32>
    %c0_127 = arith.constant 0 : index
    %c0_128 = arith.constant 0 : index
    %197 = vector.load %arg4[%c0_127, %c0_128] : memref<272x64xf32, #tpu.memory_space<vmem>>, vector<242x64xf32>
    tpu.vector_store %arg4[%c0_127, %c0_128], %196 {strides = array<i32>} : memref<272x64xf32, #tpu.memory_space<vmem>>, vector<242x64xf32>,
    %c0_129 = arith.constant 0 : index
    %c0_130 = arith.constant 0 : index
    %198 = vector.load %arg4[%c0_129, %c0_130] : memref<272x64xf32, #tpu.memory_space<vmem>>, vector<1x64xf32>
    %c121 = arith.constant 121 : index
    %c0_131 = arith.constant 0 : index
    %199 = vector.load %arg4[%c121, %c0_131] : memref<272x64xf32, #tpu.memory_space<vmem>>, vector<1x64xf32>
    %200 = tpu.concatenate %198, %199 in 0 : vector<1x64xf32>, vector<1x64xf32> -> vector<2x64xf32>
    %c1_132 = arith.constant 1 : index
    %c0_133 = arith.constant 0 : index
    %201 = vector.load %arg4[%c1_132, %c0_133] : memref<272x64xf32, #tpu.memory_space<vmem>>, vector<1x64xf32>
    %c122 = arith.constant 122 : index
    %c0_134 = arith.constant 0 : index
    %202 = vector.load %arg4[%c122, %c0_134] : memref<272x64xf32, #tpu.memory_space<vmem>>, vector<1x64xf32>
    %203 = tpu.concatenate %201, %202 in 0 : vector<1x64xf32>, vector<1x64xf32> -> vector<2x64xf32>
    %c2_135 = arith.constant 2 : index
    %c0_136 = arith.constant 0 : index
    %204 = vector.load %arg4[%c2_135, %c0_136] : memref<272x64xf32, #tpu.memory_space<vmem>>, vector<1x64xf32>
    %c123 = arith.constant 123 : index
    %c0_137 = arith.constant 0 : index
    %205 = vector.load %arg4[%c123, %c0_137] : memref<272x64xf32, #tpu.memory_space<vmem>>, vector<1x64xf32>
    %206 = tpu.concatenate %204, %205 in 0 : vector<1x64xf32>, vector<1x64xf32> -> vector<2x64xf32>
    %c11_138 = arith.constant 11 : index
    %c0_139 = arith.constant 0 : index
    %207 = vector.load %arg4[%c11_138, %c0_139] : memref<272x64xf32, #tpu.memory_space<vmem>>, vector<1x64xf32>
    %c132 = arith.constant 132 : index
    %c0_140 = arith.constant 0 : index
    %208 = vector.load %arg4[%c132, %c0_140] : memref<272x64xf32, #tpu.memory_space<vmem>>, vector<1x64xf32>
    %209 = tpu.concatenate %207, %208 in 0 : vector<1x64xf32>, vector<1x64xf32> -> vector<2x64xf32>
    %c12_141 = arith.constant 12 : index
    %c0_142 = arith.constant 0 : index
    %210 = vector.load %arg4[%c12_141, %c0_142] : memref<272x64xf32, #tpu.memory_space<vmem>>, vector<1x64xf32>
    %c133 = arith.constant 133 : index
    %c0_143 = arith.constant 0 : index
    %211 = vector.load %arg4[%c133, %c0_143] : memref<272x64xf32, #tpu.memory_space<vmem>>, vector<1x64xf32>
    %212 = tpu.concatenate %210, %211 in 0 : vector<1x64xf32>, vector<1x64xf32> -> vector<2x64xf32>
    %c13_144 = arith.constant 13 : index
    %c0_145 = arith.constant 0 : index
    %213 = vector.load %arg4[%c13_144, %c0_145] : memref<272x64xf32, #tpu.memory_space<vmem>>, vector<1x64xf32>
    %c134 = arith.constant 134 : index
    %c0_146 = arith.constant 0 : index
    %214 = vector.load %arg4[%c134, %c0_146] : memref<272x64xf32, #tpu.memory_space<vmem>>, vector<1x64xf32>
    %215 = tpu.concatenate %213, %214 in 0 : vector<1x64xf32>, vector<1x64xf32> -> vector<2x64xf32>
    %c22_147 = arith.constant 22 : index
    %c0_148 = arith.constant 0 : index
    %216 = vector.load %arg4[%c22_147, %c0_148] : memref<272x64xf32, #tpu.memory_space<vmem>>, vector<1x64xf32>
    %c143 = arith.constant 143 : index
    %c0_149 = arith.constant 0 : index
    %217 = vector.load %arg4[%c143, %c0_149] : memref<272x64xf32, #tpu.memory_space<vmem>>, vector<1x64xf32>
    %218 = tpu.concatenate %216, %217 in 0 : vector<1x64xf32>, vector<1x64xf32> -> vector<2x64xf32>
    %c23_150 = arith.constant 23 : index
    %c0_151 = arith.constant 0 : index
    %219 = vector.load %arg4[%c23_150, %c0_151] : memref<272x64xf32, #tpu.memory_space<vmem>>, vector<1x64xf32>
    %c144_152 = arith.constant 144 : index
    %c0_153 = arith.constant 0 : index
    %220 = vector.load %arg4[%c144_152, %c0_153] : memref<272x64xf32, #tpu.memory_space<vmem>>, vector<1x64xf32>
    %221 = tpu.concatenate %219, %220 in 0 : vector<1x64xf32>, vector<1x64xf32> -> vector<2x64xf32>
    %c24_154 = arith.constant 24 : index
    %c0_155 = arith.constant 0 : index
    %222 = vector.load %arg4[%c24_154, %c0_155] : memref<272x64xf32, #tpu.memory_space<vmem>>, vector<1x64xf32>
    %c145 = arith.constant 145 : index
    %c0_156 = arith.constant 0 : index
    %223 = vector.load %arg4[%c145, %c0_156] : memref<272x64xf32, #tpu.memory_space<vmem>>, vector<1x64xf32>
    %224 = tpu.concatenate %222, %223 in 0 : vector<1x64xf32>, vector<1x64xf32> -> vector<2x64xf32>
    %225 = tpu.concatenate %200, %203, %206, %209, %212, %215, %218, %221, %224 in 1 : vector<2x64xf32>, vector<2x64xf32>, vector<2x64xf32>, vector<2x64xf32>, vector<2x64xf32>, vector<2x64xf32>, vector<2x64xf32>, vector<2x64xf32>, vector<2x64xf32> -> vector<2x576xf32>
    %c360 = arith.constant 360 : index
    %c0_157 = arith.constant 0 : index
    %226 = vector.load %arg2[%c360, %c0_157] : memref<976x8xf32, #tpu.memory_space<vmem>>, vector<576x8xf32>
    %cst_158 = arith.constant dense<0.000000e+00> : vector<2x8xf32>
    %227 = tpu.matmul %225, %226, %cst_158 {dimension_numbers = #tpu.dot_dimension_numbers<[1], [0], [0], [1], [0, 0, 1, 1], [], []>} : vector<2x576xf32>, vector<576x8xf32>, vector<2x8xf32> -> vector<2x8xf32>
    %228 = arith.mulf %227, %227 : vector<2x8xf32>
    %229 = tpu.concatenate %227, %228 in 1 : vector<2x8xf32>, vector<2x8xf32> -> vector<2x16xf32>
    %cst_159 = arith.constant dense<0.000000e+00> : vector<16xf32>
    %230 = vector.multi_reduction <add>, %229, %cst_159 [0] : vector<2x16xf32> to vector<16xf32>
    %231 = vector.shape_cast %230 : vector<16xf32> to vector<1x16xf32>
    %232 = vector.extract_strided_slice %231 {offsets = [0, 0], sizes = [1, 8], strides = [1, 1]} : vector<1x16xf32> to vector<1x8xf32>
    %cst_160 = arith.constant 5.000000e-01 : f32
    %233 = vector.broadcast %cst_160 : f32 to vector<1x8xf32>
    %234 = arith.mulf %232, %233 : vector<1x8xf32>
    %235 = vector.extract_strided_slice %231 {offsets = [0, 8], sizes = [1, 8], strides = [1, 1]} : vector<1x16xf32> to vector<1x8xf32>
    %cst_161 = arith.constant 5.000000e-01 : f32
    %236 = vector.broadcast %cst_161 : f32 to vector<1x8xf32>
    %237 = arith.mulf %235, %236 : vector<1x8xf32>
    %238 = arith.mulf %234, %234 : vector<1x8xf32>
    %239 = arith.subf %237, %238 : vector<1x8xf32>
    %cst_162 = arith.constant 0.000000e+00 : f32
    %240 = vector.broadcast %cst_162 : f32 to vector<1x8xf32>
    %241 = arith.maximumf %239, %240 : vector<1x8xf32>
    %242 = vector.broadcast %234 : vector<1x8xf32> to vector<2x8xf32>
    %243 = arith.subf %227, %242 : vector<2x8xf32>
    %cst_163 = arith.constant 9.99999974E-6 : f32
    %244 = vector.broadcast %cst_163 : f32 to vector<1x8xf32>
    %245 = arith.addf %241, %244 : vector<1x8xf32>
    %246 = math.rsqrt %245 : vector<1x8xf32>
    %247 = vector.broadcast %246 : vector<1x8xf32> to vector<2x8xf32>
    %248 = arith.mulf %243, %247 : vector<2x8xf32>
    %cst_164 = arith.constant 0.000000e+00 : f32
    %249 = vector.broadcast %cst_164 : f32 to vector<2x8xf32>
    %250 = arith.maximumf %248, %249 : vector<2x8xf32>
    %c936 = arith.constant 936 : index
    %c0_165 = arith.constant 0 : index
    %251 = vector.load %arg2[%c936, %c0_165] : memref<976x8xf32, #tpu.memory_space<vmem>>, vector<8x4xf32>
    %cst_166 = arith.constant dense<0.000000e+00> : vector<2x4xf32>
    %252 = tpu.matmul %250, %251, %cst_166 {dimension_numbers = #tpu.dot_dimension_numbers<[1], [0], [0], [1], [0, 0, 1, 1], [], []>} : vector<2x8xf32>, vector<8x4xf32>, vector<2x4xf32> -> vector<2x4xf32>
    %c944 = arith.constant 944 : index
    %c0_167 = arith.constant 0 : index
    %253 = vector.load %arg2[%c944, %c0_167] : memref<976x8xf32, #tpu.memory_space<vmem>>, vector<1x4xf32>
    %254 = vector.broadcast %253 : vector<1x4xf32> to vector<2x4xf32>
    %255 = arith.addf %252, %254 : vector<2x4xf32>
    %cst_168 = arith.constant 0.000000e+00 : f32
    %256 = vector.broadcast %cst_168 : f32 to vector<2x4xf32>
    %257 = arith.cmpf oge, %255, %256 : vector<2x4xf32>
    %cst_169 = arith.constant 0.00999999977 : f32
    %258 = vector.broadcast %cst_169 : f32 to vector<2x4xf32>
    %259 = arith.mulf %258, %255 : vector<2x4xf32>
    %260 = arith.select %257, %255, %259 : vector<2x4xi1>, vector<2x4xf32>
    %c952 = arith.constant 952 : index
    %c0_170 = arith.constant 0 : index
    %261 = vector.load %arg2[%c952, %c0_170] : memref<976x8xf32, #tpu.memory_space<vmem>>, vector<4x4xf32>
    %cst_171 = arith.constant dense<0.000000e+00> : vector<2x4xf32>
    %262 = tpu.matmul %260, %261, %cst_171 {dimension_numbers = #tpu.dot_dimension_numbers<[1], [0], [0], [1], [0, 0, 1, 1], [], []>} : vector<2x4xf32>, vector<4x4xf32>, vector<2x4xf32> -> vector<2x4xf32>
    %263 = arith.mulf %262, %262 : vector<2x4xf32>
    %264 = tpu.concatenate %262, %263 in 1 : vector<2x4xf32>, vector<2x4xf32> -> vector<2x8xf32>
    %cst_172 = arith.constant dense<0.000000e+00> : vector<8xf32>
    %265 = vector.multi_reduction <add>, %264, %cst_172 [0] : vector<2x8xf32> to vector<8xf32>
    %266 = vector.shape_cast %265 : vector<8xf32> to vector<1x8xf32>
    %267 = vector.extract_strided_slice %266 {offsets = [0, 0], sizes = [1, 4], strides = [1, 1]} : vector<1x8xf32> to vector<1x4xf32>
    %cst_173 = arith.constant 5.000000e-01 : f32
    %268 = vector.broadcast %cst_173 : f32 to vector<1x4xf32>
    %269 = arith.mulf %267, %268 : vector<1x4xf32>
    %270 = vector.extract_strided_slice %266 {offsets = [0, 4], sizes = [1, 4], strides = [1, 1]} : vector<1x8xf32> to vector<1x4xf32>
    %cst_174 = arith.constant 5.000000e-01 : f32
    %271 = vector.broadcast %cst_174 : f32 to vector<1x4xf32>
    %272 = arith.mulf %270, %271 : vector<1x4xf32>
    %273 = arith.mulf %269, %269 : vector<1x4xf32>
    %274 = arith.subf %272, %273 : vector<1x4xf32>
    %cst_175 = arith.constant 0.000000e+00 : f32
    %275 = vector.broadcast %cst_175 : f32 to vector<1x4xf32>
    %276 = arith.maximumf %274, %275 : vector<1x4xf32>
    %277 = vector.broadcast %269 : vector<1x4xf32> to vector<2x4xf32>
    %278 = arith.subf %262, %277 : vector<2x4xf32>
    %cst_176 = arith.constant 9.99999974E-6 : f32
    %279 = vector.broadcast %cst_176 : f32 to vector<1x4xf32>
    %280 = arith.addf %276, %279 : vector<1x4xf32>
    %281 = math.rsqrt %280 : vector<1x4xf32>
    %282 = vector.broadcast %281 : vector<1x4xf32> to vector<2x4xf32>
    %283 = arith.mulf %278, %282 : vector<2x4xf32>
    %cst_177 = arith.constant 0.000000e+00 : f32
    %284 = vector.broadcast %cst_177 : f32 to vector<2x4xf32>
    %285 = arith.cmpf oge, %283, %284 : vector<2x4xf32>
    %cst_178 = arith.constant 0.00999999977 : f32
    %286 = vector.broadcast %cst_178 : f32 to vector<2x4xf32>
    %287 = arith.mulf %286, %283 : vector<2x4xf32>
    %288 = arith.select %285, %283, %287 : vector<2x4xi1>, vector<2x4xf32>
    %c960 = arith.constant 960 : index
    %c0_179 = arith.constant 0 : index
    %289 = vector.load %arg2[%c960, %c0_179] : memref<976x8xf32, #tpu.memory_space<vmem>>, vector<4x2xf32>
    %cst_180 = arith.constant dense<0.000000e+00> : vector<2x2xf32>
    %290 = tpu.matmul %288, %289, %cst_180 {dimension_numbers = #tpu.dot_dimension_numbers<[1], [0], [0], [1], [0, 0, 1, 1], [], []>} : vector<2x4xf32>, vector<4x2xf32>, vector<2x2xf32> -> vector<2x2xf32>
    %c968 = arith.constant 968 : index
    %c0_181 = arith.constant 0 : index
    %291 = vector.load %arg2[%c968, %c0_181] : memref<976x8xf32, #tpu.memory_space<vmem>>, vector<1x2xf32>
    %292 = vector.broadcast %291 : vector<1x2xf32> to vector<2x2xf32>
    %293 = arith.addf %290, %292 : vector<2x2xf32>
    %c0_182 = arith.constant 0 : index
    %c0_183 = arith.constant 0 : index
    %294 = vector.load %arg3[%c0_182, %c0_183] : memref<2x2xf32, #tpu.memory_space<vmem>>, vector<2x2xf32>
    tpu.vector_store %arg3[%c0_182, %c0_183], %293 {strides = array<i32>} : memref<2x2xf32, #tpu.memory_space<vmem>>, vector<2x2xf32>,
    return
  }
}

</mosaic_0001>

<llo_original>
// kernel: tile.9
$region0: #{tile.9}
  %s0 = inlined_call_operand.vmem [shape: f32[2,121,3], index: 0, kind: input, shape index: {}]
  %s1 = inlined_call_operand.vmem [shape: f32[242,3], index: 1, kind: output, shape index: {}]
  $region1: #{tile.9} parent=0
    #allocation0 [shape = 'u8[8192]{0}', space=vmem, size = 0x2000, scoped, tag = 'scoped mem for output reshape']
    #allocation1 [shape = 'u8[12288]{0}', space=vmem, size = 0x3000, scoped, tag = 'scoped mem for input reshape']
    %s3 = sshllo.u32 0, 2
    %s4 = smul.addr 2, 2
    %s5 = scalar_lea.vmem %s0, %s4
    %v6 = vld [vmem:[%s5] sm:%s3]
    %s7 = scalar_lea.vmem [#allocation1], 16
    %8 = vst [vmem:[%s7] sm:%s3] %v6
    %s9 = scalar_lea.vmem %s0, 2
    %v10 = vld [vmem:[%s9] sm:%s3]
    %s11 = scalar_lea.vmem [#allocation1], 8
    %12 = vst [vmem:[%s11] sm:%s3] %v10
    %v13 = vld [vmem:[%s0] sm:%s3]
    %14 = vst [vmem:[#allocation1] sm:%s3] %v13
    %v15 = vld [vmem:[#allocation1] ss:$8 sm:$0x7]
    %vm16 = vcmask 990208
    %17 = vst.msk [vmem:[#allocation0] sm:$0x7] %vm16, %v15
    %s18 = scalar_lea.vmem [#allocation1], 1
    %v19 = vld [vmem:[%s18] ss:$8 sm:$0x7]
    %s20 = scalar_lea.vmem [#allocation1], 1
    %v21 = vld [vmem:[%s20] ss:$8 sm:$0x7]
    %vm22 = vcmask 56320
    %v23 = vsel %vm22, %v21, %v19
    %24 = vrot.lane.b32.xlu0 %v23, 121
    %v25 = vpop.permute.xlu0 %24
    %vm26 = vcmask 932864
    %s27 = scalar_lea.vmem [#allocation0], 8
    %28 = vst.msk [vmem:[%s27] sm:$0x7] %vm26, %v25
    %vm29 = vcmask 1048520
    %30 = vst.msk [vmem:[#allocation0] sm:$0x7] %vm29, %v25
    %s32 = sshllo.u32 0, 4
    %v34 = vld [vmem:[#allocation0] sm:%s32]
    %s35 = sshllo.u32 0, 4
    %36 = vst [vmem:[%s1] sm:%s35] %v34
    %s37 = scalar_lea.vmem [#allocation0], 8
    %v38 = vld [vmem:[%s37] sm:%s32]
    %s39 = sshllo.u32 0, 4
    %s40 = scalar_lea.vmem %s1, 4
    %41 = vst [vmem:[%s40] sm:%s39] %v38

// kernel: nac_forward.1
$region0: #{nac_forward.1}
  #allocation0 [shape = 'u32[]', space=smem, size = 0x4, offset = 0x4, fixed_abs, tag = 'smem constant byte address 0x4 - core index']
  #allocation1 [shape = 'u32[144,128]{1,0:T(1,128)}', space=vmem, size = 0x12000, scoped, tag = 'internal scratch']
  #allocation2 [shape = 'f32[272,64]{1,0:T(8,128)}', space=vmem, size = 0x22000, scoped, tag = 'scratch operand']
  %s0 = inlined_call_operand.vmem [shape: f32[272,4], index: 0, kind: input, shape index: {}]
  %s1 = inlined_call_operand.vmem [shape: f32[152,64], index: 1, kind: input, shape index: {}]
  %s2 = inlined_call_operand.vmem [shape: f32[976,8], index: 2, kind: input, shape index: {}]
  %s3 = inlined_call_operand.hbm [shape: f32[2,2], index: 3, kind: output, shape index: {}]
  %s4 = sld [smem:[#allocation0]]
  $region22: #{nac_forward.1} parent=0
    _
  %s6 = ssub.s32 1, %s4
  %s7 = scalar_select 0, %s6, %s4
  $region1: #{nac_forward.1} parent=0
    #allocation3 [shape = 'u8[1024]{0}', space=vmem, size = 0x400, scoped, tag = 'output window, operand 0, single buffered']
    #allocation4 [shape = 's32[1]{0}', space=sflag, size = 0x4, scoped, tag = 'scoped memory for nac_forward.1']
    %8 = vsyncpa [#allocation4], 0
    // Predicated region
    $region2: #{nac_forward.1} parent=1 // pred_check
      _
    $region3: #{nac_forward.1} parent=1 // pred_check_branch
      %10 = sbr.rel (0) target = $region5
    $region4: #{nac_forward.1} parent=1 // pred_region
      _
    $region5: #{nac_forward.1} parent=1 // pred_fallthru
      _
    // Predicated region
    $region6: #{nac_forward.1} parent=1 // pred_check
      _
    $region7: #{nac_forward.1} parent=1 // pred_check_branch
      %12 = sbr.rel (0) target = $region9
    $region8: #{nac_forward.1} parent=1 // pred_region
      _
    $region9: #{nac_forward.1} parent=1 // pred_fallthru
      _
    // Predicated region
    $region10: #{nac_forward.1} parent=1 // pred_check
      _
    $region11: #{nac_forward.1} parent=1 // pred_check_branch
      %14 = sbr.rel (0) target = $region13
    $region12: #{nac_forward.1} parent=1 // pred_region
      _
    $region13: #{nac_forward.1} parent=1 // pred_fallthru
      _
    %vm15 = vcmask 523264
    %16 = vst.msk [vmem:[#allocation2] sm:$0xff] %vm15, 0.0
    %17 = vst.msk [vmem:[#allocation2 + $0x8] sm:$0xff] %vm15, 0.0
    %18 = vst.msk [vmem:[#allocation2 + $0x10] sm:$0xff] %vm15, 0.0
    %19 = vst.msk [vmem:[#allocation2 + $0x18] sm:$0xff] %vm15, 0.0
    %20 = vst.msk [vmem:[#allocation2 + $0x20] sm:$0xff] %vm15, 0.0
    %21 = vst.msk [vmem:[#allocation2 + $0x28] sm:$0xff] %vm15, 0.0
    %22 = vst.msk [vmem:[#allocation2 + $0x30] sm:$0xff] %vm15, 0.0
    %23 = vst.msk [vmem:[#allocation2 + $0x38] sm:$0xff] %vm15, 0.0
    %24 = vst.msk [vmem:[#allocation2 + $0x40] sm:$0xff] %vm15, 0.0
    %25 = vst.msk [vmem:[#allocation2 + $0x48] sm:$0xff] %vm15, 0.0
    %26 = vst.msk [vmem:[#allocation2 + $0x50] sm:$0xff] %vm15, 0.0
    %27 = vst.msk [vmem:[#allocation2 + $0x58] sm:$0xff] %vm15, 0.0
    %28 = vst.msk [vmem:[#allocation2 + $0x60] sm:$0xff] %vm15, 0.0
    %29 = vst.msk [vmem:[#allocation2 + $0x68] sm:$0xff] %vm15, 0.0
    %30 = vst.msk [vmem:[#allocation2 + $0x70] sm:$0xff] %vm15, 0.0
    %31 = vst.msk [vmem:[#allocation2 + $0x78] sm:$0xff] %vm15, 0.0
    %32 = vst.msk [vmem:[#allocation2 + $0x80] sm:$0xff] %vm15, 0.0
    %33 = vst.msk [vmem:[#allocation2 + $0x88] sm:$0xff] %vm15, 0.0
    %34 = vst.msk [vmem:[#allocation2 + $0x90] sm:$0xff] %vm15, 0.0
    %35 = vst.msk [vmem:[#allocation2 + $0x98] sm:$0xff] %vm15, 0.0
    %36 = vst.msk [vmem:[#allocation2 + $0xa0] sm:$0xff] %vm15, 0.0
    %37 = vst.msk [vmem:[#allocation2 + $0xa8] sm:$0xff] %vm15, 0.0
    %38 = vst.msk [vmem:[#allocation2 + $0xb0] sm:$0xff] %vm15, 0.0
    %39 = vst.msk [vmem:[#allocation2 + $0xb8] sm:$0xff] %vm15, 0.0
    %40 = vst.msk [vmem:[#allocation2 + $0xc0] sm:$0xff] %vm15, 0.0
    %41 = vst.msk [vmem:[#allocation2 + $0xc8] sm:$0xff] %vm15, 0.0
    %42 = vst.msk [vmem:[#allocation2 + $0xd0] sm:$0xff] %vm15, 0.0
    %43 = vst.msk [vmem:[#allocation2 + $0xd8] sm:$0xff] %vm15, 0.0
    %44 = vst.msk [vmem:[#allocation2 + $0xe0] sm:$0xff] %vm15, 0.0
    %45 = vst.msk [vmem:[#allocation2 + $0xe8] sm:$0xff] %vm15, 0.0
    %46 = vst.msk [vmem:[#allocation2 + $0xf0] sm:$0xff] %vm15, 0.0
    %47 = vst.msk [vmem:[#allocation2 + $0xf8] sm:$0xff] %vm15, 0.0
    %48 = vst.msk [vmem:[#allocation2 + $0x100] sm:$0xff] %vm15, 0.0
    %49 = vst.msk [vmem:[#allocation2 + $0x108] sm:$0xff] %vm15, 0.0
    %v50 = vld [vmem:[%s0] sm:$0xff]
    %v51 = vld [vmem:[%s0 + $0x8] sm:$0xff]
    %v52 = vld [vmem:[%s0 + $0x10] sm:$0xff]
    %v53 = vld [vmem:[%s0 + $0x18] sm:$0xff]
    %v54 = vld [vmem:[%s0 + $0x20] sm:$0xff]
    %v55 = vld [vmem:[%s0 + $0x28] sm:$0xff]
    %v56 = vld [vmem:[%s0 + $0x30] sm:$0xff]
    %v57 = vld [vmem:[%s0 + $0x38] sm:$0xff]
    %v58 = vld [vmem:[%s0 + $0x40] sm:$0xff]
    %v59 = vld [vmem:[%s0 + $0x48] sm:$0xff]
    %v60 = vld [vmem:[%s0 + $0x50] sm:$0xff]
    %v61 = vld [vmem:[%s0 + $0x58] sm:$0xff]
    %v62 = vld [vmem:[%s0 + $0x60] sm:$0xff]
    %v63 = vld [vmem:[%s0 + $0x68] sm:$0xff]
    %v64 = vld [vmem:[%s0 + $0x70] sm:$0xff]
    %v65 = vld [vmem:[%s0 + $0x78] sm:$0xff]
    %v66 = vld [vmem:[%s0 + $0x80] sm:$0xff]
    %v67 = vld [vmem:[%s0 + $0x88] sm:$0xff]
    %v68 = vld [vmem:[%s0 + $0x90] sm:$0xff]
    %v69 = vld [vmem:[%s0 + $0x98] sm:$0xff]
    %v70 = vld [vmem:[%s0 + $0xa0] sm:$0xff]
    %v71 = vld [vmem:[%s0 + $0xa8] sm:$0xff]
    %v72 = vld [vmem:[%s0 + $0xb0] sm:$0xff]
    %v73 = vld [vmem:[%s0 + $0xb8] sm:$0xff]
    %v74 = vld [vmem:[%s0 + $0xc0] sm:$0xff]
    %v75 = vld [vmem:[%s0 + $0xc8] sm:$0xff]
    %v76 = vld [vmem:[%s0 + $0xd0] sm:$0xff]
    %v77 = vld [vmem:[%s0 + $0xd8] sm:$0xff]
    %v78 = vld [vmem:[%s0 + $0xe0] sm:$0xff]
    %v79 = vld [vmem:[%s0 + $0xe8] sm:$0xff]
    %v80 = vld [vmem:[%s0 + $0xf0] sm:$0x3]
    %v81 = vld [vmem:[%s0 + $0x1] sm:$0xff]
    %v82 = vld [vmem:[%s0 + $0x9] sm:$0xff]
    %v83 = vld [vmem:[%s0 + $0x11] sm:$0xff]
    %v84 = vld [vmem:[%s0 + $0x19] sm:$0xff]
    %v85 = vld [vmem:[%s0 + $0x21] sm:$0xff]
    %v86 = vld [vmem:[%s0 + $0x29] sm:$0xff]
    %v87 = vld [vmem:[%s0 + $0x31] sm:$0xff]
    %v88 = vld [vmem:[%s0 + $0x39] sm:$0xff]
    %v89 = vld [vmem:[%s0 + $0x41] sm:$0xff]
    %v90 = vld [vmem:[%s0 + $0x49] sm:$0xff]
    %v91 = vld [vmem:[%s0 + $0x51] sm:$0xff]
    %v92 = vld [vmem:[%s0 + $0x59] sm:$0xff]
    %v93 = vld [vmem:[%s0 + $0x61] sm:$0xff]
    %v94 = vld [vmem:[%s0 + $0x69] sm:$0xff]
    %v95 = vld [vmem:[%s0 + $0x71] sm:$0xff]
    %v96 = vld [vmem:[%s0 + $0x79] sm:$0xff]
    %v97 = vld [vmem:[%s0 + $0x81] sm:$0xff]
    %v98 = vld [vmem:[%s0 + $0x89] sm:$0xff]
    %v99 = vld [vmem:[%s0 + $0x91] sm:$0xff]
    %v100 = vld [vmem:[%s0 + $0x99] sm:$0xff]
    %v101 = vld [vmem:[%s0 + $0xa1] sm:$0xff]
    %v102 = vld [vmem:[%s0 + $0xa9] sm:$0xff]
    %v103 = vld [vmem:[%s0 + $0xb1] sm:$0xff]
    %v104 = vld [vmem:[%s0 + $0xb9] sm:$0xff]
    %v105 = vld [vmem:[%s0 + $0xc1] sm:$0xff]
    %v106 = vld [vmem:[%s0 + $0xc9] sm:$0xff]
    %v107 = vld [vmem:[%s0 + $0xd1] sm:$0xff]
    %v108 = vld [vmem:[%s0 + $0xd9] sm:$0xff]
    %v109 = vld [vmem:[%s0 + $0xe1] sm:$0xff]
    %v110 = vld [vmem:[%s0 + $0xe9] sm:$0xff]
    %v111 = vld [vmem:[%s0 + $0xf1] sm:$0x3]
    %v112 = vld [vmem:[%s0 + $0x2] sm:$0xff]
    %v113 = vld [vmem:[%s0 + $0xa] sm:$0xff]
    %v114 = vld [vmem:[%s0 + $0x12] sm:$0xff]
    %v115 = vld [vmem:[%s0 + $0x1a] sm:$0xff]
    %v116 = vld [vmem:[%s0 + $0x22] sm:$0xff]
    %v117 = vld [vmem:[%s0 + $0x2a] sm:$0xff]
    %v118 = vld [vmem:[%s0 + $0x32] sm:$0xff]
    %v119 = vld [vmem:[%s0 + $0x3a] sm:$0xff]
    %v120 = vld [vmem:[%s0 + $0x42] sm:$0xff]
    %v121 = vld [vmem:[%s0 + $0x4a] sm:$0xff]
    %v122 = vld [vmem:[%s0 + $0x52] sm:$0xff]
    %v123 = vld [vmem:[%s0 + $0x5a] sm:$0xff]
    %v124 = vld [vmem:[%s0 + $0x62] sm:$0xff]
    %v125 = vld [vmem:[%s0 + $0x6a] sm:$0xff]
    %v126 = vld [vmem:[%s0 + $0x72] sm:$0xff]
    %v127 = vld [vmem:[%s0 + $0x7a] sm:$0xff]
    %v128 = vld [vmem:[%s0 + $0x82] sm:$0xff]
    %v129 = vld [vmem:[%s0 + $0x8a] sm:$0xff]
    %v130 = vld [vmem:[%s0 + $0x92] sm:$0xff]
    %v131 = vld [vmem:[%s0 + $0x9a] sm:$0xff]
    %v132 = vld [vmem:[%s0 + $0xa2] sm:$0xff]
    %v133 = vld [vmem:[%s0 + $0xaa] sm:$0xff]
    %v134 = vld [vmem:[%s0 + $0xb2] sm:$0xff]
    %v135 = vld [vmem:[%s0 + $0xba] sm:$0xff]
    %v136 = vld [vmem:[%s0 + $0xc2] sm:$0xff]
    %v137 = vld [vmem:[%s0 + $0xca] sm:$0xff]
    %v138 = vld [vmem:[%s0 + $0xd2] sm:$0xff]
    %v139 = vld [vmem:[%s0 + $0xda] sm:$0xff]
    %v140 = vld [vmem:[%s0 + $0xe2] sm:$0xff]
    %v141 = vld [vmem:[%s0 + $0xea] sm:$0xff]
    %v142 = vld [vmem:[%s0 + $0xf2] sm:$0x3]
    %v143 = vld [vmem:[%s0 + $0xb] sm:$0xff]
    %v144 = vld [vmem:[%s0 + $0x13] sm:$0xff]
    %v145 = vld [vmem:[%s0 + $0x1b] sm:$0xff]
    %v146 = vld [vmem:[%s0 + $0x23] sm:$0xff]
    %v147 = vld [vmem:[%s0 + $0x2b] sm:$0xff]
    %v148 = vld [vmem:[%s0 + $0x33] sm:$0xff]
    %v149 = vld [vmem:[%s0 + $0x3b] sm:$0xff]
    %v150 = vld [vmem:[%s0 + $0x43] sm:$0xff]
    %v151 = vld [vmem:[%s0 + $0x4b] sm:$0xff]
    %v152 = vld [vmem:[%s0 + $0x53] sm:$0xff]
    %v153 = vld [vmem:[%s0 + $0x5b] sm:$0xff]
    %v154 = vld [vmem:[%s0 + $0x63] sm:$0xff]
    %v155 = vld [vmem:[%s0 + $0x6b] sm:$0xff]
    %v156 = vld [vmem:[%s0 + $0x73] sm:$0xff]
    %v157 = vld [vmem:[%s0 + $0x7b] sm:$0xff]
    %v158 = vld [vmem:[%s0 + $0x83] sm:$0xff]
    %v159 = vld [vmem:[%s0 + $0x8b] sm:$0xff]
    %v160 = vld [vmem:[%s0 + $0x93] sm:$0xff]
    %v161 = vld [vmem:[%s0 + $0x9b] sm:$0xff]
    %v162 = vld [vmem:[%s0 + $0xa3] sm:$0xff]
    %v163 = vld [vmem:[%s0 + $0xab] sm:$0xff]
    %v164 = vld [vmem:[%s0 + $0xb3] sm:$0xff]
    %v165 = vld [vmem:[%s0 + $0xbb] sm:$0xff]
    %v166 = vld [vmem:[%s0 + $0xc3] sm:$0xff]
    %v167 = vld [vmem:[%s0 + $0xcb] sm:$0xff]
    %v168 = vld [vmem:[%s0 + $0xd3] sm:$0xff]
    %v169 = vld [vmem:[%s0 + $0xdb] sm:$0xff]
    %v170 = vld [vmem:[%s0 + $0xe3] sm:$0xff]
    %v171 = vld [vmem:[%s0 + $0xeb] sm:$0xff]
    %v172 = vld [vmem:[%s0 + $0xf3] sm:$0xff]
    %v173 = vld [vmem:[%s0 + $0xfb] sm:$0x3]
    %v174 = vld [vmem:[%s0 + $0xc] sm:$0xff]
    %v175 = vld [vmem:[%s0 + $0x14] sm:$0xff]
    %v176 = vld [vmem:[%s0 + $0x1c] sm:$0xff]
    %v177 = vld [vmem:[%s0 + $0x24] sm:$0xff]
    %v178 = vld [vmem:[%s0 + $0x2c] sm:$0xff]
    %v179 = vld [vmem:[%s0 + $0x34] sm:$0xff]
    %v180 = vld [vmem:[%s0 + $0x3c] sm:$0xff]
    %v181 = vld [vmem:[%s0 + $0x44] sm:$0xff]
    %v182 = vld [vmem:[%s0 + $0x4c] sm:$0xff]
    %v183 = vld [vmem:[%s0 + $0x54] sm:$0xff]
    %v184 = vld [vmem:[%s0 + $0x5c] sm:$0xff]
    %v185 = vld [vmem:[%s0 + $0x64] sm:$0xff]
    %v186 = vld [vmem:[%s0 + $0x6c] sm:$0xff]
    %v187 = vld [vmem:[%s0 + $0x74] sm:$0xff]
    %v188 = vld [vmem:[%s0 + $0x7c] sm:$0xff]
    %v189 = vld [vmem:[%s0 + $0x84] sm:$0xff]
    %v190 = vld [vmem:[%s0 + $0x8c] sm:$0xff]
    %v191 = vld [vmem:[%s0 + $0x94] sm:$0xff]
    %v192 = vld [vmem:[%s0 + $0x9c] sm:$0xff]
    %v193 = vld [vmem:[%s0 + $0xa4] sm:$0xff]
    %v194 = vld [vmem:[%s0 + $0xac] sm:$0xff]
    %v195 = vld [vmem:[%s0 + $0xb4] sm:$0xff]
    %v196 = vld [vmem:[%s0 + $0xbc] sm:$0xff]
    %v197 = vld [vmem:[%s0 + $0xc4] sm:$0xff]
    %v198 = vld [vmem:[%s0 + $0xcc] sm:$0xff]
    %v199 = vld [vmem:[%s0 + $0xd4] sm:$0xff]
    %v200 = vld [vmem:[%s0 + $0xdc] sm:$0xff]
    %v201 = vld [vmem:[%s0 + $0xe4] sm:$0xff]
    %v202 = vld [vmem:[%s0 + $0xec] sm:$0xff]
    %v203 = vld [vmem:[%s0 + $0xf4] sm:$0xff]
    %v204 = vld [vmem:[%s0 + $0xfc] sm:$0x3]
    %v205 = vld [vmem:[%s0 + $0xd] sm:$0xff]
    %v206 = vld [vmem:[%s0 + $0x15] sm:$0xff]
    %v207 = vld [vmem:[%s0 + $0x1d] sm:$0xff]
    %v208 = vld [vmem:[%s0 + $0x25] sm:$0xff]
    %v209 = vld [vmem:[%s0 + $0x2d] sm:$0xff]
    %v210 = vld [vmem:[%s0 + $0x35] sm:$0xff]
    %v211 = vld [vmem:[%s0 + $0x3d] sm:$0xff]
    %v212 = vld [vmem:[%s0 + $0x45] sm:$0xff]
    %v213 = vld [vmem:[%s0 + $0x4d] sm:$0xff]
    %v214 = vld [vmem:[%s0 + $0x55] sm:$0xff]
    %v215 = vld [vmem:[%s0 + $0x5d] sm:$0xff]
    %v216 = vld [vmem:[%s0 + $0x65] sm:$0xff]
    %v217 = vld [vmem:[%s0 + $0x6d] sm:$0xff]
    %v218 = vld [vmem:[%s0 + $0x75] sm:$0xff]
    %v219 = vld [vmem:[%s0 + $0x7d] sm:$0xff]
    %v220 = vld [vmem:[%s0 + $0x85] sm:$0xff]
    %v221 = vld [vmem:[%s0 + $0x8d] sm:$0xff]
    %v222 = vld [vmem:[%s0 + $0x95] sm:$0xff]
    %v223 = vld [vmem:[%s0 + $0x9d] sm:$0xff]
    %v224 = vld [vmem:[%s0 + $0xa5] sm:$0xff]
    %v225 = vld [vmem:[%s0 + $0xad] sm:$0xff]
    %v226 = vld [vmem:[%s0 + $0xb5] sm:$0xff]
    %v227 = vld [vmem:[%s0 + $0xbd] sm:$0xff]
    %v228 = vld [vmem:[%s0 + $0xc5] sm:$0xff]
    %v229 = vld [vmem:[%s0 + $0xcd] sm:$0xff]
    %v230 = vld [vmem:[%s0 + $0xd5] sm:$0xff]
    %v231 = vld [vmem:[%s0 + $0xdd] sm:$0xff]
    %v232 = vld [vmem:[%s0 + $0xe5] sm:$0xff]
    %v233 = vld [vmem:[%s0 + $0xed] sm:$0xff]
    %v234 = vld [vmem:[%s0 + $0xf5] sm:$0xff]
    %v235 = vld [vmem:[%s0 + $0xfd] sm:$0x3]
    %v236 = vld [vmem:[%s0 + $0x16] sm:$0xff]
    %v237 = vld [vmem:[%s0 + $0x1e] sm:$0xff]
    %v238 = vld [vmem:[%s0 + $0x26] sm:$0xff]
    %v239 = vld [vmem:[%s0 + $0x2e] sm:$0xff]
    %v240 = vld [vmem:[%s0 + $0x36] sm:$0xff]
    %v241 = vld [vmem:[%s0 + $0x3e] sm:$0xff]
    %v242 = vld [vmem:[%s0 + $0x46] sm:$0xff]
    %v243 = vld [vmem:[%s0 + $0x4e] sm:$0xff]
    %v244 = vld [vmem:[%s0 + $0x56] sm:$0xff]
    %v245 = vld [vmem:[%s0 + $0x5e] sm:$0xff]
    %v246 = vld [vmem:[%s0 + $0x66] sm:$0xff]
    %v247 = vld [vmem:[%s0 + $0x6e] sm:$0xff]
    %v248 = vld [vmem:[%s0 + $0x76] sm:$0xff]
    %v249 = vld [vmem:[%s0 + $0x7e] sm:$0xff]
    %v250 = vld [vmem:[%s0 + $0x86] sm:$0xff]
    %v251 = vld [vmem:[%s0 + $0x8e] sm:$0xff]
    %v252 = vld [vmem:[%s0 + $0x96] sm:$0xff]
    %v253 = vld [vmem:[%s0 + $0x9e] sm:$0xff]
    %v254 = vld [vmem:[%s0 + $0xa6] sm:$0xff]
    %v255 = vld [vmem:[%s0 + $0xae] sm:$0xff]
    %v256 = vld [vmem:[%s0 + $0xb6] sm:$0xff]
    %v257 = vld [vmem:[%s0 + $0xbe] sm:$0xff]
    %v258 = vld [vmem:[%s0 + $0xc6] sm:$0xff]
    %v259 = vld [vmem:[%s0 + $0xce] sm:$0xff]
    %v260 = vld [vmem:[%s0 + $0xd6] sm:$0xff]
    %v261 = vld [vmem:[%s0 + $0xde] sm:$0xff]
    %v262 = vld [vmem:[%s0 + $0xe6] sm:$0xff]
    %v263 = vld [vmem:[%s0 + $0xee] sm:$0xff]
    %v264 = vld [vmem:[%s0 + $0xf6] sm:$0xff]
    %v265 = vld [vmem:[%s0 + $0xfe] sm:$0xff]
    %v266 = vld [vmem:[%s0 + $0x106] sm:$0x3]
    %v267 = vld [vmem:[%s0 + $0x17] sm:$0xff]
    %v268 = vld [vmem:[%s0 + $0x1f] sm:$0xff]
    %v269 = vld [vmem:[%s0 + $0x27] sm:$0xff]
    %v270 = vld [vmem:[%s0 + $0x2f] sm:$0xff]
    %v271 = vld [vmem:[%s0 + $0x37] sm:$0xff]
    %v272 = vld [vmem:[%s0 + $0x3f] sm:$0xff]
    %v273 = vld [vmem:[%s0 + $0x47] sm:$0xff]
    %v274 = vld [vmem:[%s0 + $0x4f] sm:$0xff]
    %v275 = vld [vmem:[%s0 + $0x57] sm:$0xff]
    %v276 = vld [vmem:[%s0 + $0x5f] sm:$0xff]
    %v277 = vld [vmem:[%s0 + $0x67] sm:$0xff]
    %v278 = vld [vmem:[%s0 + $0x6f] sm:$0xff]
    %v279 = vld [vmem:[%s0 + $0x77] sm:$0xff]
    %v280 = vld [vmem:[%s0 + $0x7f] sm:$0xff]
    %v281 = vld [vmem:[%s0 + $0x87] sm:$0xff]
    %v282 = vld [vmem:[%s0 + $0x8f] sm:$0xff]
    %v283 = vld [vmem:[%s0 + $0x97] sm:$0xff]
    %v284 = vld [vmem:[%s0 + $0x9f] sm:$0xff]
    %v285 = vld [vmem:[%s0 + $0xa7] sm:$0xff]
    %v286 = vld [vmem:[%s0 + $0xaf] sm:$0xff]
    %v287 = vld [vmem:[%s0 + $0xb7] sm:$0xff]
    %v288 = vld [vmem:[%s0 + $0xbf] sm:$0xff]
    %v289 = vld [vmem:[%s0 + $0xc7] sm:$0xff]
    %v290 = vld [vmem:[%s0 + $0xcf] sm:$0xff]
    %v291 = vld [vmem:[%s0 + $0xd7] sm:$0xff]
    %v292 = vld [vmem:[%s0 + $0xdf] sm:$0xff]
    %v293 = vld [vmem:[%s0 + $0xe7] sm:$0xff]
    %v294 = vld [vmem:[%s0 + $0xef] sm:$0xff]
    %v295 = vld [vmem:[%s0 + $0xf7] sm:$0xff]
    %v296 = vld [vmem:[%s0 + $0xff] sm:$0xff]
    %v297 = vld [vmem:[%s0 + $0x107] sm:$0x3]
    %v298 = vld [vmem:[%s0 + $0xf0] sm:$0xff]
    %v299 = vld [vmem:[%s0 + $0xf8] sm:$0xff]
    %v300 = vld [vmem:[%s0 + $0x100] sm:$0xff]
    %v301 = vld [vmem:[%s0 + $0x108] sm:$0x3]
    %333 = vrot.lane.b32.xlu0 %v81, 1
    %v334 = vpop.permute.xlu0 %333
    %335 = vrot.lane.b32.xlu0 %v82, 1
    %v336 = vpop.permute.xlu0 %335
    %337 = vrot.lane.b32.xlu0 %v83, 1
    %v338 = vpop.permute.xlu0 %337
    %339 = vrot.lane.b32.xlu0 %v84, 1
    %v340 = vpop.permute.xlu0 %339
    %341 = vrot.lane.b32.xlu0 %v85, 1
    %v342 = vpop.permute.xlu0 %341
    %343 = vrot.lane.b32.xlu0 %v86, 1
    %v344 = vpop.permute.xlu0 %343
    %345 = vrot.lane.b32.xlu0 %v87, 1
    %v346 = vpop.permute.xlu0 %345
    %347 = vrot.lane.b32.xlu0 %v88, 1
    %v348 = vpop.permute.xlu0 %347
    %349 = vrot.lane.b32.xlu0 %v89, 1
    %v350 = vpop.permute.xlu0 %349
    %351 = vrot.lane.b32.xlu0 %v90, 1
    %v352 = vpop.permute.xlu0 %351
    %353 = vrot.lane.b32.xlu0 %v91, 1
    %v354 = vpop.permute.xlu0 %353
    %355 = vrot.lane.b32.xlu0 %v92, 1
    %v356 = vpop.permute.xlu0 %355
    %357 = vrot.lane.b32.xlu0 %v93, 1
    %v358 = vpop.permute.xlu0 %357
    %359 = vrot.lane.b32.xlu0 %v94, 1
    %v360 = vpop.permute.xlu0 %359
    %361 = vrot.lane.b32.xlu0 %v95, 1
    %v362 = vpop.permute.xlu0 %361
    %363 = vrot.lane.b32.xlu0 %v96, 1
    %v364 = vpop.permute.xlu0 %363
    %365 = vrot.lane.b32.xlu0 %v97, 1
    %v366 = vpop.permute.xlu0 %365
    %367 = vrot.lane.b32.xlu0 %v98, 1
    %v368 = vpop.permute.xlu0 %367
    %369 = vrot.lane.b32.xlu0 %v99, 1
    %v370 = vpop.permute.xlu0 %369
    %371 = vrot.lane.b32.xlu0 %v100, 1
    %v372 = vpop.permute.xlu0 %371
    %373 = vrot.lane.b32.xlu0 %v101, 1
    %v374 = vpop.permute.xlu0 %373
    %375 = vrot.lane.b32.xlu0 %v102, 1
    %v376 = vpop.permute.xlu0 %375
    %377 = vrot.lane.b32.xlu0 %v103, 1
    %v378 = vpop.permute.xlu0 %377
    %379 = vrot.lane.b32.xlu0 %v104, 1
    %v380 = vpop.permute.xlu0 %379
    %381 = vrot.lane.b32.xlu0 %v105, 1
    %v382 = vpop.permute.xlu0 %381
    %383 = vrot.lane.b32.xlu0 %v106, 1
    %v384 = vpop.permute.xlu0 %383
    %385 = vrot.lane.b32.xlu0 %v107, 1
    %v386 = vpop.permute.xlu0 %385
    %387 = vrot.lane.b32.xlu0 %v108, 1
    %v388 = vpop.permute.xlu0 %387
    %389 = vrot.lane.b32.xlu0 %v109, 1
    %v390 = vpop.permute.xlu0 %389
    %391 = vrot.lane.b32.xlu0 %v110, 1
    %v392 = vpop.permute.xlu0 %391
    %393 = vrot.lane.b32.xlu0 %v111, 1
    %v394 = vpop.permute.xlu0 %393
    %457 = vrot.lane.b32.xlu0 %v112, 2
    %v458 = vpop.permute.xlu0 %457
    %459 = vrot.lane.b32.xlu0 %v113, 2
    %v460 = vpop.permute.xlu0 %459
    %461 = vrot.lane.b32.xlu0 %v114, 2
    %v462 = vpop.permute.xlu0 %461
    %463 = vrot.lane.b32.xlu0 %v115, 2
    %v464 = vpop.permute.xlu0 %463
    %465 = vrot.lane.b32.xlu0 %v116, 2
    %v466 = vpop.permute.xlu0 %465
    %467 = vrot.lane.b32.xlu0 %v117, 2
    %v468 = vpop.permute.xlu0 %467
    %469 = vrot.lane.b32.xlu0 %v118, 2
    %v470 = vpop.permute.xlu0 %469
    %471 = vrot.lane.b32.xlu0 %v119, 2
    %v472 = vpop.permute.xlu0 %471
    %473 = vrot.lane.b32.xlu0 %v120, 2
    %v474 = vpop.permute.xlu0 %473
    %475 = vrot.lane.b32.xlu0 %v121, 2
    %v476 = vpop.permute.xlu0 %475
    %477 = vrot.lane.b32.xlu0 %v122, 2
    %v478 = vpop.permute.xlu0 %477
    %479 = vrot.lane.b32.xlu0 %v123, 2
    %v480 = vpop.permute.xlu0 %479
    %481 = vrot.lane.b32.xlu0 %v124, 2
    %v482 = vpop.permute.xlu0 %481
    %483 = vrot.lane.b32.xlu0 %v125, 2
    %v484 = vpop.permute.xlu0 %483
    %485 = vrot.lane.b32.xlu0 %v126, 2
    %v486 = vpop.permute.xlu0 %485
    %487 = vrot.lane.b32.xlu0 %v127, 2
    %v488 = vpop.permute.xlu0 %487
    %489 = vrot.lane.b32.xlu0 %v128, 2
    %v490 = vpop.permute.xlu0 %489
    %491 = vrot.lane.b32.xlu0 %v129, 2
    %v492 = vpop.permute.xlu0 %491
    %493 = vrot.lane.b32.xlu0 %v130, 2
    %v494 = vpop.permute.xlu0 %493
    %495 = vrot.lane.b32.xlu0 %v131, 2
    %v496 = vpop.permute.xlu0 %495
    %497 = vrot.lane.b32.xlu0 %v132, 2
    %v498 = vpop.permute.xlu0 %497
    %499 = vrot.lane.b32.xlu0 %v133, 2
    %v500 = vpop.permute.xlu0 %499
    %501 = vrot.lane.b32.xlu0 %v134, 2
    %v502 = vpop.permute.xlu0 %501
    %503 = vrot.lane.b32.xlu0 %v135, 2
    %v504 = vpop.permute.xlu0 %503
    %505 = vrot.lane.b32.xlu0 %v136, 2
    %v506 = vpop.permute.xlu0 %505
    %507 = vrot.lane.b32.xlu0 %v137, 2
    %v508 = vpop.permute.xlu0 %507
    %509 = vrot.lane.b32.xlu0 %v138, 2
    %v510 = vpop.permute.xlu0 %509
    %511 = vrot.lane.b32.xlu0 %v139, 2
    %v512 = vpop.permute.xlu0 %511
    %513 = vrot.lane.b32.xlu0 %v140, 2
    %v514 = vpop.permute.xlu0 %513
    %515 = vrot.lane.b32.xlu0 %v141, 2
    %v516 = vpop.permute.xlu0 %515
    %517 = vrot.lane.b32.xlu0 %v142, 2
    %v518 = vpop.permute.xlu0 %517
    %581 = vrot.lane.b32.xlu0 %v143, 3
    %v582 = vpop.permute.xlu0 %581
    %583 = vrot.lane.b32.xlu0 %v144, 3
    %v584 = vpop.permute.xlu0 %583
    %585 = vrot.lane.b32.xlu0 %v145, 3
    %v586 = vpop.permute.xlu0 %585
    %587 = vrot.lane.b32.xlu0 %v146, 3
    %v588 = vpop.permute.xlu0 %587
    %589 = vrot.lane.b32.xlu0 %v147, 3
    %v590 = vpop.permute.xlu0 %589
    %591 = vrot.lane.b32.xlu0 %v148, 3
    %v592 = vpop.permute.xlu0 %591
    %593 = vrot.lane.b32.xlu0 %v149, 3
    %v594 = vpop.permute.xlu0 %593
    %595 = vrot.lane.b32.xlu0 %v150, 3
    %v596 = vpop.permute.xlu0 %595
    %597 = vrot.lane.b32.xlu0 %v151, 3
    %v598 = vpop.permute.xlu0 %597
    %599 = vrot.lane.b32.xlu0 %v152, 3
    %v600 = vpop.permute.xlu0 %599
    %601 = vrot.lane.b32.xlu0 %v153, 3
    %v602 = vpop.permute.xlu0 %601
    %603 = vrot.lane.b32.xlu0 %v154, 3
    %v604 = vpop.permute.xlu0 %603
    %605 = vrot.lane.b32.xlu0 %v155, 3
    %v606 = vpop.permute.xlu0 %605
    %607 = vrot.lane.b32.xlu0 %v156, 3
    %v608 = vpop.permute.xlu0 %607
    %609 = vrot.lane.b32.xlu0 %v157, 3
    %v610 = vpop.permute.xlu0 %609
    %611 = vrot.lane.b32.xlu0 %v158, 3
    %v612 = vpop.permute.xlu0 %611
    %613 = vrot.lane.b32.xlu0 %v159, 3
    %v614 = vpop.permute.xlu0 %613
    %615 = vrot.lane.b32.xlu0 %v160, 3
    %v616 = vpop.permute.xlu0 %615
    %617 = vrot.lane.b32.xlu0 %v161, 3
    %v618 = vpop.permute.xlu0 %617
    %619 = vrot.lane.b32.xlu0 %v162, 3
    %v620 = vpop.permute.xlu0 %619
    %621 = vrot.lane.b32.xlu0 %v163, 3
    %v622 = vpop.permute.xlu0 %621
    %623 = vrot.lane.b32.xlu0 %v164, 3
    %v624 = vpop.permute.xlu0 %623
    %625 = vrot.lane.b32.xlu0 %v165, 3
    %v626 = vpop.permute.xlu0 %625
    %627 = vrot.lane.b32.xlu0 %v166, 3
    %v628 = vpop.permute.xlu0 %627
    %629 = vrot.lane.b32.xlu0 %v167, 3
    %v630 = vpop.permute.xlu0 %629
    %631 = vrot.lane.b32.xlu0 %v168, 3
    %v632 = vpop.permute.xlu0 %631
    %633 = vrot.lane.b32.xlu0 %v169, 3
    %v634 = vpop.permute.xlu0 %633
    %635 = vrot.lane.b32.xlu0 %v170, 3
    %v636 = vpop.permute.xlu0 %635
    %637 = vrot.lane.b32.xlu0 %v171, 3
    %v638 = vpop.permute.xlu0 %637
    %639 = vrot.lane.b32.xlu0 %v172, 3
    %v640 = vpop.permute.xlu0 %639
    %641 = vrot.lane.b32.xlu0 %v173, 3
    %v642 = vpop.permute.xlu0 %641
    %705 = vrot.lane.b32.xlu0 %v174, 4
    %v706 = vpop.permute.xlu0 %705
    %707 = vrot.lane.b32.xlu0 %v175, 4
    %v708 = vpop.permute.xlu0 %707
    %709 = vrot.lane.b32.xlu0 %v176, 4
    %v710 = vpop.permute.xlu0 %709
    %711 = vrot.lane.b32.xlu0 %v177, 4
    %v712 = vpop.permute.xlu0 %711
    %713 = vrot.lane.b32.xlu0 %v178, 4
    %v714 = vpop.permute.xlu0 %713
    %715 = vrot.lane.b32.xlu0 %v179, 4
    %v716 = vpop.permute.xlu0 %715
    %717 = vrot.lane.b32.xlu0 %v180, 4
    %v718 = vpop.permute.xlu0 %717
    %719 = vrot.lane.b32.xlu0 %v181, 4
    %v720 = vpop.permute.xlu0 %719
    %721 = vrot.lane.b32.xlu0 %v182, 4
    %v722 = vpop.permute.xlu0 %721
    %723 = vrot.lane.b32.xlu0 %v183, 4
    %v724 = vpop.permute.xlu0 %723
    %725 = vrot.lane.b32.xlu0 %v184, 4
    %v726 = vpop.permute.xlu0 %725
    %727 = vrot.lane.b32.xlu0 %v185, 4
    %v728 = vpop.permute.xlu0 %727
    %729 = vrot.lane.b32.xlu0 %v186, 4
    %v730 = vpop.permute.xlu0 %729
    %731 = vrot.lane.b32.xlu0 %v187, 4
    %v732 = vpop.permute.xlu0 %731
    %733 = vrot.lane.b32.xlu0 %v188, 4
    %v734 = vpop.permute.xlu0 %733
    %735 = vrot.lane.b32.xlu0 %v189, 4
    %v736 = vpop.permute.xlu0 %735
    %737 = vrot.lane.b32.xlu0 %v190, 4
    %v738 = vpop.permute.xlu0 %737
    %739 = vrot.lane.b32.xlu0 %v191, 4
    %v740 = vpop.permute.xlu0 %739
    %741 = vrot.lane.b32.xlu0 %v192, 4
    %v742 = vpop.permute.xlu0 %741
    %743 = vrot.lane.b32.xlu0 %v193, 4
    %v744 = vpop.permute.xlu0 %743
    %745 = vrot.lane.b32.xlu0 %v194, 4
    %v746 = vpop.permute.xlu0 %745
    %747 = vrot.lane.b32.xlu0 %v195, 4
    %v748 = vpop.permute.xlu0 %747
    %749 = vrot.lane.b32.xlu0 %v196, 4
    %v750 = vpop.permute.xlu0 %749
    %751 = vrot.lane.b32.xlu0 %v197, 4
    %v752 = vpop.permute.xlu0 %751
    %753 = vrot.lane.b32.xlu0 %v198, 4
    %v754 = vpop.permute.xlu0 %753
    %755 = vrot.lane.b32.xlu0 %v199, 4
    %v756 = vpop.permute.xlu0 %755
    %757 = vrot.lane.b32.xlu0 %v200, 4
    %v758 = vpop.permute.xlu0 %757
    %759 = vrot.lane.b32.xlu0 %v201, 4
    %v760 = vpop.permute.xlu0 %759
    %761 = vrot.lane.b32.xlu0 %v202, 4
    %v762 = vpop.permute.xlu0 %761
    %763 = vrot.lane.b32.xlu0 %v203, 4
    %v764 = vpop.permute.xlu0 %763
    %765 = vrot.lane.b32.xlu0 %v204, 4
    %v766 = vpop.permute.xlu0 %765
    %829 = vrot.lane.b32.xlu0 %v205, 5
    %v830 = vpop.permute.xlu0 %829
    %831 = vrot.lane.b32.xlu0 %v206, 5
    %v832 = vpop.permute.xlu0 %831
    %833 = vrot.lane.b32.xlu0 %v207, 5
    %v834 = vpop.permute.xlu0 %833
    %835 = vrot.lane.b32.xlu0 %v208, 5
    %v836 = vpop.permute.xlu0 %835
    %837 = vrot.lane.b32.xlu0 %v209, 5
    %v838 = vpop.permute.xlu0 %837
    %839 = vrot.lane.b32.xlu0 %v210, 5
    %v840 = vpop.permute.xlu0 %839
    %841 = vrot.lane.b32.xlu0 %v211, 5
    %v842 = vpop.permute.xlu0 %841
    %843 = vrot.lane.b32.xlu0 %v212, 5
    %v844 = vpop.permute.xlu0 %843
    %845 = vrot.lane.b32.xlu0 %v213, 5
    %v846 = vpop.permute.xlu0 %845
    %847 = vrot.lane.b32.xlu0 %v214, 5
    %v848 = vpop.permute.xlu0 %847
    %849 = vrot.lane.b32.xlu0 %v215, 5
    %v850 = vpop.permute.xlu0 %849
    %851 = vrot.lane.b32.xlu0 %v216, 5
    %v852 = vpop.permute.xlu0 %851
    %853 = vrot.lane.b32.xlu0 %v217, 5
    %v854 = vpop.permute.xlu0 %853
    %855 = vrot.lane.b32.xlu0 %v218, 5
    %v856 = vpop.permute.xlu0 %855
    %857 = vrot.lane.b32.xlu0 %v219, 5
    %v858 = vpop.permute.xlu0 %857
    %859 = vrot.lane.b32.xlu0 %v220, 5
    %v860 = vpop.permute.xlu0 %859
    %861 = vrot.lane.b32.xlu0 %v221, 5
    %v862 = vpop.permute.xlu0 %861
    %863 = vrot.lane.b32.xlu0 %v222, 5
    %v864 = vpop.permute.xlu0 %863
    %865 = vrot.lane.b32.xlu0 %v223, 5
    %v866 = vpop.permute.xlu0 %865
    %867 = vrot.lane.b32.xlu0 %v224, 5
    %v868 = vpop.permute.xlu0 %867
    %869 = vrot.lane.b32.xlu0 %v225, 5
    %v870 = vpop.permute.xlu0 %869
    %871 = vrot.lane.b32.xlu0 %v226, 5
    %v872 = vpop.permute.xlu0 %871
    %873 = vrot.lane.b32.xlu0 %v227, 5
    %v874 = vpop.permute.xlu0 %873
    %875 = vrot.lane.b32.xlu0 %v228, 5
    %v876 = vpop.permute.xlu0 %875
    %877 = vrot.lane.b32.xlu0 %v229, 5
    %v878 = vpop.permute.xlu0 %877
    %879 = vrot.lane.b32.xlu0 %v230, 5
    %v880 = vpop.permute.xlu0 %879
    %881 = vrot.lane.b32.xlu0 %v231, 5
    %v882 = vpop.permute.xlu0 %881
    %883 = vrot.lane.b32.xlu0 %v232, 5
    %v884 = vpop.permute.xlu0 %883
    %885 = vrot.lane.b32.xlu0 %v233, 5
    %v886 = vpop.permute.xlu0 %885
    %887 = vrot.lane.b32.xlu0 %v234, 5
    %v888 = vpop.permute.xlu0 %887
    %889 = vrot.lane.b32.xlu0 %v235, 5
    %v890 = vpop.permute.xlu0 %889
    %953 = vrot.lane.b32.xlu0 %v236, 6
    %v954 = vpop.permute.xlu0 %953
    %955 = vrot.lane.b32.xlu0 %v237, 6
    %v956 = vpop.permute.xlu0 %955
    %957 = vrot.lane.b32.xlu0 %v238, 6
    %v958 = vpop.permute.xlu0 %957
    %959 = vrot.lane.b32.xlu0 %v239, 6
    %v960 = vpop.permute.xlu0 %959
    %961 = vrot.lane.b32.xlu0 %v240, 6
    %v962 = vpop.permute.xlu0 %961
    %963 = vrot.lane.b32.xlu0 %v241, 6
    %v964 = vpop.permute.xlu0 %963
    %965 = vrot.lane.b32.xlu0 %v242, 6
    %v966 = vpop.permute.xlu0 %965
    %967 = vrot.lane.b32.xlu0 %v243, 6
    %v968 = vpop.permute.xlu0 %967
    %969 = vrot.lane.b32.xlu0 %v244, 6
    %v970 = vpop.permute.xlu0 %969
    %971 = vrot.lane.b32.xlu0 %v245, 6
    %v972 = vpop.permute.xlu0 %971
    %973 = vrot.lane.b32.xlu0 %v246, 6
    %v974 = vpop.permute.xlu0 %973
    %975 = vrot.lane.b32.xlu0 %v247, 6
    %v976 = vpop.permute.xlu0 %975
    %977 = vrot.lane.b32.xlu0 %v248, 6
    %v978 = vpop.permute.xlu0 %977
    %979 = vrot.lane.b32.xlu0 %v249, 6
    %v980 = vpop.permute.xlu0 %979
    %981 = vrot.lane.b32.xlu0 %v250, 6
    %v982 = vpop.permute.xlu0 %981
    %983 = vrot.lane.b32.xlu0 %v251, 6
    %v984 = vpop.permute.xlu0 %983
    %985 = vrot.lane.b32.xlu0 %v252, 6
    %v986 = vpop.permute.xlu0 %985
    %987 = vrot.lane.b32.xlu0 %v253, 6
    %v988 = vpop.permute.xlu0 %987
    %989 = vrot.lane.b32.xlu0 %v254, 6
    %v990 = vpop.permute.xlu0 %989
    %991 = vrot.lane.b32.xlu0 %v255, 6
    %v992 = vpop.permute.xlu0 %991
    %993 = vrot.lane.b32.xlu0 %v256, 6
    %v994 = vpop.permute.xlu0 %993
    %995 = vrot.lane.b32.xlu0 %v257, 6
    %v996 = vpop.permute.xlu0 %995
    %997 = vrot.lane.b32.xlu0 %v258, 6
    %v998 = vpop.permute.xlu0 %997
    %999 = vrot.lane.b32.xlu0 %v259, 6
    %v1000 = vpop.permute.xlu0 %999
    %1001 = vrot.lane.b32.xlu0 %v260, 6
    %v1002 = vpop.permute.xlu0 %1001
    %1003 = vrot.lane.b32.xlu0 %v261, 6
    %v1004 = vpop.permute.xlu0 %1003
    %1005 = vrot.lane.b32.xlu0 %v262, 6
    %v1006 = vpop.permute.xlu0 %1005
    %1007 = vrot.lane.b32.xlu0 %v263, 6
    %v1008 = vpop.permute.xlu0 %1007
    %1009 = vrot.lane.b32.xlu0 %v264, 6
    %v1010 = vpop.permute.xlu0 %1009
    %1011 = vrot.lane.b32.xlu0 %v265, 6
    %v1012 = vpop.permute.xlu0 %1011
    %1013 = vrot.lane.b32.xlu0 %v266, 6
    %v1014 = vpop.permute.xlu0 %1013
    %1077 = vrot.lane.b32.xlu0 %v267, 7
    %v1078 = vpop.permute.xlu0 %1077
    %1079 = vrot.lane.b32.xlu0 %v268, 7
    %v1080 = vpop.permute.xlu0 %1079
    %1081 = vrot.lane.b32.xlu0 %v269, 7
    %v1082 = vpop.permute.xlu0 %1081
    %1083 = vrot.lane.b32.xlu0 %v270, 7
    %v1084 = vpop.permute.xlu0 %1083
    %1085 = vrot.lane.b32.xlu0 %v271, 7
    %v1086 = vpop.permute.xlu0 %1085
    %1087 = vrot.lane.b32.xlu0 %v272, 7
    %v1088 = vpop.permute.xlu0 %1087
    %1089 = vrot.lane.b32.xlu0 %v273, 7
    %v1090 = vpop.permute.xlu0 %1089
    %1091 = vrot.lane.b32.xlu0 %v274, 7
    %v1092 = vpop.permute.xlu0 %1091
    %1093 = vrot.lane.b32.xlu0 %v275, 7
    %v1094 = vpop.permute.xlu0 %1093
    %1095 = vrot.lane.b32.xlu0 %v276, 7
    %v1096 = vpop.permute.xlu0 %1095
    %1097 = vrot.lane.b32.xlu0 %v277, 7
    %v1098 = vpop.permute.xlu0 %1097
    %1099 = vrot.lane.b32.xlu0 %v278, 7
    %v1100 = vpop.permute.xlu0 %1099
    %1101 = vrot.lane.b32.xlu0 %v279, 7
    %v1102 = vpop.permute.xlu0 %1101
    %1103 = vrot.lane.b32.xlu0 %v280, 7
    %v1104 = vpop.permute.xlu0 %1103
    %1105 = vrot.lane.b32.xlu0 %v281, 7
    %v1106 = vpop.permute.xlu0 %1105
    %1107 = vrot.lane.b32.xlu0 %v282, 7
    %v1108 = vpop.permute.xlu0 %1107
    %1109 = vrot.lane.b32.xlu0 %v283, 7
    %v1110 = vpop.permute.xlu0 %1109
    %1111 = vrot.lane.b32.xlu0 %v284, 7
    %v1112 = vpop.permute.xlu0 %1111
    %1113 = vrot.lane.b32.xlu0 %v285, 7
    %v1114 = vpop.permute.xlu0 %1113
    %1115 = vrot.lane.b32.xlu0 %v286, 7
    %v1116 = vpop.permute.xlu0 %1115
    %1117 = vrot.lane.b32.xlu0 %v287, 7
    %v1118 = vpop.permute.xlu0 %1117
    %1119 = vrot.lane.b32.xlu0 %v288, 7
    %v1120 = vpop.permute.xlu0 %1119
    %1121 = vrot.lane.b32.xlu0 %v289, 7
    %v1122 = vpop.permute.xlu0 %1121
    %1123 = vrot.lane.b32.xlu0 %v290, 7
    %v1124 = vpop.permute.xlu0 %1123
    %1125 = vrot.lane.b32.xlu0 %v291, 7
    %v1126 = vpop.permute.xlu0 %1125
    %1127 = vrot.lane.b32.xlu0 %v292, 7
    %v1128 = vpop.permute.xlu0 %1127
    %1129 = vrot.lane.b32.xlu0 %v293, 7
    %v1130 = vpop.permute.xlu0 %1129
    %1131 = vrot.lane.b32.xlu0 %v294, 7
    %v1132 = vpop.permute.xlu0 %1131
    %1133 = vrot.lane.b32.xlu0 %v295, 7
    %v1134 = vpop.permute.xlu0 %1133
    %1135 = vrot.lane.b32.xlu0 %v296, 7
    %v1136 = vpop.permute.xlu0 %1135
    %1137 = vrot.lane.b32.xlu0 %v297, 7
    %v1138 = vpop.permute.xlu0 %1137
    %1201 = vrot.lane.b32.xlu0 %v53, 8
    %v1202 = vpop.permute.xlu0 %1201
    %1203 = vrot.lane.b32.xlu0 %v54, 8
    %v1204 = vpop.permute.xlu0 %1203
    %1205 = vrot.lane.b32.xlu0 %v55, 8
    %v1206 = vpop.permute.xlu0 %1205
    %1207 = vrot.lane.b32.xlu0 %v56, 8
    %v1208 = vpop.permute.xlu0 %1207
    %1209 = vrot.lane.b32.xlu0 %v57, 8
    %v1210 = vpop.permute.xlu0 %1209
    %1211 = vrot.lane.b32.xlu0 %v58, 8
    %v1212 = vpop.permute.xlu0 %1211
    %1213 = vrot.lane.b32.xlu0 %v59, 8
    %v1214 = vpop.permute.xlu0 %1213
    %1215 = vrot.lane.b32.xlu0 %v60, 8
    %v1216 = vpop.permute.xlu0 %1215
    %1217 = vrot.lane.b32.xlu0 %v61, 8
    %v1218 = vpop.permute.xlu0 %1217
    %1219 = vrot.lane.b32.xlu0 %v62, 8
    %v1220 = vpop.permute.xlu0 %1219
    %1221 = vrot.lane.b32.xlu0 %v63, 8
    %v1222 = vpop.permute.xlu0 %1221
    %1223 = vrot.lane.b32.xlu0 %v64, 8
    %v1224 = vpop.permute.xlu0 %1223
    %1225 = vrot.lane.b32.xlu0 %v65, 8
    %v1226 = vpop.permute.xlu0 %1225
    %1227 = vrot.lane.b32.xlu0 %v66, 8
    %v1228 = vpop.permute.xlu0 %1227
    %1229 = vrot.lane.b32.xlu0 %v67, 8
    %v1230 = vpop.permute.xlu0 %1229
    %1231 = vrot.lane.b32.xlu0 %v68, 8
    %v1232 = vpop.permute.xlu0 %1231
    %1233 = vrot.lane.b32.xlu0 %v69, 8
    %v1234 = vpop.permute.xlu0 %1233
    %1235 = vrot.lane.b32.xlu0 %v70, 8
    %v1236 = vpop.permute.xlu0 %1235
    %1237 = vrot.lane.b32.xlu0 %v71, 8
    %v1238 = vpop.permute.xlu0 %1237
    %1239 = vrot.lane.b32.xlu0 %v72, 8
    %v1240 = vpop.permute.xlu0 %1239
    %1241 = vrot.lane.b32.xlu0 %v73, 8
    %v1242 = vpop.permute.xlu0 %1241
    %1243 = vrot.lane.b32.xlu0 %v74, 8
    %v1244 = vpop.permute.xlu0 %1243
    %1245 = vrot.lane.b32.xlu0 %v75, 8
    %v1246 = vpop.permute.xlu0 %1245
    %1247 = vrot.lane.b32.xlu0 %v76, 8
    %v1248 = vpop.permute.xlu0 %1247
    %1249 = vrot.lane.b32.xlu0 %v77, 8
    %v1250 = vpop.permute.xlu0 %1249
    %1251 = vrot.lane.b32.xlu0 %v78, 8
    %v1252 = vpop.permute.xlu0 %1251
    %1253 = vrot.lane.b32.xlu0 %v79, 8
    %v1254 = vpop.permute.xlu0 %1253
    %1255 = vrot.lane.b32.xlu0 %v298, 8
    %v1256 = vpop.permute.xlu0 %1255
    %1257 = vrot.lane.b32.xlu0 %v299, 8
    %v1258 = vpop.permute.xlu0 %1257
    %1259 = vrot.lane.b32.xlu0 %v300, 8
    %v1260 = vpop.permute.xlu0 %1259
    %1261 = vrot.lane.b32.xlu0 %v301, 8
    %v1262 = vpop.permute.xlu0 %1261
    %vm1294 = vcmask 7168
    %v1295 = vsel %vm1294, %v50, %v334
    %v1296 = vsel %vm1294, %v51, %v336
    %v1297 = vsel %vm1294, %v52, %v338
    %v1298 = vsel %vm1294, %v53, %v340
    %v1299 = vsel %vm1294, %v54, %v342
    %v1300 = vsel %vm1294, %v55, %v344
    %v1301 = vsel %vm1294, %v56, %v346
    %v1302 = vsel %vm1294, %v57, %v348
    %v1303 = vsel %vm1294, %v58, %v350
    %v1304 = vsel %vm1294, %v59, %v352
    %v1305 = vsel %vm1294, %v60, %v354
    %v1306 = vsel %vm1294, %v61, %v356
    %v1307 = vsel %vm1294, %v62, %v358
    %v1308 = vsel %vm1294, %v63, %v360
    %v1309 = vsel %vm1294, %v64, %v362
    %v1310 = vsel %vm1294, %v65, %v364
    %v1311 = vsel %vm1294, %v66, %v366
    %v1312 = vsel %vm1294, %v67, %v368
    %v1313 = vsel %vm1294, %v68, %v370
    %v1314 = vsel %vm1294, %v69, %v372
    %v1315 = vsel %vm1294, %v70, %v374
    %v1316 = vsel %vm1294, %v71, %v376
    %v1317 = vsel %vm1294, %v72, %v378
    %v1318 = vsel %vm1294, %v73, %v380
    %v1319 = vsel %vm1294, %v74, %v382
    %v1320 = vsel %vm1294, %v75, %v384
    %v1321 = vsel %vm1294, %v76, %v386
    %v1322 = vsel %vm1294, %v77, %v388
    %v1323 = vsel %vm1294, %v78, %v390
    %v1324 = vsel %vm1294, %v79, %v392
    %v1325 = vsel %vm1294, %v80, %v394
    %vm1326 = vcmask 15360
    %v1327 = vsel %vm1326, %v1295, %v458
    %v1328 = vsel %vm1326, %v1296, %v460
    %v1329 = vsel %vm1326, %v1297, %v462
    %v1330 = vsel %vm1326, %v1298, %v464
    %v1331 = vsel %vm1326, %v1299, %v466
    %v1332 = vsel %vm1326, %v1300, %v468
    %v1333 = vsel %vm1326, %v1301, %v470
    %v1334 = vsel %vm1326, %v1302, %v472
    %v1335 = vsel %vm1326, %v1303, %v474
    %v1336 = vsel %vm1326, %v1304, %v476
    %v1337 = vsel %vm1326, %v1305, %v478
    %v1338 = vsel %vm1326, %v1306, %v480
    %v1339 = vsel %vm1326, %v1307, %v482
    %v1340 = vsel %vm1326, %v1308, %v484
    %v1341 = vsel %vm1326, %v1309, %v486
    %v1342 = vsel %vm1326, %v1310, %v488
    %v1343 = vsel %vm1326, %v1311, %v490
    %v1344 = vsel %vm1326, %v1312, %v492
    %v1345 = vsel %vm1326, %v1313, %v494
    %v1346 = vsel %vm1326, %v1314, %v496
    %v1347 = vsel %vm1326, %v1315, %v498
    %v1348 = vsel %vm1326, %v1316, %v500
    %v1349 = vsel %vm1326, %v1317, %v502
    %v1350 = vsel %vm1326, %v1318, %v504
    %v1351 = vsel %vm1326, %v1319, %v506
    %v1352 = vsel %vm1326, %v1320, %v508
    %v1353 = vsel %vm1326, %v1321, %v510
    %v1354 = vsel %vm1326, %v1322, %v512
    %v1355 = vsel %vm1326, %v1323, %v514
    %v1356 = vsel %vm1326, %v1324, %v516
    %v1357 = vsel %vm1326, %v1325, %v518
    %vm1358 = vcmask 23552
    %v1359 = vsel %vm1358, %v1327, %v582
    %v1360 = vsel %vm1358, %v1328, %v584
    %v1361 = vsel %vm1358, %v1329, %v586
    %v1362 = vsel %vm1358, %v1330, %v588
    %v1363 = vsel %vm1358, %v1331, %v590
    %v1364 = vsel %vm1358, %v1332, %v592
    %v1365 = vsel %vm1358, %v1333, %v594
    %v1366 = vsel %vm1358, %v1334, %v596
    %v1367 = vsel %vm1358, %v1335, %v598
    %v1368 = vsel %vm1358, %v1336, %v600
    %v1369 = vsel %vm1358, %v1337, %v602
    %v1370 = vsel %vm1358, %v1338, %v604
    %v1371 = vsel %vm1358, %v1339, %v606
    %v1372 = vsel %vm1358, %v1340, %v608
    %v1373 = vsel %vm1358, %v1341, %v610
    %v1374 = vsel %vm1358, %v1342, %v612
    %v1375 = vsel %vm1358, %v1343, %v614
    %v1376 = vsel %vm1358, %v1344, %v616
    %v1377 = vsel %vm1358, %v1345, %v618
    %v1378 = vsel %vm1358, %v1346, %v620
    %v1379 = vsel %vm1358, %v1347, %v622
    %v1380 = vsel %vm1358, %v1348, %v624
    %v1381 = vsel %vm1358, %v1349, %v626
    %v1382 = vsel %vm1358, %v1350, %v628
    %v1383 = vsel %vm1358, %v1351, %v630
    %v1384 = vsel %vm1358, %v1352, %v632
    %v1385 = vsel %vm1358, %v1353, %v634
    %v1386 = vsel %vm1358, %v1354, %v636
    %v1387 = vsel %vm1358, %v1355, %v638
    %v1388 = vsel %vm1358, %v1356, %v640
    %v1389 = vsel %vm1358, %v1357, %v642
    %vm1390 = vcmask 31744
    %v1391 = vsel %vm1390, %v1359, %v706
    %v1392 = vsel %vm1390, %v1360, %v708
    %v1393 = vsel %vm1390, %v1361, %v710
    %v1394 = vsel %vm1390, %v1362, %v712
    %v1395 = vsel %vm1390, %v1363, %v714
    %v1396 = vsel %vm1390, %v1364, %v716
    %v1397 = vsel %vm1390, %v1365, %v718
    %v1398 = vsel %vm1390, %v1366, %v720
    %v1399 = vsel %vm1390, %v1367, %v722
    %v1400 = vsel %vm1390, %v1368, %v724
    %v1401 = vsel %vm1390, %v1369, %v726
    %v1402 = vsel %vm1390, %v1370, %v728
    %v1403 = vsel %vm1390, %v1371, %v730
    %v1404 = vsel %vm1390, %v1372, %v732
    %v1405 = vsel %vm1390, %v1373, %v734
    %v1406 = vsel %vm1390, %v1374, %v736
    %v1407 = vsel %vm1390, %v1375, %v738
    %v1408 = vsel %vm1390, %v1376, %v740
    %v1409 = vsel %vm1390, %v1377, %v742
    %v1410 = vsel %vm1390, %v1378, %v744
    %v1411 = vsel %vm1390, %v1379, %v746
    %v1412 = vsel %vm1390, %v1380, %v748
    %v1413 = vsel %vm1390, %v1381, %v750
    %v1414 = vsel %vm1390, %v1382, %v752
    %v1415 = vsel %vm1390, %v1383, %v754
    %v1416 = vsel %vm1390, %v1384, %v756
    %v1417 = vsel %vm1390, %v1385, %v758
    %v1418 = vsel %vm1390, %v1386, %v760
    %v1419 = vsel %vm1390, %v1387, %v762
    %v1420 = vsel %vm1390, %v1388, %v764
    %v1421 = vsel %vm1390, %v1389, %v766
    %vm1422 = vcmask 39936
    %v1423 = vsel %vm1422, %v1391, %v830
    %v1424 = vsel %vm1422, %v1392, %v832
    %v1425 = vsel %vm1422, %v1393, %v834
    %v1426 = vsel %vm1422, %v1394, %v836
    %v1427 = vsel %vm1422, %v1395, %v838
    %v1428 = vsel %vm1422, %v1396, %v840
    %v1429 = vsel %vm1422, %v1397, %v842
    %v1430 = vsel %vm1422, %v1398, %v844
    %v1431 = vsel %vm1422, %v1399, %v846
    %v1432 = vsel %vm1422, %v1400, %v848
    %v1433 = vsel %vm1422, %v1401, %v850
    %v1434 = vsel %vm1422, %v1402, %v852
    %v1435 = vsel %vm1422, %v1403, %v854
    %v1436 = vsel %vm1422, %v1404, %v856
    %v1437 = vsel %vm1422, %v1405, %v858
    %v1438 = vsel %vm1422, %v1406, %v860
    %v1439 = vsel %vm1422, %v1407, %v862
    %v1440 = vsel %vm1422, %v1408, %v864
    %v1441 = vsel %vm1422, %v1409, %v866
    %v1442 = vsel %vm1422, %v1410, %v868
    %v1443 = vsel %vm1422, %v1411, %v870
    %v1444 = vsel %vm1422, %v1412, %v872
    %v1445 = vsel %vm1422, %v1413, %v874
    %v1446 = vsel %vm1422, %v1414, %v876
    %v1447 = vsel %vm1422, %v1415, %v878
    %v1448 = vsel %vm1422, %v1416, %v880
    %v1449 = vsel %vm1422, %v1417, %v882
    %v1450 = vsel %vm1422, %v1418, %v884
    %v1451 = vsel %vm1422, %v1419, %v886
    %v1452 = vsel %vm1422, %v1420, %v888
    %v1453 = vsel %vm1422, %v1421, %v890
    %vm1454 = vcmask 48128
    %v1455 = vsel %vm1454, %v1423, %v954
    %v1456 = vsel %vm1454, %v1424, %v956
    %v1457 = vsel %vm1454, %v1425, %v958
    %v1458 = vsel %vm1454, %v1426, %v960
    %v1459 = vsel %vm1454, %v1427, %v962
    %v1460 = vsel %vm1454, %v1428, %v964
    %v1461 = vsel %vm1454, %v1429, %v966
    %v1462 = vsel %vm1454, %v1430, %v968
    %v1463 = vsel %vm1454, %v1431, %v970
    %v1464 = vsel %vm1454, %v1432, %v972
    %v1465 = vsel %vm1454, %v1433, %v974
    %v1466 = vsel %vm1454, %v1434, %v976
    %v1467 = vsel %vm1454, %v1435, %v978
    %v1468 = vsel %vm1454, %v1436, %v980
    %v1469 = vsel %vm1454, %v1437, %v982
    %v1470 = vsel %vm1454, %v1438, %v984
    %v1471 = vsel %vm1454, %v1439, %v986
    %v1472 = vsel %vm1454, %v1440, %v988
    %v1473 = vsel %vm1454, %v1441, %v990
    %v1474 = vsel %vm1454, %v1442, %v992
    %v1475 = vsel %vm1454, %v1443, %v994
    %v1476 = vsel %vm1454, %v1444, %v996
    %v1477 = vsel %vm1454, %v1445, %v998
    %v1478 = vsel %vm1454, %v1446, %v1000
    %v1479 = vsel %vm1454, %v1447, %v1002
    %v1480 = vsel %vm1454, %v1448, %v1004
    %v1481 = vsel %vm1454, %v1449, %v1006
    %v1482 = vsel %vm1454, %v1450, %v1008
    %v1483 = vsel %vm1454, %v1451, %v1010
    %v1484 = vsel %vm1454, %v1452, %v1012
    %v1485 = vsel %vm1454, %v1453, %v1014
    %vm1486 = vcmask 56320
    %v1487 = vsel %vm1486, %v1455, %v1078
    %v1488 = vsel %vm1486, %v1456, %v1080
    %v1489 = vsel %vm1486, %v1457, %v1082
    %v1490 = vsel %vm1486, %v1458, %v1084
    %v1491 = vsel %vm1486, %v1459, %v1086
    %v1492 = vsel %vm1486, %v1460, %v1088
    %v1493 = vsel %vm1486, %v1461, %v1090
    %v1494 = vsel %vm1486, %v1462, %v1092
    %v1495 = vsel %vm1486, %v1463, %v1094
    %v1496 = vsel %vm1486, %v1464, %v1096
    %v1497 = vsel %vm1486, %v1465, %v1098
    %v1498 = vsel %vm1486, %v1466, %v1100
    %v1499 = vsel %vm1486, %v1467, %v1102
    %v1500 = vsel %vm1486, %v1468, %v1104
    %v1501 = vsel %vm1486, %v1469, %v1106
    %v1502 = vsel %vm1486, %v1470, %v1108
    %v1503 = vsel %vm1486, %v1471, %v1110
    %v1504 = vsel %vm1486, %v1472, %v1112
    %v1505 = vsel %vm1486, %v1473, %v1114
    %v1506 = vsel %vm1486, %v1474, %v1116
    %v1507 = vsel %vm1486, %v1475, %v1118
    %v1508 = vsel %vm1486, %v1476, %v1120
    %v1509 = vsel %vm1486, %v1477, %v1122
    %v1510 = vsel %vm1486, %v1478, %v1124
    %v1511 = vsel %vm1486, %v1479, %v1126
    %v1512 = vsel %vm1486, %v1480, %v1128
    %v1513 = vsel %vm1486, %v1481, %v1130
    %v1514 = vsel %vm1486, %v1482, %v1132
    %v1515 = vsel %vm1486, %v1483, %v1134
    %v1516 = vsel %vm1486, %v1484, %v1136
    %v1517 = vsel %vm1486, %v1485, %v1138
    %vm1518 = vcmask 64512
    %v1519 = vsel %vm1518, %v1487, %v1202
    %v1520 = vsel %vm1518, %v1488, %v1204
    %v1521 = vsel %vm1518, %v1489, %v1206
    %v1522 = vsel %vm1518, %v1490, %v1208
    %v1523 = vsel %vm1518, %v1491, %v1210
    %v1524 = vsel %vm1518, %v1492, %v1212
    %v1525 = vsel %vm1518, %v1493, %v1214
    %v1526 = vsel %vm1518, %v1494, %v1216
    %v1527 = vsel %vm1518, %v1495, %v1218
    %v1528 = vsel %vm1518, %v1496, %v1220
    %v1529 = vsel %vm1518, %v1497, %v1222
    %v1530 = vsel %vm1518, %v1498, %v1224
    %v1531 = vsel %vm1518, %v1499, %v1226
    %v1532 = vsel %vm1518, %v1500, %v1228
    %v1533 = vsel %vm1518, %v1501, %v1230
    %v1534 = vsel %vm1518, %v1502, %v1232
    %v1535 = vsel %vm1518, %v1503, %v1234
    %v1536 = vsel %vm1518, %v1504, %v1236
    %v1537 = vsel %vm1518, %v1505, %v1238
    %v1538 = vsel %vm1518, %v1506, %v1240
    %v1539 = vsel %vm1518, %v1507, %v1242
    %v1540 = vsel %vm1518, %v1508, %v1244
    %v1541 = vsel %vm1518, %v1509, %v1246
    %v1542 = vsel %vm1518, %v1510, %v1248
    %v1543 = vsel %vm1518, %v1511, %v1250
    %v1544 = vsel %vm1518, %v1512, %v1252
    %v1545 = vsel %vm1518, %v1513, %v1254
    %v1546 = vsel %vm1518, %v1514, %v1256
    %v1547 = vsel %vm1518, %v1515, %v1258
    %v1548 = vsel %vm1518, %v1516, %v1260
    %v1549 = vsel %vm1518, %v1517, %v1262
    %v1550 = vld [vmem:[%s1] sm:$0xff]
    %v1551 = vld [vmem:[%s1 + $0x8] sm:$0x1]
    %v1552 = vld [vmem:[%s1 + $0x10] sm:$0x1]
    %v1553 = vlaneseq
    %v1554 = vshrl.u32 %v1553, 7
    %v1555 = vsub.s32 0, %v1554
    %v1556 = vrot.slane %v1552, %v1555
    %vm1557 = vcmask 72704
    %v1559 = vsel %vm1557, %v1519, 0
    %v1562 = vsel %vm1557, %v1520, 0
    %v1565 = vsel %vm1557, %v1521, 0
    %v1568 = vsel %vm1557, %v1522, 0
    %v1571 = vsel %vm1557, %v1523, 0
    %v1574 = vsel %vm1557, %v1524, 0
    %v1577 = vsel %vm1557, %v1525, 0
    %v1580 = vsel %vm1557, %v1526, 0
    %v1583 = vsel %vm1557, %v1527, 0
    %v1586 = vsel %vm1557, %v1528, 0
    %v1589 = vsel %vm1557, %v1529, 0
    %v1592 = vsel %vm1557, %v1530, 0
    %v1595 = vsel %vm1557, %v1531, 0
    %v1598 = vsel %vm1557, %v1532, 0
    %v1601 = vsel %vm1557, %v1533, 0
    %v1604 = vsel %vm1557, %v1534, 0
    %v1607 = vsel %vm1557, %v1535, 0
    %v1610 = vsel %vm1557, %v1536, 0
    %v1613 = vsel %vm1557, %v1537, 0
    %v1616 = vsel %vm1557, %v1538, 0
    %v1619 = vsel %vm1557, %v1539, 0
    %v1622 = vsel %vm1557, %v1540, 0
    %v1625 = vsel %vm1557, %v1541, 0
    %v1628 = vsel %vm1557, %v1542, 0
    %v1631 = vsel %vm1557, %v1543, 0
    %v1634 = vsel %vm1557, %v1544, 0
    %v1637 = vsel %vm1557, %v1545, 0
    %v1640 = vsel %vm1557, %v1546, 0
    %v1643 = vsel %vm1557, %v1547, 0
    %v1646 = vsel %vm1557, %v1548, 0
    %v1649 = vsel %vm1557, %v1549, 0
    %vm1651 = vcmask 1040384
    %v1653 = vsel %vm1651, %v1551, 0
    %1655 = vmatprep.subr.mxu0 0.0
    %1656 = vmatpush1.msra.mxu0 %v1550
    %1657 = vmatprep.subr.mxu0 0.0
    %1658 = vmatpush1.msra.mxu0 %v1653
    %1659 = vmatprep.subr.mxu0 0.0
    %1660 = vmatpush1.msra.mxu0 0.0
    %1661 = vmatprep.subr.mxu0 0.0
    %1662 = vmatpush1.msra.mxu0 0.0
    %1663 = vmatprep.subr.mxu0 0.0
    %1664 = vmatpush1.msra.mxu0 0.0
    %1665 = vmatprep.subr.mxu0 0.0
    %1666 = vmatpush1.msra.mxu0 0.0
    %1667 = vmatprep.subr.mxu0 0.0
    %1668 = vmatpush1.msra.mxu0 0.0
    %1669 = vmatprep.subr.mxu0 0.0
    %1670 = vmatpush1.msra.mxu0 0.0
    %1671 = vmatprep.subr.mxu0 0.0
    %1672 = vmatpush1.msra.mxu0 0.0
    %1673 = vmatprep.subr.mxu0 0.0
    %1674 = vmatpush1.msra.mxu0 0.0
    %1675 = vmatprep.subr.mxu0 0.0
    %1676 = vmatpush1.msra.mxu0 0.0
    %1677 = vmatprep.subr.mxu0 0.0
    %1678 = vmatpush1.msra.mxu0 0.0
    %1679 = vmatprep.subr.mxu0 0.0
    %1680 = vmatpush1.msra.mxu0 0.0
    %1681 = vmatprep.subr.mxu0 0.0
    %1682 = vmatpush1.msra.mxu0 0.0
    %1683 = vmatprep.subr.mxu0 0.0
    %1684 = vmatpush1.msra.mxu0 0.0
    %1685 = vmatprep.subr.mxu0 0.0
    %1686 = vmatpush1.msra.mxu0 0.0
    %1687 = vmatprep.subr.mxu0 0.0
    %1688 = vmatpush1.msra.mxu0 0.0
    %1689 = vmatprep.subr.mxu0 0.0
    %1690 = vmatpush1.msra.mxu0 0.0
    %1691 = vmatprep.subr.mxu0 0.0
    %1692 = vmatpush1.msra.mxu0 0.0
    %1693 = vmatprep.subr.mxu0 0.0
    %1694 = vmatpush1.msra.mxu0 0.0
    %1695 = vmatprep.subr.mxu0 0.0
    %1696 = vmatpush1.msra.mxu0 0.0
    %1697 = vmatprep.subr.mxu0 0.0
    %1698 = vmatpush1.msra.mxu0 0.0
    %1699 = vmatprep.subr.mxu0 0.0
    %1700 = vmatpush1.msra.mxu0 0.0
    %1701 = vmatprep.subr.mxu0 0.0
    %1702 = vmatpush1.msra.mxu0 0.0
    %1703 = vmatprep.subr.mxu0 0.0
    %1704 = vmatpush1.msra.mxu0 0.0
    %1705 = vmatprep.subr.mxu0 0.0
    %1706 = vmatpush1.msra.mxu0 0.0
    %1707 = vmatprep.subr.mxu0 0.0
    %1708 = vmatpush1.msra.mxu0 0.0
    %1709 = vmatprep.subr.mxu0 0.0
    %1710 = vmatpush1.msra.mxu0 0.0
    %1711 = vmatprep.subr.mxu0 0.0
    %1712 = vmatpush1.msra.mxu0 0.0
    %1713 = vmatprep.subr.mxu0 0.0
    %1714 = vmatpush1.msra.mxu0 0.0
    %1715 = vmatprep.subr.mxu0 0.0
    %1716 = vmatpush1.msra.mxu0 0.0
    %1717 = vmatprep.subr.mxu0 0.0
    %1718 = vmatpush1.msra.mxu0 0.0
    %1719 = vmatprep.mubr.f32.mxu0 0.0
    %1720 = vmatmul.mubr.f32.gmra.mrb[0].mxu0 %v1559
    %v1721 = vpop.f32.mrb[0].mxu0
    %v1722 = vadd.f32 %v1556, %v1721
    %v1723 = vpop.f32.mrb[0].mxu0
    %1724 = vmatprep.mubr.f32.mxu0 0.0
    %1725 = vmatmul.mubr.f32.gmra.mrb[0].mxu0 %v1562
    %v1726 = vpop.f32.mrb[0].mxu0
    %v1727 = vadd.f32 %v1556, %v1726
    %v1728 = vpop.f32.mrb[0].mxu0
    %1729 = vmatprep.mubr.f32.mxu0 0.0
    %1730 = vmatmul.mubr.f32.gmra.mrb[0].mxu0 %v1565
    %v1731 = vpop.f32.mrb[0].mxu0
    %v1732 = vadd.f32 %v1556, %v1731
    %v1733 = vpop.f32.mrb[0].mxu0
    %1734 = vmatprep.mubr.f32.mxu0 0.0
    %1735 = vmatmul.mubr.f32.gmra.mrb[0].mxu0 %v1568
    %v1736 = vpop.f32.mrb[0].mxu0
    %v1737 = vadd.f32 %v1556, %v1736
    %v1738 = vpop.f32.mrb[0].mxu0
    %1739 = vmatprep.mubr.f32.mxu0 0.0
    %1740 = vmatmul.mubr.f32.gmra.mrb[0].mxu0 %v1571
    %v1741 = vpop.f32.mrb[0].mxu0
    %v1742 = vadd.f32 %v1556, %v1741
    %v1743 = vpop.f32.mrb[0].mxu0
    %1744 = vmatprep.mubr.f32.mxu0 0.0
    %1745 = vmatmul.mubr.f32.gmra.mrb[0].mxu0 %v1574
    %v1746 = vpop.f32.mrb[0].mxu0
    %v1747 = vadd.f32 %v1556, %v1746
    %v1748 = vpop.f32.mrb[0].mxu0
    %1749 = vmatprep.mubr.f32.mxu0 0.0
    %1750 = vmatmul.mubr.f32.gmra.mrb[0].mxu0 %v1577
    %v1751 = vpop.f32.mrb[0].mxu0
    %v1752 = vadd.f32 %v1556, %v1751
    %v1753 = vpop.f32.mrb[0].mxu0
    %1754 = vmatprep.mubr.f32.mxu0 0.0
    %1755 = vmatmul.mubr.f32.gmra.mrb[0].mxu0 %v1580
    %v1756 = vpop.f32.mrb[0].mxu0
    %v1757 = vadd.f32 %v1556, %v1756
    %v1758 = vpop.f32.mrb[0].mxu0
    %1759 = vmatprep.mubr.f32.mxu0 0.0
    %1760 = vmatmul.mubr.f32.gmra.mrb[0].mxu0 %v1583
    %v1761 = vpop.f32.mrb[0].mxu0
    %v1762 = vadd.f32 %v1556, %v1761
    %v1763 = vpop.f32.mrb[0].mxu0
    %1764 = vmatprep.mubr.f32.mxu0 0.0
    %1765 = vmatmul.mubr.f32.gmra.mrb[0].mxu0 %v1586
    %v1766 = vpop.f32.mrb[0].mxu0
    %v1767 = vadd.f32 %v1556, %v1766
    %v1768 = vpop.f32.mrb[0].mxu0
    %1769 = vmatprep.mubr.f32.mxu0 0.0
    %1770 = vmatmul.mubr.f32.gmra.mrb[0].mxu0 %v1589
    %v1771 = vpop.f32.mrb[0].mxu0
    %v1772 = vadd.f32 %v1556, %v1771
    %v1773 = vpop.f32.mrb[0].mxu0
    %1774 = vmatprep.mubr.f32.mxu0 0.0
    %1775 = vmatmul.mubr.f32.gmra.mrb[0].mxu0 %v1592
    %v1776 = vpop.f32.mrb[0].mxu0
    %v1777 = vadd.f32 %v1556, %v1776
    %v1778 = vpop.f32.mrb[0].mxu0
    %1779 = vmatprep.mubr.f32.mxu0 0.0
    %1780 = vmatmul.mubr.f32.gmra.mrb[0].mxu0 %v1595
    %v1781 = vpop.f32.mrb[0].mxu0
    %v1782 = vadd.f32 %v1556, %v1781
    %v1783 = vpop.f32.mrb[0].mxu0
    %1784 = vmatprep.mubr.f32.mxu0 0.0
    %1785 = vmatmul.mubr.f32.gmra.mrb[0].mxu0 %v1598
    %v1786 = vpop.f32.mrb[0].mxu0
    %v1787 = vadd.f32 %v1556, %v1786
    %v1788 = vpop.f32.mrb[0].mxu0
    %1789 = vmatprep.mubr.f32.mxu0 0.0
    %1790 = vmatmul.mubr.f32.gmra.mrb[0].mxu0 %v1601
    %v1791 = vpop.f32.mrb[0].mxu0
    %v1792 = vadd.f32 %v1556, %v1791
    %v1793 = vpop.f32.mrb[0].mxu0
    %1794 = vmatprep.mubr.f32.mxu0 0.0
    %1795 = vmatmul.mubr.f32.gmra.mrb[0].mxu0 %v1604
    %v1796 = vpop.f32.mrb[0].mxu0
    %v1797 = vadd.f32 %v1556, %v1796
    %v1798 = vpop.f32.mrb[0].mxu0
    %1799 = vmatprep.mubr.f32.mxu0 0.0
    %1800 = vmatmul.mubr.f32.gmra.mrb[0].mxu0 %v1607
    %v1801 = vpop.f32.mrb[0].mxu0
    %v1802 = vadd.f32 %v1556, %v1801
    %v1803 = vpop.f32.mrb[0].mxu0
    %1804 = vmatprep.mubr.f32.mxu0 0.0
    %1805 = vmatmul.mubr.f32.gmra.mrb[0].mxu0 %v1610
    %v1806 = vpop.f32.mrb[0].mxu0
    %v1807 = vadd.f32 %v1556, %v1806
    %v1808 = vpop.f32.mrb[0].mxu0
    %1809 = vmatprep.mubr.f32.mxu0 0.0
    %1810 = vmatmul.mubr.f32.gmra.mrb[0].mxu0 %v1613
    %v1811 = vpop.f32.mrb[0].mxu0
    %v1812 = vadd.f32 %v1556, %v1811
    %v1813 = vpop.f32.mrb[0].mxu0
    %1814 = vmatprep.mubr.f32.mxu0 0.0
    %1815 = vmatmul.mubr.f32.gmra.mrb[0].mxu0 %v1616
    %v1816 = vpop.f32.mrb[0].mxu0
    %v1817 = vadd.f32 %v1556, %v1816
    %v1818 = vpop.f32.mrb[0].mxu0
    %1819 = vmatprep.mubr.f32.mxu0 0.0
    %1820 = vmatmul.mubr.f32.gmra.mrb[0].mxu0 %v1619
    %v1821 = vpop.f32.mrb[0].mxu0
    %v1822 = vadd.f32 %v1556, %v1821
    %v1823 = vpop.f32.mrb[0].mxu0
    %1824 = vmatprep.mubr.f32.mxu0 0.0
    %1825 = vmatmul.mubr.f32.gmra.mrb[0].mxu0 %v1622
    %v1826 = vpop.f32.mrb[0].mxu0
    %v1827 = vadd.f32 %v1556, %v1826
    %v1828 = vpop.f32.mrb[0].mxu0
    %1829 = vmatprep.mubr.f32.mxu0 0.0
    %1830 = vmatmul.mubr.f32.gmra.mrb[0].mxu0 %v1625
    %v1831 = vpop.f32.mrb[0].mxu0
    %v1832 = vadd.f32 %v1556, %v1831
    %v1833 = vpop.f32.mrb[0].mxu0
    %1834 = vmatprep.mubr.f32.mxu0 0.0
    %1835 = vmatmul.mubr.f32.gmra.mrb[0].mxu0 %v1628
    %v1836 = vpop.f32.mrb[0].mxu0
    %v1837 = vadd.f32 %v1556, %v1836
    %v1838 = vpop.f32.mrb[0].mxu0
    %1839 = vmatprep.mubr.f32.mxu0 0.0
    %1840 = vmatmul.mubr.f32.gmra.mrb[0].mxu0 %v1631
    %v1841 = vpop.f32.mrb[0].mxu0
    %v1842 = vadd.f32 %v1556, %v1841
    %v1843 = vpop.f32.mrb[0].mxu0
    %1844 = vmatprep.mubr.f32.mxu0 0.0
    %1845 = vmatmul.mubr.f32.gmra.mrb[0].mxu0 %v1634
    %v1846 = vpop.f32.mrb[0].mxu0
    %v1847 = vadd.f32 %v1556, %v1846
    %v1848 = vpop.f32.mrb[0].mxu0
    %1849 = vmatprep.mubr.f32.mxu0 0.0
    %1850 = vmatmul.mubr.f32.gmra.mrb[0].mxu0 %v1637
    %v1851 = vpop.f32.mrb[0].mxu0
    %v1852 = vadd.f32 %v1556, %v1851
    %v1853 = vpop.f32.mrb[0].mxu0
    %1854 = vmatprep.mubr.f32.mxu0 0.0
    %1855 = vmatmul.mubr.f32.gmra.mrb[0].mxu0 %v1640
    %v1856 = vpop.f32.mrb[0].mxu0
    %v1857 = vadd.f32 %v1556, %v1856
    %v1858 = vpop.f32.mrb[0].mxu0
    %1859 = vmatprep.mubr.f32.mxu0 0.0
    %1860 = vmatmul.mubr.f32.gmra.mrb[0].mxu0 %v1643
    %v1861 = vpop.f32.mrb[0].mxu0
    %v1862 = vadd.f32 %v1556, %v1861
    %v1863 = vpop.f32.mrb[0].mxu0
    %1864 = vmatprep.mubr.f32.mxu0 0.0
    %1865 = vmatmul.mubr.f32.gmra.mrb[0].mxu0 %v1646
    %v1866 = vpop.f32.mrb[0].mxu0
    %v1867 = vadd.f32 %v1556, %v1866
    %v1868 = vpop.f32.mrb[0].mxu0
    %1869 = vmatprep.mubr.f32.mxu0 0.0
    %1870 = vmatmul.mubr.f32.gmra.mrb[0].mxu0 %v1649
    %v1871 = vpop.f32.mrb[0].mxu0
    %v1872 = vadd.f32 %v1556, %v1871
    %v1873 = vpop.f32.mrb[0].mxu0
    %1874 = vdwg.mxu0
    %1876 = vset.pattern.permute.xlu0 1
    %1877 = vperm.xlu0 %1876, %v50
    %v1878 = vpop.permute.xlu0 %1877
    %1881 = vset.pattern.permute.xlu0 1
    %1882 = vperm.xlu0 %1881, %v51
    %v1883 = vpop.permute.xlu0 %1882
    %1886 = vset.pattern.permute.xlu0 1
    %1887 = vperm.xlu0 %1886, %v52
    %v1888 = vpop.permute.xlu0 %1887
    %1890 = vset.pattern.permute.xlu0 1
    %1891 = vperm.xlu0 %1890, %v53
    %v1892 = vpop.permute.xlu0 %1891
    %1894 = vset.pattern.permute.xlu0 1
    %1895 = vperm.xlu0 %1894, %v54
    %v1896 = vpop.permute.xlu0 %1895
    %1898 = vset.pattern.permute.xlu0 1
    %1899 = vperm.xlu0 %1898, %v55
    %v1900 = vpop.permute.xlu0 %1899
    %1902 = vset.pattern.permute.xlu0 1
    %1903 = vperm.xlu0 %1902, %v56
    %v1904 = vpop.permute.xlu0 %1903
    %1906 = vset.pattern.permute.xlu0 1
    %1907 = vperm.xlu0 %1906, %v57
    %v1908 = vpop.permute.xlu0 %1907
    %1910 = vset.pattern.permute.xlu0 1
    %1911 = vperm.xlu0 %1910, %v58
    %v1912 = vpop.permute.xlu0 %1911
    %1914 = vset.pattern.permute.xlu0 1
    %1915 = vperm.xlu0 %1914, %v59
    %v1916 = vpop.permute.xlu0 %1915
    %1918 = vset.pattern.permute.xlu0 1
    %1919 = vperm.xlu0 %1918, %v60
    %v1920 = vpop.permute.xlu0 %1919
    %1922 = vset.pattern.permute.xlu0 1
    %1923 = vperm.xlu0 %1922, %v61
    %v1924 = vpop.permute.xlu0 %1923
    %1926 = vset.pattern.permute.xlu0 1
    %1927 = vperm.xlu0 %1926, %v62
    %v1928 = vpop.permute.xlu0 %1927
    %1930 = vset.pattern.permute.xlu0 1
    %1931 = vperm.xlu0 %1930, %v63
    %v1932 = vpop.permute.xlu0 %1931
    %1934 = vset.pattern.permute.xlu0 1
    %1935 = vperm.xlu0 %1934, %v64
    %v1936 = vpop.permute.xlu0 %1935
    %1938 = vset.pattern.permute.xlu0 1
    %1939 = vperm.xlu0 %1938, %v65
    %v1940 = vpop.permute.xlu0 %1939
    %1942 = vset.pattern.permute.xlu0 1
    %1943 = vperm.xlu0 %1942, %v66
    %v1944 = vpop.permute.xlu0 %1943
    %1946 = vset.pattern.permute.xlu0 1
    %1947 = vperm.xlu0 %1946, %v67
    %v1948 = vpop.permute.xlu0 %1947
    %1950 = vset.pattern.permute.xlu0 1
    %1951 = vperm.xlu0 %1950, %v68
    %v1952 = vpop.permute.xlu0 %1951
    %1954 = vset.pattern.permute.xlu0 1
    %1955 = vperm.xlu0 %1954, %v69
    %v1956 = vpop.permute.xlu0 %1955
    %1958 = vset.pattern.permute.xlu0 1
    %1959 = vperm.xlu0 %1958, %v70
    %v1960 = vpop.permute.xlu0 %1959
    %1962 = vset.pattern.permute.xlu0 1
    %1963 = vperm.xlu0 %1962, %v71
    %v1964 = vpop.permute.xlu0 %1963
    %1966 = vset.pattern.permute.xlu0 1
    %1967 = vperm.xlu0 %1966, %v72
    %v1968 = vpop.permute.xlu0 %1967
    %1970 = vset.pattern.permute.xlu0 1
    %1971 = vperm.xlu0 %1970, %v73
    %v1972 = vpop.permute.xlu0 %1971
    %1974 = vset.pattern.permute.xlu0 1
    %1975 = vperm.xlu0 %1974, %v74
    %v1976 = vpop.permute.xlu0 %1975
    %1978 = vset.pattern.permute.xlu0 1
    %1979 = vperm.xlu0 %1978, %v75
    %v1980 = vpop.permute.xlu0 %1979
    %1982 = vset.pattern.permute.xlu0 1
    %1983 = vperm.xlu0 %1982, %v76
    %v1984 = vpop.permute.xlu0 %1983
    %1986 = vset.pattern.permute.xlu0 1
    %1987 = vperm.xlu0 %1986, %v77
    %v1988 = vpop.permute.xlu0 %1987
    %1990 = vset.pattern.permute.xlu0 1
    %1991 = vperm.xlu0 %1990, %v78
    %v1992 = vpop.permute.xlu0 %1991
    %1994 = vset.pattern.permute.xlu0 1
    %1995 = vperm.xlu0 %1994, %v79
    %v1996 = vpop.permute.xlu0 %1995
    %1999 = vset.pattern.permute.xlu0 1
    %2000 = vperm.xlu0 %1999, %v80
    %v2001 = vpop.permute.xlu0 %2000
    %v2003 = vmul.f32 %v1722, %v1878
    %v2004 = vmul.f32 %v1727, %v1883
    %v2005 = vmul.f32 %v1732, %v1888
    %v2006 = vmul.f32 %v1737, %v1892
    %v2007 = vmul.f32 %v1742, %v1896
    %v2008 = vmul.f32 %v1747, %v1900
    %v2009 = vmul.f32 %v1752, %v1904
    %v2010 = vmul.f32 %v1757, %v1908
    %v2011 = vmul.f32 %v1762, %v1912
    %v2012 = vmul.f32 %v1767, %v1916
    %v2013 = vmul.f32 %v1772, %v1920
    %v2014 = vmul.f32 %v1777, %v1924
    %v2015 = vmul.f32 %v1782, %v1928
    %v2016 = vmul.f32 %v1787, %v1932
    %v2017 = vmul.f32 %v1792, %v1936
    %v2018 = vmul.f32 %v1797, %v1940
    %v2019 = vmul.f32 %v1802, %v1944
    %v2020 = vmul.f32 %v1807, %v1948
    %v2021 = vmul.f32 %v1812, %v1952
    %v2022 = vmul.f32 %v1817, %v1956
    %v2023 = vmul.f32 %v1822, %v1960
    %v2024 = vmul.f32 %v1827, %v1964
    %v2025 = vmul.f32 %v1832, %v1968
    %v2026 = vmul.f32 %v1837, %v1972
    %v2027 = vmul.f32 %v1842, %v1976
    %v2028 = vmul.f32 %v1847, %v1980
    %v2029 = vmul.f32 %v1852, %v1984
    %v2030 = vmul.f32 %v1857, %v1988
    %v2031 = vmul.f32 %v1862, %v1992
    %v2032 = vmul.f32 %v1867, %v1996
    %v2033 = vmul.f32 %v1872, %v2001
    %v2034 = vld [vmem:[%s2] sm:$0xff]
    %v2035 = vld [vmem:[%s2 + $0x8] sm:$0xff]
    %v2036 = vld [vmem:[%s2 + $0x10] sm:$0xff]
    %v2037 = vld [vmem:[%s2 + $0x18] sm:$0xff]
    %v2038 = vld [vmem:[%s2 + $0x20] sm:$0x1]
    %v2039 = vlaneseq
    %v2040 = vshrl.u32 %v2039, 7
    %v2041 = vsub.s32 0, %v2040
    %v2042 = vrot.slane %v2038, %v2041
    %vm2043 = vcmask 261120
    %v2045 = vsel %vm2043, %v2003, 0
    %v2048 = vsel %vm2043, %v2004, 0
    %v2051 = vsel %vm2043, %v2005, 0
    %v2054 = vsel %vm2043, %v2006, 0
    %v2057 = vsel %vm2043, %v2007, 0
    %v2060 = vsel %vm2043, %v2008, 0
    %v2063 = vsel %vm2043, %v2009, 0
    %v2066 = vsel %vm2043, %v2010, 0
    %v2069 = vsel %vm2043, %v2011, 0
    %v2072 = vsel %vm2043, %v2012, 0
    %v2075 = vsel %vm2043, %v2013, 0
    %v2078 = vsel %vm2043, %v2014, 0
    %v2081 = vsel %vm2043, %v2015, 0
    %v2084 = vsel %vm2043, %v2016, 0
    %v2087 = vsel %vm2043, %v2017, 0
    %v2090 = vsel %vm2043, %v2018, 0
    %v2093 = vsel %vm2043, %v2019, 0
    %v2096 = vsel %vm2043, %v2020, 0
    %v2099 = vsel %vm2043, %v2021, 0
    %v2102 = vsel %vm2043, %v2022, 0
    %v2105 = vsel %vm2043, %v2023, 0
    %v2108 = vsel %vm2043, %v2024, 0
    %v2111 = vsel %vm2043, %v2025, 0
    %v2114 = vsel %vm2043, %v2026, 0
    %v2117 = vsel %vm2043, %v2027, 0
    %v2120 = vsel %vm2043, %v2028, 0
    %v2123 = vsel %vm2043, %v2029, 0
    %v2126 = vsel %vm2043, %v2030, 0
    %v2129 = vsel %vm2043, %v2031, 0
    %v2132 = vsel %vm2043, %v2032, 0
    %v2135 = vsel %vm2043, %v2033, 0
    %2137 = vmatprep.subr.mxu0 0.0
    %2138 = vmatpush1.msra.mxu0 %v2034
    %2139 = vmatprep.subr.mxu0 0.0
    %2140 = vmatpush1.msra.mxu0 %v2035
    %2141 = vmatprep.subr.mxu0 0.0
    %2142 = vmatpush1.msra.mxu0 %v2036
    %2143 = vmatprep.subr.mxu0 0.0
    %2144 = vmatpush1.msra.mxu0 %v2037
    %2145 = vmatprep.subr.mxu0 0.0
    %2146 = vmatpush1.msra.mxu0 0.0
    %2147 = vmatprep.subr.mxu0 0.0
    %2148 = vmatpush1.msra.mxu0 0.0
    %2149 = vmatprep.subr.mxu0 0.0
    %2150 = vmatpush1.msra.mxu0 0.0
    %2151 = vmatprep.subr.mxu0 0.0
    %2152 = vmatpush1.msra.mxu0 0.0
    %2153 = vmatprep.subr.mxu0 0.0
    %2154 = vmatpush1.msra.mxu0 0.0
    %2155 = vmatprep.subr.mxu0 0.0
    %2156 = vmatpush1.msra.mxu0 0.0
    %2157 = vmatprep.subr.mxu0 0.0
    %2158 = vmatpush1.msra.mxu0 0.0
    %2159 = vmatprep.subr.mxu0 0.0
    %2160 = vmatpush1.msra.mxu0 0.0
    %2161 = vmatprep.subr.mxu0 0.0
    %2162 = vmatpush1.msra.mxu0 0.0
    %2163 = vmatprep.subr.mxu0 0.0
    %2164 = vmatpush1.msra.mxu0 0.0
    %2165 = vmatprep.subr.mxu0 0.0
    %2166 = vmatpush1.msra.mxu0 0.0
    %2167 = vmatprep.subr.mxu0 0.0
    %2168 = vmatpush1.msra.mxu0 0.0
    %2169 = vmatprep.subr.mxu0 0.0
    %2170 = vmatpush1.msra.mxu0 0.0
    %2171 = vmatprep.subr.mxu0 0.0
    %2172 = vmatpush1.msra.mxu0 0.0
    %2173 = vmatprep.subr.mxu0 0.0
    %2174 = vmatpush1.msra.mxu0 0.0
    %2175 = vmatprep.subr.mxu0 0.0
    %2176 = vmatpush1.msra.mxu0 0.0
    %2177 = vmatprep.subr.mxu0 0.0
    %2178 = vmatpush1.msra.mxu0 0.0
    %2179 = vmatprep.subr.mxu0 0.0
    %2180 = vmatpush1.msra.mxu0 0.0
    %2181 = vmatprep.subr.mxu0 0.0
    %2182 = vmatpush1.msra.mxu0 0.0
    %2183 = vmatprep.subr.mxu0 0.0
    %2184 = vmatpush1.msra.mxu0 0.0
    %2185 = vmatprep.subr.mxu0 0.0
    %2186 = vmatpush1.msra.mxu0 0.0
    %2187 = vmatprep.subr.mxu0 0.0
    %2188 = vmatpush1.msra.mxu0 0.0
    %2189 = vmatprep.subr.mxu0 0.0
    %2190 = vmatpush1.msra.mxu0 0.0
    %2191 = vmatprep.subr.mxu0 0.0
    %2192 = vmatpush1.msra.mxu0 0.0
    %2193 = vmatprep.subr.mxu0 0.0
    %2194 = vmatpush1.msra.mxu0 0.0
    %2195 = vmatprep.subr.mxu0 0.0
    %2196 = vmatpush1.msra.mxu0 0.0
    %2197 = vmatprep.subr.mxu0 0.0
    %2198 = vmatpush1.msra.mxu0 0.0
    %2199 = vmatprep.subr.mxu0 0.0
    %2200 = vmatpush1.msra.mxu0 0.0
    %2201 = vmatprep.mubr.f32.mxu0 0.0
    %2202 = vmatmul.mubr.f32.gmra.mrb[0].mxu0 %v2045
    %v2203 = vpop.f32.mrb[0].mxu0
    %v2204 = vadd.f32 %v2042, %v2203
    %v2205 = vpop.f32.mrb[0].mxu0
    %2206 = vmatprep.mubr.f32.mxu0 0.0
    %2207 = vmatmul.mubr.f32.gmra.mrb[0].mxu0 %v2048
    %v2208 = vpop.f32.mrb[0].mxu0
    %v2209 = vadd.f32 %v2042, %v2208
    %v2210 = vpop.f32.mrb[0].mxu0
    %2211 = vmatprep.mubr.f32.mxu0 0.0
    %2212 = vmatmul.mubr.f32.gmra.mrb[0].mxu0 %v2051
    %v2213 = vpop.f32.mrb[0].mxu0
    %v2214 = vadd.f32 %v2042, %v2213
    %v2215 = vpop.f32.mrb[0].mxu0
    %2216 = vmatprep.mubr.f32.mxu0 0.0
    %2217 = vmatmul.mubr.f32.gmra.mrb[0].mxu0 %v2054
    %v2218 = vpop.f32.mrb[0].mxu0
    %v2219 = vadd.f32 %v2042, %v2218
    %v2220 = vpop.f32.mrb[0].mxu0
    %2221 = vmatprep.mubr.f32.mxu0 0.0
    %2222 = vmatmul.mubr.f32.gmra.mrb[0].mxu0 %v2057
    %v2223 = vpop.f32.mrb[0].mxu0
    %v2224 = vadd.f32 %v2042, %v2223
    %v2225 = vpop.f32.mrb[0].mxu0
    %2226 = vmatprep.mubr.f32.mxu0 0.0
    %2227 = vmatmul.mubr.f32.gmra.mrb[0].mxu0 %v2060
    %v2228 = vpop.f32.mrb[0].mxu0
    %v2229 = vadd.f32 %v2042, %v2228
    %v2230 = vpop.f32.mrb[0].mxu0
    %2231 = vmatprep.mubr.f32.mxu0 0.0
    %2232 = vmatmul.mubr.f32.gmra.mrb[0].mxu0 %v2063
    %v2233 = vpop.f32.mrb[0].mxu0
    %v2234 = vadd.f32 %v2042, %v2233
    %v2235 = vpop.f32.mrb[0].mxu0
    %2236 = vmatprep.mubr.f32.mxu0 0.0
    %2237 = vmatmul.mubr.f32.gmra.mrb[0].mxu0 %v2066
    %v2238 = vpop.f32.mrb[0].mxu0
    %v2239 = vadd.f32 %v2042, %v2238
    %v2240 = vpop.f32.mrb[0].mxu0
    %2241 = vmatprep.mubr.f32.mxu0 0.0
    %2242 = vmatmul.mubr.f32.gmra.mrb[0].mxu0 %v2069
    %v2243 = vpop.f32.mrb[0].mxu0
    %v2244 = vadd.f32 %v2042, %v2243
    %v2245 = vpop.f32.mrb[0].mxu0
    %2246 = vmatprep.mubr.f32.mxu0 0.0
    %2247 = vmatmul.mubr.f32.gmra.mrb[0].mxu0 %v2072
    %v2248 = vpop.f32.mrb[0].mxu0
    %v2249 = vadd.f32 %v2042, %v2248
    %v2250 = vpop.f32.mrb[0].mxu0
    %2251 = vmatprep.mubr.f32.mxu0 0.0
    %2252 = vmatmul.mubr.f32.gmra.mrb[0].mxu0 %v2075
    %v2253 = vpop.f32.mrb[0].mxu0
    %v2254 = vadd.f32 %v2042, %v2253
    %v2255 = vpop.f32.mrb[0].mxu0
    %2256 = vmatprep.mubr.f32.mxu0 0.0
    %2257 = vmatmul.mubr.f32.gmra.mrb[0].mxu0 %v2078
    %v2258 = vpop.f32.mrb[0].mxu0
    %v2259 = vadd.f32 %v2042, %v2258
    %v2260 = vpop.f32.mrb[0].mxu0
    %2261 = vmatprep.mubr.f32.mxu0 0.0
    %2262 = vmatmul.mubr.f32.gmra.mrb[0].mxu0 %v2081
    %v2263 = vpop.f32.mrb[0].mxu0
    %v2264 = vadd.f32 %v2042, %v2263
    %v2265 = vpop.f32.mrb[0].mxu0
    %2266 = vmatprep.mubr.f32.mxu0 0.0
    %2267 = vmatmul.mubr.f32.gmra.mrb[0].mxu0 %v2084
    %v2268 = vpop.f32.mrb[0].mxu0
    %v2269 = vadd.f32 %v2042, %v2268
    %v2270 = vpop.f32.mrb[0].mxu0
    %2271 = vmatprep.mubr.f32.mxu0 0.0
    %2272 = vmatmul.mubr.f32.gmra.mrb[0].mxu0 %v2087
    %v2273 = vpop.f32.mrb[0].mxu0
    %v2274 = vadd.f32 %v2042, %v2273
    %v2275 = vpop.f32.mrb[0].mxu0
    %2276 = vmatprep.mubr.f32.mxu0 0.0
    %2277 = vmatmul.mubr.f32.gmra.mrb[0].mxu0 %v2090
    %v2278 = vpop.f32.mrb[0].mxu0
    %v2279 = vadd.f32 %v2042, %v2278
    %v2280 = vpop.f32.mrb[0].mxu0
    %2281 = vmatprep.mubr.f32.mxu0 0.0
    %2282 = vmatmul.mubr.f32.gmra.mrb[0].mxu0 %v2093
    %v2283 = vpop.f32.mrb[0].mxu0
    %v2284 = vadd.f32 %v2042, %v2283
    %v2285 = vpop.f32.mrb[0].mxu0
    %2286 = vmatprep.mubr.f32.mxu0 0.0
    %2287 = vmatmul.mubr.f32.gmra.mrb[0].mxu0 %v2096
    %v2288 = vpop.f32.mrb[0].mxu0
    %v2289 = vadd.f32 %v2042, %v2288
    %v2290 = vpop.f32.mrb[0].mxu0
    %2291 = vmatprep.mubr.f32.mxu0 0.0
    %2292 = vmatmul.mubr.f32.gmra.mrb[0].mxu0 %v2099
    %v2293 = vpop.f32.mrb[0].mxu0
    %v2294 = vadd.f32 %v2042, %v2293
    %v2295 = vpop.f32.mrb[0].mxu0
    %2296 = vmatprep.mubr.f32.mxu0 0.0
    %2297 = vmatmul.mubr.f32.gmra.mrb[0].mxu0 %v2102
    %v2298 = vpop.f32.mrb[0].mxu0
    %v2299 = vadd.f32 %v2042, %v2298
    %v2300 = vpop.f32.mrb[0].mxu0
    %2301 = vmatprep.mubr.f32.mxu0 0.0
    %2302 = vmatmul.mubr.f32.gmra.mrb[0].mxu0 %v2105
    %v2303 = vpop.f32.mrb[0].mxu0
    %v2304 = vadd.f32 %v2042, %v2303
    %v2305 = vpop.f32.mrb[0].mxu0
    %2306 = vmatprep.mubr.f32.mxu0 0.0
    %2307 = vmatmul.mubr.f32.gmra.mrb[0].mxu0 %v2108
    %v2308 = vpop.f32.mrb[0].mxu0
    %v2309 = vadd.f32 %v2042, %v2308
    %v2310 = vpop.f32.mrb[0].mxu0
    %2311 = vmatprep.mubr.f32.mxu0 0.0
    %2312 = vmatmul.mubr.f32.gmra.mrb[0].mxu0 %v2111
    %v2313 = vpop.f32.mrb[0].mxu0
    %v2314 = vadd.f32 %v2042, %v2313
    %v2315 = vpop.f32.mrb[0].mxu0
    %2316 = vmatprep.mubr.f32.mxu0 0.0
    %2317 = vmatmul.mubr.f32.gmra.mrb[0].mxu0 %v2114
    %v2318 = vpop.f32.mrb[0].mxu0
    %v2319 = vadd.f32 %v2042, %v2318
    %v2320 = vpop.f32.mrb[0].mxu0
    %2321 = vmatprep.mubr.f32.mxu0 0.0
    %2322 = vmatmul.mubr.f32.gmra.mrb[0].mxu0 %v2117
    %v2323 = vpop.f32.mrb[0].mxu0
    %v2324 = vadd.f32 %v2042, %v2323
    %v2325 = vpop.f32.mrb[0].mxu0
    %2326 = vmatprep.mubr.f32.mxu0 0.0
    %2327 = vmatmul.mubr.f32.gmra.mrb[0].mxu0 %v2120
    %v2328 = vpop.f32.mrb[0].mxu0
    %v2329 = vadd.f32 %v2042, %v2328
    %v2330 = vpop.f32.mrb[0].mxu0
    %2331 = vmatprep.mubr.f32.mxu0 0.0
    %2332 = vmatmul.mubr.f32.gmra.mrb[0].mxu0 %v2123
    %v2333 = vpop.f32.mrb[0].mxu0
    %v2334 = vadd.f32 %v2042, %v2333
    %v2335 = vpop.f32.mrb[0].mxu0
    %2336 = vmatprep.mubr.f32.mxu0 0.0
    %2337 = vmatmul.mubr.f32.gmra.mrb[0].mxu0 %v2126
    %v2338 = vpop.f32.mrb[0].mxu0
    %v2339 = vadd.f32 %v2042, %v2338
    %v2340 = vpop.f32.mrb[0].mxu0
    %2341 = vmatprep.mubr.f32.mxu0 0.0
    %2342 = vmatmul.mubr.f32.gmra.mrb[0].mxu0 %v2129
    %v2343 = vpop.f32.mrb[0].mxu0
    %v2344 = vadd.f32 %v2042, %v2343
    %v2345 = vpop.f32.mrb[0].mxu0
    %2346 = vmatprep.mubr.f32.mxu0 0.0
    %2347 = vmatmul.mubr.f32.gmra.mrb[0].mxu0 %v2132
    %v2348 = vpop.f32.mrb[0].mxu0
    %v2349 = vadd.f32 %v2042, %v2348
    %v2350 = vpop.f32.mrb[0].mxu0
    %2351 = vmatprep.mubr.f32.mxu0 0.0
    %2352 = vmatmul.mubr.f32.gmra.mrb[0].mxu0 %v2135
    %v2353 = vpop.f32.mrb[0].mxu0
    %v2354 = vadd.f32 %v2042, %v2353
    %v2355 = vpop.f32.mrb[0].mxu0
    %2356 = vdwg.mxu0
    %v2357 = vmax.f32 %v2204, 0.0
    %v2358 = vmax.f32 %v2209, 0.0
    %v2359 = vmax.f32 %v2214, 0.0
    %v2360 = vmax.f32 %v2219, 0.0
    %v2361 = vmax.f32 %v2224, 0.0
    %v2362 = vmax.f32 %v2229, 0.0
    %v2363 = vmax.f32 %v2234, 0.0
    %v2364 = vmax.f32 %v2239, 0.0
    %v2365 = vmax.f32 %v2244, 0.0
    %v2366 = vmax.f32 %v2249, 0.0
    %v2367 = vmax.f32 %v2254, 0.0
    %v2368 = vmax.f32 %v2259, 0.0
    %v2369 = vmax.f32 %v2264, 0.0
    %v2370 = vmax.f32 %v2269, 0.0
    %v2371 = vmax.f32 %v2274, 0.0
    %v2372 = vmax.f32 %v2279, 0.0
    %v2373 = vmax.f32 %v2284, 0.0
    %v2374 = vmax.f32 %v2289, 0.0
    %v2375 = vmax.f32 %v2294, 0.0
    %v2376 = vmax.f32 %v2299, 0.0
    %v2377 = vmax.f32 %v2304, 0.0
    %v2378 = vmax.f32 %v2309, 0.0
    %v2379 = vmax.f32 %v2314, 0.0
    %v2380 = vmax.f32 %v2319, 0.0
    %v2381 = vmax.f32 %v2324, 0.0
    %v2382 = vmax.f32 %v2329, 0.0
    %v2383 = vmax.f32 %v2334, 0.0
    %v2384 = vmax.f32 %v2339, 0.0
    %v2385 = vmax.f32 %v2344, 0.0
    %v2386 = vmax.f32 %v2349, 0.0
    %v2387 = vmax.f32 %v2354, 0.0
    %v2388 = vmul.f32 %v2357, %v1878
    %v2389 = vmul.f32 %v2358, %v1883
    %v2390 = vmul.f32 %v2359, %v1888
    %v2391 = vmul.f32 %v2360, %v1892
    %v2392 = vmul.f32 %v2361, %v1896
    %v2393 = vmul.f32 %v2362, %v1900
    %v2394 = vmul.f32 %v2363, %v1904
    %v2395 = vmul.f32 %v2364, %v1908
    %v2396 = vmul.f32 %v2365, %v1912
    %v2397 = vmul.f32 %v2366, %v1916
    %v2398 = vmul.f32 %v2367, %v1920
    %v2399 = vmul.f32 %v2368, %v1924
    %v2400 = vmul.f32 %v2369, %v1928
    %v2401 = vmul.f32 %v2370, %v1932
    %v2402 = vmul.f32 %v2371, %v1936
    %v2403 = vmul.f32 %v2372, %v1940
    %v2404 = vmul.f32 %v2373, %v1944
    %v2405 = vmul.f32 %v2374, %v1948
    %v2406 = vmul.f32 %v2375, %v1952
    %v2407 = vmul.f32 %v2376, %v1956
    %v2408 = vmul.f32 %v2377, %v1960
    %v2409 = vmul.f32 %v2378, %v1964
    %v2410 = vmul.f32 %v2379, %v1968
    %v2411 = vmul.f32 %v2380, %v1972
    %v2412 = vmul.f32 %v2381, %v1976
    %v2413 = vmul.f32 %v2382, %v1980
    %v2414 = vmul.f32 %v2383, %v1984
    %v2415 = vmul.f32 %v2384, %v1988
    %v2416 = vmul.f32 %v2385, %v1992
    %v2417 = vmul.f32 %v2386, %v1996
    %v2418 = vmul.f32 %v2387, %v2001
    %v2419 = vld [vmem:[%s1 + $0x18] sm:$0xf]
    %v2421 = vsel %vm1390, %v2388, 0
    %v2424 = vsel %vm1390, %v2389, 0
    %v2427 = vsel %vm1390, %v2390, 0
    %v2430 = vsel %vm1390, %v2391, 0
    %v2433 = vsel %vm1390, %v2392, 0
    %v2436 = vsel %vm1390, %v2393, 0
    %v2439 = vsel %vm1390, %v2394, 0
    %v2442 = vsel %vm1390, %v2395, 0
    %v2445 = vsel %vm1390, %v2396, 0
    %v2448 = vsel %vm1390, %v2397, 0
    %v2451 = vsel %vm1390, %v2398, 0
    %v2454 = vsel %vm1390, %v2399, 0
    %v2457 = vsel %vm1390, %v2400, 0
    %v2460 = vsel %vm1390, %v2401, 0
    %v2463 = vsel %vm1390, %v2402, 0
    %v2466 = vsel %vm1390, %v2403, 0
    %v2469 = vsel %vm1390, %v2404, 0
    %v2472 = vsel %vm1390, %v2405, 0
    %v2475 = vsel %vm1390, %v2406, 0
    %v2478 = vsel %vm1390, %v2407, 0
    %v2481 = vsel %vm1390, %v2408, 0
    %v2484 = vsel %vm1390, %v2409, 0
    %v2487 = vsel %vm1390, %v2410, 0
    %v2490 = vsel %vm1390, %v2411, 0
    %v2493 = vsel %vm1390, %v2412, 0
    %v2496 = vsel %vm1390, %v2413, 0
    %v2499 = vsel %vm1390, %v2414, 0
    %v2502 = vsel %vm1390, %v2415, 0
    %v2505 = vsel %vm1390, %v2416, 0
    %v2508 = vsel %vm1390, %v2417, 0
    %v2511 = vsel %vm1390, %v2418, 0
    %vm2513 = vcmask 1043456
    %v2515 = vsel %vm2513, %v2419, 0
    %2517 = vmatprep.subr.mxu0 0.0
    %2518 = vmatpush1.msra.mxu0 %v2515
    %2519 = vmatprep.subr.mxu0 0.0
    %2520 = vmatpush1.msra.mxu0 0.0
    %2521 = vmatprep.subr.mxu0 0.0
    %2522 = vmatpush1.msra.mxu0 0.0
    %2523 = vmatprep.subr.mxu0 0.0
    %2524 = vmatpush1.msra.mxu0 0.0
    %2525 = vmatprep.subr.mxu0 0.0
    %2526 = vmatpush1.msra.mxu0 0.0
    %2527 = vmatprep.subr.mxu0 0.0
    %2528 = vmatpush1.msra.mxu0 0.0
    %2529 = vmatprep.subr.mxu0 0.0
    %2530 = vmatpush1.msra.mxu0 0.0
    %2531 = vmatprep.subr.mxu0 0.0
    %2532 = vmatpush1.msra.mxu0 0.0
    %2533 = vmatprep.subr.mxu0 0.0
    %2534 = vmatpush1.msra.mxu0 0.0
    %2535 = vmatprep.subr.mxu0 0.0
    %2536 = vmatpush1.msra.mxu0 0.0
    %2537 = vmatprep.subr.mxu0 0.0
    %2538 = vmatpush1.msra.mxu0 0.0
    %2539 = vmatprep.subr.mxu0 0.0
    %2540 = vmatpush1.msra.mxu0 0.0
    %2541 = vmatprep.subr.mxu0 0.0
    %2542 = vmatpush1.msra.mxu0 0.0
    %2543 = vmatprep.subr.mxu0 0.0
    %2544 = vmatpush1.msra.mxu0 0.0
    %2545 = vmatprep.subr.mxu0 0.0
    %2546 = vmatpush1.msra.mxu0 0.0
    %2547 = vmatprep.subr.mxu0 0.0
    %2548 = vmatpush1.msra.mxu0 0.0
    %2549 = vmatprep.subr.mxu0 0.0
    %2550 = vmatpush1.msra.mxu0 0.0
    %2551 = vmatprep.subr.mxu0 0.0
    %2552 = vmatpush1.msra.mxu0 0.0
    %2553 = vmatprep.subr.mxu0 0.0
    %2554 = vmatpush1.msra.mxu0 0.0
    %2555 = vmatprep.subr.mxu0 0.0
    %2556 = vmatpush1.msra.mxu0 0.0
    %2557 = vmatprep.subr.mxu0 0.0
    %2558 = vmatpush1.msra.mxu0 0.0
    %2559 = vmatprep.subr.mxu0 0.0
    %2560 = vmatpush1.msra.mxu0 0.0
    %2561 = vmatprep.subr.mxu0 0.0
    %2562 = vmatpush1.msra.mxu0 0.0
    %2563 = vmatprep.subr.mxu0 0.0
    %2564 = vmatpush1.msra.mxu0 0.0
    %2565 = vmatprep.subr.mxu0 0.0
    %2566 = vmatpush1.msra.mxu0 0.0
    %2567 = vmatprep.subr.mxu0 0.0
    %2568 = vmatpush1.msra.mxu0 0.0
    %2569 = vmatprep.subr.mxu0 0.0
    %2570 = vmatpush1.msra.mxu0 0.0
    %2571 = vmatprep.subr.mxu0 0.0
    %2572 = vmatpush1.msra.mxu0 0.0
    %2573 = vmatprep.subr.mxu0 0.0
    %2574 = vmatpush1.msra.mxu0 0.0
    %2575 = vmatprep.subr.mxu0 0.0
    %2576 = vmatpush1.msra.mxu0 0.0
    %2577 = vmatprep.subr.mxu0 0.0
    %2578 = vmatpush1.msra.mxu0 0.0
    %2579 = vmatprep.subr.mxu0 0.0
    %2580 = vmatpush1.msra.mxu0 0.0
    %2581 = vmatprep.mubr.f32.mxu0 0.0
    %2582 = vmatmul.mubr.f32.gmra.mrb[0].mxu0 %v2421
    %v2583 = vpop.f32.mrb[0].mxu0
    %v2584 = vadd.f32 0.0, %v2583
    %v2585 = vpop.f32.mrb[0].mxu0
    %2586 = vmatprep.mubr.f32.mxu0 0.0
    %2587 = vmatmul.mubr.f32.gmra.mrb[0].mxu0 %v2424
    %v2588 = vpop.f32.mrb[0].mxu0
    %v2589 = vadd.f32 0.0, %v2588
    %v2590 = vpop.f32.mrb[0].mxu0
    %2591 = vmatprep.mubr.f32.mxu0 0.0
    %2592 = vmatmul.mubr.f32.gmra.mrb[0].mxu0 %v2427
    %v2593 = vpop.f32.mrb[0].mxu0
    %v2594 = vadd.f32 0.0, %v2593
    %v2595 = vpop.f32.mrb[0].mxu0
    %2596 = vmatprep.mubr.f32.mxu0 0.0
    %2597 = vmatmul.mubr.f32.gmra.mrb[0].mxu0 %v2430
    %v2598 = vpop.f32.mrb[0].mxu0
    %v2599 = vadd.f32 0.0, %v2598
    %v2600 = vpop.f32.mrb[0].mxu0
    %2601 = vmatprep.mubr.f32.mxu0 0.0
    %2602 = vmatmul.mubr.f32.gmra.mrb[0].mxu0 %v2433
    %v2603 = vpop.f32.mrb[0].mxu0
    %v2604 = vadd.f32 0.0, %v2603
    %v2605 = vpop.f32.mrb[0].mxu0
    %2606 = vmatprep.mubr.f32.mxu0 0.0
    %2607 = vmatmul.mubr.f32.gmra.mrb[0].mxu0 %v2436
    %v2608 = vpop.f32.mrb[0].mxu0
    %v2609 = vadd.f32 0.0, %v2608
    %v2610 = vpop.f32.mrb[0].mxu0
    %2611 = vmatprep.mubr.f32.mxu0 0.0
    %2612 = vmatmul.mubr.f32.gmra.mrb[0].mxu0 %v2439
    %v2613 = vpop.f32.mrb[0].mxu0
    %v2614 = vadd.f32 0.0, %v2613
    %v2615 = vpop.f32.mrb[0].mxu0
    %2616 = vmatprep.mubr.f32.mxu0 0.0
    %2617 = vmatmul.mubr.f32.gmra.mrb[0].mxu0 %v2442
    %v2618 = vpop.f32.mrb[0].mxu0
    %v2619 = vadd.f32 0.0, %v2618
    %v2620 = vpop.f32.mrb[0].mxu0
    %2621 = vmatprep.mubr.f32.mxu0 0.0
    %2622 = vmatmul.mubr.f32.gmra.mrb[0].mxu0 %v2445
    %v2623 = vpop.f32.mrb[0].mxu0
    %v2624 = vadd.f32 0.0, %v2623
    %v2625 = vpop.f32.mrb[0].mxu0
    %2626 = vmatprep.mubr.f32.mxu0 0.0
    %2627 = vmatmul.mubr.f32.gmra.mrb[0].mxu0 %v2448
    %v2628 = vpop.f32.mrb[0].mxu0
    %v2629 = vadd.f32 0.0, %v2628
    %v2630 = vpop.f32.mrb[0].mxu0
    %2631 = vmatprep.mubr.f32.mxu0 0.0
    %2632 = vmatmul.mubr.f32.gmra.mrb[0].mxu0 %v2451
    %v2633 = vpop.f32.mrb[0].mxu0
    %v2634 = vadd.f32 0.0, %v2633
    %v2635 = vpop.f32.mrb[0].mxu0
    %2636 = vmatprep.mubr.f32.mxu0 0.0
    %2637 = vmatmul.mubr.f32.gmra.mrb[0].mxu0 %v2454
    %v2638 = vpop.f32.mrb[0].mxu0
    %v2639 = vadd.f32 0.0, %v2638
    %v2640 = vpop.f32.mrb[0].mxu0
    %2641 = vmatprep.mubr.f32.mxu0 0.0
    %2642 = vmatmul.mubr.f32.gmra.mrb[0].mxu0 %v2457
    %v2643 = vpop.f32.mrb[0].mxu0
    %v2644 = vadd.f32 0.0, %v2643
    %v2645 = vpop.f32.mrb[0].mxu0
    %2646 = vmatprep.mubr.f32.mxu0 0.0
    %2647 = vmatmul.mubr.f32.gmra.mrb[0].mxu0 %v2460
    %v2648 = vpop.f32.mrb[0].mxu0
    %v2649 = vadd.f32 0.0, %v2648
    %v2650 = vpop.f32.mrb[0].mxu0
    %2651 = vmatprep.mubr.f32.mxu0 0.0
    %2652 = vmatmul.mubr.f32.gmra.mrb[0].mxu0 %v2463
    %v2653 = vpop.f32.mrb[0].mxu0
    %v2654 = vadd.f32 0.0, %v2653
    %v2655 = vpop.f32.mrb[0].mxu0
    %2656 = vmatprep.mubr.f32.mxu0 0.0
    %2657 = vmatmul.mubr.f32.gmra.mrb[0].mxu0 %v2466
    %v2658 = vpop.f32.mrb[0].mxu0
    %v2659 = vadd.f32 0.0, %v2658
    %v2660 = vpop.f32.mrb[0].mxu0
    %2661 = vmatprep.mubr.f32.mxu0 0.0
    %2662 = vmatmul.mubr.f32.gmra.mrb[0].mxu0 %v2469
    %v2663 = vpop.f32.mrb[0].mxu0
    %v2664 = vadd.f32 0.0, %v2663
    %v2665 = vpop.f32.mrb[0].mxu0
    %2666 = vmatprep.mubr.f32.mxu0 0.0
    %2667 = vmatmul.mubr.f32.gmra.mrb[0].mxu0 %v2472
    %v2668 = vpop.f32.mrb[0].mxu0
    %v2669 = vadd.f32 0.0, %v2668
    %v2670 = vpop.f32.mrb[0].mxu0
    %2671 = vmatprep.mubr.f32.mxu0 0.0
    %2672 = vmatmul.mubr.f32.gmra.mrb[0].mxu0 %v2475
    %v2673 = vpop.f32.mrb[0].mxu0
    %v2674 = vadd.f32 0.0, %v2673
    %v2675 = vpop.f32.mrb[0].mxu0
    %2676 = vmatprep.mubr.f32.mxu0 0.0
    %2677 = vmatmul.mubr.f32.gmra.mrb[0].mxu0 %v2478
    %v2678 = vpop.f32.mrb[0].mxu0
    %v2679 = vadd.f32 0.0, %v2678
    %v2680 = vpop.f32.mrb[0].mxu0
    %2681 = vmatprep.mubr.f32.mxu0 0.0
    %2682 = vmatmul.mubr.f32.gmra.mrb[0].mxu0 %v2481
    %v2683 = vpop.f32.mrb[0].mxu0
    %v2684 = vadd.f32 0.0, %v2683
    %v2685 = vpop.f32.mrb[0].mxu0
    %2686 = vmatprep.mubr.f32.mxu0 0.0
    %2687 = vmatmul.mubr.f32.gmra.mrb[0].mxu0 %v2484
    %v2688 = vpop.f32.mrb[0].mxu0
    %v2689 = vadd.f32 0.0, %v2688
    %v2690 = vpop.f32.mrb[0].mxu0
    %2691 = vmatprep.mubr.f32.mxu0 0.0
    %2692 = vmatmul.mubr.f32.gmra.mrb[0].mxu0 %v2487
    %v2693 = vpop.f32.mrb[0].mxu0
    %v2694 = vadd.f32 0.0, %v2693
    %v2695 = vpop.f32.mrb[0].mxu0
    %2696 = vmatprep.mubr.f32.mxu0 0.0
    %2697 = vmatmul.mubr.f32.gmra.mrb[0].mxu0 %v2490
    %v2698 = vpop.f32.mrb[0].mxu0
    %v2699 = vadd.f32 0.0, %v2698
    %v2700 = vpop.f32.mrb[0].mxu0
    %2701 = vmatprep.mubr.f32.mxu0 0.0
    %2702 = vmatmul.mubr.f32.gmra.mrb[0].mxu0 %v2493
    %v2703 = vpop.f32.mrb[0].mxu0
    %v2704 = vadd.f32 0.0, %v2703
    %v2705 = vpop.f32.mrb[0].mxu0
    %2706 = vmatprep.mubr.f32.mxu0 0.0
    %2707 = vmatmul.mubr.f32.gmra.mrb[0].mxu0 %v2496
    %v2708 = vpop.f32.mrb[0].mxu0
    %v2709 = vadd.f32 0.0, %v2708
    %v2710 = vpop.f32.mrb[0].mxu0
    %2711 = vmatprep.mubr.f32.mxu0 0.0
    %2712 = vmatmul.mubr.f32.gmra.mrb[0].mxu0 %v2499
    %v2713 = vpop.f32.mrb[0].mxu0
    %v2714 = vadd.f32 0.0, %v2713
    %v2715 = vpop.f32.mrb[0].mxu0
    %2716 = vmatprep.mubr.f32.mxu0 0.0
    %2717 = vmatmul.mubr.f32.gmra.mrb[0].mxu0 %v2502
    %v2718 = vpop.f32.mrb[0].mxu0
    %v2719 = vadd.f32 0.0, %v2718
    %v2720 = vpop.f32.mrb[0].mxu0
    %2721 = vmatprep.mubr.f32.mxu0 0.0
    %2722 = vmatmul.mubr.f32.gmra.mrb[0].mxu0 %v2505
    %v2723 = vpop.f32.mrb[0].mxu0
    %v2724 = vadd.f32 0.0, %v2723
    %v2725 = vpop.f32.mrb[0].mxu0
    %2726 = vmatprep.mubr.f32.mxu0 0.0
    %2727 = vmatmul.mubr.f32.gmra.mrb[0].mxu0 %v2508
    %v2728 = vpop.f32.mrb[0].mxu0
    %v2729 = vadd.f32 0.0, %v2728
    %v2730 = vpop.f32.mrb[0].mxu0
    %2731 = vmatprep.mubr.f32.mxu0 0.0
    %2732 = vmatmul.mubr.f32.gmra.mrb[0].mxu0 %v2511
    %v2733 = vpop.f32.mrb[0].mxu0
    %v2734 = vadd.f32 0.0, %v2733
    %v2735 = vpop.f32.mrb[0].mxu0
    %2736 = vdwg.mxu0
    %v2737 = vmul.f32 %v2584, %v1878
    %v2738 = vmul.f32 %v2589, %v1883
    %v2739 = vmul.f32 %v2594, %v1888
    %v2740 = vmul.f32 %v2599, %v1892
    %v2741 = vmul.f32 %v2604, %v1896
    %v2742 = vmul.f32 %v2609, %v1900
    %v2743 = vmul.f32 %v2614, %v1904
    %v2744 = vmul.f32 %v2619, %v1908
    %v2745 = vmul.f32 %v2624, %v1912
    %v2746 = vmul.f32 %v2629, %v1916
    %v2747 = vmul.f32 %v2634, %v1920
    %v2748 = vmul.f32 %v2639, %v1924
    %v2749 = vmul.f32 %v2644, %v1928
    %v2750 = vmul.f32 %v2649, %v1932
    %v2751 = vmul.f32 %v2654, %v1936
    %v2752 = vmul.f32 %v2659, %v1940
    %v2753 = vmul.f32 %v2664, %v1944
    %v2754 = vmul.f32 %v2669, %v1948
    %v2755 = vmul.f32 %v2674, %v1952
    %v2756 = vmul.f32 %v2679, %v1956
    %v2757 = vmul.f32 %v2684, %v1960
    %v2758 = vmul.f32 %v2689, %v1964
    %v2759 = vmul.f32 %v2694, %v1968
    %v2760 = vmul.f32 %v2699, %v1972
    %v2761 = vmul.f32 %v2704, %v1976
    %v2762 = vmul.f32 %v2709, %v1980
    %v2763 = vmul.f32 %v2714, %v1984
    %v2764 = vmul.f32 %v2719, %v1988
    %v2765 = vmul.f32 %v2724, %v1992
    %v2766 = vmul.f32 %v2729, %v1996
    %v2767 = vmul.f32 %v2734, %v2001
    %v2768 = vmul.f32 %v2737, %v2737
    %v2769 = vmul.f32 %v2738, %v2738
    %v2770 = vmul.f32 %v2739, %v2739
    %v2771 = vmul.f32 %v2740, %v2740
    %v2772 = vmul.f32 %v2741, %v2741
    %v2773 = vmul.f32 %v2742, %v2742
    %v2774 = vmul.f32 %v2743, %v2743
    %v2775 = vmul.f32 %v2744, %v2744
    %v2776 = vmul.f32 %v2745, %v2745
    %v2777 = vmul.f32 %v2746, %v2746
    %v2778 = vmul.f32 %v2747, %v2747
    %v2779 = vmul.f32 %v2748, %v2748
    %v2780 = vmul.f32 %v2749, %v2749
    %v2781 = vmul.f32 %v2750, %v2750
    %v2782 = vmul.f32 %v2751, %v2751
    %v2783 = vmul.f32 %v2752, %v2752
    %v2784 = vmul.f32 %v2753, %v2753
    %v2785 = vmul.f32 %v2754, %v2754
    %v2786 = vmul.f32 %v2755, %v2755
    %v2787 = vmul.f32 %v2756, %v2756
    %v2788 = vmul.f32 %v2757, %v2757
    %v2789 = vmul.f32 %v2758, %v2758
    %v2790 = vmul.f32 %v2759, %v2759
    %v2791 = vmul.f32 %v2760, %v2760
    %v2792 = vmul.f32 %v2761, %v2761
    %v2793 = vmul.f32 %v2762, %v2762
    %v2794 = vmul.f32 %v2763, %v2763
    %v2795 = vmul.f32 %v2764, %v2764
    %v2796 = vmul.f32 %v2765, %v2765
    %v2797 = vmul.f32 %v2766, %v2766
    %v2798 = vmul.f32 %v2767, %v2767
    %2830 = vrot.lane.b32.xlu0 %v2768, 32
    %v2831 = vpop.permute.xlu0 %2830
    %2832 = vrot.lane.b32.xlu0 %v2769, 32
    %v2833 = vpop.permute.xlu0 %2832
    %2834 = vrot.lane.b32.xlu0 %v2770, 32
    %v2835 = vpop.permute.xlu0 %2834
    %2836 = vrot.lane.b32.xlu0 %v2771, 32
    %v2837 = vpop.permute.xlu0 %2836
    %2838 = vrot.lane.b32.xlu0 %v2772, 32
    %v2839 = vpop.permute.xlu0 %2838
    %2840 = vrot.lane.b32.xlu0 %v2773, 32
    %v2841 = vpop.permute.xlu0 %2840
    %2842 = vrot.lane.b32.xlu0 %v2774, 32
    %v2843 = vpop.permute.xlu0 %2842
    %2844 = vrot.lane.b32.xlu0 %v2775, 32
    %v2845 = vpop.permute.xlu0 %2844
    %2846 = vrot.lane.b32.xlu0 %v2776, 32
    %v2847 = vpop.permute.xlu0 %2846
    %2848 = vrot.lane.b32.xlu0 %v2777, 32
    %v2849 = vpop.permute.xlu0 %2848
    %2850 = vrot.lane.b32.xlu0 %v2778, 32
    %v2851 = vpop.permute.xlu0 %2850
    %2852 = vrot.lane.b32.xlu0 %v2779, 32
    %v2853 = vpop.permute.xlu0 %2852
    %2854 = vrot.lane.b32.xlu0 %v2780, 32
    %v2855 = vpop.permute.xlu0 %2854
    %2856 = vrot.lane.b32.xlu0 %v2781, 32
    %v2857 = vpop.permute.xlu0 %2856
    %2858 = vrot.lane.b32.xlu0 %v2782, 32
    %v2859 = vpop.permute.xlu0 %2858
    %2860 = vrot.lane.b32.xlu0 %v2783, 32
    %v2861 = vpop.permute.xlu0 %2860
    %2862 = vrot.lane.b32.xlu0 %v2784, 32
    %v2863 = vpop.permute.xlu0 %2862
    %2864 = vrot.lane.b32.xlu0 %v2785, 32
    %v2865 = vpop.permute.xlu0 %2864
    %2866 = vrot.lane.b32.xlu0 %v2786, 32
    %v2867 = vpop.permute.xlu0 %2866
    %2868 = vrot.lane.b32.xlu0 %v2787, 32
    %v2869 = vpop.permute.xlu0 %2868
    %2870 = vrot.lane.b32.xlu0 %v2788, 32
    %v2871 = vpop.permute.xlu0 %2870
    %2872 = vrot.lane.b32.xlu0 %v2789, 32
    %v2873 = vpop.permute.xlu0 %2872
    %2874 = vrot.lane.b32.xlu0 %v2790, 32
    %v2875 = vpop.permute.xlu0 %2874
    %2876 = vrot.lane.b32.xlu0 %v2791, 32
    %v2877 = vpop.permute.xlu0 %2876
    %2878 = vrot.lane.b32.xlu0 %v2792, 32
    %v2879 = vpop.permute.xlu0 %2878
    %2880 = vrot.lane.b32.xlu0 %v2793, 32
    %v2881 = vpop.permute.xlu0 %2880
    %2882 = vrot.lane.b32.xlu0 %v2794, 32
    %v2883 = vpop.permute.xlu0 %2882
    %2884 = vrot.lane.b32.xlu0 %v2795, 32
    %v2885 = vpop.permute.xlu0 %2884
    %2886 = vrot.lane.b32.xlu0 %v2796, 32
    %v2887 = vpop.permute.xlu0 %2886
    %2888 = vrot.lane.b32.xlu0 %v2797, 32
    %v2889 = vpop.permute.xlu0 %2888
    %2890 = vrot.lane.b32.xlu0 %v2798, 32
    %v2891 = vpop.permute.xlu0 %2890
    %v2923 = vsel %vm2043, %v2737, %v2831
    %v2924 = vsel %vm2043, %v2738, %v2833
    %v2925 = vsel %vm2043, %v2739, %v2835
    %v2926 = vsel %vm2043, %v2740, %v2837
    %v2927 = vsel %vm2043, %v2741, %v2839
    %v2928 = vsel %vm2043, %v2742, %v2841
    %v2929 = vsel %vm2043, %v2743, %v2843
    %v2930 = vsel %vm2043, %v2744, %v2845
    %v2931 = vsel %vm2043, %v2745, %v2847
    %v2932 = vsel %vm2043, %v2746, %v2849
    %v2933 = vsel %vm2043, %v2747, %v2851
    %v2934 = vsel %vm2043, %v2748, %v2853
    %v2935 = vsel %vm2043, %v2749, %v2855
    %v2936 = vsel %vm2043, %v2750, %v2857
    %v2937 = vsel %vm2043, %v2751, %v2859
    %v2938 = vsel %vm2043, %v2752, %v2861
    %v2939 = vsel %vm2043, %v2753, %v2863
    %v2940 = vsel %vm2043, %v2754, %v2865
    %v2941 = vsel %vm2043, %v2755, %v2867
    %v2942 = vsel %vm2043, %v2756, %v2869
    %v2943 = vsel %vm2043, %v2757, %v2871
    %v2944 = vsel %vm2043, %v2758, %v2873
    %v2945 = vsel %vm2043, %v2759, %v2875
    %v2946 = vsel %vm2043, %v2760, %v2877
    %v2947 = vsel %vm2043, %v2761, %v2879
    %v2948 = vsel %vm2043, %v2762, %v2881
    %v2949 = vsel %vm2043, %v2763, %v2883
    %v2950 = vsel %vm2043, %v2764, %v2885
    %v2951 = vsel %vm2043, %v2765, %v2887
    %v2952 = vsel %vm2043, %v2766, %v2889
    %v2953 = vsel %vm2043, %v2767, %v2891
    %v2954 = vsel %vm15, %v2923, 0.0
    %v2955 = vsel %vm15, %v2924, 0.0
    %v2956 = vadd.f32 %v2954, %v2955
    %v2957 = vsel %vm15, %v2925, 0.0
    %v2958 = vadd.f32 %v2956, %v2957
    %v2959 = vsel %vm15, %v2926, 0.0
    %v2960 = vadd.f32 %v2958, %v2959
    %v2961 = vsel %vm15, %v2927, 0.0
    %v2962 = vadd.f32 %v2960, %v2961
    %v2963 = vsel %vm15, %v2928, 0.0
    %v2964 = vadd.f32 %v2962, %v2963
    %v2965 = vsel %vm15, %v2929, 0.0
    %v2966 = vadd.f32 %v2964, %v2965
    %v2967 = vsel %vm15, %v2930, 0.0
    %v2968 = vadd.f32 %v2966, %v2967
    %v2969 = vsel %vm15, %v2931, 0.0
    %v2970 = vadd.f32 %v2968, %v2969
    %v2971 = vsel %vm15, %v2932, 0.0
    %v2972 = vadd.f32 %v2970, %v2971
    %v2973 = vsel %vm15, %v2933, 0.0
    %v2974 = vadd.f32 %v2972, %v2973
    %v2975 = vsel %vm15, %v2934, 0.0
    %v2976 = vadd.f32 %v2974, %v2975
    %v2977 = vsel %vm15, %v2935, 0.0
    %v2978 = vadd.f32 %v2976, %v2977
    %v2979 = vsel %vm15, %v2936, 0.0
    %v2980 = vadd.f32 %v2978, %v2979
    %v2981 = vsel %vm15, %v2937, 0.0
    %v2982 = vadd.f32 %v2980, %v2981
    %v2983 = vsel %vm15, %v2938, 0.0
    %v2984 = vadd.f32 %v2982, %v2983
    %v2985 = vsel %vm15, %v2939, 0.0
    %v2986 = vadd.f32 %v2984, %v2985
    %v2987 = vsel %vm15, %v2940, 0.0
    %v2988 = vadd.f32 %v2986, %v2987
    %v2989 = vsel %vm15, %v2941, 0.0
    %v2990 = vadd.f32 %v2988, %v2989
    %v2991 = vsel %vm15, %v2942, 0.0
    %v2992 = vadd.f32 %v2990, %v2991
    %v2993 = vsel %vm15, %v2943, 0.0
    %v2994 = vadd.f32 %v2992, %v2993
    %v2995 = vsel %vm15, %v2944, 0.0
    %v2996 = vadd.f32 %v2994, %v2995
    %v2997 = vsel %vm15, %v2945, 0.0
    %v2998 = vadd.f32 %v2996, %v2997
    %v2999 = vsel %vm15, %v2946, 0.0
    %v3000 = vadd.f32 %v2998, %v2999
    %v3001 = vsel %vm15, %v2947, 0.0
    %v3002 = vadd.f32 %v3000, %v3001
    %v3003 = vsel %vm15, %v2948, 0.0
    %v3004 = vadd.f32 %v3002, %v3003
    %v3005 = vsel %vm15, %v2949, 0.0
    %v3006 = vadd.f32 %v3004, %v3005
    %v3007 = vsel %vm15, %v2950, 0.0
    %v3008 = vadd.f32 %v3006, %v3007
    %v3009 = vsel %vm15, %v2951, 0.0
    %v3010 = vadd.f32 %v3008, %v3009
    %v3011 = vsel %vm15, %v2952, 0.0
    %v3012 = vadd.f32 %v3010, %v3011
    %vm3013 = vcmask 517120
    %v3014 = vsel %vm3013, %v2953, 0.0
    %v3015 = vadd.f32 %v3012, %v3014
    %v3016 = vrot.slane %v3015, 4
    %v3017 = vadd.f32 %v3015, %v3016
    %v3018 = vrot.slane %v3017, 2
    %v3019 = vadd.f32 %v3017, %v3018
    %v3020 = vrot.slane %v3019, 1
    %v3021 = vadd.f32 %v3019, %v3020
    %v3022 = vmul.f32 %v3021, 0.0061728396
    %v3023 = vmul.f32 %v3022, %v3022
    %3025 = vrot.lane.b32.xlu0 %v3023, 32
    %v3026 = vpop.permute.xlu0 %3025
    %v3028 = vsub.f32 %v3022, %v3026
    %v3029 = vmax.f32 %v3028, 0.0
    %v3030 = vsub.f32 %v2584, %v3022
    %v3031 = vsub.f32 %v2589, %v3022
    %v3032 = vsub.f32 %v2594, %v3022
    %v3033 = vsub.f32 %v2599, %v3022
    %v3034 = vsub.f32 %v2604, %v3022
    %v3035 = vsub.f32 %v2609, %v3022
    %v3036 = vsub.f32 %v2614, %v3022
    %v3037 = vsub.f32 %v2619, %v3022
    %v3038 = vsub.f32 %v2624, %v3022
    %v3039 = vsub.f32 %v2629, %v3022
    %v3040 = vsub.f32 %v2634, %v3022
    %v3041 = vsub.f32 %v2639, %v3022
    %v3042 = vsub.f32 %v2644, %v3022
    %v3043 = vsub.f32 %v2649, %v3022
    %v3044 = vsub.f32 %v2654, %v3022
    %v3045 = vsub.f32 %v2659, %v3022
    %v3046 = vsub.f32 %v2664, %v3022
    %v3047 = vsub.f32 %v2669, %v3022
    %v3048 = vsub.f32 %v2674, %v3022
    %v3049 = vsub.f32 %v2679, %v3022
    %v3050 = vsub.f32 %v2684, %v3022
    %v3051 = vsub.f32 %v2689, %v3022
    %v3052 = vsub.f32 %v2694, %v3022
    %v3053 = vsub.f32 %v2699, %v3022
    %v3054 = vsub.f32 %v2704, %v3022
    %v3055 = vsub.f32 %v2709, %v3022
    %v3056 = vsub.f32 %v2714, %v3022
    %v3057 = vsub.f32 %v2719, %v3022
    %v3058 = vsub.f32 %v2724, %v3022
    %v3059 = vsub.f32 %v2729, %v3022
    %v3060 = vsub.f32 %v2734, %v3022
    %v3061 = vadd.f32 %v3029, 1e-05
    %v3062 = vrsqrt.pop %v3061
    %v3063 = vlaneseq
    %v3064 = vshrl.u32 %v3063, 7
    %v3065 = vsub.s32 0, %v3064
    %v3066 = vrot.slane %v3062, %v3065
    %3068 = vrot.lane.b32.xlu0 %v3066, 96
    %v3069 = vpop.permute.xlu0 %3068
    %v3071 = vmul.f32 %v3030, %v3069
    %v3072 = vmul.f32 %v3031, %v3069
    %v3073 = vmul.f32 %v3032, %v3069
    %v3074 = vmul.f32 %v3033, %v3069
    %v3075 = vmul.f32 %v3034, %v3069
    %v3076 = vmul.f32 %v3035, %v3069
    %v3077 = vmul.f32 %v3036, %v3069
    %v3078 = vmul.f32 %v3037, %v3069
    %v3079 = vmul.f32 %v3038, %v3069
    %v3080 = vmul.f32 %v3039, %v3069
    %v3081 = vmul.f32 %v3040, %v3069
    %v3082 = vmul.f32 %v3041, %v3069
    %v3083 = vmul.f32 %v3042, %v3069
    %v3084 = vmul.f32 %v3043, %v3069
    %v3085 = vmul.f32 %v3044, %v3069
    %v3086 = vmul.f32 %v3045, %v3069
    %v3087 = vmul.f32 %v3046, %v3069
    %v3088 = vmul.f32 %v3047, %v3069
    %v3089 = vmul.f32 %v3048, %v3069
    %v3090 = vmul.f32 %v3049, %v3069
    %v3091 = vmul.f32 %v3050, %v3069
    %v3092 = vmul.f32 %v3051, %v3069
    %v3093 = vmul.f32 %v3052, %v3069
    %v3094 = vmul.f32 %v3053, %v3069
    %v3095 = vmul.f32 %v3054, %v3069
    %v3096 = vmul.f32 %v3055, %v3069
    %v3097 = vmul.f32 %v3056, %v3069
    %v3098 = vmul.f32 %v3057, %v3069
    %v3099 = vmul.f32 %v3058, %v3069
    %v3100 = vmul.f32 %v3059, %v3069
    %v3101 = vmul.f32 %v3060, %v3069
    %vm3102 = vcmp.ge.f32.partialorder %v3071, 0.0
    %vm3103 = vcmp.ge.f32.partialorder %v3072, 0.0
    %vm3104 = vcmp.ge.f32.partialorder %v3073, 0.0
    %vm3105 = vcmp.ge.f32.partialorder %v3074, 0.0
    %vm3106 = vcmp.ge.f32.partialorder %v3075, 0.0
    %vm3107 = vcmp.ge.f32.partialorder %v3076, 0.0
    %vm3108 = vcmp.ge.f32.partialorder %v3077, 0.0
    %vm3109 = vcmp.ge.f32.partialorder %v3078, 0.0
    %vm3110 = vcmp.ge.f32.partialorder %v3079, 0.0
    %vm3111 = vcmp.ge.f32.partialorder %v3080, 0.0
    %vm3112 = vcmp.ge.f32.partialorder %v3081, 0.0
    %vm3113 = vcmp.ge.f32.partialorder %v3082, 0.0
    %vm3114 = vcmp.ge.f32.partialorder %v3083, 0.0
    %vm3115 = vcmp.ge.f32.partialorder %v3084, 0.0
    %vm3116 = vcmp.ge.f32.partialorder %v3085, 0.0
    %vm3117 = vcmp.ge.f32.partialorder %v3086, 0.0
    %vm3118 = vcmp.ge.f32.partialorder %v3087, 0.0
    %vm3119 = vcmp.ge.f32.partialorder %v3088, 0.0
    %vm3120 = vcmp.ge.f32.partialorder %v3089, 0.0
    %vm3121 = vcmp.ge.f32.partialorder %v3090, 0.0
    %vm3122 = vcmp.ge.f32.partialorder %v3091, 0.0
    %vm3123 = vcmp.ge.f32.partialorder %v3092, 0.0
    %vm3124 = vcmp.ge.f32.partialorder %v3093, 0.0
    %vm3125 = vcmp.ge.f32.partialorder %v3094, 0.0
    %vm3126 = vcmp.ge.f32.partialorder %v3095, 0.0
    %vm3127 = vcmp.ge.f32.partialorder %v3096, 0.0
    %vm3128 = vcmp.ge.f32.partialorder %v3097, 0.0
    %vm3129 = vcmp.ge.f32.partialorder %v3098, 0.0
    %vm3130 = vcmp.ge.f32.partialorder %v3099, 0.0
    %vm3131 = vcmp.ge.f32.partialorder %v3100, 0.0
    %vm3132 = vcmp.ge.f32.partialorder %v3101, 0.0
    %v3133 = vmul.f32 %v3071, 0.01
    %v3134 = vmul.f32 %v3072, 0.01
    %v3135 = vmul.f32 %v3073, 0.01
    %v3136 = vmul.f32 %v3074, 0.01
    %v3137 = vmul.f32 %v3075, 0.01
    %v3138 = vmul.f32 %v3076, 0.01
    %v3139 = vmul.f32 %v3077, 0.01
    %v3140 = vmul.f32 %v3078, 0.01
    %v3141 = vmul.f32 %v3079, 0.01
    %v3142 = vmul.f32 %v3080, 0.01
    %v3143 = vmul.f32 %v3081, 0.01
    %v3144 = vmul.f32 %v3082, 0.01
    %v3145 = vmul.f32 %v3083, 0.01
    %v3146 = vmul.f32 %v3084, 0.01
    %v3147 = vmul.f32 %v3085, 0.01
    %v3148 = vmul.f32 %v3086, 0.01
    %v3149 = vmul.f32 %v3087, 0.01
    %v3150 = vmul.f32 %v3088, 0.01
    %v3151 = vmul.f32 %v3089, 0.01
    %v3152 = vmul.f32 %v3090, 0.01
    %v3153 = vmul.f32 %v3091, 0.01
    %v3154 = vmul.f32 %v3092, 0.01
    %v3155 = vmul.f32 %v3093, 0.01
    %v3156 = vmul.f32 %v3094, 0.01
    %v3157 = vmul.f32 %v3095, 0.01
    %v3158 = vmul.f32 %v3096, 0.01
    %v3159 = vmul.f32 %v3097, 0.01
    %v3160 = vmul.f32 %v3098, 0.01
    %v3161 = vmul.f32 %v3099, 0.01
    %v3162 = vmul.f32 %v3100, 0.01
    %v3163 = vmul.f32 %v3101, 0.01
    %v3164 = vsel %vm3102, %v3071, %v3133
    %v3165 = vsel %vm3103, %v3072, %v3134
    %v3166 = vsel %vm3104, %v3073, %v3135
    %v3167 = vsel %vm3105, %v3074, %v3136
    %v3168 = vsel %vm3106, %v3075, %v3137
    %v3169 = vsel %vm3107, %v3076, %v3138
    %v3170 = vsel %vm3108, %v3077, %v3139
    %v3171 = vsel %vm3109, %v3078, %v3140
    %v3172 = vsel %vm3110, %v3079, %v3141
    %v3173 = vsel %vm3111, %v3080, %v3142
    %v3174 = vsel %vm3112, %v3081, %v3143
    %v3175 = vsel %vm3113, %v3082, %v3144
    %v3176 = vsel %vm3114, %v3083, %v3145
    %v3177 = vsel %vm3115, %v3084, %v3146
    %v3178 = vsel %vm3116, %v3085, %v3147
    %v3179 = vsel %vm3117, %v3086, %v3148
    %v3180 = vsel %vm3118, %v3087, %v3149
    %v3181 = vsel %vm3119, %v3088, %v3150
    %v3182 = vsel %vm3120, %v3089, %v3151
    %v3183 = vsel %vm3121, %v3090, %v3152
    %v3184 = vsel %vm3122, %v3091, %v3153
    %v3185 = vsel %vm3123, %v3092, %v3154
    %v3186 = vsel %vm3124, %v3093, %v3155
    %v3187 = vsel %vm3125, %v3094, %v3156
    %v3188 = vsel %vm3126, %v3095, %v3157
    %v3189 = vsel %vm3127, %v3096, %v3158
    %v3190 = vsel %vm3128, %v3097, %v3159
    %v3191 = vsel %vm3129, %v3098, %v3160
    %v3192 = vsel %vm3130, %v3099, %v3161
    %v3193 = vsel %vm3131, %v3100, %v3162
    %v3194 = vsel %vm3132, %v3101, %v3163
    %v3195 = vmul.f32 %v3164, %v1878
    %v3196 = vmul.f32 %v3165, %v1883
    %v3197 = vmul.f32 %v3166, %v1888
    %v3198 = vmul.f32 %v3167, %v1892
    %v3199 = vmul.f32 %v3168, %v1896
    %v3200 = vmul.f32 %v3169, %v1900
    %v3201 = vmul.f32 %v3170, %v1904
    %v3202 = vmul.f32 %v3171, %v1908
    %v3203 = vmul.f32 %v3172, %v1912
    %v3204 = vmul.f32 %v3173, %v1916
    %v3205 = vmul.f32 %v3174, %v1920
    %v3206 = vmul.f32 %v3175, %v1924
    %v3207 = vmul.f32 %v3176, %v1928
    %v3208 = vmul.f32 %v3177, %v1932
    %v3209 = vmul.f32 %v3178, %v1936
    %v3210 = vmul.f32 %v3179, %v1940
    %v3211 = vmul.f32 %v3180, %v1944
    %v3212 = vmul.f32 %v3181, %v1948
    %v3213 = vmul.f32 %v3182, %v1952
    %v3214 = vmul.f32 %v3183, %v1956
    %v3215 = vmul.f32 %v3184, %v1960
    %v3216 = vmul.f32 %v3185, %v1964
    %v3217 = vmul.f32 %v3186, %v1968
    %v3218 = vmul.f32 %v3187, %v1972
    %v3219 = vmul.f32 %v3188, %v1976
    %v3220 = vmul.f32 %v3189, %v1980
    %v3221 = vmul.f32 %v3190, %v1984
    %v3222 = vmul.f32 %v3191, %v1988
    %v3223 = vmul.f32 %v3192, %v1992
    %v3224 = vmul.f32 %v3193, %v1996
    %v3225 = vmul.f32 %v3194, %v2001
    %v3226 = vld [vmem:[%s2 + $0x28] sm:$0xff]
    %v3227 = vld [vmem:[%s2 + $0x30] sm:$0xff]
    %v3228 = vld [vmem:[%s2 + $0x38] sm:$0xff]
    %v3229 = vld [vmem:[%s2 + $0x40] sm:$0xff]
    %v3231 = vsel %vm2043, %v3195, 0
    %v3234 = vsel %vm2043, %v3196, 0
    %v3237 = vsel %vm2043, %v3197, 0
    %v3240 = vsel %vm2043, %v3198, 0
    %v3243 = vsel %vm2043, %v3199, 0
    %v3246 = vsel %vm2043, %v3200, 0
    %v3249 = vsel %vm2043, %v3201, 0
    %v3252 = vsel %vm2043, %v3202, 0
    %v3255 = vsel %vm2043, %v3203, 0
    %v3258 = vsel %vm2043, %v3204, 0
    %v3261 = vsel %vm2043, %v3205, 0
    %v3264 = vsel %vm2043, %v3206, 0
    %v3267 = vsel %vm2043, %v3207, 0
    %v3270 = vsel %vm2043, %v3208, 0
    %v3273 = vsel %vm2043, %v3209, 0
    %v3276 = vsel %vm2043, %v3210, 0
    %v3279 = vsel %vm2043, %v3211, 0
    %v3282 = vsel %vm2043, %v3212, 0
    %v3285 = vsel %vm2043, %v3213, 0
    %v3288 = vsel %vm2043, %v3214, 0
    %v3291 = vsel %vm2043, %v3215, 0
    %v3294 = vsel %vm2043, %v3216, 0
    %v3297 = vsel %vm2043, %v3217, 0
    %v3300 = vsel %vm2043, %v3218, 0
    %v3303 = vsel %vm2043, %v3219, 0
    %v3306 = vsel %vm2043, %v3220, 0
    %v3309 = vsel %vm2043, %v3221, 0
    %v3312 = vsel %vm2043, %v3222, 0
    %v3315 = vsel %vm2043, %v3223, 0
    %v3318 = vsel %vm2043, %v3224, 0
    %v3321 = vsel %vm2043, %v3225, 0
    %3323 = vmatprep.subr.mxu0 0.0
    %3324 = vmatpush1.msra.mxu0 %v3226
    %3325 = vmatprep.subr.mxu0 0.0
    %3326 = vmatpush1.msra.mxu0 %v3227
    %3327 = vmatprep.subr.mxu0 0.0
    %3328 = vmatpush1.msra.mxu0 %v3228
    %3329 = vmatprep.subr.mxu0 0.0
    %3330 = vmatpush1.msra.mxu0 %v3229
    %3331 = vmatprep.subr.mxu0 0.0
    %3332 = vmatpush1.msra.mxu0 0.0
    %3333 = vmatprep.subr.mxu0 0.0
    %3334 = vmatpush1.msra.mxu0 0.0
    %3335 = vmatprep.subr.mxu0 0.0
    %3336 = vmatpush1.msra.mxu0 0.0
    %3337 = vmatprep.subr.mxu0 0.0
    %3338 = vmatpush1.msra.mxu0 0.0
    %3339 = vmatprep.subr.mxu0 0.0
    %3340 = vmatpush1.msra.mxu0 0.0
    %3341 = vmatprep.subr.mxu0 0.0
    %3342 = vmatpush1.msra.mxu0 0.0
    %3343 = vmatprep.subr.mxu0 0.0
    %3344 = vmatpush1.msra.mxu0 0.0
    %3345 = vmatprep.subr.mxu0 0.0
    %3346 = vmatpush1.msra.mxu0 0.0
    %3347 = vmatprep.subr.mxu0 0.0
    %3348 = vmatpush1.msra.mxu0 0.0
    %3349 = vmatprep.subr.mxu0 0.0
    %3350 = vmatpush1.msra.mxu0 0.0
    %3351 = vmatprep.subr.mxu0 0.0
    %3352 = vmatpush1.msra.mxu0 0.0
    %3353 = vmatprep.subr.mxu0 0.0
    %3354 = vmatpush1.msra.mxu0 0.0
    %3355 = vmatprep.subr.mxu0 0.0
    %3356 = vmatpush1.msra.mxu0 0.0
    %3357 = vmatprep.subr.mxu0 0.0
    %3358 = vmatpush1.msra.mxu0 0.0
    %3359 = vmatprep.subr.mxu0 0.0
    %3360 = vmatpush1.msra.mxu0 0.0
    %3361 = vmatprep.subr.mxu0 0.0
    %3362 = vmatpush1.msra.mxu0 0.0
    %3363 = vmatprep.subr.mxu0 0.0
    %3364 = vmatpush1.msra.mxu0 0.0
    %3365 = vmatprep.subr.mxu0 0.0
    %3366 = vmatpush1.msra.mxu0 0.0
    %3367 = vmatprep.subr.mxu0 0.0
    %3368 = vmatpush1.msra.mxu0 0.0
    %3369 = vmatprep.subr.mxu0 0.0
    %3370 = vmatpush1.msra.mxu0 0.0
    %3371 = vmatprep.subr.mxu0 0.0
    %3372 = vmatpush1.msra.mxu0 0.0
    %3373 = vmatprep.subr.mxu0 0.0
    %3374 = vmatpush1.msra.mxu0 0.0
    %3375 = vmatprep.subr.mxu0 0.0
    %3376 = vmatpush1.msra.mxu0 0.0
    %3377 = vmatprep.subr.mxu0 0.0
    %3378 = vmatpush1.msra.mxu0 0.0
    %3379 = vmatprep.subr.mxu0 0.0
    %3380 = vmatpush1.msra.mxu0 0.0
    %3381 = vmatprep.subr.mxu0 0.0
    %3382 = vmatpush1.msra.mxu0 0.0
    %3383 = vmatprep.subr.mxu0 0.0
    %3384 = vmatpush1.msra.mxu0 0.0
    %3385 = vmatprep.subr.mxu0 0.0
    %3386 = vmatpush1.msra.mxu0 0.0
    %3387 = vmatprep.mubr.f32.mxu0 0.0
    %3388 = vmatmul.mubr.f32.gmra.mrb[0].mxu0 %v3231
    %v3389 = vpop.f32.mrb[0].mxu0
    %v3390 = vadd.f32 0.0, %v3389
    %v3391 = vpop.f32.mrb[0].mxu0
    %3392 = vmatprep.mubr.f32.mxu0 0.0
    %3393 = vmatmul.mubr.f32.gmra.mrb[0].mxu0 %v3234
    %v3394 = vpop.f32.mrb[0].mxu0
    %v3395 = vadd.f32 0.0, %v3394
    %v3396 = vpop.f32.mrb[0].mxu0
    %3397 = vmatprep.mubr.f32.mxu0 0.0
    %3398 = vmatmul.mubr.f32.gmra.mrb[0].mxu0 %v3237
    %v3399 = vpop.f32.mrb[0].mxu0
    %v3400 = vadd.f32 0.0, %v3399
    %v3401 = vpop.f32.mrb[0].mxu0
    %3402 = vmatprep.mubr.f32.mxu0 0.0
    %3403 = vmatmul.mubr.f32.gmra.mrb[0].mxu0 %v3240
    %v3404 = vpop.f32.mrb[0].mxu0
    %v3405 = vadd.f32 0.0, %v3404
    %v3406 = vpop.f32.mrb[0].mxu0
    %3407 = vmatprep.mubr.f32.mxu0 0.0
    %3408 = vmatmul.mubr.f32.gmra.mrb[0].mxu0 %v3243
    %v3409 = vpop.f32.mrb[0].mxu0
    %v3410 = vadd.f32 0.0, %v3409
    %v3411 = vpop.f32.mrb[0].mxu0
    %3412 = vmatprep.mubr.f32.mxu0 0.0
    %3413 = vmatmul.mubr.f32.gmra.mrb[0].mxu0 %v3246
    %v3414 = vpop.f32.mrb[0].mxu0
    %v3415 = vadd.f32 0.0, %v3414
    %v3416 = vpop.f32.mrb[0].mxu0
    %3417 = vmatprep.mubr.f32.mxu0 0.0
    %3418 = vmatmul.mubr.f32.gmra.mrb[0].mxu0 %v3249
    %v3419 = vpop.f32.mrb[0].mxu0
    %v3420 = vadd.f32 0.0, %v3419
    %v3421 = vpop.f32.mrb[0].mxu0
    %3422 = vmatprep.mubr.f32.mxu0 0.0
    %3423 = vmatmul.mubr.f32.gmra.mrb[0].mxu0 %v3252
    %v3424 = vpop.f32.mrb[0].mxu0
    %v3425 = vadd.f32 0.0, %v3424
    %v3426 = vpop.f32.mrb[0].mxu0
    %3427 = vmatprep.mubr.f32.mxu0 0.0
    %3428 = vmatmul.mubr.f32.gmra.mrb[0].mxu0 %v3255
    %v3429 = vpop.f32.mrb[0].mxu0
    %v3430 = vadd.f32 0.0, %v3429
    %v3431 = vpop.f32.mrb[0].mxu0
    %3432 = vmatprep.mubr.f32.mxu0 0.0
    %3433 = vmatmul.mubr.f32.gmra.mrb[0].mxu0 %v3258
    %v3434 = vpop.f32.mrb[0].mxu0
    %v3435 = vadd.f32 0.0, %v3434
    %v3436 = vpop.f32.mrb[0].mxu0
    %3437 = vmatprep.mubr.f32.mxu0 0.0
    %3438 = vmatmul.mubr.f32.gmra.mrb[0].mxu0 %v3261
    %v3439 = vpop.f32.mrb[0].mxu0
    %v3440 = vadd.f32 0.0, %v3439
    %v3441 = vpop.f32.mrb[0].mxu0
    %3442 = vmatprep.mubr.f32.mxu0 0.0
    %3443 = vmatmul.mubr.f32.gmra.mrb[0].mxu0 %v3264
    %v3444 = vpop.f32.mrb[0].mxu0
    %v3445 = vadd.f32 0.0, %v3444
    %v3446 = vpop.f32.mrb[0].mxu0
    %3447 = vmatprep.mubr.f32.mxu0 0.0
    %3448 = vmatmul.mubr.f32.gmra.mrb[0].mxu0 %v3267
    %v3449 = vpop.f32.mrb[0].mxu0
    %v3450 = vadd.f32 0.0, %v3449
    %v3451 = vpop.f32.mrb[0].mxu0
    %3452 = vmatprep.mubr.f32.mxu0 0.0
    %3453 = vmatmul.mubr.f32.gmra.mrb[0].mxu0 %v3270
    %v3454 = vpop.f32.mrb[0].mxu0
    %v3455 = vadd.f32 0.0, %v3454
    %v3456 = vpop.f32.mrb[0].mxu0
    %3457 = vmatprep.mubr.f32.mxu0 0.0
    %3458 = vmatmul.mubr.f32.gmra.mrb[0].mxu0 %v3273
    %v3459 = vpop.f32.mrb[0].mxu0
    %v3460 = vadd.f32 0.0, %v3459
    %v3461 = vpop.f32.mrb[0].mxu0
    %3462 = vmatprep.mubr.f32.mxu0 0.0
    %3463 = vmatmul.mubr.f32.gmra.mrb[0].mxu0 %v3276
    %v3464 = vpop.f32.mrb[0].mxu0
    %v3465 = vadd.f32 0.0, %v3464
    %v3466 = vpop.f32.mrb[0].mxu0
    %3467 = vmatprep.mubr.f32.mxu0 0.0
    %3468 = vmatmul.mubr.f32.gmra.mrb[0].mxu0 %v3279
    %v3469 = vpop.f32.mrb[0].mxu0
    %v3470 = vadd.f32 0.0, %v3469
    %v3471 = vpop.f32.mrb[0].mxu0
    %3472 = vmatprep.mubr.f32.mxu0 0.0
    %3473 = vmatmul.mubr.f32.gmra.mrb[0].mxu0 %v3282
    %v3474 = vpop.f32.mrb[0].mxu0
    %v3475 = vadd.f32 0.0, %v3474
    %v3476 = vpop.f32.mrb[0].mxu0
    %3477 = vmatprep.mubr.f32.mxu0 0.0
    %3478 = vmatmul.mubr.f32.gmra.mrb[0].mxu0 %v3285
    %v3479 = vpop.f32.mrb[0].mxu0
    %v3480 = vadd.f32 0.0, %v3479
    %v3481 = vpop.f32.mrb[0].mxu0
    %3482 = vmatprep.mubr.f32.mxu0 0.0
    %3483 = vmatmul.mubr.f32.gmra.mrb[0].mxu0 %v3288
    %v3484 = vpop.f32.mrb[0].mxu0
    %v3485 = vadd.f32 0.0, %v3484
    %v3486 = vpop.f32.mrb[0].mxu0
    %3487 = vmatprep.mubr.f32.mxu0 0.0
    %3488 = vmatmul.mubr.f32.gmra.mrb[0].mxu0 %v3291
    %v3489 = vpop.f32.mrb[0].mxu0
    %v3490 = vadd.f32 0.0, %v3489
    %v3491 = vpop.f32.mrb[0].mxu0
    %3492 = vmatprep.mubr.f32.mxu0 0.0
    %3493 = vmatmul.mubr.f32.gmra.mrb[0].mxu0 %v3294
    %v3494 = vpop.f32.mrb[0].mxu0
    %v3495 = vadd.f32 0.0, %v3494
    %v3496 = vpop.f32.mrb[0].mxu0
    %3497 = vmatprep.mubr.f32.mxu0 0.0
    %3498 = vmatmul.mubr.f32.gmra.mrb[0].mxu0 %v3297
    %v3499 = vpop.f32.mrb[0].mxu0
    %v3500 = vadd.f32 0.0, %v3499
    %v3501 = vpop.f32.mrb[0].mxu0
    %3502 = vmatprep.mubr.f32.mxu0 0.0
    %3503 = vmatmul.mubr.f32.gmra.mrb[0].mxu0 %v3300
    %v3504 = vpop.f32.mrb[0].mxu0
    %v3505 = vadd.f32 0.0, %v3504
    %v3506 = vpop.f32.mrb[0].mxu0
    %3507 = vmatprep.mubr.f32.mxu0 0.0
    %3508 = vmatmul.mubr.f32.gmra.mrb[0].mxu0 %v3303
    %v3509 = vpop.f32.mrb[0].mxu0
    %v3510 = vadd.f32 0.0, %v3509
    %v3511 = vpop.f32.mrb[0].mxu0
    %3512 = vmatprep.mubr.f32.mxu0 0.0
    %3513 = vmatmul.mubr.f32.gmra.mrb[0].mxu0 %v3306
    %v3514 = vpop.f32.mrb[0].mxu0
    %v3515 = vadd.f32 0.0, %v3514
    %v3516 = vpop.f32.mrb[0].mxu0
    %3517 = vmatprep.mubr.f32.mxu0 0.0
    %3518 = vmatmul.mubr.f32.gmra.mrb[0].mxu0 %v3309
    %v3519 = vpop.f32.mrb[0].mxu0
    %v3520 = vadd.f32 0.0, %v3519
    %v3521 = vpop.f32.mrb[0].mxu0
    %3522 = vmatprep.mubr.f32.mxu0 0.0
    %3523 = vmatmul.mubr.f32.gmra.mrb[0].mxu0 %v3312
    %v3524 = vpop.f32.mrb[0].mxu0
    %v3525 = vadd.f32 0.0, %v3524
    %v3526 = vpop.f32.mrb[0].mxu0
    %3527 = vmatprep.mubr.f32.mxu0 0.0
    %3528 = vmatmul.mubr.f32.gmra.mrb[0].mxu0 %v3315
    %v3529 = vpop.f32.mrb[0].mxu0
    %v3530 = vadd.f32 0.0, %v3529
    %v3531 = vpop.f32.mrb[0].mxu0
    %3532 = vmatprep.mubr.f32.mxu0 0.0
    %3533 = vmatmul.mubr.f32.gmra.mrb[0].mxu0 %v3318
    %v3534 = vpop.f32.mrb[0].mxu0
    %v3535 = vadd.f32 0.0, %v3534
    %v3536 = vpop.f32.mrb[0].mxu0
    %3537 = vmatprep.mubr.f32.mxu0 0.0
    %3538 = vmatmul.mubr.f32.gmra.mrb[0].mxu0 %v3321
    %v3539 = vpop.f32.mrb[0].mxu0
    %v3540 = vadd.f32 0.0, %v3539
    %v3541 = vpop.f32.mrb[0].mxu0
    %3542 = vdwg.mxu0
    %v3543 = vmul.f32 %v3390, %v1878
    %v3544 = vmul.f32 %v3395, %v1883
    %v3545 = vmul.f32 %v3400, %v1888
    %v3546 = vmul.f32 %v3405, %v1892
    %v3547 = vmul.f32 %v3410, %v1896
    %v3548 = vmul.f32 %v3415, %v1900
    %v3549 = vmul.f32 %v3420, %v1904
    %v3550 = vmul.f32 %v3425, %v1908
    %v3551 = vmul.f32 %v3430, %v1912
    %v3552 = vmul.f32 %v3435, %v1916
    %v3553 = vmul.f32 %v3440, %v1920
    %v3554 = vmul.f32 %v3445, %v1924
    %v3555 = vmul.f32 %v3450, %v1928
    %v3556 = vmul.f32 %v3455, %v1932
    %v3557 = vmul.f32 %v3460, %v1936
    %v3558 = vmul.f32 %v3465, %v1940
    %v3559 = vmul.f32 %v3470, %v1944
    %v3560 = vmul.f32 %v3475, %v1948
    %v3561 = vmul.f32 %v3480, %v1952
    %v3562 = vmul.f32 %v3485, %v1956
    %v3563 = vmul.f32 %v3490, %v1960
    %v3564 = vmul.f32 %v3495, %v1964
    %v3565 = vmul.f32 %v3500, %v1968
    %v3566 = vmul.f32 %v3505, %v1972
    %v3567 = vmul.f32 %v3510, %v1976
    %v3568 = vmul.f32 %v3515, %v1980
    %v3569 = vmul.f32 %v3520, %v1984
    %v3570 = vmul.f32 %v3525, %v1988
    %v3571 = vmul.f32 %v3530, %v1992
    %v3572 = vmul.f32 %v3535, %v1996
    %v3573 = vmul.f32 %v3540, %v2001
    %v3574 = vmul.f32 %v3543, %v3543
    %v3575 = vmul.f32 %v3544, %v3544
    %v3576 = vmul.f32 %v3545, %v3545
    %v3577 = vmul.f32 %v3546, %v3546
    %v3578 = vmul.f32 %v3547, %v3547
    %v3579 = vmul.f32 %v3548, %v3548
    %v3580 = vmul.f32 %v3549, %v3549
    %v3581 = vmul.f32 %v3550, %v3550
    %v3582 = vmul.f32 %v3551, %v3551
    %v3583 = vmul.f32 %v3552, %v3552
    %v3584 = vmul.f32 %v3553, %v3553
    %v3585 = vmul.f32 %v3554, %v3554
    %v3586 = vmul.f32 %v3555, %v3555
    %v3587 = vmul.f32 %v3556, %v3556
    %v3588 = vmul.f32 %v3557, %v3557
    %v3589 = vmul.f32 %v3558, %v3558
    %v3590 = vmul.f32 %v3559, %v3559
    %v3591 = vmul.f32 %v3560, %v3560
    %v3592 = vmul.f32 %v3561, %v3561
    %v3593 = vmul.f32 %v3562, %v3562
    %v3594 = vmul.f32 %v3563, %v3563
    %v3595 = vmul.f32 %v3564, %v3564
    %v3596 = vmul.f32 %v3565, %v3565
    %v3597 = vmul.f32 %v3566, %v3566
    %v3598 = vmul.f32 %v3567, %v3567
    %v3599 = vmul.f32 %v3568, %v3568
    %v3600 = vmul.f32 %v3569, %v3569
    %v3601 = vmul.f32 %v3570, %v3570
    %v3602 = vmul.f32 %v3571, %v3571
    %v3603 = vmul.f32 %v3572, %v3572
    %v3604 = vmul.f32 %v3573, %v3573
    %3636 = vrot.lane.b32.xlu0 %v3574, 4
    %v3637 = vpop.permute.xlu0 %3636
    %3638 = vrot.lane.b32.xlu0 %v3575, 4
    %v3639 = vpop.permute.xlu0 %3638
    %3640 = vrot.lane.b32.xlu0 %v3576, 4
    %v3641 = vpop.permute.xlu0 %3640
    %3642 = vrot.lane.b32.xlu0 %v3577, 4
    %v3643 = vpop.permute.xlu0 %3642
    %3644 = vrot.lane.b32.xlu0 %v3578, 4
    %v3645 = vpop.permute.xlu0 %3644
    %3646 = vrot.lane.b32.xlu0 %v3579, 4
    %v3647 = vpop.permute.xlu0 %3646
    %3648 = vrot.lane.b32.xlu0 %v3580, 4
    %v3649 = vpop.permute.xlu0 %3648
    %3650 = vrot.lane.b32.xlu0 %v3581, 4
    %v3651 = vpop.permute.xlu0 %3650
    %3652 = vrot.lane.b32.xlu0 %v3582, 4
    %v3653 = vpop.permute.xlu0 %3652
    %3654 = vrot.lane.b32.xlu0 %v3583, 4
    %v3655 = vpop.permute.xlu0 %3654
    %3656 = vrot.lane.b32.xlu0 %v3584, 4
    %v3657 = vpop.permute.xlu0 %3656
    %3658 = vrot.lane.b32.xlu0 %v3585, 4
    %v3659 = vpop.permute.xlu0 %3658
    %3660 = vrot.lane.b32.xlu0 %v3586, 4
    %v3661 = vpop.permute.xlu0 %3660
    %3662 = vrot.lane.b32.xlu0 %v3587, 4
    %v3663 = vpop.permute.xlu0 %3662
    %3664 = vrot.lane.b32.xlu0 %v3588, 4
    %v3665 = vpop.permute.xlu0 %3664
    %3666 = vrot.lane.b32.xlu0 %v3589, 4
    %v3667 = vpop.permute.xlu0 %3666
    %3668 = vrot.lane.b32.xlu0 %v3590, 4
    %v3669 = vpop.permute.xlu0 %3668
    %3670 = vrot.lane.b32.xlu0 %v3591, 4
    %v3671 = vpop.permute.xlu0 %3670
    %3672 = vrot.lane.b32.xlu0 %v3592, 4
    %v3673 = vpop.permute.xlu0 %3672
    %3674 = vrot.lane.b32.xlu0 %v3593, 4
    %v3675 = vpop.permute.xlu0 %3674
    %3676 = vrot.lane.b32.xlu0 %v3594, 4
    %v3677 = vpop.permute.xlu0 %3676
    %3678 = vrot.lane.b32.xlu0 %v3595, 4
    %v3679 = vpop.permute.xlu0 %3678
    %3680 = vrot.lane.b32.xlu0 %v3596, 4
    %v3681 = vpop.permute.xlu0 %3680
    %3682 = vrot.lane.b32.xlu0 %v3597, 4
    %v3683 = vpop.permute.xlu0 %3682
    %3684 = vrot.lane.b32.xlu0 %v3598, 4
    %v3685 = vpop.permute.xlu0 %3684
    %3686 = vrot.lane.b32.xlu0 %v3599, 4
    %v3687 = vpop.permute.xlu0 %3686
    %3688 = vrot.lane.b32.xlu0 %v3600, 4
    %v3689 = vpop.permute.xlu0 %3688
    %3690 = vrot.lane.b32.xlu0 %v3601, 4
    %v3691 = vpop.permute.xlu0 %3690
    %3692 = vrot.lane.b32.xlu0 %v3602, 4
    %v3693 = vpop.permute.xlu0 %3692
    %3694 = vrot.lane.b32.xlu0 %v3603, 4
    %v3695 = vpop.permute.xlu0 %3694
    %3696 = vrot.lane.b32.xlu0 %v3604, 4
    %v3697 = vpop.permute.xlu0 %3696
    %v3729 = vsel %vm1390, %v3543, %v3637
    %v3730 = vsel %vm1390, %v3544, %v3639
    %v3731 = vsel %vm1390, %v3545, %v3641
    %v3732 = vsel %vm1390, %v3546, %v3643
    %v3733 = vsel %vm1390, %v3547, %v3645
    %v3734 = vsel %vm1390, %v3548, %v3647
    %v3735 = vsel %vm1390, %v3549, %v3649
    %v3736 = vsel %vm1390, %v3550, %v3651
    %v3737 = vsel %vm1390, %v3551, %v3653
    %v3738 = vsel %vm1390, %v3552, %v3655
    %v3739 = vsel %vm1390, %v3553, %v3657
    %v3740 = vsel %vm1390, %v3554, %v3659
    %v3741 = vsel %vm1390, %v3555, %v3661
    %v3742 = vsel %vm1390, %v3556, %v3663
    %v3743 = vsel %vm1390, %v3557, %v3665
    %v3744 = vsel %vm1390, %v3558, %v3667
    %v3745 = vsel %vm1390, %v3559, %v3669
    %v3746 = vsel %vm1390, %v3560, %v3671
    %v3747 = vsel %vm1390, %v3561, %v3673
    %v3748 = vsel %vm1390, %v3562, %v3675
    %v3749 = vsel %vm1390, %v3563, %v3677
    %v3750 = vsel %vm1390, %v3564, %v3679
    %v3751 = vsel %vm1390, %v3565, %v3681
    %v3752 = vsel %vm1390, %v3566, %v3683
    %v3753 = vsel %vm1390, %v3567, %v3685
    %v3754 = vsel %vm1390, %v3568, %v3687
    %v3755 = vsel %vm1390, %v3569, %v3689
    %v3756 = vsel %vm1390, %v3570, %v3691
    %v3757 = vsel %vm1390, %v3571, %v3693
    %v3758 = vsel %vm1390, %v3572, %v3695
    %v3759 = vsel %vm1390, %v3573, %v3697
    %v3760 = vsel %vm1518, %v3729, 0.0
    %v3761 = vsel %vm1518, %v3730, 0.0
    %v3762 = vadd.f32 %v3760, %v3761
    %v3763 = vsel %vm1518, %v3731, 0.0
    %v3764 = vadd.f32 %v3762, %v3763
    %v3765 = vsel %vm1518, %v3732, 0.0
    %v3766 = vadd.f32 %v3764, %v3765
    %v3767 = vsel %vm1518, %v3733, 0.0
    %v3768 = vadd.f32 %v3766, %v3767
    %v3769 = vsel %vm1518, %v3734, 0.0
    %v3770 = vadd.f32 %v3768, %v3769
    %v3771 = vsel %vm1518, %v3735, 0.0
    %v3772 = vadd.f32 %v3770, %v3771
    %v3773 = vsel %vm1518, %v3736, 0.0
    %v3774 = vadd.f32 %v3772, %v3773
    %v3775 = vsel %vm1518, %v3737, 0.0
    %v3776 = vadd.f32 %v3774, %v3775
    %v3777 = vsel %vm1518, %v3738, 0.0
    %v3778 = vadd.f32 %v3776, %v3777
    %v3779 = vsel %vm1518, %v3739, 0.0
    %v3780 = vadd.f32 %v3778, %v3779
    %v3781 = vsel %vm1518, %v3740, 0.0
    %v3782 = vadd.f32 %v3780, %v3781
    %v3783 = vsel %vm1518, %v3741, 0.0
    %v3784 = vadd.f32 %v3782, %v3783
    %v3785 = vsel %vm1518, %v3742, 0.0
    %v3786 = vadd.f32 %v3784, %v3785
    %v3787 = vsel %vm1518, %v3743, 0.0
    %v3788 = vadd.f32 %v3786, %v3787
    %v3789 = vsel %vm1518, %v3744, 0.0
    %v3790 = vadd.f32 %v3788, %v3789
    %v3791 = vsel %vm1518, %v3745, 0.0
    %v3792 = vadd.f32 %v3790, %v3791
    %v3793 = vsel %vm1518, %v3746, 0.0
    %v3794 = vadd.f32 %v3792, %v3793
    %v3795 = vsel %vm1518, %v3747, 0.0
    %v3796 = vadd.f32 %v3794, %v3795
    %v3797 = vsel %vm1518, %v3748, 0.0
    %v3798 = vadd.f32 %v3796, %v3797
    %v3799 = vsel %vm1518, %v3749, 0.0
    %v3800 = vadd.f32 %v3798, %v3799
    %v3801 = vsel %vm1518, %v3750, 0.0
    %v3802 = vadd.f32 %v3800, %v3801
    %v3803 = vsel %vm1518, %v3751, 0.0
    %v3804 = vadd.f32 %v3802, %v3803
    %v3805 = vsel %vm1518, %v3752, 0.0
    %v3806 = vadd.f32 %v3804, %v3805
    %v3807 = vsel %vm1518, %v3753, 0.0
    %v3808 = vadd.f32 %v3806, %v3807
    %v3809 = vsel %vm1518, %v3754, 0.0
    %v3810 = vadd.f32 %v3808, %v3809
    %v3811 = vsel %vm1518, %v3755, 0.0
    %v3812 = vadd.f32 %v3810, %v3811
    %v3813 = vsel %vm1518, %v3756, 0.0
    %v3814 = vadd.f32 %v3812, %v3813
    %v3815 = vsel %vm1518, %v3757, 0.0
    %v3816 = vadd.f32 %v3814, %v3815
    %v3817 = vsel %vm1518, %v3758, 0.0
    %v3818 = vadd.f32 %v3816, %v3817
    %vm3819 = vcmask 58368
    %v3820 = vsel %vm3819, %v3759, 0.0
    %v3821 = vadd.f32 %v3818, %v3820
    %v3822 = vrot.slane %v3821, 4
    %v3823 = vadd.f32 %v3821, %v3822
    %v3824 = vrot.slane %v3823, 2
    %v3825 = vadd.f32 %v3823, %v3824
    %v3826 = vrot.slane %v3825, 1
    %v3827 = vadd.f32 %v3825, %v3826
    %v3828 = vmul.f32 %v3827, 0.0061728396
    %v3829 = vmul.f32 %v3828, %v3828
    %3831 = vrot.lane.b32.xlu0 %v3829, 4
    %v3832 = vpop.permute.xlu0 %3831
    %v3834 = vsub.f32 %v3828, %v3832
    %v3835 = vmax.f32 %v3834, 0.0
    %v3836 = vsub.f32 %v3390, %v3828
    %v3837 = vsub.f32 %v3395, %v3828
    %v3838 = vsub.f32 %v3400, %v3828
    %v3839 = vsub.f32 %v3405, %v3828
    %v3840 = vsub.f32 %v3410, %v3828
    %v3841 = vsub.f32 %v3415, %v3828
    %v3842 = vsub.f32 %v3420, %v3828
    %v3843 = vsub.f32 %v3425, %v3828
    %v3844 = vsub.f32 %v3430, %v3828
    %v3845 = vsub.f32 %v3435, %v3828
    %v3846 = vsub.f32 %v3440, %v3828
    %v3847 = vsub.f32 %v3445, %v3828
    %v3848 = vsub.f32 %v3450, %v3828
    %v3849 = vsub.f32 %v3455, %v3828
    %v3850 = vsub.f32 %v3460, %v3828
    %v3851 = vsub.f32 %v3465, %v3828
    %v3852 = vsub.f32 %v3470, %v3828
    %v3853 = vsub.f32 %v3475, %v3828
    %v3854 = vsub.f32 %v3480, %v3828
    %v3855 = vsub.f32 %v3485, %v3828
    %v3856 = vsub.f32 %v3490, %v3828
    %v3857 = vsub.f32 %v3495, %v3828
    %v3858 = vsub.f32 %v3500, %v3828
    %v3859 = vsub.f32 %v3505, %v3828
    %v3860 = vsub.f32 %v3510, %v3828
    %v3861 = vsub.f32 %v3515, %v3828
    %v3862 = vsub.f32 %v3520, %v3828
    %v3863 = vsub.f32 %v3525, %v3828
    %v3864 = vsub.f32 %v3530, %v3828
    %v3865 = vsub.f32 %v3535, %v3828
    %v3866 = vsub.f32 %v3540, %v3828
    %v3867 = vadd.f32 %v3835, 1e-05
    %v3868 = vrsqrt.pop %v3867
    %v3869 = vlaneseq
    %v3870 = vshrl.u32 %v3869, 7
    %v3871 = vsub.s32 0, %v3870
    %v3872 = vrot.slane %v3868, %v3871
    %3874 = vrot.lane.b32.xlu0 %v3872, 124
    %v3875 = vpop.permute.xlu0 %3874
    %v3877 = vmul.f32 %v3836, %v3875
    %v3878 = vmul.f32 %v3837, %v3875
    %v3879 = vmul.f32 %v3838, %v3875
    %v3880 = vmul.f32 %v3839, %v3875
    %v3881 = vmul.f32 %v3840, %v3875
    %v3882 = vmul.f32 %v3841, %v3875
    %v3883 = vmul.f32 %v3842, %v3875
    %v3884 = vmul.f32 %v3843, %v3875
    %v3885 = vmul.f32 %v3844, %v3875
    %v3886 = vmul.f32 %v3845, %v3875
    %v3887 = vmul.f32 %v3846, %v3875
    %v3888 = vmul.f32 %v3847, %v3875
    %v3889 = vmul.f32 %v3848, %v3875
    %v3890 = vmul.f32 %v3849, %v3875
    %v3891 = vmul.f32 %v3850, %v3875
    %v3892 = vmul.f32 %v3851, %v3875
    %v3893 = vmul.f32 %v3852, %v3875
    %v3894 = vmul.f32 %v3853, %v3875
    %v3895 = vmul.f32 %v3854, %v3875
    %v3896 = vmul.f32 %v3855, %v3875
    %v3897 = vmul.f32 %v3856, %v3875
    %v3898 = vmul.f32 %v3857, %v3875
    %v3899 = vmul.f32 %v3858, %v3875
    %v3900 = vmul.f32 %v3859, %v3875
    %v3901 = vmul.f32 %v3860, %v3875
    %v3902 = vmul.f32 %v3861, %v3875
    %v3903 = vmul.f32 %v3862, %v3875
    %v3904 = vmul.f32 %v3863, %v3875
    %v3905 = vmul.f32 %v3864, %v3875
    %v3906 = vmul.f32 %v3865, %v3875
    %v3907 = vmul.f32 %v3866, %v3875
    %vm3908 = vcmp.ge.f32.partialorder %v3877, 0.0
    %vm3909 = vcmp.ge.f32.partialorder %v3878, 0.0
    %vm3910 = vcmp.ge.f32.partialorder %v3879, 0.0
    %vm3911 = vcmp.ge.f32.partialorder %v3880, 0.0
    %vm3912 = vcmp.ge.f32.partialorder %v3881, 0.0
    %vm3913 = vcmp.ge.f32.partialorder %v3882, 0.0
    %vm3914 = vcmp.ge.f32.partialorder %v3883, 0.0
    %vm3915 = vcmp.ge.f32.partialorder %v3884, 0.0
    %vm3916 = vcmp.ge.f32.partialorder %v3885, 0.0
    %vm3917 = vcmp.ge.f32.partialorder %v3886, 0.0
    %vm3918 = vcmp.ge.f32.partialorder %v3887, 0.0
    %vm3919 = vcmp.ge.f32.partialorder %v3888, 0.0
    %vm3920 = vcmp.ge.f32.partialorder %v3889, 0.0
    %vm3921 = vcmp.ge.f32.partialorder %v3890, 0.0
    %vm3922 = vcmp.ge.f32.partialorder %v3891, 0.0
    %vm3923 = vcmp.ge.f32.partialorder %v3892, 0.0
    %vm3924 = vcmp.ge.f32.partialorder %v3893, 0.0
    %vm3925 = vcmp.ge.f32.partialorder %v3894, 0.0
    %vm3926 = vcmp.ge.f32.partialorder %v3895, 0.0
    %vm3927 = vcmp.ge.f32.partialorder %v3896, 0.0
    %vm3928 = vcmp.ge.f32.partialorder %v3897, 0.0
    %vm3929 = vcmp.ge.f32.partialorder %v3898, 0.0
    %vm3930 = vcmp.ge.f32.partialorder %v3899, 0.0
    %vm3931 = vcmp.ge.f32.partialorder %v3900, 0.0
    %vm3932 = vcmp.ge.f32.partialorder %v3901, 0.0
    %vm3933 = vcmp.ge.f32.partialorder %v3902, 0.0
    %vm3934 = vcmp.ge.f32.partialorder %v3903, 0.0
    %vm3935 = vcmp.ge.f32.partialorder %v3904, 0.0
    %vm3936 = vcmp.ge.f32.partialorder %v3905, 0.0
    %vm3937 = vcmp.ge.f32.partialorder %v3906, 0.0
    %vm3938 = vcmp.ge.f32.partialorder %v3907, 0.0
    %v3939 = vmul.f32 %v3877, 0.01
    %v3940 = vmul.f32 %v3878, 0.01
    %v3941 = vmul.f32 %v3879, 0.01
    %v3942 = vmul.f32 %v3880, 0.01
    %v3943 = vmul.f32 %v3881, 0.01
    %v3944 = vmul.f32 %v3882, 0.01
    %v3945 = vmul.f32 %v3883, 0.01
    %v3946 = vmul.f32 %v3884, 0.01
    %v3947 = vmul.f32 %v3885, 0.01
    %v3948 = vmul.f32 %v3886, 0.01
    %v3949 = vmul.f32 %v3887, 0.01
    %v3950 = vmul.f32 %v3888, 0.01
    %v3951 = vmul.f32 %v3889, 0.01
    %v3952 = vmul.f32 %v3890, 0.01
    %v3953 = vmul.f32 %v3891, 0.01
    %v3954 = vmul.f32 %v3892, 0.01
    %v3955 = vmul.f32 %v3893, 0.01
    %v3956 = vmul.f32 %v3894, 0.01
    %v3957 = vmul.f32 %v3895, 0.01
    %v3958 = vmul.f32 %v3896, 0.01
    %v3959 = vmul.f32 %v3897, 0.01
    %v3960 = vmul.f32 %v3898, 0.01
    %v3961 = vmul.f32 %v3899, 0.01
    %v3962 = vmul.f32 %v3900, 0.01
    %v3963 = vmul.f32 %v3901, 0.01
    %v3964 = vmul.f32 %v3902, 0.01
    %v3965 = vmul.f32 %v3903, 0.01
    %v3966 = vmul.f32 %v3904, 0.01
    %v3967 = vmul.f32 %v3905, 0.01
    %v3968 = vmul.f32 %v3906, 0.01
    %v3969 = vmul.f32 %v3907, 0.01
    %v3970 = vsel %vm3908, %v3877, %v3939
    %v3971 = vsel %vm3909, %v3878, %v3940
    %v3972 = vsel %vm3910, %v3879, %v3941
    %v3973 = vsel %vm3911, %v3880, %v3942
    %v3974 = vsel %vm3912, %v3881, %v3943
    %v3975 = vsel %vm3913, %v3882, %v3944
    %v3976 = vsel %vm3914, %v3883, %v3945
    %v3977 = vsel %vm3915, %v3884, %v3946
    %v3978 = vsel %vm3916, %v3885, %v3947
    %v3979 = vsel %vm3917, %v3886, %v3948
    %v3980 = vsel %vm3918, %v3887, %v3949
    %v3981 = vsel %vm3919, %v3888, %v3950
    %v3982 = vsel %vm3920, %v3889, %v3951
    %v3983 = vsel %vm3921, %v3890, %v3952
    %v3984 = vsel %vm3922, %v3891, %v3953
    %v3985 = vsel %vm3923, %v3892, %v3954
    %v3986 = vsel %vm3924, %v3893, %v3955
    %v3987 = vsel %vm3925, %v3894, %v3956
    %v3988 = vsel %vm3926, %v3895, %v3957
    %v3989 = vsel %vm3927, %v3896, %v3958
    %v3990 = vsel %vm3928, %v3897, %v3959
    %v3991 = vsel %vm3929, %v3898, %v3960
    %v3992 = vsel %vm3930, %v3899, %v3961
    %v3993 = vsel %vm3931, %v3900, %v3962
    %v3994 = vsel %vm3932, %v3901, %v3963
    %v3995 = vsel %vm3933, %v3902, %v3964
    %v3996 = vsel %vm3934, %v3903, %v3965
    %v3997 = vsel %vm3935, %v3904, %v3966
    %v3998 = vsel %vm3936, %v3905, %v3967
    %v3999 = vsel %vm3937, %v3906, %v3968
    %v4000 = vsel %vm3938, %v3907, %v3969
    %v4001 = vmul.f32 %v3970, %v1878
    %v4002 = vmul.f32 %v3971, %v1883
    %v4003 = vmul.f32 %v3972, %v1888
    %v4004 = vmul.f32 %v3973, %v1892
    %v4005 = vmul.f32 %v3974, %v1896
    %v4006 = vmul.f32 %v3975, %v1900
    %v4007 = vmul.f32 %v3976, %v1904
    %v4008 = vmul.f32 %v3977, %v1908
    %v4009 = vmul.f32 %v3978, %v1912
    %v4010 = vmul.f32 %v3979, %v1916
    %v4011 = vmul.f32 %v3980, %v1920
    %v4012 = vmul.f32 %v3981, %v1924
    %v4013 = vmul.f32 %v3982, %v1928
    %v4014 = vmul.f32 %v3983, %v1932
    %v4015 = vmul.f32 %v3984, %v1936
    %v4016 = vmul.f32 %v3985, %v1940
    %v4017 = vmul.f32 %v3986, %v1944
    %v4018 = vmul.f32 %v3987, %v1948
    %v4019 = vmul.f32 %v3988, %v1952
    %v4020 = vmul.f32 %v3989, %v1956
    %v4021 = vmul.f32 %v3990, %v1960
    %v4022 = vmul.f32 %v3991, %v1964
    %v4023 = vmul.f32 %v3992, %v1968
    %v4024 = vmul.f32 %v3993, %v1972
    %v4025 = vmul.f32 %v3994, %v1976
    %v4026 = vmul.f32 %v3995, %v1980
    %v4027 = vmul.f32 %v3996, %v1984
    %v4028 = vmul.f32 %v3997, %v1988
    %v4029 = vmul.f32 %v3998, %v1992
    %v4030 = vmul.f32 %v3999, %v1996
    %v4031 = vmul.f32 %v4000, %v2001
    %4032 = vst.msk [vmem:[#allocation2] sm:$0xff] %vm1390, %v4001
    %4033 = vst.msk [vmem:[#allocation2 + $0x8] sm:$0xff] %vm1390, %v4002
    %4034 = vst.msk [vmem:[#allocation2 + $0x10] sm:$0xff] %vm1390, %v4003
    %4035 = vst.msk [vmem:[#allocation2 + $0x18] sm:$0xff] %vm1390, %v4004
    %4036 = vst.msk [vmem:[#allocation2 + $0x20] sm:$0xff] %vm1390, %v4005
    %4037 = vst.msk [vmem:[#allocation2 + $0x28] sm:$0xff] %vm1390, %v4006
    %4038 = vst.msk [vmem:[#allocation2 + $0x30] sm:$0xff] %vm1390, %v4007
    %4039 = vst.msk [vmem:[#allocation2 + $0x38] sm:$0xff] %vm1390, %v4008
    %4040 = vst.msk [vmem:[#allocation2 + $0x40] sm:$0xff] %vm1390, %v4009
    %4041 = vst.msk [vmem:[#allocation2 + $0x48] sm:$0xff] %vm1390, %v4010
    %4042 = vst.msk [vmem:[#allocation2 + $0x50] sm:$0xff] %vm1390, %v4011
    %4043 = vst.msk [vmem:[#allocation2 + $0x58] sm:$0xff] %vm1390, %v4012
    %4044 = vst.msk [vmem:[#allocation2 + $0x60] sm:$0xff] %vm1390, %v4013
    %4045 = vst.msk [vmem:[#allocation2 + $0x68] sm:$0xff] %vm1390, %v4014
    %4046 = vst.msk [vmem:[#allocation2 + $0x70] sm:$0xff] %vm1390, %v4015
    %4047 = vst.msk [vmem:[#allocation2 + $0x78] sm:$0xff] %vm1390, %v4016
    %4048 = vst.msk [vmem:[#allocation2 + $0x80] sm:$0xff] %vm1390, %v4017
    %4049 = vst.msk [vmem:[#allocation2 + $0x88] sm:$0xff] %vm1390, %v4018
    %4050 = vst.msk [vmem:[#allocation2 + $0x90] sm:$0xff] %vm1390, %v4019
    %4051 = vst.msk [vmem:[#allocation2 + $0x98] sm:$0xff] %vm1390, %v4020
    %4052 = vst.msk [vmem:[#allocation2 + $0xa0] sm:$0xff] %vm1390, %v4021
    %4053 = vst.msk [vmem:[#allocation2 + $0xa8] sm:$0xff] %vm1390, %v4022
    %4054 = vst.msk [vmem:[#allocation2 + $0xb0] sm:$0xff] %vm1390, %v4023
    %4055 = vst.msk [vmem:[#allocation2 + $0xb8] sm:$0xff] %vm1390, %v4024
    %4056 = vst.msk [vmem:[#allocation2 + $0xc0] sm:$0xff] %vm1390, %v4025
    %4057 = vst.msk [vmem:[#allocation2 + $0xc8] sm:$0xff] %vm1390, %v4026
    %4058 = vst.msk [vmem:[#allocation2 + $0xd0] sm:$0xff] %vm1390, %v4027
    %4059 = vst.msk [vmem:[#allocation2 + $0xd8] sm:$0xff] %vm1390, %v4028
    %4060 = vst.msk [vmem:[#allocation2 + $0xe0] sm:$0xff] %vm1390, %v4029
    %4061 = vst.msk [vmem:[#allocation2 + $0xe8] sm:$0xff] %vm1390, %v4030
    %vm4062 = vcmask 25600
    %4063 = vst.msk [vmem:[#allocation2 + $0xf0] sm:$0x3] %vm4062, %v4031
    %v4064 = vld [vmem:[#allocation2] sm:$0xff]
    %v4065 = vld [vmem:[#allocation2 + $0x8] sm:$0xff]
    %v4066 = vld [vmem:[#allocation2 + $0x10] sm:$0xff]
    %v4067 = vld [vmem:[#allocation2 + $0x18] sm:$0xff]
    %v4068 = vld [vmem:[#allocation2 + $0x20] sm:$0xff]
    %v4069 = vld [vmem:[#allocation2 + $0x28] sm:$0xff]
    %v4070 = vld [vmem:[#allocation2 + $0x30] sm:$0xff]
    %v4071 = vld [vmem:[#allocation2 + $0x38] sm:$0xff]
    %v4072 = vld [vmem:[#allocation2 + $0x40] sm:$0xff]
    %v4073 = vld [vmem:[#allocation2 + $0x48] sm:$0xff]
    %v4074 = vld [vmem:[#allocation2 + $0x50] sm:$0xff]
    %v4075 = vld [vmem:[#allocation2 + $0x58] sm:$0xff]
    %v4076 = vld [vmem:[#allocation2 + $0x60] sm:$0xff]
    %v4077 = vld [vmem:[#allocation2 + $0x68] sm:$0xff]
    %v4078 = vld [vmem:[#allocation2 + $0x70] sm:$0xff]
    %v4079 = vld [vmem:[#allocation2 + $0x78] sm:$0xff]
    %v4080 = vld [vmem:[#allocation2 + $0x80] sm:$0xff]
    %v4081 = vld [vmem:[#allocation2 + $0x88] sm:$0xff]
    %v4082 = vld [vmem:[#allocation2 + $0x90] sm:$0xff]
    %v4083 = vld [vmem:[#allocation2 + $0x98] sm:$0xff]
    %v4084 = vld [vmem:[#allocation2 + $0xa0] sm:$0xff]
    %v4085 = vld [vmem:[#allocation2 + $0xa8] sm:$0xff]
    %v4086 = vld [vmem:[#allocation2 + $0xb0] sm:$0xff]
    %v4087 = vld [vmem:[#allocation2 + $0xb8] sm:$0xff]
    %v4088 = vld [vmem:[#allocation2 + $0xc0] sm:$0xff]
    %v4089 = vld [vmem:[#allocation2 + $0xc8] sm:$0xff]
    %v4090 = vld [vmem:[#allocation2 + $0xd0] sm:$0xff]
    %v4091 = vld [vmem:[#allocation2 + $0xd8] sm:$0xff]
    %v4092 = vld [vmem:[#allocation2 + $0xe0] sm:$0xff]
    %v4093 = vld [vmem:[#allocation2 + $0xe8] sm:$0xff]
    %v4094 = vld [vmem:[#allocation2 + $0xf0] sm:$0x3]
    %v4095 = vld [vmem:[#allocation2 + $0x1] sm:$0xff]
    %v4096 = vld [vmem:[#allocation2 + $0x9] sm:$0xff]
    %v4097 = vld [vmem:[#allocation2 + $0x11] sm:$0xff]
    %v4098 = vld [vmem:[#allocation2 + $0x19] sm:$0xff]
    %v4099 = vld [vmem:[#allocation2 + $0x21] sm:$0xff]
    %v4100 = vld [vmem:[#allocation2 + $0x29] sm:$0xff]
    %v4101 = vld [vmem:[#allocation2 + $0x31] sm:$0xff]
    %v4102 = vld [vmem:[#allocation2 + $0x39] sm:$0xff]
    %v4103 = vld [vmem:[#allocation2 + $0x41] sm:$0xff]
    %v4104 = vld [vmem:[#allocation2 + $0x49] sm:$0xff]
    %v4105 = vld [vmem:[#allocation2 + $0x51] sm:$0xff]
    %v4106 = vld [vmem:[#allocation2 + $0x59] sm:$0xff]
    %v4107 = vld [vmem:[#allocation2 + $0x61] sm:$0xff]
    %v4108 = vld [vmem:[#allocation2 + $0x69] sm:$0xff]
    %v4109 = vld [vmem:[#allocation2 + $0x71] sm:$0xff]
    %v4110 = vld [vmem:[#allocation2 + $0x79] sm:$0xff]
    %v4111 = vld [vmem:[#allocation2 + $0x81] sm:$0xff]
    %v4112 = vld [vmem:[#allocation2 + $0x89] sm:$0xff]
    %v4113 = vld [vmem:[#allocation2 + $0x91] sm:$0xff]
    %v4114 = vld [vmem:[#allocation2 + $0x99] sm:$0xff]
    %v4115 = vld [vmem:[#allocation2 + $0xa1] sm:$0xff]
    %v4116 = vld [vmem:[#allocation2 + $0xa9] sm:$0xff]
    %v4117 = vld [vmem:[#allocation2 + $0xb1] sm:$0xff]
    %v4118 = vld [vmem:[#allocation2 + $0xb9] sm:$0xff]
    %v4119 = vld [vmem:[#allocation2 + $0xc1] sm:$0xff]
    %v4120 = vld [vmem:[#allocation2 + $0xc9] sm:$0xff]
    %v4121 = vld [vmem:[#allocation2 + $0xd1] sm:$0xff]
    %v4122 = vld [vmem:[#allocation2 + $0xd9] sm:$0xff]
    %v4123 = vld [vmem:[#allocation2 + $0xe1] sm:$0xff]
    %v4124 = vld [vmem:[#allocation2 + $0xe9] sm:$0xff]
    %v4125 = vld [vmem:[#allocation2 + $0xf1] sm:$0x3]
    %v4126 = vld [vmem:[#allocation2 + $0x2] sm:$0xff]
    %v4127 = vld [vmem:[#allocation2 + $0xa] sm:$0xff]
    %v4128 = vld [vmem:[#allocation2 + $0x12] sm:$0xff]
    %v4129 = vld [vmem:[#allocation2 + $0x1a] sm:$0xff]
    %v4130 = vld [vmem:[#allocation2 + $0x22] sm:$0xff]
    %v4131 = vld [vmem:[#allocation2 + $0x2a] sm:$0xff]
    %v4132 = vld [vmem:[#allocation2 + $0x32] sm:$0xff]
    %v4133 = vld [vmem:[#allocation2 + $0x3a] sm:$0xff]
    %v4134 = vld [vmem:[#allocation2 + $0x42] sm:$0xff]
    %v4135 = vld [vmem:[#allocation2 + $0x4a] sm:$0xff]
    %v4136 = vld [vmem:[#allocation2 + $0x52] sm:$0xff]
    %v4137 = vld [vmem:[#allocation2 + $0x5a] sm:$0xff]
    %v4138 = vld [vmem:[#allocation2 + $0x62] sm:$0xff]
    %v4139 = vld [vmem:[#allocation2 + $0x6a] sm:$0xff]
    %v4140 = vld [vmem:[#allocation2 + $0x72] sm:$0xff]
    %v4141 = vld [vmem:[#allocation2 + $0x7a] sm:$0xff]
    %v4142 = vld [vmem:[#allocation2 + $0x82] sm:$0xff]
    %v4143 = vld [vmem:[#allocation2 + $0x8a] sm:$0xff]
    %v4144 = vld [vmem:[#allocation2 + $0x92] sm:$0xff]
    %v4145 = vld [vmem:[#allocation2 + $0x9a] sm:$0xff]
    %v4146 = vld [vmem:[#allocation2 + $0xa2] sm:$0xff]
    %v4147 = vld [vmem:[#allocation2 + $0xaa] sm:$0xff]
    %v4148 = vld [vmem:[#allocation2 + $0xb2] sm:$0xff]
    %v4149 = vld [vmem:[#allocation2 + $0xba] sm:$0xff]
    %v4150 = vld [vmem:[#allocation2 + $0xc2] sm:$0xff]
    %v4151 = vld [vmem:[#allocation2 + $0xca] sm:$0xff]
    %v4152 = vld [vmem:[#allocation2 + $0xd2] sm:$0xff]
    %v4153 = vld [vmem:[#allocation2 + $0xda] sm:$0xff]
    %v4154 = vld [vmem:[#allocation2 + $0xe2] sm:$0xff]
    %v4155 = vld [vmem:[#allocation2 + $0xea] sm:$0xff]
    %v4156 = vld [vmem:[#allocation2 + $0xf2] sm:$0x3]
    %v4157 = vld [vmem:[#allocation2 + $0xb] sm:$0xff]
    %v4158 = vld [vmem:[#allocation2 + $0x13] sm:$0xff]
    %v4159 = vld [vmem:[#allocation2 + $0x1b] sm:$0xff]
    %v4160 = vld [vmem:[#allocation2 + $0x23] sm:$0xff]
    %v4161 = vld [vmem:[#allocation2 + $0x2b] sm:$0xff]
    %v4162 = vld [vmem:[#allocation2 + $0x33] sm:$0xff]
    %v4163 = vld [vmem:[#allocation2 + $0x3b] sm:$0xff]
    %v4164 = vld [vmem:[#allocation2 + $0x43] sm:$0xff]
    %v4165 = vld [vmem:[#allocation2 + $0x4b] sm:$0xff]
    %v4166 = vld [vmem:[#allocation2 + $0x53] sm:$0xff]
    %v4167 = vld [vmem:[#allocation2 + $0x5b] sm:$0xff]
    %v4168 = vld [vmem:[#allocation2 + $0x63] sm:$0xff]
    %v4169 = vld [vmem:[#allocation2 + $0x6b] sm:$0xff]
    %v4170 = vld [vmem:[#allocation2 + $0x73] sm:$0xff]
    %v4171 = vld [vmem:[#allocation2 + $0x7b] sm:$0xff]
    %v4172 = vld [vmem:[#allocation2 + $0x83] sm:$0xff]
    %v4173 = vld [vmem:[#allocation2 + $0x8b] sm:$0xff]
    %v4174 = vld [vmem:[#allocation2 + $0x93] sm:$0xff]
    %v4175 = vld [vmem:[#allocation2 + $0x9b] sm:$0xff]
    %v4176 = vld [vmem:[#allocation2 + $0xa3] sm:$0xff]
    %v4177 = vld [vmem:[#allocation2 + $0xab] sm:$0xff]
    %v4178 = vld [vmem:[#allocation2 + $0xb3] sm:$0xff]
    %v4179 = vld [vmem:[#allocation2 + $0xbb] sm:$0xff]
    %v4180 = vld [vmem:[#allocation2 + $0xc3] sm:$0xff]
    %v4181 = vld [vmem:[#allocation2 + $0xcb] sm:$0xff]
    %v4182 = vld [vmem:[#allocation2 + $0xd3] sm:$0xff]
    %v4183 = vld [vmem:[#allocation2 + $0xdb] sm:$0xff]
    %v4184 = vld [vmem:[#allocation2 + $0xe3] sm:$0xff]
    %v4185 = vld [vmem:[#allocation2 + $0xeb] sm:$0xff]
    %v4186 = vld [vmem:[#allocation2 + $0xf3] sm:$0xff]
    %v4187 = vld [vmem:[#allocation2 + $0xfb] sm:$0x3]
    %v4188 = vld [vmem:[#allocation2 + $0xc] sm:$0xff]
    %v4189 = vld [vmem:[#allocation2 + $0x14] sm:$0xff]
    %v4190 = vld [vmem:[#allocation2 + $0x1c] sm:$0xff]
    %v4191 = vld [vmem:[#allocation2 + $0x24] sm:$0xff]
    %v4192 = vld [vmem:[#allocation2 + $0x2c] sm:$0xff]
    %v4193 = vld [vmem:[#allocation2 + $0x34] sm:$0xff]
    %v4194 = vld [vmem:[#allocation2 + $0x3c] sm:$0xff]
    %v4195 = vld [vmem:[#allocation2 + $0x44] sm:$0xff]
    %v4196 = vld [vmem:[#allocation2 + $0x4c] sm:$0xff]
    %v4197 = vld [vmem:[#allocation2 + $0x54] sm:$0xff]
    %v4198 = vld [vmem:[#allocation2 + $0x5c] sm:$0xff]
    %v4199 = vld [vmem:[#allocation2 + $0x64] sm:$0xff]
    %v4200 = vld [vmem:[#allocation2 + $0x6c] sm:$0xff]
    %v4201 = vld [vmem:[#allocation2 + $0x74] sm:$0xff]
    %v4202 = vld [vmem:[#allocation2 + $0x7c] sm:$0xff]
    %v4203 = vld [vmem:[#allocation2 + $0x84] sm:$0xff]
    %v4204 = vld [vmem:[#allocation2 + $0x8c] sm:$0xff]
    %v4205 = vld [vmem:[#allocation2 + $0x94] sm:$0xff]
    %v4206 = vld [vmem:[#allocation2 + $0x9c] sm:$0xff]
    %v4207 = vld [vmem:[#allocation2 + $0xa4] sm:$0xff]
    %v4208 = vld [vmem:[#allocation2 + $0xac] sm:$0xff]
    %v4209 = vld [vmem:[#allocation2 + $0xb4] sm:$0xff]
    %v4210 = vld [vmem:[#allocation2 + $0xbc] sm:$0xff]
    %v4211 = vld [vmem:[#allocation2 + $0xc4] sm:$0xff]
    %v4212 = vld [vmem:[#allocation2 + $0xcc] sm:$0xff]
    %v4213 = vld [vmem:[#allocation2 + $0xd4] sm:$0xff]
    %v4214 = vld [vmem:[#allocation2 + $0xdc] sm:$0xff]
    %v4215 = vld [vmem:[#allocation2 + $0xe4] sm:$0xff]
    %v4216 = vld [vmem:[#allocation2 + $0xec] sm:$0xff]
    %v4217 = vld [vmem:[#allocation2 + $0xf4] sm:$0xff]
    %v4218 = vld [vmem:[#allocation2 + $0xfc] sm:$0x3]
    %v4219 = vld [vmem:[#allocation2 + $0xd] sm:$0xff]
    %v4220 = vld [vmem:[#allocation2 + $0x15] sm:$0xff]
    %v4221 = vld [vmem:[#allocation2 + $0x1d] sm:$0xff]
    %v4222 = vld [vmem:[#allocation2 + $0x25] sm:$0xff]
    %v4223 = vld [vmem:[#allocation2 + $0x2d] sm:$0xff]
    %v4224 = vld [vmem:[#allocation2 + $0x35] sm:$0xff]
    %v4225 = vld [vmem:[#allocation2 + $0x3d] sm:$0xff]
    %v4226 = vld [vmem:[#allocation2 + $0x45] sm:$0xff]
    %v4227 = vld [vmem:[#allocation2 + $0x4d] sm:$0xff]
    %v4228 = vld [vmem:[#allocation2 + $0x55] sm:$0xff]
    %v4229 = vld [vmem:[#allocation2 + $0x5d] sm:$0xff]
    %v4230 = vld [vmem:[#allocation2 + $0x65] sm:$0xff]
    %v4231 = vld [vmem:[#allocation2 + $0x6d] sm:$0xff]
    %v4232 = vld [vmem:[#allocation2 + $0x75] sm:$0xff]
    %v4233 = vld [vmem:[#allocation2 + $0x7d] sm:$0xff]
    %v4234 = vld [vmem:[#allocation2 + $0x85] sm:$0xff]
    %v4235 = vld [vmem:[#allocation2 + $0x8d] sm:$0xff]
    %v4236 = vld [vmem:[#allocation2 + $0x95] sm:$0xff]
    %v4237 = vld [vmem:[#allocation2 + $0x9d] sm:$0xff]
    %v4238 = vld [vmem:[#allocation2 + $0xa5] sm:$0xff]
    %v4239 = vld [vmem:[#allocation2 + $0xad] sm:$0xff]
    %v4240 = vld [vmem:[#allocation2 + $0xb5] sm:$0xff]
    %v4241 = vld [vmem:[#allocation2 + $0xbd] sm:$0xff]
    %v4242 = vld [vmem:[#allocation2 + $0xc5] sm:$0xff]
    %v4243 = vld [vmem:[#allocation2 + $0xcd] sm:$0xff]
    %v4244 = vld [vmem:[#allocation2 + $0xd5] sm:$0xff]
    %v4245 = vld [vmem:[#allocation2 + $0xdd] sm:$0xff]
    %v4246 = vld [vmem:[#allocation2 + $0xe5] sm:$0xff]
    %v4247 = vld [vmem:[#allocation2 + $0xed] sm:$0xff]
    %v4248 = vld [vmem:[#allocation2 + $0xf5] sm:$0xff]
    %v4249 = vld [vmem:[#allocation2 + $0xfd] sm:$0x3]
    %v4250 = vld [vmem:[#allocation2 + $0x16] sm:$0xff]
    %v4251 = vld [vmem:[#allocation2 + $0x1e] sm:$0xff]
    %v4252 = vld [vmem:[#allocation2 + $0x26] sm:$0xff]
    %v4253 = vld [vmem:[#allocation2 + $0x2e] sm:$0xff]
    %v4254 = vld [vmem:[#allocation2 + $0x36] sm:$0xff]
    %v4255 = vld [vmem:[#allocation2 + $0x3e] sm:$0xff]
    %v4256 = vld [vmem:[#allocation2 + $0x46] sm:$0xff]
    %v4257 = vld [vmem:[#allocation2 + $0x4e] sm:$0xff]
    %v4258 = vld [vmem:[#allocation2 + $0x56] sm:$0xff]
    %v4259 = vld [vmem:[#allocation2 + $0x5e] sm:$0xff]
    %v4260 = vld [vmem:[#allocation2 + $0x66] sm:$0xff]
    %v4261 = vld [vmem:[#allocation2 + $0x6e] sm:$0xff]
    %v4262 = vld [vmem:[#allocation2 + $0x76] sm:$0xff]
    %v4263 = vld [vmem:[#allocation2 + $0x7e] sm:$0xff]
    %v4264 = vld [vmem:[#allocation2 + $0x86] sm:$0xff]
    %v4265 = vld [vmem:[#allocation2 + $0x8e] sm:$0xff]
    %v4266 = vld [vmem:[#allocation2 + $0x96] sm:$0xff]
    %v4267 = vld [vmem:[#allocation2 + $0x9e] sm:$0xff]
    %v4268 = vld [vmem:[#allocation2 + $0xa6] sm:$0xff]
    %v4269 = vld [vmem:[#allocation2 + $0xae] sm:$0xff]
    %v4270 = vld [vmem:[#allocation2 + $0xb6] sm:$0xff]
    %v4271 = vld [vmem:[#allocation2 + $0xbe] sm:$0xff]
    %v4272 = vld [vmem:[#allocation2 + $0xc6] sm:$0xff]
    %v4273 = vld [vmem:[#allocation2 + $0xce] sm:$0xff]
    %v4274 = vld [vmem:[#allocation2 + $0xd6] sm:$0xff]
    %v4275 = vld [vmem:[#allocation2 + $0xde] sm:$0xff]
    %v4276 = vld [vmem:[#allocation2 + $0xe6] sm:$0xff]
    %v4277 = vld [vmem:[#allocation2 + $0xee] sm:$0xff]
    %v4278 = vld [vmem:[#allocation2 + $0xf6] sm:$0xff]
    %v4279 = vld [vmem:[#allocation2 + $0xfe] sm:$0xff]
    %v4280 = vld [vmem:[#allocation2 + $0x106] sm:$0x3]
    %v4281 = vld [vmem:[#allocation2 + $0x17] sm:$0xff]
    %v4282 = vld [vmem:[#allocation2 + $0x1f] sm:$0xff]
    %v4283 = vld [vmem:[#allocation2 + $0x27] sm:$0xff]
    %v4284 = vld [vmem:[#allocation2 + $0x2f] sm:$0xff]
    %v4285 = vld [vmem:[#allocation2 + $0x37] sm:$0xff]
    %v4286 = vld [vmem:[#allocation2 + $0x3f] sm:$0xff]
    %v4287 = vld [vmem:[#allocation2 + $0x47] sm:$0xff]
    %v4288 = vld [vmem:[#allocation2 + $0x4f] sm:$0xff]
    %v4289 = vld [vmem:[#allocation2 + $0x57] sm:$0xff]
    %v4290 = vld [vmem:[#allocation2 + $0x5f] sm:$0xff]
    %v4291 = vld [vmem:[#allocation2 + $0x67] sm:$0xff]
    %v4292 = vld [vmem:[#allocation2 + $0x6f] sm:$0xff]
    %v4293 = vld [vmem:[#allocation2 + $0x77] sm:$0xff]
    %v4294 = vld [vmem:[#allocation2 + $0x7f] sm:$0xff]
    %v4295 = vld [vmem:[#allocation2 + $0x87] sm:$0xff]
    %v4296 = vld [vmem:[#allocation2 + $0x8f] sm:$0xff]
    %v4297 = vld [vmem:[#allocation2 + $0x97] sm:$0xff]
    %v4298 = vld [vmem:[#allocation2 + $0x9f] sm:$0xff]
    %v4299 = vld [vmem:[#allocation2 + $0xa7] sm:$0xff]
    %v4300 = vld [vmem:[#allocation2 + $0xaf] sm:$0xff]
    %v4301 = vld [vmem:[#allocation2 + $0xb7] sm:$0xff]
    %v4302 = vld [vmem:[#allocation2 + $0xbf] sm:$0xff]
    %v4303 = vld [vmem:[#allocation2 + $0xc7] sm:$0xff]
    %v4304 = vld [vmem:[#allocation2 + $0xcf] sm:$0xff]
    %v4305 = vld [vmem:[#allocation2 + $0xd7] sm:$0xff]
    %v4306 = vld [vmem:[#allocation2 + $0xdf] sm:$0xff]
    %v4307 = vld [vmem:[#allocation2 + $0xe7] sm:$0xff]
    %v4308 = vld [vmem:[#allocation2 + $0xef] sm:$0xff]
    %v4309 = vld [vmem:[#allocation2 + $0xf7] sm:$0xff]
    %v4310 = vld [vmem:[#allocation2 + $0xff] sm:$0xff]
    %v4311 = vld [vmem:[#allocation2 + $0x107] sm:$0x3]
    %v4312 = vld [vmem:[#allocation2 + $0xf0] sm:$0xff]
    %v4313 = vld [vmem:[#allocation2 + $0xf8] sm:$0xff]
    %v4314 = vld [vmem:[#allocation2 + $0x100] sm:$0xff]
    %v4315 = vld [vmem:[#allocation2 + $0x108] sm:$0x3]
    %4347 = vrot.lane.b32.xlu0 %v4095, 4
    %v4348 = vpop.permute.xlu0 %4347
    %4349 = vrot.lane.b32.xlu0 %v4096, 4
    %v4350 = vpop.permute.xlu0 %4349
    %4351 = vrot.lane.b32.xlu0 %v4097, 4
    %v4352 = vpop.permute.xlu0 %4351
    %4353 = vrot.lane.b32.xlu0 %v4098, 4
    %v4354 = vpop.permute.xlu0 %4353
    %4355 = vrot.lane.b32.xlu0 %v4099, 4
    %v4356 = vpop.permute.xlu0 %4355
    %4357 = vrot.lane.b32.xlu0 %v4100, 4
    %v4358 = vpop.permute.xlu0 %4357
    %4359 = vrot.lane.b32.xlu0 %v4101, 4
    %v4360 = vpop.permute.xlu0 %4359
    %4361 = vrot.lane.b32.xlu0 %v4102, 4
    %v4362 = vpop.permute.xlu0 %4361
    %4363 = vrot.lane.b32.xlu0 %v4103, 4
    %v4364 = vpop.permute.xlu0 %4363
    %4365 = vrot.lane.b32.xlu0 %v4104, 4
    %v4366 = vpop.permute.xlu0 %4365
    %4367 = vrot.lane.b32.xlu0 %v4105, 4
    %v4368 = vpop.permute.xlu0 %4367
    %4369 = vrot.lane.b32.xlu0 %v4106, 4
    %v4370 = vpop.permute.xlu0 %4369
    %4371 = vrot.lane.b32.xlu0 %v4107, 4
    %v4372 = vpop.permute.xlu0 %4371
    %4373 = vrot.lane.b32.xlu0 %v4108, 4
    %v4374 = vpop.permute.xlu0 %4373
    %4375 = vrot.lane.b32.xlu0 %v4109, 4
    %v4376 = vpop.permute.xlu0 %4375
    %4377 = vrot.lane.b32.xlu0 %v4110, 4
    %v4378 = vpop.permute.xlu0 %4377
    %4379 = vrot.lane.b32.xlu0 %v4111, 4
    %v4380 = vpop.permute.xlu0 %4379
    %4381 = vrot.lane.b32.xlu0 %v4112, 4
    %v4382 = vpop.permute.xlu0 %4381
    %4383 = vrot.lane.b32.xlu0 %v4113, 4
    %v4384 = vpop.permute.xlu0 %4383
    %4385 = vrot.lane.b32.xlu0 %v4114, 4
    %v4386 = vpop.permute.xlu0 %4385
    %4387 = vrot.lane.b32.xlu0 %v4115, 4
    %v4388 = vpop.permute.xlu0 %4387
    %4389 = vrot.lane.b32.xlu0 %v4116, 4
    %v4390 = vpop.permute.xlu0 %4389
    %4391 = vrot.lane.b32.xlu0 %v4117, 4
    %v4392 = vpop.permute.xlu0 %4391
    %4393 = vrot.lane.b32.xlu0 %v4118, 4
    %v4394 = vpop.permute.xlu0 %4393
    %4395 = vrot.lane.b32.xlu0 %v4119, 4
    %v4396 = vpop.permute.xlu0 %4395
    %4397 = vrot.lane.b32.xlu0 %v4120, 4
    %v4398 = vpop.permute.xlu0 %4397
    %4399 = vrot.lane.b32.xlu0 %v4121, 4
    %v4400 = vpop.permute.xlu0 %4399
    %4401 = vrot.lane.b32.xlu0 %v4122, 4
    %v4402 = vpop.permute.xlu0 %4401
    %4403 = vrot.lane.b32.xlu0 %v4123, 4
    %v4404 = vpop.permute.xlu0 %4403
    %4405 = vrot.lane.b32.xlu0 %v4124, 4
    %v4406 = vpop.permute.xlu0 %4405
    %4407 = vrot.lane.b32.xlu0 %v4125, 4
    %v4408 = vpop.permute.xlu0 %4407
    %4471 = vrot.lane.b32.xlu0 %v4126, 8
    %v4472 = vpop.permute.xlu0 %4471
    %4473 = vrot.lane.b32.xlu0 %v4127, 8
    %v4474 = vpop.permute.xlu0 %4473
    %4475 = vrot.lane.b32.xlu0 %v4128, 8
    %v4476 = vpop.permute.xlu0 %4475
    %4477 = vrot.lane.b32.xlu0 %v4129, 8
    %v4478 = vpop.permute.xlu0 %4477
    %4479 = vrot.lane.b32.xlu0 %v4130, 8
    %v4480 = vpop.permute.xlu0 %4479
    %4481 = vrot.lane.b32.xlu0 %v4131, 8
    %v4482 = vpop.permute.xlu0 %4481
    %4483 = vrot.lane.b32.xlu0 %v4132, 8
    %v4484 = vpop.permute.xlu0 %4483
    %4485 = vrot.lane.b32.xlu0 %v4133, 8
    %v4486 = vpop.permute.xlu0 %4485
    %4487 = vrot.lane.b32.xlu0 %v4134, 8
    %v4488 = vpop.permute.xlu0 %4487
    %4489 = vrot.lane.b32.xlu0 %v4135, 8
    %v4490 = vpop.permute.xlu0 %4489
    %4491 = vrot.lane.b32.xlu0 %v4136, 8
    %v4492 = vpop.permute.xlu0 %4491
    %4493 = vrot.lane.b32.xlu0 %v4137, 8
    %v4494 = vpop.permute.xlu0 %4493
    %4495 = vrot.lane.b32.xlu0 %v4138, 8
    %v4496 = vpop.permute.xlu0 %4495
    %4497 = vrot.lane.b32.xlu0 %v4139, 8
    %v4498 = vpop.permute.xlu0 %4497
    %4499 = vrot.lane.b32.xlu0 %v4140, 8
    %v4500 = vpop.permute.xlu0 %4499
    %4501 = vrot.lane.b32.xlu0 %v4141, 8
    %v4502 = vpop.permute.xlu0 %4501
    %4503 = vrot.lane.b32.xlu0 %v4142, 8
    %v4504 = vpop.permute.xlu0 %4503
    %4505 = vrot.lane.b32.xlu0 %v4143, 8
    %v4506 = vpop.permute.xlu0 %4505
    %4507 = vrot.lane.b32.xlu0 %v4144, 8
    %v4508 = vpop.permute.xlu0 %4507
    %4509 = vrot.lane.b32.xlu0 %v4145, 8
    %v4510 = vpop.permute.xlu0 %4509
    %4511 = vrot.lane.b32.xlu0 %v4146, 8
    %v4512 = vpop.permute.xlu0 %4511
    %4513 = vrot.lane.b32.xlu0 %v4147, 8
    %v4514 = vpop.permute.xlu0 %4513
    %4515 = vrot.lane.b32.xlu0 %v4148, 8
    %v4516 = vpop.permute.xlu0 %4515
    %4517 = vrot.lane.b32.xlu0 %v4149, 8
    %v4518 = vpop.permute.xlu0 %4517
    %4519 = vrot.lane.b32.xlu0 %v4150, 8
    %v4520 = vpop.permute.xlu0 %4519
    %4521 = vrot.lane.b32.xlu0 %v4151, 8
    %v4522 = vpop.permute.xlu0 %4521
    %4523 = vrot.lane.b32.xlu0 %v4152, 8
    %v4524 = vpop.permute.xlu0 %4523
    %4525 = vrot.lane.b32.xlu0 %v4153, 8
    %v4526 = vpop.permute.xlu0 %4525
    %4527 = vrot.lane.b32.xlu0 %v4154, 8
    %v4528 = vpop.permute.xlu0 %4527
    %4529 = vrot.lane.b32.xlu0 %v4155, 8
    %v4530 = vpop.permute.xlu0 %4529
    %4531 = vrot.lane.b32.xlu0 %v4156, 8
    %v4532 = vpop.permute.xlu0 %4531
    %4595 = vrot.lane.b32.xlu0 %v4157, 12
    %v4596 = vpop.permute.xlu0 %4595
    %4597 = vrot.lane.b32.xlu0 %v4158, 12
    %v4598 = vpop.permute.xlu0 %4597
    %4599 = vrot.lane.b32.xlu0 %v4159, 12
    %v4600 = vpop.permute.xlu0 %4599
    %4601 = vrot.lane.b32.xlu0 %v4160, 12
    %v4602 = vpop.permute.xlu0 %4601
    %4603 = vrot.lane.b32.xlu0 %v4161, 12
    %v4604 = vpop.permute.xlu0 %4603
    %4605 = vrot.lane.b32.xlu0 %v4162, 12
    %v4606 = vpop.permute.xlu0 %4605
    %4607 = vrot.lane.b32.xlu0 %v4163, 12
    %v4608 = vpop.permute.xlu0 %4607
    %4609 = vrot.lane.b32.xlu0 %v4164, 12
    %v4610 = vpop.permute.xlu0 %4609
    %4611 = vrot.lane.b32.xlu0 %v4165, 12
    %v4612 = vpop.permute.xlu0 %4611
    %4613 = vrot.lane.b32.xlu0 %v4166, 12
    %v4614 = vpop.permute.xlu0 %4613
    %4615 = vrot.lane.b32.xlu0 %v4167, 12
    %v4616 = vpop.permute.xlu0 %4615
    %4617 = vrot.lane.b32.xlu0 %v4168, 12
    %v4618 = vpop.permute.xlu0 %4617
    %4619 = vrot.lane.b32.xlu0 %v4169, 12
    %v4620 = vpop.permute.xlu0 %4619
    %4621 = vrot.lane.b32.xlu0 %v4170, 12
    %v4622 = vpop.permute.xlu0 %4621
    %4623 = vrot.lane.b32.xlu0 %v4171, 12
    %v4624 = vpop.permute.xlu0 %4623
    %4625 = vrot.lane.b32.xlu0 %v4172, 12
    %v4626 = vpop.permute.xlu0 %4625
    %4627 = vrot.lane.b32.xlu0 %v4173, 12
    %v4628 = vpop.permute.xlu0 %4627
    %4629 = vrot.lane.b32.xlu0 %v4174, 12
    %v4630 = vpop.permute.xlu0 %4629
    %4631 = vrot.lane.b32.xlu0 %v4175, 12
    %v4632 = vpop.permute.xlu0 %4631
    %4633 = vrot.lane.b32.xlu0 %v4176, 12
    %v4634 = vpop.permute.xlu0 %4633
    %4635 = vrot.lane.b32.xlu0 %v4177, 12
    %v4636 = vpop.permute.xlu0 %4635
    %4637 = vrot.lane.b32.xlu0 %v4178, 12
    %v4638 = vpop.permute.xlu0 %4637
    %4639 = vrot.lane.b32.xlu0 %v4179, 12
    %v4640 = vpop.permute.xlu0 %4639
    %4641 = vrot.lane.b32.xlu0 %v4180, 12
    %v4642 = vpop.permute.xlu0 %4641
    %4643 = vrot.lane.b32.xlu0 %v4181, 12
    %v4644 = vpop.permute.xlu0 %4643
    %4645 = vrot.lane.b32.xlu0 %v4182, 12
    %v4646 = vpop.permute.xlu0 %4645
    %4647 = vrot.lane.b32.xlu0 %v4183, 12
    %v4648 = vpop.permute.xlu0 %4647
    %4649 = vrot.lane.b32.xlu0 %v4184, 12
    %v4650 = vpop.permute.xlu0 %4649
    %4651 = vrot.lane.b32.xlu0 %v4185, 12
    %v4652 = vpop.permute.xlu0 %4651
    %4653 = vrot.lane.b32.xlu0 %v4186, 12
    %v4654 = vpop.permute.xlu0 %4653
    %4655 = vrot.lane.b32.xlu0 %v4187, 12
    %v4656 = vpop.permute.xlu0 %4655
    %4719 = vrot.lane.b32.xlu0 %v4188, 16
    %v4720 = vpop.permute.xlu0 %4719
    %4721 = vrot.lane.b32.xlu0 %v4189, 16
    %v4722 = vpop.permute.xlu0 %4721
    %4723 = vrot.lane.b32.xlu0 %v4190, 16
    %v4724 = vpop.permute.xlu0 %4723
    %4725 = vrot.lane.b32.xlu0 %v4191, 16
    %v4726 = vpop.permute.xlu0 %4725
    %4727 = vrot.lane.b32.xlu0 %v4192, 16
    %v4728 = vpop.permute.xlu0 %4727
    %4729 = vrot.lane.b32.xlu0 %v4193, 16
    %v4730 = vpop.permute.xlu0 %4729
    %4731 = vrot.lane.b32.xlu0 %v4194, 16
    %v4732 = vpop.permute.xlu0 %4731
    %4733 = vrot.lane.b32.xlu0 %v4195, 16
    %v4734 = vpop.permute.xlu0 %4733
    %4735 = vrot.lane.b32.xlu0 %v4196, 16
    %v4736 = vpop.permute.xlu0 %4735
    %4737 = vrot.lane.b32.xlu0 %v4197, 16
    %v4738 = vpop.permute.xlu0 %4737
    %4739 = vrot.lane.b32.xlu0 %v4198, 16
    %v4740 = vpop.permute.xlu0 %4739
    %4741 = vrot.lane.b32.xlu0 %v4199, 16
    %v4742 = vpop.permute.xlu0 %4741
    %4743 = vrot.lane.b32.xlu0 %v4200, 16
    %v4744 = vpop.permute.xlu0 %4743
    %4745 = vrot.lane.b32.xlu0 %v4201, 16
    %v4746 = vpop.permute.xlu0 %4745
    %4747 = vrot.lane.b32.xlu0 %v4202, 16
    %v4748 = vpop.permute.xlu0 %4747
    %4749 = vrot.lane.b32.xlu0 %v4203, 16
    %v4750 = vpop.permute.xlu0 %4749
    %4751 = vrot.lane.b32.xlu0 %v4204, 16
    %v4752 = vpop.permute.xlu0 %4751
    %4753 = vrot.lane.b32.xlu0 %v4205, 16
    %v4754 = vpop.permute.xlu0 %4753
    %4755 = vrot.lane.b32.xlu0 %v4206, 16
    %v4756 = vpop.permute.xlu0 %4755
    %4757 = vrot.lane.b32.xlu0 %v4207, 16
    %v4758 = vpop.permute.xlu0 %4757
    %4759 = vrot.lane.b32.xlu0 %v4208, 16
    %v4760 = vpop.permute.xlu0 %4759
    %4761 = vrot.lane.b32.xlu0 %v4209, 16
    %v4762 = vpop.permute.xlu0 %4761
    %4763 = vrot.lane.b32.xlu0 %v4210, 16
    %v4764 = vpop.permute.xlu0 %4763
    %4765 = vrot.lane.b32.xlu0 %v4211, 16
    %v4766 = vpop.permute.xlu0 %4765
    %4767 = vrot.lane.b32.xlu0 %v4212, 16
    %v4768 = vpop.permute.xlu0 %4767
    %4769 = vrot.lane.b32.xlu0 %v4213, 16
    %v4770 = vpop.permute.xlu0 %4769
    %4771 = vrot.lane.b32.xlu0 %v4214, 16
    %v4772 = vpop.permute.xlu0 %4771
    %4773 = vrot.lane.b32.xlu0 %v4215, 16
    %v4774 = vpop.permute.xlu0 %4773
    %4775 = vrot.lane.b32.xlu0 %v4216, 16
    %v4776 = vpop.permute.xlu0 %4775
    %4777 = vrot.lane.b32.xlu0 %v4217, 16
    %v4778 = vpop.permute.xlu0 %4777
    %4779 = vrot.lane.b32.xlu0 %v4218, 16
    %v4780 = vpop.permute.xlu0 %4779
    %4843 = vrot.lane.b32.xlu0 %v4219, 20
    %v4844 = vpop.permute.xlu0 %4843
    %4845 = vrot.lane.b32.xlu0 %v4220, 20
    %v4846 = vpop.permute.xlu0 %4845
    %4847 = vrot.lane.b32.xlu0 %v4221, 20
    %v4848 = vpop.permute.xlu0 %4847
    %4849 = vrot.lane.b32.xlu0 %v4222, 20
    %v4850 = vpop.permute.xlu0 %4849
    %4851 = vrot.lane.b32.xlu0 %v4223, 20
    %v4852 = vpop.permute.xlu0 %4851
    %4853 = vrot.lane.b32.xlu0 %v4224, 20
    %v4854 = vpop.permute.xlu0 %4853
    %4855 = vrot.lane.b32.xlu0 %v4225, 20
    %v4856 = vpop.permute.xlu0 %4855
    %4857 = vrot.lane.b32.xlu0 %v4226, 20
    %v4858 = vpop.permute.xlu0 %4857
    %4859 = vrot.lane.b32.xlu0 %v4227, 20
    %v4860 = vpop.permute.xlu0 %4859
    %4861 = vrot.lane.b32.xlu0 %v4228, 20
    %v4862 = vpop.permute.xlu0 %4861
    %4863 = vrot.lane.b32.xlu0 %v4229, 20
    %v4864 = vpop.permute.xlu0 %4863
    %4865 = vrot.lane.b32.xlu0 %v4230, 20
    %v4866 = vpop.permute.xlu0 %4865
    %4867 = vrot.lane.b32.xlu0 %v4231, 20
    %v4868 = vpop.permute.xlu0 %4867
    %4869 = vrot.lane.b32.xlu0 %v4232, 20
    %v4870 = vpop.permute.xlu0 %4869
    %4871 = vrot.lane.b32.xlu0 %v4233, 20
    %v4872 = vpop.permute.xlu0 %4871
    %4873 = vrot.lane.b32.xlu0 %v4234, 20
    %v4874 = vpop.permute.xlu0 %4873
    %4875 = vrot.lane.b32.xlu0 %v4235, 20
    %v4876 = vpop.permute.xlu0 %4875
    %4877 = vrot.lane.b32.xlu0 %v4236, 20
    %v4878 = vpop.permute.xlu0 %4877
    %4879 = vrot.lane.b32.xlu0 %v4237, 20
    %v4880 = vpop.permute.xlu0 %4879
    %4881 = vrot.lane.b32.xlu0 %v4238, 20
    %v4882 = vpop.permute.xlu0 %4881
    %4883 = vrot.lane.b32.xlu0 %v4239, 20
    %v4884 = vpop.permute.xlu0 %4883
    %4885 = vrot.lane.b32.xlu0 %v4240, 20
    %v4886 = vpop.permute.xlu0 %4885
    %4887 = vrot.lane.b32.xlu0 %v4241, 20
    %v4888 = vpop.permute.xlu0 %4887
    %4889 = vrot.lane.b32.xlu0 %v4242, 20
    %v4890 = vpop.permute.xlu0 %4889
    %4891 = vrot.lane.b32.xlu0 %v4243, 20
    %v4892 = vpop.permute.xlu0 %4891
    %4893 = vrot.lane.b32.xlu0 %v4244, 20
    %v4894 = vpop.permute.xlu0 %4893
    %4895 = vrot.lane.b32.xlu0 %v4245, 20
    %v4896 = vpop.permute.xlu0 %4895
    %4897 = vrot.lane.b32.xlu0 %v4246, 20
    %v4898 = vpop.permute.xlu0 %4897
    %4899 = vrot.lane.b32.xlu0 %v4247, 20
    %v4900 = vpop.permute.xlu0 %4899
    %4901 = vrot.lane.b32.xlu0 %v4248, 20
    %v4902 = vpop.permute.xlu0 %4901
    %4903 = vrot.lane.b32.xlu0 %v4249, 20
    %v4904 = vpop.permute.xlu0 %4903
    %4967 = vrot.lane.b32.xlu0 %v4250, 24
    %v4968 = vpop.permute.xlu0 %4967
    %4969 = vrot.lane.b32.xlu0 %v4251, 24
    %v4970 = vpop.permute.xlu0 %4969
    %4971 = vrot.lane.b32.xlu0 %v4252, 24
    %v4972 = vpop.permute.xlu0 %4971
    %4973 = vrot.lane.b32.xlu0 %v4253, 24
    %v4974 = vpop.permute.xlu0 %4973
    %4975 = vrot.lane.b32.xlu0 %v4254, 24
    %v4976 = vpop.permute.xlu0 %4975
    %4977 = vrot.lane.b32.xlu0 %v4255, 24
    %v4978 = vpop.permute.xlu0 %4977
    %4979 = vrot.lane.b32.xlu0 %v4256, 24
    %v4980 = vpop.permute.xlu0 %4979
    %4981 = vrot.lane.b32.xlu0 %v4257, 24
    %v4982 = vpop.permute.xlu0 %4981
    %4983 = vrot.lane.b32.xlu0 %v4258, 24
    %v4984 = vpop.permute.xlu0 %4983
    %4985 = vrot.lane.b32.xlu0 %v4259, 24
    %v4986 = vpop.permute.xlu0 %4985
    %4987 = vrot.lane.b32.xlu0 %v4260, 24
    %v4988 = vpop.permute.xlu0 %4987
    %4989 = vrot.lane.b32.xlu0 %v4261, 24
    %v4990 = vpop.permute.xlu0 %4989
    %4991 = vrot.lane.b32.xlu0 %v4262, 24
    %v4992 = vpop.permute.xlu0 %4991
    %4993 = vrot.lane.b32.xlu0 %v4263, 24
    %v4994 = vpop.permute.xlu0 %4993
    %4995 = vrot.lane.b32.xlu0 %v4264, 24
    %v4996 = vpop.permute.xlu0 %4995
    %4997 = vrot.lane.b32.xlu0 %v4265, 24
    %v4998 = vpop.permute.xlu0 %4997
    %4999 = vrot.lane.b32.xlu0 %v4266, 24
    %v5000 = vpop.permute.xlu0 %4999
    %5001 = vrot.lane.b32.xlu0 %v4267, 24
    %v5002 = vpop.permute.xlu0 %5001
    %5003 = vrot.lane.b32.xlu0 %v4268, 24
    %v5004 = vpop.permute.xlu0 %5003
    %5005 = vrot.lane.b32.xlu0 %v4269, 24
    %v5006 = vpop.permute.xlu0 %5005
    %5007 = vrot.lane.b32.xlu0 %v4270, 24
    %v5008 = vpop.permute.xlu0 %5007
    %5009 = vrot.lane.b32.xlu0 %v4271, 24
    %v5010 = vpop.permute.xlu0 %5009
    %5011 = vrot.lane.b32.xlu0 %v4272, 24
    %v5012 = vpop.permute.xlu0 %5011
    %5013 = vrot.lane.b32.xlu0 %v4273, 24
    %v5014 = vpop.permute.xlu0 %5013
    %5015 = vrot.lane.b32.xlu0 %v4274, 24
    %v5016 = vpop.permute.xlu0 %5015
    %5017 = vrot.lane.b32.xlu0 %v4275, 24
    %v5018 = vpop.permute.xlu0 %5017
    %5019 = vrot.lane.b32.xlu0 %v4276, 24
    %v5020 = vpop.permute.xlu0 %5019
    %5021 = vrot.lane.b32.xlu0 %v4277, 24
    %v5022 = vpop.permute.xlu0 %5021
    %5023 = vrot.lane.b32.xlu0 %v4278, 24
    %v5024 = vpop.permute.xlu0 %5023
    %5025 = vrot.lane.b32.xlu0 %v4279, 24
    %v5026 = vpop.permute.xlu0 %5025
    %5027 = vrot.lane.b32.xlu0 %v4280, 24
    %v5028 = vpop.permute.xlu0 %5027
    %5091 = vrot.lane.b32.xlu0 %v4281, 28
    %v5092 = vpop.permute.xlu0 %5091
    %5093 = vrot.lane.b32.xlu0 %v4282, 28
    %v5094 = vpop.permute.xlu0 %5093
    %5095 = vrot.lane.b32.xlu0 %v4283, 28
    %v5096 = vpop.permute.xlu0 %5095
    %5097 = vrot.lane.b32.xlu0 %v4284, 28
    %v5098 = vpop.permute.xlu0 %5097
    %5099 = vrot.lane.b32.xlu0 %v4285, 28
    %v5100 = vpop.permute.xlu0 %5099
    %5101 = vrot.lane.b32.xlu0 %v4286, 28
    %v5102 = vpop.permute.xlu0 %5101
    %5103 = vrot.lane.b32.xlu0 %v4287, 28
    %v5104 = vpop.permute.xlu0 %5103
    %5105 = vrot.lane.b32.xlu0 %v4288, 28
    %v5106 = vpop.permute.xlu0 %5105
    %5107 = vrot.lane.b32.xlu0 %v4289, 28
    %v5108 = vpop.permute.xlu0 %5107
    %5109 = vrot.lane.b32.xlu0 %v4290, 28
    %v5110 = vpop.permute.xlu0 %5109
    %5111 = vrot.lane.b32.xlu0 %v4291, 28
    %v5112 = vpop.permute.xlu0 %5111
    %5113 = vrot.lane.b32.xlu0 %v4292, 28
    %v5114 = vpop.permute.xlu0 %5113
    %5115 = vrot.lane.b32.xlu0 %v4293, 28
    %v5116 = vpop.permute.xlu0 %5115
    %5117 = vrot.lane.b32.xlu0 %v4294, 28
    %v5118 = vpop.permute.xlu0 %5117
    %5119 = vrot.lane.b32.xlu0 %v4295, 28
    %v5120 = vpop.permute.xlu0 %5119
    %5121 = vrot.lane.b32.xlu0 %v4296, 28
    %v5122 = vpop.permute.xlu0 %5121
    %5123 = vrot.lane.b32.xlu0 %v4297, 28
    %v5124 = vpop.permute.xlu0 %5123
    %5125 = vrot.lane.b32.xlu0 %v4298, 28
    %v5126 = vpop.permute.xlu0 %5125
    %5127 = vrot.lane.b32.xlu0 %v4299, 28
    %v5128 = vpop.permute.xlu0 %5127
    %5129 = vrot.lane.b32.xlu0 %v4300, 28
    %v5130 = vpop.permute.xlu0 %5129
    %5131 = vrot.lane.b32.xlu0 %v4301, 28
    %v5132 = vpop.permute.xlu0 %5131
    %5133 = vrot.lane.b32.xlu0 %v4302, 28
    %v5134 = vpop.permute.xlu0 %5133
    %5135 = vrot.lane.b32.xlu0 %v4303, 28
    %v5136 = vpop.permute.xlu0 %5135
    %5137 = vrot.lane.b32.xlu0 %v4304, 28
    %v5138 = vpop.permute.xlu0 %5137
    %5139 = vrot.lane.b32.xlu0 %v4305, 28
    %v5140 = vpop.permute.xlu0 %5139
    %5141 = vrot.lane.b32.xlu0 %v4306, 28
    %v5142 = vpop.permute.xlu0 %5141
    %5143 = vrot.lane.b32.xlu0 %v4307, 28
    %v5144 = vpop.permute.xlu0 %5143
    %5145 = vrot.lane.b32.xlu0 %v4308, 28
    %v5146 = vpop.permute.xlu0 %5145
    %5147 = vrot.lane.b32.xlu0 %v4309, 28
    %v5148 = vpop.permute.xlu0 %5147
    %5149 = vrot.lane.b32.xlu0 %v4310, 28
    %v5150 = vpop.permute.xlu0 %5149
    %5151 = vrot.lane.b32.xlu0 %v4311, 28
    %v5152 = vpop.permute.xlu0 %5151
    %5215 = vrot.lane.b32.xlu0 %v4067, 32
    %v5216 = vpop.permute.xlu0 %5215
    %5217 = vrot.lane.b32.xlu0 %v4068, 32
    %v5218 = vpop.permute.xlu0 %5217
    %5219 = vrot.lane.b32.xlu0 %v4069, 32
    %v5220 = vpop.permute.xlu0 %5219
    %5221 = vrot.lane.b32.xlu0 %v4070, 32
    %v5222 = vpop.permute.xlu0 %5221
    %5223 = vrot.lane.b32.xlu0 %v4071, 32
    %v5224 = vpop.permute.xlu0 %5223
    %5225 = vrot.lane.b32.xlu0 %v4072, 32
    %v5226 = vpop.permute.xlu0 %5225
    %5227 = vrot.lane.b32.xlu0 %v4073, 32
    %v5228 = vpop.permute.xlu0 %5227
    %5229 = vrot.lane.b32.xlu0 %v4074, 32
    %v5230 = vpop.permute.xlu0 %5229
    %5231 = vrot.lane.b32.xlu0 %v4075, 32
    %v5232 = vpop.permute.xlu0 %5231
    %5233 = vrot.lane.b32.xlu0 %v4076, 32
    %v5234 = vpop.permute.xlu0 %5233
    %5235 = vrot.lane.b32.xlu0 %v4077, 32
    %v5236 = vpop.permute.xlu0 %5235
    %5237 = vrot.lane.b32.xlu0 %v4078, 32
    %v5238 = vpop.permute.xlu0 %5237
    %5239 = vrot.lane.b32.xlu0 %v4079, 32
    %v5240 = vpop.permute.xlu0 %5239
    %5241 = vrot.lane.b32.xlu0 %v4080, 32
    %v5242 = vpop.permute.xlu0 %5241
    %5243 = vrot.lane.b32.xlu0 %v4081, 32
    %v5244 = vpop.permute.xlu0 %5243
    %5245 = vrot.lane.b32.xlu0 %v4082, 32
    %v5246 = vpop.permute.xlu0 %5245
    %5247 = vrot.lane.b32.xlu0 %v4083, 32
    %v5248 = vpop.permute.xlu0 %5247
    %5249 = vrot.lane.b32.xlu0 %v4084, 32
    %v5250 = vpop.permute.xlu0 %5249
    %5251 = vrot.lane.b32.xlu0 %v4085, 32
    %v5252 = vpop.permute.xlu0 %5251
    %5253 = vrot.lane.b32.xlu0 %v4086, 32
    %v5254 = vpop.permute.xlu0 %5253
    %5255 = vrot.lane.b32.xlu0 %v4087, 32
    %v5256 = vpop.permute.xlu0 %5255
    %5257 = vrot.lane.b32.xlu0 %v4088, 32
    %v5258 = vpop.permute.xlu0 %5257
    %5259 = vrot.lane.b32.xlu0 %v4089, 32
    %v5260 = vpop.permute.xlu0 %5259
    %5261 = vrot.lane.b32.xlu0 %v4090, 32
    %v5262 = vpop.permute.xlu0 %5261
    %5263 = vrot.lane.b32.xlu0 %v4091, 32
    %v5264 = vpop.permute.xlu0 %5263
    %5265 = vrot.lane.b32.xlu0 %v4092, 32
    %v5266 = vpop.permute.xlu0 %5265
    %5267 = vrot.lane.b32.xlu0 %v4093, 32
    %v5268 = vpop.permute.xlu0 %5267
    %5269 = vrot.lane.b32.xlu0 %v4312, 32
    %v5270 = vpop.permute.xlu0 %5269
    %5271 = vrot.lane.b32.xlu0 %v4313, 32
    %v5272 = vpop.permute.xlu0 %5271
    %5273 = vrot.lane.b32.xlu0 %v4314, 32
    %v5274 = vpop.permute.xlu0 %5273
    %5275 = vrot.lane.b32.xlu0 %v4315, 32
    %v5276 = vpop.permute.xlu0 %5275
    %v5308 = vsel %vm1390, %v4064, %v4348
    %v5309 = vsel %vm1390, %v4065, %v4350
    %v5310 = vsel %vm1390, %v4066, %v4352
    %v5311 = vsel %vm1390, %v4067, %v4354
    %v5312 = vsel %vm1390, %v4068, %v4356
    %v5313 = vsel %vm1390, %v4069, %v4358
    %v5314 = vsel %vm1390, %v4070, %v4360
    %v5315 = vsel %vm1390, %v4071, %v4362
    %v5316 = vsel %vm1390, %v4072, %v4364
    %v5317 = vsel %vm1390, %v4073, %v4366
    %v5318 = vsel %vm1390, %v4074, %v4368
    %v5319 = vsel %vm1390, %v4075, %v4370
    %v5320 = vsel %vm1390, %v4076, %v4372
    %v5321 = vsel %vm1390, %v4077, %v4374
    %v5322 = vsel %vm1390, %v4078, %v4376
    %v5323 = vsel %vm1390, %v4079, %v4378
    %v5324 = vsel %vm1390, %v4080, %v4380
    %v5325 = vsel %vm1390, %v4081, %v4382
    %v5326 = vsel %vm1390, %v4082, %v4384
    %v5327 = vsel %vm1390, %v4083, %v4386
    %v5328 = vsel %vm1390, %v4084, %v4388
    %v5329 = vsel %vm1390, %v4085, %v4390
    %v5330 = vsel %vm1390, %v4086, %v4392
    %v5331 = vsel %vm1390, %v4087, %v4394
    %v5332 = vsel %vm1390, %v4088, %v4396
    %v5333 = vsel %vm1390, %v4089, %v4398
    %v5334 = vsel %vm1390, %v4090, %v4400
    %v5335 = vsel %vm1390, %v4091, %v4402
    %v5336 = vsel %vm1390, %v4092, %v4404
    %v5337 = vsel %vm1390, %v4093, %v4406
    %v5338 = vsel %vm1390, %v4094, %v4408
    %v5339 = vsel %vm1518, %v5308, %v4472
    %v5340 = vsel %vm1518, %v5309, %v4474
    %v5341 = vsel %vm1518, %v5310, %v4476
    %v5342 = vsel %vm1518, %v5311, %v4478
    %v5343 = vsel %vm1518, %v5312, %v4480
    %v5344 = vsel %vm1518, %v5313, %v4482
    %v5345 = vsel %vm1518, %v5314, %v4484
    %v5346 = vsel %vm1518, %v5315, %v4486
    %v5347 = vsel %vm1518, %v5316, %v4488
    %v5348 = vsel %vm1518, %v5317, %v4490
    %v5349 = vsel %vm1518, %v5318, %v4492
    %v5350 = vsel %vm1518, %v5319, %v4494
    %v5351 = vsel %vm1518, %v5320, %v4496
    %v5352 = vsel %vm1518, %v5321, %v4498
    %v5353 = vsel %vm1518, %v5322, %v4500
    %v5354 = vsel %vm1518, %v5323, %v4502
    %v5355 = vsel %vm1518, %v5324, %v4504
    %v5356 = vsel %vm1518, %v5325, %v4506
    %v5357 = vsel %vm1518, %v5326, %v4508
    %v5358 = vsel %vm1518, %v5327, %v4510
    %v5359 = vsel %vm1518, %v5328, %v4512
    %v5360 = vsel %vm1518, %v5329, %v4514
    %v5361 = vsel %vm1518, %v5330, %v4516
    %v5362 = vsel %vm1518, %v5331, %v4518
    %v5363 = vsel %vm1518, %v5332, %v4520
    %v5364 = vsel %vm1518, %v5333, %v4522
    %v5365 = vsel %vm1518, %v5334, %v4524
    %v5366 = vsel %vm1518, %v5335, %v4526
    %v5367 = vsel %vm1518, %v5336, %v4528
    %v5368 = vsel %vm1518, %v5337, %v4530
    %v5369 = vsel %vm1518, %v5338, %v4532
    %vm5370 = vcmask 97280
    %v5371 = vsel %vm5370, %v5339, %v4596
    %v5372 = vsel %vm5370, %v5340, %v4598
    %v5373 = vsel %vm5370, %v5341, %v4600
    %v5374 = vsel %vm5370, %v5342, %v4602
    %v5375 = vsel %vm5370, %v5343, %v4604
    %v5376 = vsel %vm5370, %v5344, %v4606
    %v5377 = vsel %vm5370, %v5345, %v4608
    %v5378 = vsel %vm5370, %v5346, %v4610
    %v5379 = vsel %vm5370, %v5347, %v4612
    %v5380 = vsel %vm5370, %v5348, %v4614
    %v5381 = vsel %vm5370, %v5349, %v4616
    %v5382 = vsel %vm5370, %v5350, %v4618
    %v5383 = vsel %vm5370, %v5351, %v4620
    %v5384 = vsel %vm5370, %v5352, %v4622
    %v5385 = vsel %vm5370, %v5353, %v4624
    %v5386 = vsel %vm5370, %v5354, %v4626
    %v5387 = vsel %vm5370, %v5355, %v4628
    %v5388 = vsel %vm5370, %v5356, %v4630
    %v5389 = vsel %vm5370, %v5357, %v4632
    %v5390 = vsel %vm5370, %v5358, %v4634
    %v5391 = vsel %vm5370, %v5359, %v4636
    %v5392 = vsel %vm5370, %v5360, %v4638
    %v5393 = vsel %vm5370, %v5361, %v4640
    %v5394 = vsel %vm5370, %v5362, %v4642
    %v5395 = vsel %vm5370, %v5363, %v4644
    %v5396 = vsel %vm5370, %v5364, %v4646
    %v5397 = vsel %vm5370, %v5365, %v4648
    %v5398 = vsel %vm5370, %v5366, %v4650
    %v5399 = vsel %vm5370, %v5367, %v4652
    %v5400 = vsel %vm5370, %v5368, %v4654
    %v5401 = vsel %vm5370, %v5369, %v4656
    %vm5402 = vcmask 130048
    %v5403 = vsel %vm5402, %v5371, %v4720
    %v5404 = vsel %vm5402, %v5372, %v4722
    %v5405 = vsel %vm5402, %v5373, %v4724
    %v5406 = vsel %vm5402, %v5374, %v4726
    %v5407 = vsel %vm5402, %v5375, %v4728
    %v5408 = vsel %vm5402, %v5376, %v4730
    %v5409 = vsel %vm5402, %v5377, %v4732
    %v5410 = vsel %vm5402, %v5378, %v4734
    %v5411 = vsel %vm5402, %v5379, %v4736
    %v5412 = vsel %vm5402, %v5380, %v4738
    %v5413 = vsel %vm5402, %v5381, %v4740
    %v5414 = vsel %vm5402, %v5382, %v4742
    %v5415 = vsel %vm5402, %v5383, %v4744
    %v5416 = vsel %vm5402, %v5384, %v4746
    %v5417 = vsel %vm5402, %v5385, %v4748
    %v5418 = vsel %vm5402, %v5386, %v4750
    %v5419 = vsel %vm5402, %v5387, %v4752
    %v5420 = vsel %vm5402, %v5388, %v4754
    %v5421 = vsel %vm5402, %v5389, %v4756
    %v5422 = vsel %vm5402, %v5390, %v4758
    %v5423 = vsel %vm5402, %v5391, %v4760
    %v5424 = vsel %vm5402, %v5392, %v4762
    %v5425 = vsel %vm5402, %v5393, %v4764
    %v5426 = vsel %vm5402, %v5394, %v4766
    %v5427 = vsel %vm5402, %v5395, %v4768
    %v5428 = vsel %vm5402, %v5396, %v4770
    %v5429 = vsel %vm5402, %v5397, %v4772
    %v5430 = vsel %vm5402, %v5398, %v4774
    %v5431 = vsel %vm5402, %v5399, %v4776
    %v5432 = vsel %vm5402, %v5400, %v4778
    %v5433 = vsel %vm5402, %v5401, %v4780
    %vm5434 = vcmask 162816
    %v5435 = vsel %vm5434, %v5403, %v4844
    %v5436 = vsel %vm5434, %v5404, %v4846
    %v5437 = vsel %vm5434, %v5405, %v4848
    %v5438 = vsel %vm5434, %v5406, %v4850
    %v5439 = vsel %vm5434, %v5407, %v4852
    %v5440 = vsel %vm5434, %v5408, %v4854
    %v5441 = vsel %vm5434, %v5409, %v4856
    %v5442 = vsel %vm5434, %v5410, %v4858
    %v5443 = vsel %vm5434, %v5411, %v4860
    %v5444 = vsel %vm5434, %v5412, %v4862
    %v5445 = vsel %vm5434, %v5413, %v4864
    %v5446 = vsel %vm5434, %v5414, %v4866
    %v5447 = vsel %vm5434, %v5415, %v4868
    %v5448 = vsel %vm5434, %v5416, %v4870
    %v5449 = vsel %vm5434, %v5417, %v4872
    %v5450 = vsel %vm5434, %v5418, %v4874
    %v5451 = vsel %vm5434, %v5419, %v4876
    %v5452 = vsel %vm5434, %v5420, %v4878
    %v5453 = vsel %vm5434, %v5421, %v4880
    %v5454 = vsel %vm5434, %v5422, %v4882
    %v5455 = vsel %vm5434, %v5423, %v4884
    %v5456 = vsel %vm5434, %v5424, %v4886
    %v5457 = vsel %vm5434, %v5425, %v4888
    %v5458 = vsel %vm5434, %v5426, %v4890
    %v5459 = vsel %vm5434, %v5427, %v4892
    %v5460 = vsel %vm5434, %v5428, %v4894
    %v5461 = vsel %vm5434, %v5429, %v4896
    %v5462 = vsel %vm5434, %v5430, %v4898
    %v5463 = vsel %vm5434, %v5431, %v4900
    %v5464 = vsel %vm5434, %v5432, %v4902
    %v5465 = vsel %vm5434, %v5433, %v4904
    %vm5466 = vcmask 195584
    %v5467 = vsel %vm5466, %v5435, %v4968
    %v5468 = vsel %vm5466, %v5436, %v4970
    %v5469 = vsel %vm5466, %v5437, %v4972
    %v5470 = vsel %vm5466, %v5438, %v4974
    %v5471 = vsel %vm5466, %v5439, %v4976
    %v5472 = vsel %vm5466, %v5440, %v4978
    %v5473 = vsel %vm5466, %v5441, %v4980
    %v5474 = vsel %vm5466, %v5442, %v4982
    %v5475 = vsel %vm5466, %v5443, %v4984
    %v5476 = vsel %vm5466, %v5444, %v4986
    %v5477 = vsel %vm5466, %v5445, %v4988
    %v5478 = vsel %vm5466, %v5446, %v4990
    %v5479 = vsel %vm5466, %v5447, %v4992
    %v5480 = vsel %vm5466, %v5448, %v4994
    %v5481 = vsel %vm5466, %v5449, %v4996
    %v5482 = vsel %vm5466, %v5450, %v4998
    %v5483 = vsel %vm5466, %v5451, %v5000
    %v5484 = vsel %vm5466, %v5452, %v5002
    %v5485 = vsel %vm5466, %v5453, %v5004
    %v5486 = vsel %vm5466, %v5454, %v5006
    %v5487 = vsel %vm5466, %v5455, %v5008
    %v5488 = vsel %vm5466, %v5456, %v5010
    %v5489 = vsel %vm5466, %v5457, %v5012
    %v5490 = vsel %vm5466, %v5458, %v5014
    %v5491 = vsel %vm5466, %v5459, %v5016
    %v5492 = vsel %vm5466, %v5460, %v5018
    %v5493 = vsel %vm5466, %v5461, %v5020
    %v5494 = vsel %vm5466, %v5462, %v5022
    %v5495 = vsel %vm5466, %v5463, %v5024
    %v5496 = vsel %vm5466, %v5464, %v5026
    %v5497 = vsel %vm5466, %v5465, %v5028
    %vm5498 = vcmask 228352
    %v5499 = vsel %vm5498, %v5467, %v5092
    %v5500 = vsel %vm5498, %v5468, %v5094
    %v5501 = vsel %vm5498, %v5469, %v5096
    %v5502 = vsel %vm5498, %v5470, %v5098
    %v5503 = vsel %vm5498, %v5471, %v5100
    %v5504 = vsel %vm5498, %v5472, %v5102
    %v5505 = vsel %vm5498, %v5473, %v5104
    %v5506 = vsel %vm5498, %v5474, %v5106
    %v5507 = vsel %vm5498, %v5475, %v5108
    %v5508 = vsel %vm5498, %v5476, %v5110
    %v5509 = vsel %vm5498, %v5477, %v5112
    %v5510 = vsel %vm5498, %v5478, %v5114
    %v5511 = vsel %vm5498, %v5479, %v5116
    %v5512 = vsel %vm5498, %v5480, %v5118
    %v5513 = vsel %vm5498, %v5481, %v5120
    %v5514 = vsel %vm5498, %v5482, %v5122
    %v5515 = vsel %vm5498, %v5483, %v5124
    %v5516 = vsel %vm5498, %v5484, %v5126
    %v5517 = vsel %vm5498, %v5485, %v5128
    %v5518 = vsel %vm5498, %v5486, %v5130
    %v5519 = vsel %vm5498, %v5487, %v5132
    %v5520 = vsel %vm5498, %v5488, %v5134
    %v5521 = vsel %vm5498, %v5489, %v5136
    %v5522 = vsel %vm5498, %v5490, %v5138
    %v5523 = vsel %vm5498, %v5491, %v5140
    %v5524 = vsel %vm5498, %v5492, %v5142
    %v5525 = vsel %vm5498, %v5493, %v5144
    %v5526 = vsel %vm5498, %v5494, %v5146
    %v5527 = vsel %vm5498, %v5495, %v5148
    %v5528 = vsel %vm5498, %v5496, %v5150
    %v5529 = vsel %vm5498, %v5497, %v5152
    %v5530 = vsel %vm2043, %v5499, %v5216
    %v5531 = vsel %vm2043, %v5500, %v5218
    %v5532 = vsel %vm2043, %v5501, %v5220
    %v5533 = vsel %vm2043, %v5502, %v5222
    %v5534 = vsel %vm2043, %v5503, %v5224
    %v5535 = vsel %vm2043, %v5504, %v5226
    %v5536 = vsel %vm2043, %v5505, %v5228
    %v5537 = vsel %vm2043, %v5506, %v5230
    %v5538 = vsel %vm2043, %v5507, %v5232
    %v5539 = vsel %vm2043, %v5508, %v5234
    %v5540 = vsel %vm2043, %v5509, %v5236
    %v5541 = vsel %vm2043, %v5510, %v5238
    %v5542 = vsel %vm2043, %v5511, %v5240
    %v5543 = vsel %vm2043, %v5512, %v5242
    %v5544 = vsel %vm2043, %v5513, %v5244
    %v5545 = vsel %vm2043, %v5514, %v5246
    %v5546 = vsel %vm2043, %v5515, %v5248
    %v5547 = vsel %vm2043, %v5516, %v5250
    %v5548 = vsel %vm2043, %v5517, %v5252
    %v5549 = vsel %vm2043, %v5518, %v5254
    %v5550 = vsel %vm2043, %v5519, %v5256
    %v5551 = vsel %vm2043, %v5520, %v5258
    %v5552 = vsel %vm2043, %v5521, %v5260
    %v5553 = vsel %vm2043, %v5522, %v5262
    %v5554 = vsel %vm2043, %v5523, %v5264
    %v5555 = vsel %vm2043, %v5524, %v5266
    %v5556 = vsel %vm2043, %v5525, %v5268
    %v5557 = vsel %vm2043, %v5526, %v5270
    %v5558 = vsel %vm2043, %v5527, %v5272
    %v5559 = vsel %vm2043, %v5528, %v5274
    %v5560 = vsel %vm2043, %v5529, %v5276
    %v5561 = vld [vmem:[%s1 + $0x20] sm:$0xff]
    %v5562 = vld [vmem:[%s1 + $0x28] sm:$0xff]
    %v5563 = vld [vmem:[%s1 + $0x30] sm:$0xff]
    %v5564 = vld [vmem:[%s1 + $0x38] sm:$0xff]
    %v5565 = vld [vmem:[%s1 + $0x40] sm:$0xf]
    %vm5566 = vcmask 293888
    %v5568 = vsel %vm5566, %v5530, 0
    %v5571 = vsel %vm5566, %v5531, 0
    %v5574 = vsel %vm5566, %v5532, 0
    %v5577 = vsel %vm5566, %v5533, 0
    %v5580 = vsel %vm5566, %v5534, 0
    %v5583 = vsel %vm5566, %v5535, 0
    %v5586 = vsel %vm5566, %v5536, 0
    %v5589 = vsel %vm5566, %v5537, 0
    %v5592 = vsel %vm5566, %v5538, 0
    %v5595 = vsel %vm5566, %v5539, 0
    %v5598 = vsel %vm5566, %v5540, 0
    %v5601 = vsel %vm5566, %v5541, 0
    %v5604 = vsel %vm5566, %v5542, 0
    %v5607 = vsel %vm5566, %v5543, 0
    %v5610 = vsel %vm5566, %v5544, 0
    %v5613 = vsel %vm5566, %v5545, 0
    %v5616 = vsel %vm5566, %v5546, 0
    %v5619 = vsel %vm5566, %v5547, 0
    %v5622 = vsel %vm5566, %v5548, 0
    %v5625 = vsel %vm5566, %v5549, 0
    %v5628 = vsel %vm5566, %v5550, 0
    %v5631 = vsel %vm5566, %v5551, 0
    %v5634 = vsel %vm5566, %v5552, 0
    %v5637 = vsel %vm5566, %v5553, 0
    %v5640 = vsel %vm5566, %v5554, 0
    %v5643 = vsel %vm5566, %v5555, 0
    %v5646 = vsel %vm5566, %v5556, 0
    %v5649 = vsel %vm5566, %v5557, 0
    %v5652 = vsel %vm5566, %v5558, 0
    %v5655 = vsel %vm5566, %v5559, 0
    %v5658 = vsel %vm5566, %v5560, 0
    %v5661 = vsel %vm2513, %v5565, 0
    %5663 = vmatprep.subr.mxu0 0.0
    %5664 = vmatpush1.msra.mxu0 %v5561
    %5665 = vmatprep.subr.mxu0 0.0
    %5666 = vmatpush1.msra.mxu0 %v5562
    %5667 = vmatprep.subr.mxu0 0.0
    %5668 = vmatpush1.msra.mxu0 %v5563
    %5669 = vmatprep.subr.mxu0 0.0
    %5670 = vmatpush1.msra.mxu0 %v5564
    %5671 = vmatprep.subr.mxu0 0.0
    %5672 = vmatpush1.msra.mxu0 %v5661
    %5673 = vmatprep.subr.mxu0 0.0
    %5674 = vmatpush1.msra.mxu0 0.0
    %5675 = vmatprep.subr.mxu0 0.0
    %5676 = vmatpush1.msra.mxu0 0.0
    %5677 = vmatprep.subr.mxu0 0.0
    %5678 = vmatpush1.msra.mxu0 0.0
    %5679 = vmatprep.subr.mxu0 0.0
    %5680 = vmatpush1.msra.mxu0 0.0
    %5681 = vmatprep.subr.mxu0 0.0
    %5682 = vmatpush1.msra.mxu0 0.0
    %5683 = vmatprep.subr.mxu0 0.0
    %5684 = vmatpush1.msra.mxu0 0.0
    %5685 = vmatprep.subr.mxu0 0.0
    %5686 = vmatpush1.msra.mxu0 0.0
    %5687 = vmatprep.subr.mxu0 0.0
    %5688 = vmatpush1.msra.mxu0 0.0
    %5689 = vmatprep.subr.mxu0 0.0
    %5690 = vmatpush1.msra.mxu0 0.0
    %5691 = vmatprep.subr.mxu0 0.0
    %5692 = vmatpush1.msra.mxu0 0.0
    %5693 = vmatprep.subr.mxu0 0.0
    %5694 = vmatpush1.msra.mxu0 0.0
    %5695 = vmatprep.subr.mxu0 0.0
    %5696 = vmatpush1.msra.mxu0 0.0
    %5697 = vmatprep.subr.mxu0 0.0
    %5698 = vmatpush1.msra.mxu0 0.0
    %5699 = vmatprep.subr.mxu0 0.0
    %5700 = vmatpush1.msra.mxu0 0.0
    %5701 = vmatprep.subr.mxu0 0.0
    %5702 = vmatpush1.msra.mxu0 0.0
    %5703 = vmatprep.subr.mxu0 0.0
    %5704 = vmatpush1.msra.mxu0 0.0
    %5705 = vmatprep.subr.mxu0 0.0
    %5706 = vmatpush1.msra.mxu0 0.0
    %5707 = vmatprep.subr.mxu0 0.0
    %5708 = vmatpush1.msra.mxu0 0.0
    %5709 = vmatprep.subr.mxu0 0.0
    %5710 = vmatpush1.msra.mxu0 0.0
    %5711 = vmatprep.subr.mxu0 0.0
    %5712 = vmatpush1.msra.mxu0 0.0
    %5713 = vmatprep.subr.mxu0 0.0
    %5714 = vmatpush1.msra.mxu0 0.0
    %5715 = vmatprep.subr.mxu0 0.0
    %5716 = vmatpush1.msra.mxu0 0.0
    %5717 = vmatprep.subr.mxu0 0.0
    %5718 = vmatpush1.msra.mxu0 0.0
    %5719 = vmatprep.subr.mxu0 0.0
    %5720 = vmatpush1.msra.mxu0 0.0
    %5721 = vmatprep.subr.mxu0 0.0
    %5722 = vmatpush1.msra.mxu0 0.0
    %5723 = vmatprep.subr.mxu0 0.0
    %5724 = vmatpush1.msra.mxu0 0.0
    %5725 = vmatprep.subr.mxu0 0.0
    %5726 = vmatpush1.msra.mxu0 0.0
    %5727 = vmatprep.mubr.f32.mxu0 0.0
    %5728 = vmatmul.mubr.f32.gmra.mrb[0].mxu0 %v5568
    %v5729 = vpop.f32.mrb[0].mxu0
    %v5730 = vadd.f32 0.0, %v5729
    %v5731 = vpop.f32.mrb[0].mxu0
    %5732 = vmatprep.mubr.f32.mxu0 0.0
    %5733 = vmatmul.mubr.f32.gmra.mrb[0].mxu0 %v5571
    %v5734 = vpop.f32.mrb[0].mxu0
    %v5735 = vadd.f32 0.0, %v5734
    %v5736 = vpop.f32.mrb[0].mxu0
    %5737 = vmatprep.mubr.f32.mxu0 0.0
    %5738 = vmatmul.mubr.f32.gmra.mrb[0].mxu0 %v5574
    %v5739 = vpop.f32.mrb[0].mxu0
    %v5740 = vadd.f32 0.0, %v5739
    %v5741 = vpop.f32.mrb[0].mxu0
    %5742 = vmatprep.mubr.f32.mxu0 0.0
    %5743 = vmatmul.mubr.f32.gmra.mrb[0].mxu0 %v5577
    %v5744 = vpop.f32.mrb[0].mxu0
    %v5745 = vadd.f32 0.0, %v5744
    %v5746 = vpop.f32.mrb[0].mxu0
    %5747 = vmatprep.mubr.f32.mxu0 0.0
    %5748 = vmatmul.mubr.f32.gmra.mrb[0].mxu0 %v5580
    %v5749 = vpop.f32.mrb[0].mxu0
    %v5750 = vadd.f32 0.0, %v5749
    %v5751 = vpop.f32.mrb[0].mxu0
    %5752 = vmatprep.mubr.f32.mxu0 0.0
    %5753 = vmatmul.mubr.f32.gmra.mrb[0].mxu0 %v5583
    %v5754 = vpop.f32.mrb[0].mxu0
    %v5755 = vadd.f32 0.0, %v5754
    %v5756 = vpop.f32.mrb[0].mxu0
    %5757 = vmatprep.mubr.f32.mxu0 0.0
    %5758 = vmatmul.mubr.f32.gmra.mrb[0].mxu0 %v5586
    %v5759 = vpop.f32.mrb[0].mxu0
    %v5760 = vadd.f32 0.0, %v5759
    %v5761 = vpop.f32.mrb[0].mxu0
    %5762 = vmatprep.mubr.f32.mxu0 0.0
    %5763 = vmatmul.mubr.f32.gmra.mrb[0].mxu0 %v5589
    %v5764 = vpop.f32.mrb[0].mxu0
    %v5765 = vadd.f32 0.0, %v5764
    %v5766 = vpop.f32.mrb[0].mxu0
    %5767 = vmatprep.mubr.f32.mxu0 0.0
    %5768 = vmatmul.mubr.f32.gmra.mrb[0].mxu0 %v5592
    %v5769 = vpop.f32.mrb[0].mxu0
    %v5770 = vadd.f32 0.0, %v5769
    %v5771 = vpop.f32.mrb[0].mxu0
    %5772 = vmatprep.mubr.f32.mxu0 0.0
    %5773 = vmatmul.mubr.f32.gmra.mrb[0].mxu0 %v5595
    %v5774 = vpop.f32.mrb[0].mxu0
    %v5775 = vadd.f32 0.0, %v5774
    %v5776 = vpop.f32.mrb[0].mxu0
    %5777 = vmatprep.mubr.f32.mxu0 0.0
    %5778 = vmatmul.mubr.f32.gmra.mrb[0].mxu0 %v5598
    %v5779 = vpop.f32.mrb[0].mxu0
    %v5780 = vadd.f32 0.0, %v5779
    %v5781 = vpop.f32.mrb[0].mxu0
    %5782 = vmatprep.mubr.f32.mxu0 0.0
    %5783 = vmatmul.mubr.f32.gmra.mrb[0].mxu0 %v5601
    %v5784 = vpop.f32.mrb[0].mxu0
    %v5785 = vadd.f32 0.0, %v5784
    %v5786 = vpop.f32.mrb[0].mxu0
    %5787 = vmatprep.mubr.f32.mxu0 0.0
    %5788 = vmatmul.mubr.f32.gmra.mrb[0].mxu0 %v5604
    %v5789 = vpop.f32.mrb[0].mxu0
    %v5790 = vadd.f32 0.0, %v5789
    %v5791 = vpop.f32.mrb[0].mxu0
    %5792 = vmatprep.mubr.f32.mxu0 0.0
    %5793 = vmatmul.mubr.f32.gmra.mrb[0].mxu0 %v5607
    %v5794 = vpop.f32.mrb[0].mxu0
    %v5795 = vadd.f32 0.0, %v5794
    %v5796 = vpop.f32.mrb[0].mxu0
    %5797 = vmatprep.mubr.f32.mxu0 0.0
    %5798 = vmatmul.mubr.f32.gmra.mrb[0].mxu0 %v5610
    %v5799 = vpop.f32.mrb[0].mxu0
    %v5800 = vadd.f32 0.0, %v5799
    %v5801 = vpop.f32.mrb[0].mxu0
    %5802 = vmatprep.mubr.f32.mxu0 0.0
    %5803 = vmatmul.mubr.f32.gmra.mrb[0].mxu0 %v5613
    %v5804 = vpop.f32.mrb[0].mxu0
    %v5805 = vadd.f32 0.0, %v5804
    %v5806 = vpop.f32.mrb[0].mxu0
    %5807 = vmatprep.mubr.f32.mxu0 0.0
    %5808 = vmatmul.mubr.f32.gmra.mrb[0].mxu0 %v5616
    %v5809 = vpop.f32.mrb[0].mxu0
    %v5810 = vadd.f32 0.0, %v5809
    %v5811 = vpop.f32.mrb[0].mxu0
    %5812 = vmatprep.mubr.f32.mxu0 0.0
    %5813 = vmatmul.mubr.f32.gmra.mrb[0].mxu0 %v5619
    %v5814 = vpop.f32.mrb[0].mxu0
    %v5815 = vadd.f32 0.0, %v5814
    %v5816 = vpop.f32.mrb[0].mxu0
    %5817 = vmatprep.mubr.f32.mxu0 0.0
    %5818 = vmatmul.mubr.f32.gmra.mrb[0].mxu0 %v5622
    %v5819 = vpop.f32.mrb[0].mxu0
    %v5820 = vadd.f32 0.0, %v5819
    %v5821 = vpop.f32.mrb[0].mxu0
    %5822 = vmatprep.mubr.f32.mxu0 0.0
    %5823 = vmatmul.mubr.f32.gmra.mrb[0].mxu0 %v5625
    %v5824 = vpop.f32.mrb[0].mxu0
    %v5825 = vadd.f32 0.0, %v5824
    %v5826 = vpop.f32.mrb[0].mxu0
    %5827 = vmatprep.mubr.f32.mxu0 0.0
    %5828 = vmatmul.mubr.f32.gmra.mrb[0].mxu0 %v5628
    %v5829 = vpop.f32.mrb[0].mxu0
    %v5830 = vadd.f32 0.0, %v5829
    %v5831 = vpop.f32.mrb[0].mxu0
    %5832 = vmatprep.mubr.f32.mxu0 0.0
    %5833 = vmatmul.mubr.f32.gmra.mrb[0].mxu0 %v5631
    %v5834 = vpop.f32.mrb[0].mxu0
    %v5835 = vadd.f32 0.0, %v5834
    %v5836 = vpop.f32.mrb[0].mxu0
    %5837 = vmatprep.mubr.f32.mxu0 0.0
    %5838 = vmatmul.mubr.f32.gmra.mrb[0].mxu0 %v5634
    %v5839 = vpop.f32.mrb[0].mxu0
    %v5840 = vadd.f32 0.0, %v5839
    %v5841 = vpop.f32.mrb[0].mxu0
    %5842 = vmatprep.mubr.f32.mxu0 0.0
    %5843 = vmatmul.mubr.f32.gmra.mrb[0].mxu0 %v5637
    %v5844 = vpop.f32.mrb[0].mxu0
    %v5845 = vadd.f32 0.0, %v5844
    %v5846 = vpop.f32.mrb[0].mxu0
    %5847 = vmatprep.mubr.f32.mxu0 0.0
    %5848 = vmatmul.mubr.f32.gmra.mrb[0].mxu0 %v5640
    %v5849 = vpop.f32.mrb[0].mxu0
    %v5850 = vadd.f32 0.0, %v5849
    %v5851 = vpop.f32.mrb[0].mxu0
    %5852 = vmatprep.mubr.f32.mxu0 0.0
    %5853 = vmatmul.mubr.f32.gmra.mrb[0].mxu0 %v5643
    %v5854 = vpop.f32.mrb[0].mxu0
    %v5855 = vadd.f32 0.0, %v5854
    %v5856 = vpop.f32.mrb[0].mxu0
    %5857 = vmatprep.mubr.f32.mxu0 0.0
    %5858 = vmatmul.mubr.f32.gmra.mrb[0].mxu0 %v5646
    %v5859 = vpop.f32.mrb[0].mxu0
    %v5860 = vadd.f32 0.0, %v5859
    %v5861 = vpop.f32.mrb[0].mxu0
    %5862 = vmatprep.mubr.f32.mxu0 0.0
    %5863 = vmatmul.mubr.f32.gmra.mrb[0].mxu0 %v5649
    %v5864 = vpop.f32.mrb[0].mxu0
    %v5865 = vadd.f32 0.0, %v5864
    %v5866 = vpop.f32.mrb[0].mxu0
    %5867 = vmatprep.mubr.f32.mxu0 0.0
    %5868 = vmatmul.mubr.f32.gmra.mrb[0].mxu0 %v5652
    %v5869 = vpop.f32.mrb[0].mxu0
    %v5870 = vadd.f32 0.0, %v5869
    %v5871 = vpop.f32.mrb[0].mxu0
    %5872 = vmatprep.mubr.f32.mxu0 0.0
    %5873 = vmatmul.mubr.f32.gmra.mrb[0].mxu0 %v5655
    %v5874 = vpop.f32.mrb[0].mxu0
    %v5875 = vadd.f32 0.0, %v5874
    %v5876 = vpop.f32.mrb[0].mxu0
    %5877 = vmatprep.mubr.f32.mxu0 0.0
    %5878 = vmatmul.mubr.f32.gmra.mrb[0].mxu0 %v5658
    %v5879 = vpop.f32.mrb[0].mxu0
    %v5880 = vadd.f32 0.0, %v5879
    %v5881 = vpop.f32.mrb[0].mxu0
    %5882 = vdwg.mxu0
    %5883 = vset.pattern.permute.xlu0 2
    %5884 = vperm.xlu0 %5883, %v50
    %v5885 = vpop.permute.xlu0 %5884
    %5887 = vset.pattern.permute.xlu0 2
    %5888 = vperm.xlu0 %5887, %v51
    %v5889 = vpop.permute.xlu0 %5888
    %5891 = vset.pattern.permute.xlu0 2
    %5892 = vperm.xlu0 %5891, %v52
    %v5893 = vpop.permute.xlu0 %5892
    %5895 = vset.pattern.permute.xlu0 2
    %5896 = vperm.xlu0 %5895, %v53
    %v5897 = vpop.permute.xlu0 %5896
    %5899 = vset.pattern.permute.xlu0 2
    %5900 = vperm.xlu0 %5899, %v54
    %v5901 = vpop.permute.xlu0 %5900
    %5903 = vset.pattern.permute.xlu0 2
    %5904 = vperm.xlu0 %5903, %v55
    %v5905 = vpop.permute.xlu0 %5904
    %5907 = vset.pattern.permute.xlu0 2
    %5908 = vperm.xlu0 %5907, %v56
    %v5909 = vpop.permute.xlu0 %5908
    %5911 = vset.pattern.permute.xlu0 2
    %5912 = vperm.xlu0 %5911, %v57
    %v5913 = vpop.permute.xlu0 %5912
    %5915 = vset.pattern.permute.xlu0 2
    %5916 = vperm.xlu0 %5915, %v58
    %v5917 = vpop.permute.xlu0 %5916
    %5919 = vset.pattern.permute.xlu0 2
    %5920 = vperm.xlu0 %5919, %v59
    %v5921 = vpop.permute.xlu0 %5920
    %5923 = vset.pattern.permute.xlu0 2
    %5924 = vperm.xlu0 %5923, %v60
    %v5925 = vpop.permute.xlu0 %5924
    %5927 = vset.pattern.permute.xlu0 2
    %5928 = vperm.xlu0 %5927, %v61
    %v5929 = vpop.permute.xlu0 %5928
    %5931 = vset.pattern.permute.xlu0 2
    %5932 = vperm.xlu0 %5931, %v62
    %v5933 = vpop.permute.xlu0 %5932
    %5935 = vset.pattern.permute.xlu0 2
    %5936 = vperm.xlu0 %5935, %v63
    %v5937 = vpop.permute.xlu0 %5936
    %5939 = vset.pattern.permute.xlu0 2
    %5940 = vperm.xlu0 %5939, %v64
    %v5941 = vpop.permute.xlu0 %5940
    %5943 = vset.pattern.permute.xlu0 2
    %5944 = vperm.xlu0 %5943, %v65
    %v5945 = vpop.permute.xlu0 %5944
    %5947 = vset.pattern.permute.xlu0 2
    %5948 = vperm.xlu0 %5947, %v66
    %v5949 = vpop.permute.xlu0 %5948
    %5951 = vset.pattern.permute.xlu0 2
    %5952 = vperm.xlu0 %5951, %v67
    %v5953 = vpop.permute.xlu0 %5952
    %5955 = vset.pattern.permute.xlu0 2
    %5956 = vperm.xlu0 %5955, %v68
    %v5957 = vpop.permute.xlu0 %5956
    %5959 = vset.pattern.permute.xlu0 2
    %5960 = vperm.xlu0 %5959, %v69
    %v5961 = vpop.permute.xlu0 %5960
    %5963 = vset.pattern.permute.xlu0 2
    %5964 = vperm.xlu0 %5963, %v70
    %v5965 = vpop.permute.xlu0 %5964
    %5967 = vset.pattern.permute.xlu0 2
    %5968 = vperm.xlu0 %5967, %v71
    %v5969 = vpop.permute.xlu0 %5968
    %5971 = vset.pattern.permute.xlu0 2
    %5972 = vperm.xlu0 %5971, %v72
    %v5973 = vpop.permute.xlu0 %5972
    %5975 = vset.pattern.permute.xlu0 2
    %5976 = vperm.xlu0 %5975, %v73
    %v5977 = vpop.permute.xlu0 %5976
    %5979 = vset.pattern.permute.xlu0 2
    %5980 = vperm.xlu0 %5979, %v74
    %v5981 = vpop.permute.xlu0 %5980
    %5983 = vset.pattern.permute.xlu0 2
    %5984 = vperm.xlu0 %5983, %v75
    %v5985 = vpop.permute.xlu0 %5984
    %5987 = vset.pattern.permute.xlu0 2
    %5988 = vperm.xlu0 %5987, %v76
    %v5989 = vpop.permute.xlu0 %5988
    %5991 = vset.pattern.permute.xlu0 2
    %5992 = vperm.xlu0 %5991, %v77
    %v5993 = vpop.permute.xlu0 %5992
    %5995 = vset.pattern.permute.xlu0 2
    %5996 = vperm.xlu0 %5995, %v78
    %v5997 = vpop.permute.xlu0 %5996
    %5999 = vset.pattern.permute.xlu0 2
    %6000 = vperm.xlu0 %5999, %v79
    %v6001 = vpop.permute.xlu0 %6000
    %6003 = vset.pattern.permute.xlu0 2
    %6004 = vperm.xlu0 %6003, %v80
    %v6005 = vpop.permute.xlu0 %6004
    %v6007 = vmul.f32 %v5730, %v5885
    %v6008 = vmul.f32 %v5735, %v5889
    %v6009 = vmul.f32 %v5740, %v5893
    %v6010 = vmul.f32 %v5745, %v5897
    %v6011 = vmul.f32 %v5750, %v5901
    %v6012 = vmul.f32 %v5755, %v5905
    %v6013 = vmul.f32 %v5760, %v5909
    %v6014 = vmul.f32 %v5765, %v5913
    %v6015 = vmul.f32 %v5770, %v5917
    %v6016 = vmul.f32 %v5775, %v5921
    %v6017 = vmul.f32 %v5780, %v5925
    %v6018 = vmul.f32 %v5785, %v5929
    %v6019 = vmul.f32 %v5790, %v5933
    %v6020 = vmul.f32 %v5795, %v5937
    %v6021 = vmul.f32 %v5800, %v5941
    %v6022 = vmul.f32 %v5805, %v5945
    %v6023 = vmul.f32 %v5810, %v5949
    %v6024 = vmul.f32 %v5815, %v5953
    %v6025 = vmul.f32 %v5820, %v5957
    %v6026 = vmul.f32 %v5825, %v5961
    %v6027 = vmul.f32 %v5830, %v5965
    %v6028 = vmul.f32 %v5835, %v5969
    %v6029 = vmul.f32 %v5840, %v5973
    %v6030 = vmul.f32 %v5845, %v5977
    %v6031 = vmul.f32 %v5850, %v5981
    %v6032 = vmul.f32 %v5855, %v5985
    %v6033 = vmul.f32 %v5860, %v5989
    %v6034 = vmul.f32 %v5865, %v5993
    %v6035 = vmul.f32 %v5870, %v5997
    %v6036 = vmul.f32 %v5875, %v6001
    %v6037 = vmul.f32 %v5880, %v6005
    %v6038 = vmul.f32 %v6007, %v6007
    %v6039 = vmul.f32 %v6008, %v6008
    %v6040 = vmul.f32 %v6009, %v6009
    %v6041 = vmul.f32 %v6010, %v6010
    %v6042 = vmul.f32 %v6011, %v6011
    %v6043 = vmul.f32 %v6012, %v6012
    %v6044 = vmul.f32 %v6013, %v6013
    %v6045 = vmul.f32 %v6014, %v6014
    %v6046 = vmul.f32 %v6015, %v6015
    %v6047 = vmul.f32 %v6016, %v6016
    %v6048 = vmul.f32 %v6017, %v6017
    %v6049 = vmul.f32 %v6018, %v6018
    %v6050 = vmul.f32 %v6019, %v6019
    %v6051 = vmul.f32 %v6020, %v6020
    %v6052 = vmul.f32 %v6021, %v6021
    %v6053 = vmul.f32 %v6022, %v6022
    %v6054 = vmul.f32 %v6023, %v6023
    %v6055 = vmul.f32 %v6024, %v6024
    %v6056 = vmul.f32 %v6025, %v6025
    %v6057 = vmul.f32 %v6026, %v6026
    %v6058 = vmul.f32 %v6027, %v6027
    %v6059 = vmul.f32 %v6028, %v6028
    %v6060 = vmul.f32 %v6029, %v6029
    %v6061 = vmul.f32 %v6030, %v6030
    %v6062 = vmul.f32 %v6031, %v6031
    %v6063 = vmul.f32 %v6032, %v6032
    %v6064 = vmul.f32 %v6033, %v6033
    %v6065 = vmul.f32 %v6034, %v6034
    %v6066 = vmul.f32 %v6035, %v6035
    %v6067 = vmul.f32 %v6036, %v6036
    %v6068 = vmul.f32 %v6037, %v6037
    %6100 = vrot.lane.b32.xlu0 %v6038, 32
    %v6101 = vpop.permute.xlu0 %6100
    %6102 = vrot.lane.b32.xlu0 %v6039, 32
    %v6103 = vpop.permute.xlu0 %6102
    %6104 = vrot.lane.b32.xlu0 %v6040, 32
    %v6105 = vpop.permute.xlu0 %6104
    %6106 = vrot.lane.b32.xlu0 %v6041, 32
    %v6107 = vpop.permute.xlu0 %6106
    %6108 = vrot.lane.b32.xlu0 %v6042, 32
    %v6109 = vpop.permute.xlu0 %6108
    %6110 = vrot.lane.b32.xlu0 %v6043, 32
    %v6111 = vpop.permute.xlu0 %6110
    %6112 = vrot.lane.b32.xlu0 %v6044, 32
    %v6113 = vpop.permute.xlu0 %6112
    %6114 = vrot.lane.b32.xlu0 %v6045, 32
    %v6115 = vpop.permute.xlu0 %6114
    %6116 = vrot.lane.b32.xlu0 %v6046, 32
    %v6117 = vpop.permute.xlu0 %6116
    %6118 = vrot.lane.b32.xlu0 %v6047, 32
    %v6119 = vpop.permute.xlu0 %6118
    %6120 = vrot.lane.b32.xlu0 %v6048, 32
    %v6121 = vpop.permute.xlu0 %6120
    %6122 = vrot.lane.b32.xlu0 %v6049, 32
    %v6123 = vpop.permute.xlu0 %6122
    %6124 = vrot.lane.b32.xlu0 %v6050, 32
    %v6125 = vpop.permute.xlu0 %6124
    %6126 = vrot.lane.b32.xlu0 %v6051, 32
    %v6127 = vpop.permute.xlu0 %6126
    %6128 = vrot.lane.b32.xlu0 %v6052, 32
    %v6129 = vpop.permute.xlu0 %6128
    %6130 = vrot.lane.b32.xlu0 %v6053, 32
    %v6131 = vpop.permute.xlu0 %6130
    %6132 = vrot.lane.b32.xlu0 %v6054, 32
    %v6133 = vpop.permute.xlu0 %6132
    %6134 = vrot.lane.b32.xlu0 %v6055, 32
    %v6135 = vpop.permute.xlu0 %6134
    %6136 = vrot.lane.b32.xlu0 %v6056, 32
    %v6137 = vpop.permute.xlu0 %6136
    %6138 = vrot.lane.b32.xlu0 %v6057, 32
    %v6139 = vpop.permute.xlu0 %6138
    %6140 = vrot.lane.b32.xlu0 %v6058, 32
    %v6141 = vpop.permute.xlu0 %6140
    %6142 = vrot.lane.b32.xlu0 %v6059, 32
    %v6143 = vpop.permute.xlu0 %6142
    %6144 = vrot.lane.b32.xlu0 %v6060, 32
    %v6145 = vpop.permute.xlu0 %6144
    %6146 = vrot.lane.b32.xlu0 %v6061, 32
    %v6147 = vpop.permute.xlu0 %6146
    %6148 = vrot.lane.b32.xlu0 %v6062, 32
    %v6149 = vpop.permute.xlu0 %6148
    %6150 = vrot.lane.b32.xlu0 %v6063, 32
    %v6151 = vpop.permute.xlu0 %6150
    %6152 = vrot.lane.b32.xlu0 %v6064, 32
    %v6153 = vpop.permute.xlu0 %6152
    %6154 = vrot.lane.b32.xlu0 %v6065, 32
    %v6155 = vpop.permute.xlu0 %6154
    %6156 = vrot.lane.b32.xlu0 %v6066, 32
    %v6157 = vpop.permute.xlu0 %6156
    %6158 = vrot.lane.b32.xlu0 %v6067, 32
    %v6159 = vpop.permute.xlu0 %6158
    %6160 = vrot.lane.b32.xlu0 %v6068, 32
    %v6161 = vpop.permute.xlu0 %6160
    %v6193 = vsel %vm2043, %v6007, %v6101
    %v6194 = vsel %vm2043, %v6008, %v6103
    %v6195 = vsel %vm2043, %v6009, %v6105
    %v6196 = vsel %vm2043, %v6010, %v6107
    %v6197 = vsel %vm2043, %v6011, %v6109
    %v6198 = vsel %vm2043, %v6012, %v6111
    %v6199 = vsel %vm2043, %v6013, %v6113
    %v6200 = vsel %vm2043, %v6014, %v6115
    %v6201 = vsel %vm2043, %v6015, %v6117
    %v6202 = vsel %vm2043, %v6016, %v6119
    %v6203 = vsel %vm2043, %v6017, %v6121
    %v6204 = vsel %vm2043, %v6018, %v6123
    %v6205 = vsel %vm2043, %v6019, %v6125
    %v6206 = vsel %vm2043, %v6020, %v6127
    %v6207 = vsel %vm2043, %v6021, %v6129
    %v6208 = vsel %vm2043, %v6022, %v6131
    %v6209 = vsel %vm2043, %v6023, %v6133
    %v6210 = vsel %vm2043, %v6024, %v6135
    %v6211 = vsel %vm2043, %v6025, %v6137
    %v6212 = vsel %vm2043, %v6026, %v6139
    %v6213 = vsel %vm2043, %v6027, %v6141
    %v6214 = vsel %vm2043, %v6028, %v6143
    %v6215 = vsel %vm2043, %v6029, %v6145
    %v6216 = vsel %vm2043, %v6030, %v6147
    %v6217 = vsel %vm2043, %v6031, %v6149
    %v6218 = vsel %vm2043, %v6032, %v6151
    %v6219 = vsel %vm2043, %v6033, %v6153
    %v6220 = vsel %vm2043, %v6034, %v6155
    %v6221 = vsel %vm2043, %v6035, %v6157
    %v6222 = vsel %vm2043, %v6036, %v6159
    %v6223 = vsel %vm2043, %v6037, %v6161
    %v6224 = vsel %vm15, %v6193, 0.0
    %v6225 = vsel %vm15, %v6194, 0.0
    %v6226 = vadd.f32 %v6224, %v6225
    %v6227 = vsel %vm15, %v6195, 0.0
    %v6228 = vadd.f32 %v6226, %v6227
    %v6229 = vsel %vm15, %v6196, 0.0
    %v6230 = vadd.f32 %v6228, %v6229
    %v6231 = vsel %vm15, %v6197, 0.0
    %v6232 = vadd.f32 %v6230, %v6231
    %v6233 = vsel %vm15, %v6198, 0.0
    %v6234 = vadd.f32 %v6232, %v6233
    %v6235 = vsel %vm15, %v6199, 0.0
    %v6236 = vadd.f32 %v6234, %v6235
    %v6237 = vsel %vm15, %v6200, 0.0
    %v6238 = vadd.f32 %v6236, %v6237
    %v6239 = vsel %vm15, %v6201, 0.0
    %v6240 = vadd.f32 %v6238, %v6239
    %v6241 = vsel %vm15, %v6202, 0.0
    %v6242 = vadd.f32 %v6240, %v6241
    %v6243 = vsel %vm15, %v6203, 0.0
    %v6244 = vadd.f32 %v6242, %v6243
    %v6245 = vsel %vm15, %v6204, 0.0
    %v6246 = vadd.f32 %v6244, %v6245
    %v6247 = vsel %vm15, %v6205, 0.0
    %v6248 = vadd.f32 %v6246, %v6247
    %v6249 = vsel %vm15, %v6206, 0.0
    %v6250 = vadd.f32 %v6248, %v6249
    %v6251 = vsel %vm15, %v6207, 0.0
    %v6252 = vadd.f32 %v6250, %v6251
    %v6253 = vsel %vm15, %v6208, 0.0
    %v6254 = vadd.f32 %v6252, %v6253
    %v6255 = vsel %vm15, %v6209, 0.0
    %v6256 = vadd.f32 %v6254, %v6255
    %v6257 = vsel %vm15, %v6210, 0.0
    %v6258 = vadd.f32 %v6256, %v6257
    %v6259 = vsel %vm15, %v6211, 0.0
    %v6260 = vadd.f32 %v6258, %v6259
    %v6261 = vsel %vm15, %v6212, 0.0
    %v6262 = vadd.f32 %v6260, %v6261
    %v6263 = vsel %vm15, %v6213, 0.0
    %v6264 = vadd.f32 %v6262, %v6263
    %v6265 = vsel %vm15, %v6214, 0.0
    %v6266 = vadd.f32 %v6264, %v6265
    %v6267 = vsel %vm15, %v6215, 0.0
    %v6268 = vadd.f32 %v6266, %v6267
    %v6269 = vsel %vm15, %v6216, 0.0
    %v6270 = vadd.f32 %v6268, %v6269
    %v6271 = vsel %vm15, %v6217, 0.0
    %v6272 = vadd.f32 %v6270, %v6271
    %v6273 = vsel %vm15, %v6218, 0.0
    %v6274 = vadd.f32 %v6272, %v6273
    %v6275 = vsel %vm15, %v6219, 0.0
    %v6276 = vadd.f32 %v6274, %v6275
    %v6277 = vsel %vm15, %v6220, 0.0
    %v6278 = vadd.f32 %v6276, %v6277
    %v6279 = vsel %vm15, %v6221, 0.0
    %v6280 = vadd.f32 %v6278, %v6279
    %v6281 = vsel %vm15, %v6222, 0.0
    %v6282 = vadd.f32 %v6280, %v6281
    %v6283 = vsel %vm3013, %v6223, 0.0
    %v6284 = vadd.f32 %v6282, %v6283
    %v6285 = vrot.slane %v6284, 4
    %v6286 = vadd.f32 %v6284, %v6285
    %v6287 = vrot.slane %v6286, 2
    %v6288 = vadd.f32 %v6286, %v6287
    %v6289 = vrot.slane %v6288, 1
    %v6290 = vadd.f32 %v6288, %v6289
    %v6291 = vmul.f32 %v6290, 0.010204081
    %v6292 = vmul.f32 %v6291, %v6291
    %6294 = vrot.lane.b32.xlu0 %v6292, 32
    %v6295 = vpop.permute.xlu0 %6294
    %v6297 = vsub.f32 %v6291, %v6295
    %v6298 = vmax.f32 %v6297, 0.0
    %v6299 = vsub.f32 %v5730, %v6291
    %v6300 = vsub.f32 %v5735, %v6291
    %v6301 = vsub.f32 %v5740, %v6291
    %v6302 = vsub.f32 %v5745, %v6291
    %v6303 = vsub.f32 %v5750, %v6291
    %v6304 = vsub.f32 %v5755, %v6291
    %v6305 = vsub.f32 %v5760, %v6291
    %v6306 = vsub.f32 %v5765, %v6291
    %v6307 = vsub.f32 %v5770, %v6291
    %v6308 = vsub.f32 %v5775, %v6291
    %v6309 = vsub.f32 %v5780, %v6291
    %v6310 = vsub.f32 %v5785, %v6291
    %v6311 = vsub.f32 %v5790, %v6291
    %v6312 = vsub.f32 %v5795, %v6291
    %v6313 = vsub.f32 %v5800, %v6291
    %v6314 = vsub.f32 %v5805, %v6291
    %v6315 = vsub.f32 %v5810, %v6291
    %v6316 = vsub.f32 %v5815, %v6291
    %v6317 = vsub.f32 %v5820, %v6291
    %v6318 = vsub.f32 %v5825, %v6291
    %v6319 = vsub.f32 %v5830, %v6291
    %v6320 = vsub.f32 %v5835, %v6291
    %v6321 = vsub.f32 %v5840, %v6291
    %v6322 = vsub.f32 %v5845, %v6291
    %v6323 = vsub.f32 %v5850, %v6291
    %v6324 = vsub.f32 %v5855, %v6291
    %v6325 = vsub.f32 %v5860, %v6291
    %v6326 = vsub.f32 %v5865, %v6291
    %v6327 = vsub.f32 %v5870, %v6291
    %v6328 = vsub.f32 %v5875, %v6291
    %v6329 = vsub.f32 %v5880, %v6291
    %v6330 = vadd.f32 %v6298, 1e-05
    %v6331 = vrsqrt.pop %v6330
    %v6332 = vlaneseq
    %v6333 = vshrl.u32 %v6332, 7
    %v6334 = vsub.s32 0, %v6333
    %v6335 = vrot.slane %v6331, %v6334
    %6337 = vrot.lane.b32.xlu0 %v6335, 96
    %v6338 = vpop.permute.xlu0 %6337
    %v6340 = vmul.f32 %v6299, %v6338
    %v6341 = vmul.f32 %v6300, %v6338
    %v6342 = vmul.f32 %v6301, %v6338
    %v6343 = vmul.f32 %v6302, %v6338
    %v6344 = vmul.f32 %v6303, %v6338
    %v6345 = vmul.f32 %v6304, %v6338
    %v6346 = vmul.f32 %v6305, %v6338
    %v6347 = vmul.f32 %v6306, %v6338
    %v6348 = vmul.f32 %v6307, %v6338
    %v6349 = vmul.f32 %v6308, %v6338
    %v6350 = vmul.f32 %v6309, %v6338
    %v6351 = vmul.f32 %v6310, %v6338
    %v6352 = vmul.f32 %v6311, %v6338
    %v6353 = vmul.f32 %v6312, %v6338
    %v6354 = vmul.f32 %v6313, %v6338
    %v6355 = vmul.f32 %v6314, %v6338
    %v6356 = vmul.f32 %v6315, %v6338
    %v6357 = vmul.f32 %v6316, %v6338
    %v6358 = vmul.f32 %v6317, %v6338
    %v6359 = vmul.f32 %v6318, %v6338
    %v6360 = vmul.f32 %v6319, %v6338
    %v6361 = vmul.f32 %v6320, %v6338
    %v6362 = vmul.f32 %v6321, %v6338
    %v6363 = vmul.f32 %v6322, %v6338
    %v6364 = vmul.f32 %v6323, %v6338
    %v6365 = vmul.f32 %v6324, %v6338
    %v6366 = vmul.f32 %v6325, %v6338
    %v6367 = vmul.f32 %v6326, %v6338
    %v6368 = vmul.f32 %v6327, %v6338
    %v6369 = vmul.f32 %v6328, %v6338
    %v6370 = vmul.f32 %v6329, %v6338
    %vm6371 = vcmp.ge.f32.partialorder %v6340, 0.0
    %vm6372 = vcmp.ge.f32.partialorder %v6341, 0.0
    %vm6373 = vcmp.ge.f32.partialorder %v6342, 0.0
    %vm6374 = vcmp.ge.f32.partialorder %v6343, 0.0
    %vm6375 = vcmp.ge.f32.partialorder %v6344, 0.0
    %vm6376 = vcmp.ge.f32.partialorder %v6345, 0.0
    %vm6377 = vcmp.ge.f32.partialorder %v6346, 0.0
    %vm6378 = vcmp.ge.f32.partialorder %v6347, 0.0
    %vm6379 = vcmp.ge.f32.partialorder %v6348, 0.0
    %vm6380 = vcmp.ge.f32.partialorder %v6349, 0.0
    %vm6381 = vcmp.ge.f32.partialorder %v6350, 0.0
    %vm6382 = vcmp.ge.f32.partialorder %v6351, 0.0
    %vm6383 = vcmp.ge.f32.partialorder %v6352, 0.0
    %vm6384 = vcmp.ge.f32.partialorder %v6353, 0.0
    %vm6385 = vcmp.ge.f32.partialorder %v6354, 0.0
    %vm6386 = vcmp.ge.f32.partialorder %v6355, 0.0
    %vm6387 = vcmp.ge.f32.partialorder %v6356, 0.0
    %vm6388 = vcmp.ge.f32.partialorder %v6357, 0.0
    %vm6389 = vcmp.ge.f32.partialorder %v6358, 0.0
    %vm6390 = vcmp.ge.f32.partialorder %v6359, 0.0
    %vm6391 = vcmp.ge.f32.partialorder %v6360, 0.0
    %vm6392 = vcmp.ge.f32.partialorder %v6361, 0.0
    %vm6393 = vcmp.ge.f32.partialorder %v6362, 0.0
    %vm6394 = vcmp.ge.f32.partialorder %v6363, 0.0
    %vm6395 = vcmp.ge.f32.partialorder %v6364, 0.0
    %vm6396 = vcmp.ge.f32.partialorder %v6365, 0.0
    %vm6397 = vcmp.ge.f32.partialorder %v6366, 0.0
    %vm6398 = vcmp.ge.f32.partialorder %v6367, 0.0
    %vm6399 = vcmp.ge.f32.partialorder %v6368, 0.0
    %vm6400 = vcmp.ge.f32.partialorder %v6369, 0.0
    %vm6401 = vcmp.ge.f32.partialorder %v6370, 0.0
    %v6402 = vmul.f32 %v6340, 0.01
    %v6403 = vmul.f32 %v6341, 0.01
    %v6404 = vmul.f32 %v6342, 0.01
    %v6405 = vmul.f32 %v6343, 0.01
    %v6406 = vmul.f32 %v6344, 0.01
    %v6407 = vmul.f32 %v6345, 0.01
    %v6408 = vmul.f32 %v6346, 0.01
    %v6409 = vmul.f32 %v6347, 0.01
    %v6410 = vmul.f32 %v6348, 0.01
    %v6411 = vmul.f32 %v6349, 0.01
    %v6412 = vmul.f32 %v6350, 0.01
    %v6413 = vmul.f32 %v6351, 0.01
    %v6414 = vmul.f32 %v6352, 0.01
    %v6415 = vmul.f32 %v6353, 0.01
    %v6416 = vmul.f32 %v6354, 0.01
    %v6417 = vmul.f32 %v6355, 0.01
    %v6418 = vmul.f32 %v6356, 0.01
    %v6419 = vmul.f32 %v6357, 0.01
    %v6420 = vmul.f32 %v6358, 0.01
    %v6421 = vmul.f32 %v6359, 0.01
    %v6422 = vmul.f32 %v6360, 0.01
    %v6423 = vmul.f32 %v6361, 0.01
    %v6424 = vmul.f32 %v6362, 0.01
    %v6425 = vmul.f32 %v6363, 0.01
    %v6426 = vmul.f32 %v6364, 0.01
    %v6427 = vmul.f32 %v6365, 0.01
    %v6428 = vmul.f32 %v6366, 0.01
    %v6429 = vmul.f32 %v6367, 0.01
    %v6430 = vmul.f32 %v6368, 0.01
    %v6431 = vmul.f32 %v6369, 0.01
    %v6432 = vmul.f32 %v6370, 0.01
    %v6433 = vsel %vm6371, %v6340, %v6402
    %v6434 = vsel %vm6372, %v6341, %v6403
    %v6435 = vsel %vm6373, %v6342, %v6404
    %v6436 = vsel %vm6374, %v6343, %v6405
    %v6437 = vsel %vm6375, %v6344, %v6406
    %v6438 = vsel %vm6376, %v6345, %v6407
    %v6439 = vsel %vm6377, %v6346, %v6408
    %v6440 = vsel %vm6378, %v6347, %v6409
    %v6441 = vsel %vm6379, %v6348, %v6410
    %v6442 = vsel %vm6380, %v6349, %v6411
    %v6443 = vsel %vm6381, %v6350, %v6412
    %v6444 = vsel %vm6382, %v6351, %v6413
    %v6445 = vsel %vm6383, %v6352, %v6414
    %v6446 = vsel %vm6384, %v6353, %v6415
    %v6447 = vsel %vm6385, %v6354, %v6416
    %v6448 = vsel %vm6386, %v6355, %v6417
    %v6449 = vsel %vm6387, %v6356, %v6418
    %v6450 = vsel %vm6388, %v6357, %v6419
    %v6451 = vsel %vm6389, %v6358, %v6420
    %v6452 = vsel %vm6390, %v6359, %v6421
    %v6453 = vsel %vm6391, %v6360, %v6422
    %v6454 = vsel %vm6392, %v6361, %v6423
    %v6455 = vsel %vm6393, %v6362, %v6424
    %v6456 = vsel %vm6394, %v6363, %v6425
    %v6457 = vsel %vm6395, %v6364, %v6426
    %v6458 = vsel %vm6396, %v6365, %v6427
    %v6459 = vsel %vm6397, %v6366, %v6428
    %v6460 = vsel %vm6398, %v6367, %v6429
    %v6461 = vsel %vm6399, %v6368, %v6430
    %v6462 = vsel %vm6400, %v6369, %v6431
    %v6463 = vsel %vm6401, %v6370, %v6432
    %v6464 = vmul.f32 %v6433, %v5885
    %v6465 = vmul.f32 %v6434, %v5889
    %v6466 = vmul.f32 %v6435, %v5893
    %v6467 = vmul.f32 %v6436, %v5897
    %v6468 = vmul.f32 %v6437, %v5901
    %v6469 = vmul.f32 %v6438, %v5905
    %v6470 = vmul.f32 %v6439, %v5909
    %v6471 = vmul.f32 %v6440, %v5913
    %v6472 = vmul.f32 %v6441, %v5917
    %v6473 = vmul.f32 %v6442, %v5921
    %v6474 = vmul.f32 %v6443, %v5925
    %v6475 = vmul.f32 %v6444, %v5929
    %v6476 = vmul.f32 %v6445, %v5933
    %v6477 = vmul.f32 %v6446, %v5937
    %v6478 = vmul.f32 %v6447, %v5941
    %v6479 = vmul.f32 %v6448, %v5945
    %v6480 = vmul.f32 %v6449, %v5949
    %v6481 = vmul.f32 %v6450, %v5953
    %v6482 = vmul.f32 %v6451, %v5957
    %v6483 = vmul.f32 %v6452, %v5961
    %v6484 = vmul.f32 %v6453, %v5965
    %v6485 = vmul.f32 %v6454, %v5969
    %v6486 = vmul.f32 %v6455, %v5973
    %v6487 = vmul.f32 %v6456, %v5977
    %v6488 = vmul.f32 %v6457, %v5981
    %v6489 = vmul.f32 %v6458, %v5985
    %v6490 = vmul.f32 %v6459, %v5989
    %v6491 = vmul.f32 %v6460, %v5993
    %v6492 = vmul.f32 %v6461, %v5997
    %v6493 = vmul.f32 %v6462, %v6001
    %v6494 = vmul.f32 %v6463, %v6005
    %6495 = vst.msk [vmem:[#allocation2] sm:$0xff] %vm2043, %v6464
    %6496 = vst.msk [vmem:[#allocation2 + $0x8] sm:$0xff] %vm2043, %v6465
    %6497 = vst.msk [vmem:[#allocation2 + $0x10] sm:$0xff] %vm2043, %v6466
    %6498 = vst.msk [vmem:[#allocation2 + $0x18] sm:$0xff] %vm2043, %v6467
    %6499 = vst.msk [vmem:[#allocation2 + $0x20] sm:$0xff] %vm2043, %v6468
    %6500 = vst.msk [vmem:[#allocation2 + $0x28] sm:$0xff] %vm2043, %v6469
    %6501 = vst.msk [vmem:[#allocation2 + $0x30] sm:$0xff] %vm2043, %v6470
    %6502 = vst.msk [vmem:[#allocation2 + $0x38] sm:$0xff] %vm2043, %v6471
    %6503 = vst.msk [vmem:[#allocation2 + $0x40] sm:$0xff] %vm2043, %v6472
    %6504 = vst.msk [vmem:[#allocation2 + $0x48] sm:$0xff] %vm2043, %v6473
    %6505 = vst.msk [vmem:[#allocation2 + $0x50] sm:$0xff] %vm2043, %v6474
    %6506 = vst.msk [vmem:[#allocation2 + $0x58] sm:$0xff] %vm2043, %v6475
    %6507 = vst.msk [vmem:[#allocation2 + $0x60] sm:$0xff] %vm2043, %v6476
    %6508 = vst.msk [vmem:[#allocation2 + $0x68] sm:$0xff] %vm2043, %v6477
    %6509 = vst.msk [vmem:[#allocation2 + $0x70] sm:$0xff] %vm2043, %v6478
    %6510 = vst.msk [vmem:[#allocation2 + $0x78] sm:$0xff] %vm2043, %v6479
    %6511 = vst.msk [vmem:[#allocation2 + $0x80] sm:$0xff] %vm2043, %v6480
    %6512 = vst.msk [vmem:[#allocation2 + $0x88] sm:$0xff] %vm2043, %v6481
    %6513 = vst.msk [vmem:[#allocation2 + $0x90] sm:$0xff] %vm2043, %v6482
    %6514 = vst.msk [vmem:[#allocation2 + $0x98] sm:$0xff] %vm2043, %v6483
    %6515 = vst.msk [vmem:[#allocation2 + $0xa0] sm:$0xff] %vm2043, %v6484
    %6516 = vst.msk [vmem:[#allocation2 + $0xa8] sm:$0xff] %vm2043, %v6485
    %6517 = vst.msk [vmem:[#allocation2 + $0xb0] sm:$0xff] %vm2043, %v6486
    %6518 = vst.msk [vmem:[#allocation2 + $0xb8] sm:$0xff] %vm2043, %v6487
    %6519 = vst.msk [vmem:[#allocation2 + $0xc0] sm:$0xff] %vm2043, %v6488
    %6520 = vst.msk [vmem:[#allocation2 + $0xc8] sm:$0xff] %vm2043, %v6489
    %6521 = vst.msk [vmem:[#allocation2 + $0xd0] sm:$0xff] %vm2043, %v6490
    %6522 = vst.msk [vmem:[#allocation2 + $0xd8] sm:$0xff] %vm2043, %v6491
    %6523 = vst.msk [vmem:[#allocation2 + $0xe0] sm:$0xff] %vm2043, %v6492
    %6524 = vst.msk [vmem:[#allocation2 + $0xe8] sm:$0xff] %vm2043, %v6493
    %vm6525 = vcmask 254976
    %6526 = vst.msk [vmem:[#allocation2 + $0xf0] sm:$0x3] %vm6525, %v6494
    %v6527 = vld [vmem:[#allocation2] sm:$0xff]
    %v6528 = vld [vmem:[#allocation2 + $0x8] sm:$0xff]
    %v6529 = vld [vmem:[#allocation2 + $0x10] sm:$0xff]
    %v6530 = vld [vmem:[#allocation2 + $0x18] sm:$0xff]
    %v6531 = vld [vmem:[#allocation2 + $0x20] sm:$0xff]
    %v6532 = vld [vmem:[#allocation2 + $0x28] sm:$0xff]
    %v6533 = vld [vmem:[#allocation2 + $0x30] sm:$0xff]
    %v6534 = vld [vmem:[#allocation2 + $0x38] sm:$0xff]
    %v6535 = vld [vmem:[#allocation2 + $0x40] sm:$0xff]
    %v6536 = vld [vmem:[#allocation2 + $0x48] sm:$0xff]
    %v6537 = vld [vmem:[#allocation2 + $0x50] sm:$0xff]
    %v6538 = vld [vmem:[#allocation2 + $0x58] sm:$0xff]
    %v6539 = vld [vmem:[#allocation2 + $0x60] sm:$0xff]
    %v6540 = vld [vmem:[#allocation2 + $0x68] sm:$0xff]
    %v6541 = vld [vmem:[#allocation2 + $0x70] sm:$0xff]
    %v6542 = vld [vmem:[#allocation2 + $0x78] sm:$0xff]
    %v6543 = vld [vmem:[#allocation2 + $0x80] sm:$0xff]
    %v6544 = vld [vmem:[#allocation2 + $0x88] sm:$0xff]
    %v6545 = vld [vmem:[#allocation2 + $0x90] sm:$0xff]
    %v6546 = vld [vmem:[#allocation2 + $0x98] sm:$0xff]
    %v6547 = vld [vmem:[#allocation2 + $0xa0] sm:$0xff]
    %v6548 = vld [vmem:[#allocation2 + $0xa8] sm:$0xff]
    %v6549 = vld [vmem:[#allocation2 + $0xb0] sm:$0xff]
    %v6550 = vld [vmem:[#allocation2 + $0xb8] sm:$0xff]
    %v6551 = vld [vmem:[#allocation2 + $0xc0] sm:$0xff]
    %v6552 = vld [vmem:[#allocation2 + $0xc8] sm:$0xff]
    %v6553 = vld [vmem:[#allocation2 + $0xd0] sm:$0xff]
    %v6554 = vld [vmem:[#allocation2 + $0xd8] sm:$0xff]
    %v6555 = vld [vmem:[#allocation2 + $0xe0] sm:$0xff]
    %v6556 = vld [vmem:[#allocation2 + $0xe8] sm:$0xff]
    %v6557 = vld [vmem:[#allocation2 + $0xf0] sm:$0x3]
    %v6558 = vld [vmem:[#allocation2 + $0x1] sm:$0xff]
    %v6559 = vld [vmem:[#allocation2 + $0x9] sm:$0xff]
    %v6560 = vld [vmem:[#allocation2 + $0x11] sm:$0xff]
    %v6561 = vld [vmem:[#allocation2 + $0x19] sm:$0xff]
    %v6562 = vld [vmem:[#allocation2 + $0x21] sm:$0xff]
    %v6563 = vld [vmem:[#allocation2 + $0x29] sm:$0xff]
    %v6564 = vld [vmem:[#allocation2 + $0x31] sm:$0xff]
    %v6565 = vld [vmem:[#allocation2 + $0x39] sm:$0xff]
    %v6566 = vld [vmem:[#allocation2 + $0x41] sm:$0xff]
    %v6567 = vld [vmem:[#allocation2 + $0x49] sm:$0xff]
    %v6568 = vld [vmem:[#allocation2 + $0x51] sm:$0xff]
    %v6569 = vld [vmem:[#allocation2 + $0x59] sm:$0xff]
    %v6570 = vld [vmem:[#allocation2 + $0x61] sm:$0xff]
    %v6571 = vld [vmem:[#allocation2 + $0x69] sm:$0xff]
    %v6572 = vld [vmem:[#allocation2 + $0x71] sm:$0xff]
    %v6573 = vld [vmem:[#allocation2 + $0x79] sm:$0xff]
    %v6574 = vld [vmem:[#allocation2 + $0x81] sm:$0xff]
    %v6575 = vld [vmem:[#allocation2 + $0x89] sm:$0xff]
    %v6576 = vld [vmem:[#allocation2 + $0x91] sm:$0xff]
    %v6577 = vld [vmem:[#allocation2 + $0x99] sm:$0xff]
    %v6578 = vld [vmem:[#allocation2 + $0xa1] sm:$0xff]
    %v6579 = vld [vmem:[#allocation2 + $0xa9] sm:$0xff]
    %v6580 = vld [vmem:[#allocation2 + $0xb1] sm:$0xff]
    %v6581 = vld [vmem:[#allocation2 + $0xb9] sm:$0xff]
    %v6582 = vld [vmem:[#allocation2 + $0xc1] sm:$0xff]
    %v6583 = vld [vmem:[#allocation2 + $0xc9] sm:$0xff]
    %v6584 = vld [vmem:[#allocation2 + $0xd1] sm:$0xff]
    %v6585 = vld [vmem:[#allocation2 + $0xd9] sm:$0xff]
    %v6586 = vld [vmem:[#allocation2 + $0xe1] sm:$0xff]
    %v6587 = vld [vmem:[#allocation2 + $0xe9] sm:$0xff]
    %v6588 = vld [vmem:[#allocation2 + $0xf1] sm:$0x3]
    %v6589 = vld [vmem:[#allocation2 + $0x2] sm:$0xff]
    %v6590 = vld [vmem:[#allocation2 + $0xa] sm:$0xff]
    %v6591 = vld [vmem:[#allocation2 + $0x12] sm:$0xff]
    %v6592 = vld [vmem:[#allocation2 + $0x1a] sm:$0xff]
    %v6593 = vld [vmem:[#allocation2 + $0x22] sm:$0xff]
    %v6594 = vld [vmem:[#allocation2 + $0x2a] sm:$0xff]
    %v6595 = vld [vmem:[#allocation2 + $0x32] sm:$0xff]
    %v6596 = vld [vmem:[#allocation2 + $0x3a] sm:$0xff]
    %v6597 = vld [vmem:[#allocation2 + $0x42] sm:$0xff]
    %v6598 = vld [vmem:[#allocation2 + $0x4a] sm:$0xff]
    %v6599 = vld [vmem:[#allocation2 + $0x52] sm:$0xff]
    %v6600 = vld [vmem:[#allocation2 + $0x5a] sm:$0xff]
    %v6601 = vld [vmem:[#allocation2 + $0x62] sm:$0xff]
    %v6602 = vld [vmem:[#allocation2 + $0x6a] sm:$0xff]
    %v6603 = vld [vmem:[#allocation2 + $0x72] sm:$0xff]
    %v6604 = vld [vmem:[#allocation2 + $0x7a] sm:$0xff]
    %v6605 = vld [vmem:[#allocation2 + $0x82] sm:$0xff]
    %v6606 = vld [vmem:[#allocation2 + $0x8a] sm:$0xff]
    %v6607 = vld [vmem:[#allocation2 + $0x92] sm:$0xff]
    %v6608 = vld [vmem:[#allocation2 + $0x9a] sm:$0xff]
    %v6609 = vld [vmem:[#allocation2 + $0xa2] sm:$0xff]
    %v6610 = vld [vmem:[#allocation2 + $0xaa] sm:$0xff]
    %v6611 = vld [vmem:[#allocation2 + $0xb2] sm:$0xff]
    %v6612 = vld [vmem:[#allocation2 + $0xba] sm:$0xff]
    %v6613 = vld [vmem:[#allocation2 + $0xc2] sm:$0xff]
    %v6614 = vld [vmem:[#allocation2 + $0xca] sm:$0xff]
    %v6615 = vld [vmem:[#allocation2 + $0xd2] sm:$0xff]
    %v6616 = vld [vmem:[#allocation2 + $0xda] sm:$0xff]
    %v6617 = vld [vmem:[#allocation2 + $0xe2] sm:$0xff]
    %v6618 = vld [vmem:[#allocation2 + $0xea] sm:$0xff]
    %v6619 = vld [vmem:[#allocation2 + $0xf2] sm:$0x3]
    %v6620 = vld [vmem:[#allocation2 + $0xb] sm:$0xff]
    %v6621 = vld [vmem:[#allocation2 + $0x13] sm:$0xff]
    %v6622 = vld [vmem:[#allocation2 + $0x1b] sm:$0xff]
    %v6623 = vld [vmem:[#allocation2 + $0x23] sm:$0xff]
    %v6624 = vld [vmem:[#allocation2 + $0x2b] sm:$0xff]
    %v6625 = vld [vmem:[#allocation2 + $0x33] sm:$0xff]
    %v6626 = vld [vmem:[#allocation2 + $0x3b] sm:$0xff]
    %v6627 = vld [vmem:[#allocation2 + $0x43] sm:$0xff]
    %v6628 = vld [vmem:[#allocation2 + $0x4b] sm:$0xff]
    %v6629 = vld [vmem:[#allocation2 + $0x53] sm:$0xff]
    %v6630 = vld [vmem:[#allocation2 + $0x5b] sm:$0xff]
    %v6631 = vld [vmem:[#allocation2 + $0x63] sm:$0xff]
    %v6632 = vld [vmem:[#allocation2 + $0x6b] sm:$0xff]
    %v6633 = vld [vmem:[#allocation2 + $0x73] sm:$0xff]
    %v6634 = vld [vmem:[#allocation2 + $0x7b] sm:$0xff]
    %v6635 = vld [vmem:[#allocation2 + $0x83] sm:$0xff]
    %v6636 = vld [vmem:[#allocation2 + $0x8b] sm:$0xff]
    %v6637 = vld [vmem:[#allocation2 + $0x93] sm:$0xff]
    %v6638 = vld [vmem:[#allocation2 + $0x9b] sm:$0xff]
    %v6639 = vld [vmem:[#allocation2 + $0xa3] sm:$0xff]
    %v6640 = vld [vmem:[#allocation2 + $0xab] sm:$0xff]
    %v6641 = vld [vmem:[#allocation2 + $0xb3] sm:$0xff]
    %v6642 = vld [vmem:[#allocation2 + $0xbb] sm:$0xff]
    %v6643 = vld [vmem:[#allocation2 + $0xc3] sm:$0xff]
    %v6644 = vld [vmem:[#allocation2 + $0xcb] sm:$0xff]
    %v6645 = vld [vmem:[#allocation2 + $0xd3] sm:$0xff]
    %v6646 = vld [vmem:[#allocation2 + $0xdb] sm:$0xff]
    %v6647 = vld [vmem:[#allocation2 + $0xe3] sm:$0xff]
    %v6648 = vld [vmem:[#allocation2 + $0xeb] sm:$0xff]
    %v6649 = vld [vmem:[#allocation2 + $0xf3] sm:$0xff]
    %v6650 = vld [vmem:[#allocation2 + $0xfb] sm:$0x3]
    %v6651 = vld [vmem:[#allocation2 + $0xc] sm:$0xff]
    %v6652 = vld [vmem:[#allocation2 + $0x14] sm:$0xff]
    %v6653 = vld [vmem:[#allocation2 + $0x1c] sm:$0xff]
    %v6654 = vld [vmem:[#allocation2 + $0x24] sm:$0xff]
    %v6655 = vld [vmem:[#allocation2 + $0x2c] sm:$0xff]
    %v6656 = vld [vmem:[#allocation2 + $0x34] sm:$0xff]
    %v6657 = vld [vmem:[#allocation2 + $0x3c] sm:$0xff]
    %v6658 = vld [vmem:[#allocation2 + $0x44] sm:$0xff]
    %v6659 = vld [vmem:[#allocation2 + $0x4c] sm:$0xff]
    %v6660 = vld [vmem:[#allocation2 + $0x54] sm:$0xff]
    %v6661 = vld [vmem:[#allocation2 + $0x5c] sm:$0xff]
    %v6662 = vld [vmem:[#allocation2 + $0x64] sm:$0xff]
    %v6663 = vld [vmem:[#allocation2 + $0x6c] sm:$0xff]
    %v6664 = vld [vmem:[#allocation2 + $0x74] sm:$0xff]
    %v6665 = vld [vmem:[#allocation2 + $0x7c] sm:$0xff]
    %v6666 = vld [vmem:[#allocation2 + $0x84] sm:$0xff]
    %v6667 = vld [vmem:[#allocation2 + $0x8c] sm:$0xff]
    %v6668 = vld [vmem:[#allocation2 + $0x94] sm:$0xff]
    %v6669 = vld [vmem:[#allocation2 + $0x9c] sm:$0xff]
    %v6670 = vld [vmem:[#allocation2 + $0xa4] sm:$0xff]
    %v6671 = vld [vmem:[#allocation2 + $0xac] sm:$0xff]
    %v6672 = vld [vmem:[#allocation2 + $0xb4] sm:$0xff]
    %v6673 = vld [vmem:[#allocation2 + $0xbc] sm:$0xff]
    %v6674 = vld [vmem:[#allocation2 + $0xc4] sm:$0xff]
    %v6675 = vld [vmem:[#allocation2 + $0xcc] sm:$0xff]
    %v6676 = vld [vmem:[#allocation2 + $0xd4] sm:$0xff]
    %v6677 = vld [vmem:[#allocation2 + $0xdc] sm:$0xff]
    %v6678 = vld [vmem:[#allocation2 + $0xe4] sm:$0xff]
    %v6679 = vld [vmem:[#allocation2 + $0xec] sm:$0xff]
    %v6680 = vld [vmem:[#allocation2 + $0xf4] sm:$0xff]
    %v6681 = vld [vmem:[#allocation2 + $0xfc] sm:$0x3]
    %v6682 = vld [vmem:[#allocation2 + $0xd] sm:$0xff]
    %v6683 = vld [vmem:[#allocation2 + $0x15] sm:$0xff]
    %v6684 = vld [vmem:[#allocation2 + $0x1d] sm:$0xff]
    %v6685 = vld [vmem:[#allocation2 + $0x25] sm:$0xff]
    %v6686 = vld [vmem:[#allocation2 + $0x2d] sm:$0xff]
    %v6687 = vld [vmem:[#allocation2 + $0x35] sm:$0xff]
    %v6688 = vld [vmem:[#allocation2 + $0x3d] sm:$0xff]
    %v6689 = vld [vmem:[#allocation2 + $0x45] sm:$0xff]
    %v6690 = vld [vmem:[#allocation2 + $0x4d] sm:$0xff]
    %v6691 = vld [vmem:[#allocation2 + $0x55] sm:$0xff]
    %v6692 = vld [vmem:[#allocation2 + $0x5d] sm:$0xff]
    %v6693 = vld [vmem:[#allocation2 + $0x65] sm:$0xff]
    %v6694 = vld [vmem:[#allocation2 + $0x6d] sm:$0xff]
    %v6695 = vld [vmem:[#allocation2 + $0x75] sm:$0xff]
    %v6696 = vld [vmem:[#allocation2 + $0x7d] sm:$0xff]
    %v6697 = vld [vmem:[#allocation2 + $0x85] sm:$0xff]
    %v6698 = vld [vmem:[#allocation2 + $0x8d] sm:$0xff]
    %v6699 = vld [vmem:[#allocation2 + $0x95] sm:$0xff]
    %v6700 = vld [vmem:[#allocation2 + $0x9d] sm:$0xff]
    %v6701 = vld [vmem:[#allocation2 + $0xa5] sm:$0xff]
    %v6702 = vld [vmem:[#allocation2 + $0xad] sm:$0xff]
    %v6703 = vld [vmem:[#allocation2 + $0xb5] sm:$0xff]
    %v6704 = vld [vmem:[#allocation2 + $0xbd] sm:$0xff]
    %v6705 = vld [vmem:[#allocation2 + $0xc5] sm:$0xff]
    %v6706 = vld [vmem:[#allocation2 + $0xcd] sm:$0xff]
    %v6707 = vld [vmem:[#allocation2 + $0xd5] sm:$0xff]
    %v6708 = vld [vmem:[#allocation2 + $0xdd] sm:$0xff]
    %v6709 = vld [vmem:[#allocation2 + $0xe5] sm:$0xff]
    %v6710 = vld [vmem:[#allocation2 + $0xed] sm:$0xff]
    %v6711 = vld [vmem:[#allocation2 + $0xf5] sm:$0xff]
    %v6712 = vld [vmem:[#allocation2 + $0xfd] sm:$0x3]
    %v6713 = vld [vmem:[#allocation2 + $0x16] sm:$0xff]
    %v6714 = vld [vmem:[#allocation2 + $0x1e] sm:$0xff]
    %v6715 = vld [vmem:[#allocation2 + $0x26] sm:$0xff]
    %v6716 = vld [vmem:[#allocation2 + $0x2e] sm:$0xff]
    %v6717 = vld [vmem:[#allocation2 + $0x36] sm:$0xff]
    %v6718 = vld [vmem:[#allocation2 + $0x3e] sm:$0xff]
    %v6719 = vld [vmem:[#allocation2 + $0x46] sm:$0xff]
    %v6720 = vld [vmem:[#allocation2 + $0x4e] sm:$0xff]
    %v6721 = vld [vmem:[#allocation2 + $0x56] sm:$0xff]
    %v6722 = vld [vmem:[#allocation2 + $0x5e] sm:$0xff]
    %v6723 = vld [vmem:[#allocation2 + $0x66] sm:$0xff]
    %v6724 = vld [vmem:[#allocation2 + $0x6e] sm:$0xff]
    %v6725 = vld [vmem:[#allocation2 + $0x76] sm:$0xff]
    %v6726 = vld [vmem:[#allocation2 + $0x7e] sm:$0xff]
    %v6727 = vld [vmem:[#allocation2 + $0x86] sm:$0xff]
    %v6728 = vld [vmem:[#allocation2 + $0x8e] sm:$0xff]
    %v6729 = vld [vmem:[#allocation2 + $0x96] sm:$0xff]
    %v6730 = vld [vmem:[#allocation2 + $0x9e] sm:$0xff]
    %v6731 = vld [vmem:[#allocation2 + $0xa6] sm:$0xff]
    %v6732 = vld [vmem:[#allocation2 + $0xae] sm:$0xff]
    %v6733 = vld [vmem:[#allocation2 + $0xb6] sm:$0xff]
    %v6734 = vld [vmem:[#allocation2 + $0xbe] sm:$0xff]
    %v6735 = vld [vmem:[#allocation2 + $0xc6] sm:$0xff]
    %v6736 = vld [vmem:[#allocation2 + $0xce] sm:$0xff]
    %v6737 = vld [vmem:[#allocation2 + $0xd6] sm:$0xff]
    %v6738 = vld [vmem:[#allocation2 + $0xde] sm:$0xff]
    %v6739 = vld [vmem:[#allocation2 + $0xe6] sm:$0xff]
    %v6740 = vld [vmem:[#allocation2 + $0xee] sm:$0xff]
    %v6741 = vld [vmem:[#allocation2 + $0xf6] sm:$0xff]
    %v6742 = vld [vmem:[#allocation2 + $0xfe] sm:$0xff]
    %v6743 = vld [vmem:[#allocation2 + $0x106] sm:$0x3]
    %v6744 = vld [vmem:[#allocation2 + $0x17] sm:$0xff]
    %v6745 = vld [vmem:[#allocation2 + $0x1f] sm:$0xff]
    %v6746 = vld [vmem:[#allocation2 + $0x27] sm:$0xff]
    %v6747 = vld [vmem:[#allocation2 + $0x2f] sm:$0xff]
    %v6748 = vld [vmem:[#allocation2 + $0x37] sm:$0xff]
    %v6749 = vld [vmem:[#allocation2 + $0x3f] sm:$0xff]
    %v6750 = vld [vmem:[#allocation2 + $0x47] sm:$0xff]
    %v6751 = vld [vmem:[#allocation2 + $0x4f] sm:$0xff]
    %v6752 = vld [vmem:[#allocation2 + $0x57] sm:$0xff]
    %v6753 = vld [vmem:[#allocation2 + $0x5f] sm:$0xff]
    %v6754 = vld [vmem:[#allocation2 + $0x67] sm:$0xff]
    %v6755 = vld [vmem:[#allocation2 + $0x6f] sm:$0xff]
    %v6756 = vld [vmem:[#allocation2 + $0x77] sm:$0xff]
    %v6757 = vld [vmem:[#allocation2 + $0x7f] sm:$0xff]
    %v6758 = vld [vmem:[#allocation2 + $0x87] sm:$0xff]
    %v6759 = vld [vmem:[#allocation2 + $0x8f] sm:$0xff]
    %v6760 = vld [vmem:[#allocation2 + $0x97] sm:$0xff]
    %v6761 = vld [vmem:[#allocation2 + $0x9f] sm:$0xff]
    %v6762 = vld [vmem:[#allocation2 + $0xa7] sm:$0xff]
    %v6763 = vld [vmem:[#allocation2 + $0xaf] sm:$0xff]
    %v6764 = vld [vmem:[#allocation2 + $0xb7] sm:$0xff]
    %v6765 = vld [vmem:[#allocation2 + $0xbf] sm:$0xff]
    %v6766 = vld [vmem:[#allocation2 + $0xc7] sm:$0xff]
    %v6767 = vld [vmem:[#allocation2 + $0xcf] sm:$0xff]
    %v6768 = vld [vmem:[#allocation2 + $0xd7] sm:$0xff]
    %v6769 = vld [vmem:[#allocation2 + $0xdf] sm:$0xff]
    %v6770 = vld [vmem:[#allocation2 + $0xe7] sm:$0xff]
    %v6771 = vld [vmem:[#allocation2 + $0xef] sm:$0xff]
    %v6772 = vld [vmem:[#allocation2 + $0xf7] sm:$0xff]
    %v6773 = vld [vmem:[#allocation2 + $0xff] sm:$0xff]
    %v6774 = vld [vmem:[#allocation2 + $0x107] sm:$0x3]
    %v6775 = vld [vmem:[#allocation2 + $0xf0] sm:$0xff]
    %v6776 = vld [vmem:[#allocation2 + $0xf8] sm:$0xff]
    %v6777 = vld [vmem:[#allocation2 + $0x100] sm:$0xff]
    %v6778 = vld [vmem:[#allocation2 + $0x108] sm:$0x3]
    %6810 = vrot.lane.b32.xlu0 %v6558, 32
    %v6811 = vpop.permute.xlu0 %6810
    %6812 = vrot.lane.b32.xlu0 %v6559, 32
    %v6813 = vpop.permute.xlu0 %6812
    %6814 = vrot.lane.b32.xlu0 %v6560, 32
    %v6815 = vpop.permute.xlu0 %6814
    %6816 = vrot.lane.b32.xlu0 %v6561, 32
    %v6817 = vpop.permute.xlu0 %6816
    %6818 = vrot.lane.b32.xlu0 %v6562, 32
    %v6819 = vpop.permute.xlu0 %6818
    %6820 = vrot.lane.b32.xlu0 %v6563, 32
    %v6821 = vpop.permute.xlu0 %6820
    %6822 = vrot.lane.b32.xlu0 %v6564, 32
    %v6823 = vpop.permute.xlu0 %6822
    %6824 = vrot.lane.b32.xlu0 %v6565, 32
    %v6825 = vpop.permute.xlu0 %6824
    %6826 = vrot.lane.b32.xlu0 %v6566, 32
    %v6827 = vpop.permute.xlu0 %6826
    %6828 = vrot.lane.b32.xlu0 %v6567, 32
    %v6829 = vpop.permute.xlu0 %6828
    %6830 = vrot.lane.b32.xlu0 %v6568, 32
    %v6831 = vpop.permute.xlu0 %6830
    %6832 = vrot.lane.b32.xlu0 %v6569, 32
    %v6833 = vpop.permute.xlu0 %6832
    %6834 = vrot.lane.b32.xlu0 %v6570, 32
    %v6835 = vpop.permute.xlu0 %6834
    %6836 = vrot.lane.b32.xlu0 %v6571, 32
    %v6837 = vpop.permute.xlu0 %6836
    %6838 = vrot.lane.b32.xlu0 %v6572, 32
    %v6839 = vpop.permute.xlu0 %6838
    %6840 = vrot.lane.b32.xlu0 %v6573, 32
    %v6841 = vpop.permute.xlu0 %6840
    %6842 = vrot.lane.b32.xlu0 %v6574, 32
    %v6843 = vpop.permute.xlu0 %6842
    %6844 = vrot.lane.b32.xlu0 %v6575, 32
    %v6845 = vpop.permute.xlu0 %6844
    %6846 = vrot.lane.b32.xlu0 %v6576, 32
    %v6847 = vpop.permute.xlu0 %6846
    %6848 = vrot.lane.b32.xlu0 %v6577, 32
    %v6849 = vpop.permute.xlu0 %6848
    %6850 = vrot.lane.b32.xlu0 %v6578, 32
    %v6851 = vpop.permute.xlu0 %6850
    %6852 = vrot.lane.b32.xlu0 %v6579, 32
    %v6853 = vpop.permute.xlu0 %6852
    %6854 = vrot.lane.b32.xlu0 %v6580, 32
    %v6855 = vpop.permute.xlu0 %6854
    %6856 = vrot.lane.b32.xlu0 %v6581, 32
    %v6857 = vpop.permute.xlu0 %6856
    %6858 = vrot.lane.b32.xlu0 %v6582, 32
    %v6859 = vpop.permute.xlu0 %6858
    %6860 = vrot.lane.b32.xlu0 %v6583, 32
    %v6861 = vpop.permute.xlu0 %6860
    %6862 = vrot.lane.b32.xlu0 %v6584, 32
    %v6863 = vpop.permute.xlu0 %6862
    %6864 = vrot.lane.b32.xlu0 %v6585, 32
    %v6865 = vpop.permute.xlu0 %6864
    %6866 = vrot.lane.b32.xlu0 %v6586, 32
    %v6867 = vpop.permute.xlu0 %6866
    %6868 = vrot.lane.b32.xlu0 %v6587, 32
    %v6869 = vpop.permute.xlu0 %6868
    %6870 = vrot.lane.b32.xlu0 %v6588, 32
    %v6871 = vpop.permute.xlu0 %6870
    %6934 = vrot.lane.b32.xlu0 %v6589, 64
    %v6935 = vpop.permute.xlu0 %6934
    %6936 = vrot.lane.b32.xlu0 %v6590, 64
    %v6937 = vpop.permute.xlu0 %6936
    %6938 = vrot.lane.b32.xlu0 %v6591, 64
    %v6939 = vpop.permute.xlu0 %6938
    %6940 = vrot.lane.b32.xlu0 %v6592, 64
    %v6941 = vpop.permute.xlu0 %6940
    %6942 = vrot.lane.b32.xlu0 %v6593, 64
    %v6943 = vpop.permute.xlu0 %6942
    %6944 = vrot.lane.b32.xlu0 %v6594, 64
    %v6945 = vpop.permute.xlu0 %6944
    %6946 = vrot.lane.b32.xlu0 %v6595, 64
    %v6947 = vpop.permute.xlu0 %6946
    %6948 = vrot.lane.b32.xlu0 %v6596, 64
    %v6949 = vpop.permute.xlu0 %6948
    %6950 = vrot.lane.b32.xlu0 %v6597, 64
    %v6951 = vpop.permute.xlu0 %6950
    %6952 = vrot.lane.b32.xlu0 %v6598, 64
    %v6953 = vpop.permute.xlu0 %6952
    %6954 = vrot.lane.b32.xlu0 %v6599, 64
    %v6955 = vpop.permute.xlu0 %6954
    %6956 = vrot.lane.b32.xlu0 %v6600, 64
    %v6957 = vpop.permute.xlu0 %6956
    %6958 = vrot.lane.b32.xlu0 %v6601, 64
    %v6959 = vpop.permute.xlu0 %6958
    %6960 = vrot.lane.b32.xlu0 %v6602, 64
    %v6961 = vpop.permute.xlu0 %6960
    %6962 = vrot.lane.b32.xlu0 %v6603, 64
    %v6963 = vpop.permute.xlu0 %6962
    %6964 = vrot.lane.b32.xlu0 %v6604, 64
    %v6965 = vpop.permute.xlu0 %6964
    %6966 = vrot.lane.b32.xlu0 %v6605, 64
    %v6967 = vpop.permute.xlu0 %6966
    %6968 = vrot.lane.b32.xlu0 %v6606, 64
    %v6969 = vpop.permute.xlu0 %6968
    %6970 = vrot.lane.b32.xlu0 %v6607, 64
    %v6971 = vpop.permute.xlu0 %6970
    %6972 = vrot.lane.b32.xlu0 %v6608, 64
    %v6973 = vpop.permute.xlu0 %6972
    %6974 = vrot.lane.b32.xlu0 %v6609, 64
    %v6975 = vpop.permute.xlu0 %6974
    %6976 = vrot.lane.b32.xlu0 %v6610, 64
    %v6977 = vpop.permute.xlu0 %6976
    %6978 = vrot.lane.b32.xlu0 %v6611, 64
    %v6979 = vpop.permute.xlu0 %6978
    %6980 = vrot.lane.b32.xlu0 %v6612, 64
    %v6981 = vpop.permute.xlu0 %6980
    %6982 = vrot.lane.b32.xlu0 %v6613, 64
    %v6983 = vpop.permute.xlu0 %6982
    %6984 = vrot.lane.b32.xlu0 %v6614, 64
    %v6985 = vpop.permute.xlu0 %6984
    %6986 = vrot.lane.b32.xlu0 %v6615, 64
    %v6987 = vpop.permute.xlu0 %6986
    %6988 = vrot.lane.b32.xlu0 %v6616, 64
    %v6989 = vpop.permute.xlu0 %6988
    %6990 = vrot.lane.b32.xlu0 %v6617, 64
    %v6991 = vpop.permute.xlu0 %6990
    %6992 = vrot.lane.b32.xlu0 %v6618, 64
    %v6993 = vpop.permute.xlu0 %6992
    %6994 = vrot.lane.b32.xlu0 %v6619, 64
    %v6995 = vpop.permute.xlu0 %6994
    %7058 = vrot.lane.b32.xlu0 %v6620, 96
    %v7059 = vpop.permute.xlu0 %7058
    %7060 = vrot.lane.b32.xlu0 %v6621, 96
    %v7061 = vpop.permute.xlu0 %7060
    %7062 = vrot.lane.b32.xlu0 %v6622, 96
    %v7063 = vpop.permute.xlu0 %7062
    %7064 = vrot.lane.b32.xlu0 %v6623, 96
    %v7065 = vpop.permute.xlu0 %7064
    %7066 = vrot.lane.b32.xlu0 %v6624, 96
    %v7067 = vpop.permute.xlu0 %7066
    %7068 = vrot.lane.b32.xlu0 %v6625, 96
    %v7069 = vpop.permute.xlu0 %7068
    %7070 = vrot.lane.b32.xlu0 %v6626, 96
    %v7071 = vpop.permute.xlu0 %7070
    %7072 = vrot.lane.b32.xlu0 %v6627, 96
    %v7073 = vpop.permute.xlu0 %7072
    %7074 = vrot.lane.b32.xlu0 %v6628, 96
    %v7075 = vpop.permute.xlu0 %7074
    %7076 = vrot.lane.b32.xlu0 %v6629, 96
    %v7077 = vpop.permute.xlu0 %7076
    %7078 = vrot.lane.b32.xlu0 %v6630, 96
    %v7079 = vpop.permute.xlu0 %7078
    %7080 = vrot.lane.b32.xlu0 %v6631, 96
    %v7081 = vpop.permute.xlu0 %7080
    %7082 = vrot.lane.b32.xlu0 %v6632, 96
    %v7083 = vpop.permute.xlu0 %7082
    %7084 = vrot.lane.b32.xlu0 %v6633, 96
    %v7085 = vpop.permute.xlu0 %7084
    %7086 = vrot.lane.b32.xlu0 %v6634, 96
    %v7087 = vpop.permute.xlu0 %7086
    %7088 = vrot.lane.b32.xlu0 %v6635, 96
    %v7089 = vpop.permute.xlu0 %7088
    %7090 = vrot.lane.b32.xlu0 %v6636, 96
    %v7091 = vpop.permute.xlu0 %7090
    %7092 = vrot.lane.b32.xlu0 %v6637, 96
    %v7093 = vpop.permute.xlu0 %7092
    %7094 = vrot.lane.b32.xlu0 %v6638, 96
    %v7095 = vpop.permute.xlu0 %7094
    %7096 = vrot.lane.b32.xlu0 %v6639, 96
    %v7097 = vpop.permute.xlu0 %7096
    %7098 = vrot.lane.b32.xlu0 %v6640, 96
    %v7099 = vpop.permute.xlu0 %7098
    %7100 = vrot.lane.b32.xlu0 %v6641, 96
    %v7101 = vpop.permute.xlu0 %7100
    %7102 = vrot.lane.b32.xlu0 %v6642, 96
    %v7103 = vpop.permute.xlu0 %7102
    %7104 = vrot.lane.b32.xlu0 %v6643, 96
    %v7105 = vpop.permute.xlu0 %7104
    %7106 = vrot.lane.b32.xlu0 %v6644, 96
    %v7107 = vpop.permute.xlu0 %7106
    %7108 = vrot.lane.b32.xlu0 %v6645, 96
    %v7109 = vpop.permute.xlu0 %7108
    %7110 = vrot.lane.b32.xlu0 %v6646, 96
    %v7111 = vpop.permute.xlu0 %7110
    %7112 = vrot.lane.b32.xlu0 %v6647, 96
    %v7113 = vpop.permute.xlu0 %7112
    %7114 = vrot.lane.b32.xlu0 %v6648, 96
    %v7115 = vpop.permute.xlu0 %7114
    %7116 = vrot.lane.b32.xlu0 %v6649, 96
    %v7117 = vpop.permute.xlu0 %7116
    %7118 = vrot.lane.b32.xlu0 %v6650, 96
    %v7119 = vpop.permute.xlu0 %7118
    %7182 = vrot.lane.b32.xlu0 %v6682, 32
    %v7183 = vpop.permute.xlu0 %7182
    %7184 = vrot.lane.b32.xlu0 %v6683, 32
    %v7185 = vpop.permute.xlu0 %7184
    %7186 = vrot.lane.b32.xlu0 %v6684, 32
    %v7187 = vpop.permute.xlu0 %7186
    %7188 = vrot.lane.b32.xlu0 %v6685, 32
    %v7189 = vpop.permute.xlu0 %7188
    %7190 = vrot.lane.b32.xlu0 %v6686, 32
    %v7191 = vpop.permute.xlu0 %7190
    %7192 = vrot.lane.b32.xlu0 %v6687, 32
    %v7193 = vpop.permute.xlu0 %7192
    %7194 = vrot.lane.b32.xlu0 %v6688, 32
    %v7195 = vpop.permute.xlu0 %7194
    %7196 = vrot.lane.b32.xlu0 %v6689, 32
    %v7197 = vpop.permute.xlu0 %7196
    %7198 = vrot.lane.b32.xlu0 %v6690, 32
    %v7199 = vpop.permute.xlu0 %7198
    %7200 = vrot.lane.b32.xlu0 %v6691, 32
    %v7201 = vpop.permute.xlu0 %7200
    %7202 = vrot.lane.b32.xlu0 %v6692, 32
    %v7203 = vpop.permute.xlu0 %7202
    %7204 = vrot.lane.b32.xlu0 %v6693, 32
    %v7205 = vpop.permute.xlu0 %7204
    %7206 = vrot.lane.b32.xlu0 %v6694, 32
    %v7207 = vpop.permute.xlu0 %7206
    %7208 = vrot.lane.b32.xlu0 %v6695, 32
    %v7209 = vpop.permute.xlu0 %7208
    %7210 = vrot.lane.b32.xlu0 %v6696, 32
    %v7211 = vpop.permute.xlu0 %7210
    %7212 = vrot.lane.b32.xlu0 %v6697, 32
    %v7213 = vpop.permute.xlu0 %7212
    %7214 = vrot.lane.b32.xlu0 %v6698, 32
    %v7215 = vpop.permute.xlu0 %7214
    %7216 = vrot.lane.b32.xlu0 %v6699, 32
    %v7217 = vpop.permute.xlu0 %7216
    %7218 = vrot.lane.b32.xlu0 %v6700, 32
    %v7219 = vpop.permute.xlu0 %7218
    %7220 = vrot.lane.b32.xlu0 %v6701, 32
    %v7221 = vpop.permute.xlu0 %7220
    %7222 = vrot.lane.b32.xlu0 %v6702, 32
    %v7223 = vpop.permute.xlu0 %7222
    %7224 = vrot.lane.b32.xlu0 %v6703, 32
    %v7225 = vpop.permute.xlu0 %7224
    %7226 = vrot.lane.b32.xlu0 %v6704, 32
    %v7227 = vpop.permute.xlu0 %7226
    %7228 = vrot.lane.b32.xlu0 %v6705, 32
    %v7229 = vpop.permute.xlu0 %7228
    %7230 = vrot.lane.b32.xlu0 %v6706, 32
    %v7231 = vpop.permute.xlu0 %7230
    %7232 = vrot.lane.b32.xlu0 %v6707, 32
    %v7233 = vpop.permute.xlu0 %7232
    %7234 = vrot.lane.b32.xlu0 %v6708, 32
    %v7235 = vpop.permute.xlu0 %7234
    %7236 = vrot.lane.b32.xlu0 %v6709, 32
    %v7237 = vpop.permute.xlu0 %7236
    %7238 = vrot.lane.b32.xlu0 %v6710, 32
    %v7239 = vpop.permute.xlu0 %7238
    %7240 = vrot.lane.b32.xlu0 %v6711, 32
    %v7241 = vpop.permute.xlu0 %7240
    %7242 = vrot.lane.b32.xlu0 %v6712, 32
    %v7243 = vpop.permute.xlu0 %7242
    %7306 = vrot.lane.b32.xlu0 %v6713, 64
    %v7307 = vpop.permute.xlu0 %7306
    %7308 = vrot.lane.b32.xlu0 %v6714, 64
    %v7309 = vpop.permute.xlu0 %7308
    %7310 = vrot.lane.b32.xlu0 %v6715, 64
    %v7311 = vpop.permute.xlu0 %7310
    %7312 = vrot.lane.b32.xlu0 %v6716, 64
    %v7313 = vpop.permute.xlu0 %7312
    %7314 = vrot.lane.b32.xlu0 %v6717, 64
    %v7315 = vpop.permute.xlu0 %7314
    %7316 = vrot.lane.b32.xlu0 %v6718, 64
    %v7317 = vpop.permute.xlu0 %7316
    %7318 = vrot.lane.b32.xlu0 %v6719, 64
    %v7319 = vpop.permute.xlu0 %7318
    %7320 = vrot.lane.b32.xlu0 %v6720, 64
    %v7321 = vpop.permute.xlu0 %7320
    %7322 = vrot.lane.b32.xlu0 %v6721, 64
    %v7323 = vpop.permute.xlu0 %7322
    %7324 = vrot.lane.b32.xlu0 %v6722, 64
    %v7325 = vpop.permute.xlu0 %7324
    %7326 = vrot.lane.b32.xlu0 %v6723, 64
    %v7327 = vpop.permute.xlu0 %7326
    %7328 = vrot.lane.b32.xlu0 %v6724, 64
    %v7329 = vpop.permute.xlu0 %7328
    %7330 = vrot.lane.b32.xlu0 %v6725, 64
    %v7331 = vpop.permute.xlu0 %7330
    %7332 = vrot.lane.b32.xlu0 %v6726, 64
    %v7333 = vpop.permute.xlu0 %7332
    %7334 = vrot.lane.b32.xlu0 %v6727, 64
    %v7335 = vpop.permute.xlu0 %7334
    %7336 = vrot.lane.b32.xlu0 %v6728, 64
    %v7337 = vpop.permute.xlu0 %7336
    %7338 = vrot.lane.b32.xlu0 %v6729, 64
    %v7339 = vpop.permute.xlu0 %7338
    %7340 = vrot.lane.b32.xlu0 %v6730, 64
    %v7341 = vpop.permute.xlu0 %7340
    %7342 = vrot.lane.b32.xlu0 %v6731, 64
    %v7343 = vpop.permute.xlu0 %7342
    %7344 = vrot.lane.b32.xlu0 %v6732, 64
    %v7345 = vpop.permute.xlu0 %7344
    %7346 = vrot.lane.b32.xlu0 %v6733, 64
    %v7347 = vpop.permute.xlu0 %7346
    %7348 = vrot.lane.b32.xlu0 %v6734, 64
    %v7349 = vpop.permute.xlu0 %7348
    %7350 = vrot.lane.b32.xlu0 %v6735, 64
    %v7351 = vpop.permute.xlu0 %7350
    %7352 = vrot.lane.b32.xlu0 %v6736, 64
    %v7353 = vpop.permute.xlu0 %7352
    %7354 = vrot.lane.b32.xlu0 %v6737, 64
    %v7355 = vpop.permute.xlu0 %7354
    %7356 = vrot.lane.b32.xlu0 %v6738, 64
    %v7357 = vpop.permute.xlu0 %7356
    %7358 = vrot.lane.b32.xlu0 %v6739, 64
    %v7359 = vpop.permute.xlu0 %7358
    %7360 = vrot.lane.b32.xlu0 %v6740, 64
    %v7361 = vpop.permute.xlu0 %7360
    %7362 = vrot.lane.b32.xlu0 %v6741, 64
    %v7363 = vpop.permute.xlu0 %7362
    %7364 = vrot.lane.b32.xlu0 %v6742, 64
    %v7365 = vpop.permute.xlu0 %7364
    %7366 = vrot.lane.b32.xlu0 %v6743, 64
    %v7367 = vpop.permute.xlu0 %7366
    %7430 = vrot.lane.b32.xlu0 %v6744, 96
    %v7431 = vpop.permute.xlu0 %7430
    %7432 = vrot.lane.b32.xlu0 %v6745, 96
    %v7433 = vpop.permute.xlu0 %7432
    %7434 = vrot.lane.b32.xlu0 %v6746, 96
    %v7435 = vpop.permute.xlu0 %7434
    %7436 = vrot.lane.b32.xlu0 %v6747, 96
    %v7437 = vpop.permute.xlu0 %7436
    %7438 = vrot.lane.b32.xlu0 %v6748, 96
    %v7439 = vpop.permute.xlu0 %7438
    %7440 = vrot.lane.b32.xlu0 %v6749, 96
    %v7441 = vpop.permute.xlu0 %7440
    %7442 = vrot.lane.b32.xlu0 %v6750, 96
    %v7443 = vpop.permute.xlu0 %7442
    %7444 = vrot.lane.b32.xlu0 %v6751, 96
    %v7445 = vpop.permute.xlu0 %7444
    %7446 = vrot.lane.b32.xlu0 %v6752, 96
    %v7447 = vpop.permute.xlu0 %7446
    %7448 = vrot.lane.b32.xlu0 %v6753, 96
    %v7449 = vpop.permute.xlu0 %7448
    %7450 = vrot.lane.b32.xlu0 %v6754, 96
    %v7451 = vpop.permute.xlu0 %7450
    %7452 = vrot.lane.b32.xlu0 %v6755, 96
    %v7453 = vpop.permute.xlu0 %7452
    %7454 = vrot.lane.b32.xlu0 %v6756, 96
    %v7455 = vpop.permute.xlu0 %7454
    %7456 = vrot.lane.b32.xlu0 %v6757, 96
    %v7457 = vpop.permute.xlu0 %7456
    %7458 = vrot.lane.b32.xlu0 %v6758, 96
    %v7459 = vpop.permute.xlu0 %7458
    %7460 = vrot.lane.b32.xlu0 %v6759, 96
    %v7461 = vpop.permute.xlu0 %7460
    %7462 = vrot.lane.b32.xlu0 %v6760, 96
    %v7463 = vpop.permute.xlu0 %7462
    %7464 = vrot.lane.b32.xlu0 %v6761, 96
    %v7465 = vpop.permute.xlu0 %7464
    %7466 = vrot.lane.b32.xlu0 %v6762, 96
    %v7467 = vpop.permute.xlu0 %7466
    %7468 = vrot.lane.b32.xlu0 %v6763, 96
    %v7469 = vpop.permute.xlu0 %7468
    %7470 = vrot.lane.b32.xlu0 %v6764, 96
    %v7471 = vpop.permute.xlu0 %7470
    %7472 = vrot.lane.b32.xlu0 %v6765, 96
    %v7473 = vpop.permute.xlu0 %7472
    %7474 = vrot.lane.b32.xlu0 %v6766, 96
    %v7475 = vpop.permute.xlu0 %7474
    %7476 = vrot.lane.b32.xlu0 %v6767, 96
    %v7477 = vpop.permute.xlu0 %7476
    %7478 = vrot.lane.b32.xlu0 %v6768, 96
    %v7479 = vpop.permute.xlu0 %7478
    %7480 = vrot.lane.b32.xlu0 %v6769, 96
    %v7481 = vpop.permute.xlu0 %7480
    %7482 = vrot.lane.b32.xlu0 %v6770, 96
    %v7483 = vpop.permute.xlu0 %7482
    %7484 = vrot.lane.b32.xlu0 %v6771, 96
    %v7485 = vpop.permute.xlu0 %7484
    %7486 = vrot.lane.b32.xlu0 %v6772, 96
    %v7487 = vpop.permute.xlu0 %7486
    %7488 = vrot.lane.b32.xlu0 %v6773, 96
    %v7489 = vpop.permute.xlu0 %7488
    %7490 = vrot.lane.b32.xlu0 %v6774, 96
    %v7491 = vpop.permute.xlu0 %7490
    %v7523 = vsel %vm2043, %v6527, %v6811
    %v7524 = vsel %vm2043, %v6528, %v6813
    %v7525 = vsel %vm2043, %v6529, %v6815
    %v7526 = vsel %vm2043, %v6530, %v6817
    %v7527 = vsel %vm2043, %v6531, %v6819
    %v7528 = vsel %vm2043, %v6532, %v6821
    %v7529 = vsel %vm2043, %v6533, %v6823
    %v7530 = vsel %vm2043, %v6534, %v6825
    %v7531 = vsel %vm2043, %v6535, %v6827
    %v7532 = vsel %vm2043, %v6536, %v6829
    %v7533 = vsel %vm2043, %v6537, %v6831
    %v7534 = vsel %vm2043, %v6538, %v6833
    %v7535 = vsel %vm2043, %v6539, %v6835
    %v7536 = vsel %vm2043, %v6540, %v6837
    %v7537 = vsel %vm2043, %v6541, %v6839
    %v7538 = vsel %vm2043, %v6542, %v6841
    %v7539 = vsel %vm2043, %v6543, %v6843
    %v7540 = vsel %vm2043, %v6544, %v6845
    %v7541 = vsel %vm2043, %v6545, %v6847
    %v7542 = vsel %vm2043, %v6546, %v6849
    %v7543 = vsel %vm2043, %v6547, %v6851
    %v7544 = vsel %vm2043, %v6548, %v6853
    %v7545 = vsel %vm2043, %v6549, %v6855
    %v7546 = vsel %vm2043, %v6550, %v6857
    %v7547 = vsel %vm2043, %v6551, %v6859
    %v7548 = vsel %vm2043, %v6552, %v6861
    %v7549 = vsel %vm2043, %v6553, %v6863
    %v7550 = vsel %vm2043, %v6554, %v6865
    %v7551 = vsel %vm2043, %v6555, %v6867
    %v7552 = vsel %vm2043, %v6556, %v6869
    %v7553 = vsel %vm2043, %v6557, %v6871
    %v7554 = vsel %vm15, %v7523, %v6935
    %v7555 = vsel %vm15, %v7524, %v6937
    %v7556 = vsel %vm15, %v7525, %v6939
    %v7557 = vsel %vm15, %v7526, %v6941
    %v7558 = vsel %vm15, %v7527, %v6943
    %v7559 = vsel %vm15, %v7528, %v6945
    %v7560 = vsel %vm15, %v7529, %v6947
    %v7561 = vsel %vm15, %v7530, %v6949
    %v7562 = vsel %vm15, %v7531, %v6951
    %v7563 = vsel %vm15, %v7532, %v6953
    %v7564 = vsel %vm15, %v7533, %v6955
    %v7565 = vsel %vm15, %v7534, %v6957
    %v7566 = vsel %vm15, %v7535, %v6959
    %v7567 = vsel %vm15, %v7536, %v6961
    %v7568 = vsel %vm15, %v7537, %v6963
    %v7569 = vsel %vm15, %v7538, %v6965
    %v7570 = vsel %vm15, %v7539, %v6967
    %v7571 = vsel %vm15, %v7540, %v6969
    %v7572 = vsel %vm15, %v7541, %v6971
    %v7573 = vsel %vm15, %v7542, %v6973
    %v7574 = vsel %vm15, %v7543, %v6975
    %v7575 = vsel %vm15, %v7544, %v6977
    %v7576 = vsel %vm15, %v7545, %v6979
    %v7577 = vsel %vm15, %v7546, %v6981
    %v7578 = vsel %vm15, %v7547, %v6983
    %v7579 = vsel %vm15, %v7548, %v6985
    %v7580 = vsel %vm15, %v7549, %v6987
    %v7581 = vsel %vm15, %v7550, %v6989
    %v7582 = vsel %vm15, %v7551, %v6991
    %v7583 = vsel %vm15, %v7552, %v6993
    %v7584 = vsel %vm15, %v7553, %v6995
    %vm7585 = vcmask 785408
    %v7586 = vsel %vm7585, %v7554, %v7059
    %v7587 = vsel %vm7585, %v7555, %v7061
    %v7588 = vsel %vm7585, %v7556, %v7063
    %v7589 = vsel %vm7585, %v7557, %v7065
    %v7590 = vsel %vm7585, %v7558, %v7067
    %v7591 = vsel %vm7585, %v7559, %v7069
    %v7592 = vsel %vm7585, %v7560, %v7071
    %v7593 = vsel %vm7585, %v7561, %v7073
    %v7594 = vsel %vm7585, %v7562, %v7075
    %v7595 = vsel %vm7585, %v7563, %v7077
    %v7596 = vsel %vm7585, %v7564, %v7079
    %v7597 = vsel %vm7585, %v7565, %v7081
    %v7598 = vsel %vm7585, %v7566, %v7083
    %v7599 = vsel %vm7585, %v7567, %v7085
    %v7600 = vsel %vm7585, %v7568, %v7087
    %v7601 = vsel %vm7585, %v7569, %v7089
    %v7602 = vsel %vm7585, %v7570, %v7091
    %v7603 = vsel %vm7585, %v7571, %v7093
    %v7604 = vsel %vm7585, %v7572, %v7095
    %v7605 = vsel %vm7585, %v7573, %v7097
    %v7606 = vsel %vm7585, %v7574, %v7099
    %v7607 = vsel %vm7585, %v7575, %v7101
    %v7608 = vsel %vm7585, %v7576, %v7103
    %v7609 = vsel %vm7585, %v7577, %v7105
    %v7610 = vsel %vm7585, %v7578, %v7107
    %v7611 = vsel %vm7585, %v7579, %v7109
    %v7612 = vsel %vm7585, %v7580, %v7111
    %v7613 = vsel %vm7585, %v7581, %v7113
    %v7614 = vsel %vm7585, %v7582, %v7115
    %v7615 = vsel %vm7585, %v7583, %v7117
    %v7616 = vsel %vm7585, %v7584, %v7119
    %v7617 = vsel %vm2043, %v6651, %v7183
    %v7618 = vsel %vm2043, %v6652, %v7185
    %v7619 = vsel %vm2043, %v6653, %v7187
    %v7620 = vsel %vm2043, %v6654, %v7189
    %v7621 = vsel %vm2043, %v6655, %v7191
    %v7622 = vsel %vm2043, %v6656, %v7193
    %v7623 = vsel %vm2043, %v6657, %v7195
    %v7624 = vsel %vm2043, %v6658, %v7197
    %v7625 = vsel %vm2043, %v6659, %v7199
    %v7626 = vsel %vm2043, %v6660, %v7201
    %v7627 = vsel %vm2043, %v6661, %v7203
    %v7628 = vsel %vm2043, %v6662, %v7205
    %v7629 = vsel %vm2043, %v6663, %v7207
    %v7630 = vsel %vm2043, %v6664, %v7209
    %v7631 = vsel %vm2043, %v6665, %v7211
    %v7632 = vsel %vm2043, %v6666, %v7213
    %v7633 = vsel %vm2043, %v6667, %v7215
    %v7634 = vsel %vm2043, %v6668, %v7217
    %v7635 = vsel %vm2043, %v6669, %v7219
    %v7636 = vsel %vm2043, %v6670, %v7221
    %v7637 = vsel %vm2043, %v6671, %v7223
    %v7638 = vsel %vm2043, %v6672, %v7225
    %v7639 = vsel %vm2043, %v6673, %v7227
    %v7640 = vsel %vm2043, %v6674, %v7229
    %v7641 = vsel %vm2043, %v6675, %v7231
    %v7642 = vsel %vm2043, %v6676, %v7233
    %v7643 = vsel %vm2043, %v6677, %v7235
    %v7644 = vsel %vm2043, %v6678, %v7237
    %v7645 = vsel %vm2043, %v6679, %v7239
    %v7646 = vsel %vm2043, %v6680, %v7241
    %v7647 = vsel %vm2043, %v6681, %v7243
    %v7648 = vsel %vm15, %v7617, %v7307
    %v7649 = vsel %vm15, %v7618, %v7309
    %v7650 = vsel %vm15, %v7619, %v7311
    %v7651 = vsel %vm15, %v7620, %v7313
    %v7652 = vsel %vm15, %v7621, %v7315
    %v7653 = vsel %vm15, %v7622, %v7317
    %v7654 = vsel %vm15, %v7623, %v7319
    %v7655 = vsel %vm15, %v7624, %v7321
    %v7656 = vsel %vm15, %v7625, %v7323
    %v7657 = vsel %vm15, %v7626, %v7325
    %v7658 = vsel %vm15, %v7627, %v7327
    %v7659 = vsel %vm15, %v7628, %v7329
    %v7660 = vsel %vm15, %v7629, %v7331
    %v7661 = vsel %vm15, %v7630, %v7333
    %v7662 = vsel %vm15, %v7631, %v7335
    %v7663 = vsel %vm15, %v7632, %v7337
    %v7664 = vsel %vm15, %v7633, %v7339
    %v7665 = vsel %vm15, %v7634, %v7341
    %v7666 = vsel %vm15, %v7635, %v7343
    %v7667 = vsel %vm15, %v7636, %v7345
    %v7668 = vsel %vm15, %v7637, %v7347
    %v7669 = vsel %vm15, %v7638, %v7349
    %v7670 = vsel %vm15, %v7639, %v7351
    %v7671 = vsel %vm15, %v7640, %v7353
    %v7672 = vsel %vm15, %v7641, %v7355
    %v7673 = vsel %vm15, %v7642, %v7357
    %v7674 = vsel %vm15, %v7643, %v7359
    %v7675 = vsel %vm15, %v7644, %v7361
    %v7676 = vsel %vm15, %v7645, %v7363
    %v7677 = vsel %vm15, %v7646, %v7365
    %v7678 = vsel %vm15, %v7647, %v7367
    %v7679 = vsel %vm7585, %v7648, %v7431
    %v7680 = vsel %vm7585, %v7649, %v7433
    %v7681 = vsel %vm7585, %v7650, %v7435
    %v7682 = vsel %vm7585, %v7651, %v7437
    %v7683 = vsel %vm7585, %v7652, %v7439
    %v7684 = vsel %vm7585, %v7653, %v7441
    %v7685 = vsel %vm7585, %v7654, %v7443
    %v7686 = vsel %vm7585, %v7655, %v7445
    %v7687 = vsel %vm7585, %v7656, %v7447
    %v7688 = vsel %vm7585, %v7657, %v7449
    %v7689 = vsel %vm7585, %v7658, %v7451
    %v7690 = vsel %vm7585, %v7659, %v7453
    %v7691 = vsel %vm7585, %v7660, %v7455
    %v7692 = vsel %vm7585, %v7661, %v7457
    %v7693 = vsel %vm7585, %v7662, %v7459
    %v7694 = vsel %vm7585, %v7663, %v7461
    %v7695 = vsel %vm7585, %v7664, %v7463
    %v7696 = vsel %vm7585, %v7665, %v7465
    %v7697 = vsel %vm7585, %v7666, %v7467
    %v7698 = vsel %vm7585, %v7667, %v7469
    %v7699 = vsel %vm7585, %v7668, %v7471
    %v7700 = vsel %vm7585, %v7669, %v7473
    %v7701 = vsel %vm7585, %v7670, %v7475
    %v7702 = vsel %vm7585, %v7671, %v7477
    %v7703 = vsel %vm7585, %v7672, %v7479
    %v7704 = vsel %vm7585, %v7673, %v7481
    %v7705 = vsel %vm7585, %v7674, %v7483
    %v7706 = vsel %vm7585, %v7675, %v7485
    %v7707 = vsel %vm7585, %v7676, %v7487
    %v7708 = vsel %vm7585, %v7677, %v7489
    %v7709 = vsel %vm7585, %v7678, %v7491
    %v7710 = vld [vmem:[%s2 + $0x48] sm:$0xff]
    %v7711 = vld [vmem:[%s2 + $0x50] sm:$0xff]
    %v7712 = vld [vmem:[%s2 + $0x58] sm:$0xff]
    %v7713 = vld [vmem:[%s2 + $0x60] sm:$0xff]
    %v7714 = vld [vmem:[%s2 + $0x68] sm:$0xff]
    %v7715 = vld [vmem:[%s2 + $0x70] sm:$0xff]
    %v7716 = vld [vmem:[%s2 + $0x78] sm:$0xff]
    %v7717 = vld [vmem:[%s2 + $0x80] sm:$0xff]
    %v7718 = vld [vmem:[%s2 + $0x88] sm:$0xff]
    %v7719 = vld [vmem:[%s2 + $0x90] sm:$0xff]
    %v7720 = vld [vmem:[%s2 + $0x98] sm:$0xff]
    %v7721 = vld [vmem:[%s2 + $0xa0] sm:$0xff]
    %v7722 = vld [vmem:[%s2 + $0xa8] sm:$0xff]
    %v7723 = vld [vmem:[%s2 + $0xb0] sm:$0xff]
    %v7724 = vld [vmem:[%s2 + $0xb8] sm:$0xff]
    %v7725 = vld [vmem:[%s2 + $0xc0] sm:$0xff]
    %v7726 = vld [vmem:[%s2 + $0xc8] sm:$0xff]
    %v7727 = vld [vmem:[%s2 + $0xd0] sm:$0xff]
    %v7728 = vld [vmem:[%s2 + $0xd8] sm:$0xff]
    %v7729 = vld [vmem:[%s2 + $0xe0] sm:$0xff]
    %v7730 = vld [vmem:[%s2 + $0xe8] sm:$0xff]
    %v7731 = vld [vmem:[%s2 + $0xf0] sm:$0xff]
    %v7732 = vld [vmem:[%s2 + $0xf8] sm:$0xff]
    %v7733 = vld [vmem:[%s2 + $0x100] sm:$0xff]
    %v7734 = vld [vmem:[%s2 + $0x108] sm:$0xff]
    %v7735 = vld [vmem:[%s2 + $0x110] sm:$0xff]
    %v7736 = vld [vmem:[%s2 + $0x118] sm:$0xff]
    %v7737 = vld [vmem:[%s2 + $0x120] sm:$0xff]
    %v7738 = vld [vmem:[%s2 + $0x128] sm:$0xff]
    %v7739 = vld [vmem:[%s2 + $0x130] sm:$0xff]
    %v7740 = vld [vmem:[%s2 + $0x138] sm:$0xff]
    %v7741 = vld [vmem:[%s2 + $0x140] sm:$0xff]
    %v7742 = vld [vmem:[%s2 + $0x148] sm:$0xff]
    %v7743 = vld [vmem:[%s2 + $0x150] sm:$0xff]
    %v7744 = vld [vmem:[%s2 + $0x158] sm:$0xff]
    %v7745 = vld [vmem:[%s2 + $0x160] sm:$0xff]
    %v7747 = vsel %vm2043, %v6530, 0
    %v7750 = vsel %vm2043, %v6531, 0
    %v7753 = vsel %vm2043, %v6532, 0
    %v7756 = vsel %vm2043, %v6533, 0
    %v7759 = vsel %vm2043, %v6534, 0
    %v7762 = vsel %vm2043, %v6535, 0
    %v7765 = vsel %vm2043, %v6536, 0
    %v7768 = vsel %vm2043, %v6537, 0
    %v7771 = vsel %vm2043, %v6538, 0
    %v7774 = vsel %vm2043, %v6539, 0
    %v7777 = vsel %vm2043, %v6540, 0
    %v7780 = vsel %vm2043, %v6541, 0
    %v7783 = vsel %vm2043, %v6542, 0
    %v7786 = vsel %vm2043, %v6543, 0
    %v7789 = vsel %vm2043, %v6544, 0
    %v7792 = vsel %vm2043, %v6545, 0
    %v7795 = vsel %vm2043, %v6546, 0
    %v7798 = vsel %vm2043, %v6547, 0
    %v7801 = vsel %vm2043, %v6548, 0
    %v7804 = vsel %vm2043, %v6549, 0
    %v7807 = vsel %vm2043, %v6550, 0
    %v7810 = vsel %vm2043, %v6551, 0
    %v7813 = vsel %vm2043, %v6552, 0
    %v7816 = vsel %vm2043, %v6553, 0
    %v7819 = vsel %vm2043, %v6554, 0
    %v7822 = vsel %vm2043, %v6555, 0
    %v7825 = vsel %vm2043, %v6556, 0
    %v7828 = vsel %vm2043, %v6775, 0
    %v7831 = vsel %vm2043, %v6776, 0
    %v7834 = vsel %vm2043, %v6777, 0
    %v7837 = vsel %vm2043, %v6778, 0
    %7839 = vmatprep.subr.mxu0 0.0
    %7840 = vmatpush1.msra.mxu0 %v7710
    %7841 = vmatprep.subr.mxu0 0.0
    %7842 = vmatpush1.msra.mxu0 %v7711
    %7843 = vmatprep.subr.mxu0 0.0
    %7844 = vmatpush1.msra.mxu0 %v7712
    %7845 = vmatprep.subr.mxu0 0.0
    %7846 = vmatpush1.msra.mxu0 %v7713
    %7847 = vmatprep.subr.mxu0 0.0
    %7848 = vmatpush1.msra.mxu0 %v7714
    %7849 = vmatprep.subr.mxu0 0.0
    %7850 = vmatpush1.msra.mxu0 %v7715
    %7851 = vmatprep.subr.mxu0 0.0
    %7852 = vmatpush1.msra.mxu0 %v7716
    %7853 = vmatprep.subr.mxu0 0.0
    %7854 = vmatpush1.msra.mxu0 %v7717
    %7855 = vmatprep.subr.mxu0 0.0
    %7856 = vmatpush1.msra.mxu0 %v7718
    %7857 = vmatprep.subr.mxu0 0.0
    %7858 = vmatpush1.msra.mxu0 %v7719
    %7859 = vmatprep.subr.mxu0 0.0
    %7860 = vmatpush1.msra.mxu0 %v7720
    %7861 = vmatprep.subr.mxu0 0.0
    %7862 = vmatpush1.msra.mxu0 %v7721
    %7863 = vmatprep.subr.mxu0 0.0
    %7864 = vmatpush1.msra.mxu0 %v7722
    %7865 = vmatprep.subr.mxu0 0.0
    %7866 = vmatpush1.msra.mxu0 %v7723
    %7867 = vmatprep.subr.mxu0 0.0
    %7868 = vmatpush1.msra.mxu0 %v7724
    %7869 = vmatprep.subr.mxu0 0.0
    %7870 = vmatpush1.msra.mxu0 %v7725
    %7871 = vmatprep.subr.mxu0 0.0
    %7872 = vmatpush1.msra.mxu0 %v7726
    %7873 = vmatprep.subr.mxu0 0.0
    %7874 = vmatpush1.msra.mxu0 %v7727
    %7875 = vmatprep.subr.mxu0 0.0
    %7876 = vmatpush1.msra.mxu0 %v7728
    %7877 = vmatprep.subr.mxu0 0.0
    %7878 = vmatpush1.msra.mxu0 %v7729
    %7879 = vmatprep.subr.mxu0 0.0
    %7880 = vmatpush1.msra.mxu0 %v7730
    %7881 = vmatprep.subr.mxu0 0.0
    %7882 = vmatpush1.msra.mxu0 %v7731
    %7883 = vmatprep.subr.mxu0 0.0
    %7884 = vmatpush1.msra.mxu0 %v7732
    %7885 = vmatprep.subr.mxu0 0.0
    %7886 = vmatpush1.msra.mxu0 %v7733
    %7887 = vmatprep.subr.mxu0 0.0
    %7888 = vmatpush1.msra.mxu0 %v7734
    %7889 = vmatprep.subr.mxu0 0.0
    %7890 = vmatpush1.msra.mxu0 %v7735
    %7891 = vmatprep.subr.mxu0 0.0
    %7892 = vmatpush1.msra.mxu0 %v7736
    %7893 = vmatprep.subr.mxu0 0.0
    %7894 = vmatpush1.msra.mxu0 %v7737
    %7895 = vmatprep.subr.mxu0 0.0
    %7896 = vmatpush1.msra.mxu0 %v7738
    %7897 = vmatprep.subr.mxu0 0.0
    %7898 = vmatpush1.msra.mxu0 %v7739
    %7899 = vmatprep.subr.mxu0 0.0
    %7900 = vmatpush1.msra.mxu0 %v7740
    %7901 = vmatprep.subr.mxu0 0.0
    %7902 = vmatpush1.msra.mxu0 %v7741
    %7903 = vmatprep.mubr.f32.mxu0 %v7679
    %7904 = vmatmul.mubr.f32.gmra.mrb[0].mxu0 %v7586
    %v7905 = vpop.f32.mrb[0].mxu0
    %v7906 = vadd.f32 0.0, %v7905
    %v7907 = vpop.f32.mrb[0].mxu0
    %7908 = vmatprep.mubr.f32.mxu0 %v7680
    %7909 = vmatmul.mubr.f32.gmra.mrb[0].mxu0 %v7587
    %v7910 = vpop.f32.mrb[0].mxu0
    %v7911 = vadd.f32 0.0, %v7910
    %v7912 = vpop.f32.mrb[0].mxu0
    %7913 = vmatprep.mubr.f32.mxu0 %v7681
    %7914 = vmatmul.mubr.f32.gmra.mrb[0].mxu0 %v7588
    %v7915 = vpop.f32.mrb[0].mxu0
    %v7916 = vadd.f32 0.0, %v7915
    %v7917 = vpop.f32.mrb[0].mxu0
    %7918 = vmatprep.mubr.f32.mxu0 %v7682
    %7919 = vmatmul.mubr.f32.gmra.mrb[0].mxu0 %v7589
    %v7920 = vpop.f32.mrb[0].mxu0
    %v7921 = vadd.f32 0.0, %v7920
    %v7922 = vpop.f32.mrb[0].mxu0
    %7923 = vmatprep.mubr.f32.mxu0 %v7683
    %7924 = vmatmul.mubr.f32.gmra.mrb[0].mxu0 %v7590
    %v7925 = vpop.f32.mrb[0].mxu0
    %v7926 = vadd.f32 0.0, %v7925
    %v7927 = vpop.f32.mrb[0].mxu0
    %7928 = vmatprep.mubr.f32.mxu0 %v7684
    %7929 = vmatmul.mubr.f32.gmra.mrb[0].mxu0 %v7591
    %v7930 = vpop.f32.mrb[0].mxu0
    %v7931 = vadd.f32 0.0, %v7930
    %v7932 = vpop.f32.mrb[0].mxu0
    %7933 = vmatprep.mubr.f32.mxu0 %v7685
    %7934 = vmatmul.mubr.f32.gmra.mrb[0].mxu0 %v7592
    %v7935 = vpop.f32.mrb[0].mxu0
    %v7936 = vadd.f32 0.0, %v7935
    %v7937 = vpop.f32.mrb[0].mxu0
    %7938 = vmatprep.mubr.f32.mxu0 %v7686
    %7939 = vmatmul.mubr.f32.gmra.mrb[0].mxu0 %v7593
    %v7940 = vpop.f32.mrb[0].mxu0
    %v7941 = vadd.f32 0.0, %v7940
    %v7942 = vpop.f32.mrb[0].mxu0
    %7943 = vmatprep.mubr.f32.mxu0 %v7687
    %7944 = vmatmul.mubr.f32.gmra.mrb[0].mxu0 %v7594
    %v7945 = vpop.f32.mrb[0].mxu0
    %v7946 = vadd.f32 0.0, %v7945
    %v7947 = vpop.f32.mrb[0].mxu0
    %7948 = vmatprep.mubr.f32.mxu0 %v7688
    %7949 = vmatmul.mubr.f32.gmra.mrb[0].mxu0 %v7595
    %v7950 = vpop.f32.mrb[0].mxu0
    %v7951 = vadd.f32 0.0, %v7950
    %v7952 = vpop.f32.mrb[0].mxu0
    %7953 = vmatprep.mubr.f32.mxu0 %v7689
    %7954 = vmatmul.mubr.f32.gmra.mrb[0].mxu0 %v7596
    %v7955 = vpop.f32.mrb[0].mxu0
    %v7956 = vadd.f32 0.0, %v7955
    %v7957 = vpop.f32.mrb[0].mxu0
    %7958 = vmatprep.mubr.f32.mxu0 %v7690
    %7959 = vmatmul.mubr.f32.gmra.mrb[0].mxu0 %v7597
    %v7960 = vpop.f32.mrb[0].mxu0
    %v7961 = vadd.f32 0.0, %v7960
    %v7962 = vpop.f32.mrb[0].mxu0
    %7963 = vmatprep.mubr.f32.mxu0 %v7691
    %7964 = vmatmul.mubr.f32.gmra.mrb[0].mxu0 %v7598
    %v7965 = vpop.f32.mrb[0].mxu0
    %v7966 = vadd.f32 0.0, %v7965
    %v7967 = vpop.f32.mrb[0].mxu0
    %7968 = vmatprep.mubr.f32.mxu0 %v7692
    %7969 = vmatmul.mubr.f32.gmra.mrb[0].mxu0 %v7599
    %v7970 = vpop.f32.mrb[0].mxu0
    %v7971 = vadd.f32 0.0, %v7970
    %v7972 = vpop.f32.mrb[0].mxu0
    %7973 = vmatprep.mubr.f32.mxu0 %v7693
    %7974 = vmatmul.mubr.f32.gmra.mrb[0].mxu0 %v7600
    %v7975 = vpop.f32.mrb[0].mxu0
    %v7976 = vadd.f32 0.0, %v7975
    %v7977 = vpop.f32.mrb[0].mxu0
    %7978 = vmatprep.mubr.f32.mxu0 %v7694
    %7979 = vmatmul.mubr.f32.gmra.mrb[0].mxu0 %v7601
    %v7980 = vpop.f32.mrb[0].mxu0
    %v7981 = vadd.f32 0.0, %v7980
    %v7982 = vpop.f32.mrb[0].mxu0
    %7983 = vmatprep.mubr.f32.mxu0 %v7695
    %7984 = vmatmul.mubr.f32.gmra.mrb[0].mxu0 %v7602
    %v7985 = vpop.f32.mrb[0].mxu0
    %v7986 = vadd.f32 0.0, %v7985
    %v7987 = vpop.f32.mrb[0].mxu0
    %7988 = vmatprep.mubr.f32.mxu0 %v7696
    %7989 = vmatmul.mubr.f32.gmra.mrb[0].mxu0 %v7603
    %v7990 = vpop.f32.mrb[0].mxu0
    %v7991 = vadd.f32 0.0, %v7990
    %v7992 = vpop.f32.mrb[0].mxu0
    %7993 = vmatprep.mubr.f32.mxu0 %v7697
    %7994 = vmatmul.mubr.f32.gmra.mrb[0].mxu0 %v7604
    %v7995 = vpop.f32.mrb[0].mxu0
    %v7996 = vadd.f32 0.0, %v7995
    %v7997 = vpop.f32.mrb[0].mxu0
    %7998 = vmatprep.mubr.f32.mxu0 %v7698
    %7999 = vmatmul.mubr.f32.gmra.mrb[0].mxu0 %v7605
    %v8000 = vpop.f32.mrb[0].mxu0
    %v8001 = vadd.f32 0.0, %v8000
    %v8002 = vpop.f32.mrb[0].mxu0
    %8003 = vmatprep.mubr.f32.mxu0 %v7699
    %8004 = vmatmul.mubr.f32.gmra.mrb[0].mxu0 %v7606
    %v8005 = vpop.f32.mrb[0].mxu0
    %v8006 = vadd.f32 0.0, %v8005
    %v8007 = vpop.f32.mrb[0].mxu0
    %8008 = vmatprep.mubr.f32.mxu0 %v7700
    %8009 = vmatmul.mubr.f32.gmra.mrb[0].mxu0 %v7607
    %v8010 = vpop.f32.mrb[0].mxu0
    %v8011 = vadd.f32 0.0, %v8010
    %v8012 = vpop.f32.mrb[0].mxu0
    %8013 = vmatprep.mubr.f32.mxu0 %v7701
    %8014 = vmatmul.mubr.f32.gmra.mrb[0].mxu0 %v7608
    %v8015 = vpop.f32.mrb[0].mxu0
    %v8016 = vadd.f32 0.0, %v8015
    %v8017 = vpop.f32.mrb[0].mxu0
    %8018 = vmatprep.mubr.f32.mxu0 %v7702
    %8019 = vmatmul.mubr.f32.gmra.mrb[0].mxu0 %v7609
    %v8020 = vpop.f32.mrb[0].mxu0
    %v8021 = vadd.f32 0.0, %v8020
    %v8022 = vpop.f32.mrb[0].mxu0
    %8023 = vmatprep.mubr.f32.mxu0 %v7703
    %8024 = vmatmul.mubr.f32.gmra.mrb[0].mxu0 %v7610
    %v8025 = vpop.f32.mrb[0].mxu0
    %v8026 = vadd.f32 0.0, %v8025
    %v8027 = vpop.f32.mrb[0].mxu0
    %8028 = vmatprep.mubr.f32.mxu0 %v7704
    %8029 = vmatmul.mubr.f32.gmra.mrb[0].mxu0 %v7611
    %v8030 = vpop.f32.mrb[0].mxu0
    %v8031 = vadd.f32 0.0, %v8030
    %v8032 = vpop.f32.mrb[0].mxu0
    %8033 = vmatprep.mubr.f32.mxu0 %v7705
    %8034 = vmatmul.mubr.f32.gmra.mrb[0].mxu0 %v7612
    %v8035 = vpop.f32.mrb[0].mxu0
    %v8036 = vadd.f32 0.0, %v8035
    %v8037 = vpop.f32.mrb[0].mxu0
    %8038 = vmatprep.mubr.f32.mxu0 %v7706
    %8039 = vmatmul.mubr.f32.gmra.mrb[0].mxu0 %v7613
    %v8040 = vpop.f32.mrb[0].mxu0
    %v8041 = vadd.f32 0.0, %v8040
    %v8042 = vpop.f32.mrb[0].mxu0
    %8043 = vmatprep.mubr.f32.mxu0 %v7707
    %8044 = vmatmul.mubr.f32.gmra.mrb[0].mxu0 %v7614
    %v8045 = vpop.f32.mrb[0].mxu0
    %v8046 = vadd.f32 0.0, %v8045
    %v8047 = vpop.f32.mrb[0].mxu0
    %8048 = vmatprep.mubr.f32.mxu0 %v7708
    %8049 = vmatmul.mubr.f32.gmra.mrb[0].mxu0 %v7615
    %v8050 = vpop.f32.mrb[0].mxu0
    %v8051 = vadd.f32 0.0, %v8050
    %v8052 = vpop.f32.mrb[0].mxu0
    %8053 = vmatprep.mubr.f32.mxu0 %v7709
    %8054 = vmatmul.mubr.f32.gmra.mrb[0].mxu0 %v7616
    %v8055 = vpop.f32.mrb[0].mxu0
    %v8056 = vadd.f32 0.0, %v8055
    %v8057 = vpop.f32.mrb[0].mxu0
    %8058 = vdwg.mxu0
    %8059 = vmatprep.subr.mxu0 0.0
    %8060 = vmatpush1.msra.mxu0 %v7742
    %8061 = vmatprep.subr.mxu0 0.0
    %8062 = vmatpush1.msra.mxu0 %v7743
    %8063 = vmatprep.subr.mxu0 0.0
    %8064 = vmatpush1.msra.mxu0 %v7744
    %8065 = vmatprep.subr.mxu0 0.0
    %8066 = vmatpush1.msra.mxu0 %v7745
    %8067 = vmatprep.subr.mxu0 0.0
    %8068 = vmatpush1.msra.mxu0 0.0
    %8069 = vmatprep.subr.mxu0 0.0
    %8070 = vmatpush1.msra.mxu0 0.0
    %8071 = vmatprep.subr.mxu0 0.0
    %8072 = vmatpush1.msra.mxu0 0.0
    %8073 = vmatprep.subr.mxu0 0.0
    %8074 = vmatpush1.msra.mxu0 0.0
    %8075 = vmatprep.subr.mxu0 0.0
    %8076 = vmatpush1.msra.mxu0 0.0
    %8077 = vmatprep.subr.mxu0 0.0
    %8078 = vmatpush1.msra.mxu0 0.0
    %8079 = vmatprep.subr.mxu0 0.0
    %8080 = vmatpush1.msra.mxu0 0.0
    %8081 = vmatprep.subr.mxu0 0.0
    %8082 = vmatpush1.msra.mxu0 0.0
    %8083 = vmatprep.subr.mxu0 0.0
    %8084 = vmatpush1.msra.mxu0 0.0
    %8085 = vmatprep.subr.mxu0 0.0
    %8086 = vmatpush1.msra.mxu0 0.0
    %8087 = vmatprep.subr.mxu0 0.0
    %8088 = vmatpush1.msra.mxu0 0.0
    %8089 = vmatprep.subr.mxu0 0.0
    %8090 = vmatpush1.msra.mxu0 0.0
    %8091 = vmatprep.subr.mxu0 0.0
    %8092 = vmatpush1.msra.mxu0 0.0
    %8093 = vmatprep.subr.mxu0 0.0
    %8094 = vmatpush1.msra.mxu0 0.0
    %8095 = vmatprep.subr.mxu0 0.0
    %8096 = vmatpush1.msra.mxu0 0.0
    %8097 = vmatprep.subr.mxu0 0.0
    %8098 = vmatpush1.msra.mxu0 0.0
    %8099 = vmatprep.subr.mxu0 0.0
    %8100 = vmatpush1.msra.mxu0 0.0
    %8101 = vmatprep.subr.mxu0 0.0
    %8102 = vmatpush1.msra.mxu0 0.0
    %8103 = vmatprep.subr.mxu0 0.0
    %8104 = vmatpush1.msra.mxu0 0.0
    %8105 = vmatprep.subr.mxu0 0.0
    %8106 = vmatpush1.msra.mxu0 0.0
    %8107 = vmatprep.subr.mxu0 0.0
    %8108 = vmatpush1.msra.mxu0 0.0
    %8109 = vmatprep.subr.mxu0 0.0
    %8110 = vmatpush1.msra.mxu0 0.0
    %8111 = vmatprep.subr.mxu0 0.0
    %8112 = vmatpush1.msra.mxu0 0.0
    %8113 = vmatprep.subr.mxu0 0.0
    %8114 = vmatpush1.msra.mxu0 0.0
    %8115 = vmatprep.subr.mxu0 0.0
    %8116 = vmatpush1.msra.mxu0 0.0
    %8117 = vmatprep.subr.mxu0 0.0
    %8118 = vmatpush1.msra.mxu0 0.0
    %8119 = vmatprep.subr.mxu0 0.0
    %8120 = vmatpush1.msra.mxu0 0.0
    %8121 = vmatprep.subr.mxu0 0.0
    %8122 = vmatpush1.msra.mxu0 0.0
    %8123 = vmatprep.mubr.f32.mxu0 0.0
    %8124 = vmatmul.mubr.f32.gmra.mrb[0].mxu0 %v7747
    %v8125 = vpop.f32.mrb[0].mxu0
    %v8126 = vadd.f32 %v7906, %v8125
    %v8127 = vpop.f32.mrb[0].mxu0
    %8128 = vmatprep.mubr.f32.mxu0 0.0
    %8129 = vmatmul.mubr.f32.gmra.mrb[0].mxu0 %v7750
    %v8130 = vpop.f32.mrb[0].mxu0
    %v8131 = vadd.f32 %v7911, %v8130
    %v8132 = vpop.f32.mrb[0].mxu0
    %8133 = vmatprep.mubr.f32.mxu0 0.0
    %8134 = vmatmul.mubr.f32.gmra.mrb[0].mxu0 %v7753
    %v8135 = vpop.f32.mrb[0].mxu0
    %v8136 = vadd.f32 %v7916, %v8135
    %v8137 = vpop.f32.mrb[0].mxu0
    %8138 = vmatprep.mubr.f32.mxu0 0.0
    %8139 = vmatmul.mubr.f32.gmra.mrb[0].mxu0 %v7756
    %v8140 = vpop.f32.mrb[0].mxu0
    %v8141 = vadd.f32 %v7921, %v8140
    %v8142 = vpop.f32.mrb[0].mxu0
    %8143 = vmatprep.mubr.f32.mxu0 0.0
    %8144 = vmatmul.mubr.f32.gmra.mrb[0].mxu0 %v7759
    %v8145 = vpop.f32.mrb[0].mxu0
    %v8146 = vadd.f32 %v7926, %v8145
    %v8147 = vpop.f32.mrb[0].mxu0
    %8148 = vmatprep.mubr.f32.mxu0 0.0
    %8149 = vmatmul.mubr.f32.gmra.mrb[0].mxu0 %v7762
    %v8150 = vpop.f32.mrb[0].mxu0
    %v8151 = vadd.f32 %v7931, %v8150
    %v8152 = vpop.f32.mrb[0].mxu0
    %8153 = vmatprep.mubr.f32.mxu0 0.0
    %8154 = vmatmul.mubr.f32.gmra.mrb[0].mxu0 %v7765
    %v8155 = vpop.f32.mrb[0].mxu0
    %v8156 = vadd.f32 %v7936, %v8155
    %v8157 = vpop.f32.mrb[0].mxu0
    %8158 = vmatprep.mubr.f32.mxu0 0.0
    %8159 = vmatmul.mubr.f32.gmra.mrb[0].mxu0 %v7768
    %v8160 = vpop.f32.mrb[0].mxu0
    %v8161 = vadd.f32 %v7941, %v8160
    %v8162 = vpop.f32.mrb[0].mxu0
    %8163 = vmatprep.mubr.f32.mxu0 0.0
    %8164 = vmatmul.mubr.f32.gmra.mrb[0].mxu0 %v7771
    %v8165 = vpop.f32.mrb[0].mxu0
    %v8166 = vadd.f32 %v7946, %v8165
    %v8167 = vpop.f32.mrb[0].mxu0
    %8168 = vmatprep.mubr.f32.mxu0 0.0
    %8169 = vmatmul.mubr.f32.gmra.mrb[0].mxu0 %v7774
    %v8170 = vpop.f32.mrb[0].mxu0
    %v8171 = vadd.f32 %v7951, %v8170
    %v8172 = vpop.f32.mrb[0].mxu0
    %8173 = vmatprep.mubr.f32.mxu0 0.0
    %8174 = vmatmul.mubr.f32.gmra.mrb[0].mxu0 %v7777
    %v8175 = vpop.f32.mrb[0].mxu0
    %v8176 = vadd.f32 %v7956, %v8175
    %v8177 = vpop.f32.mrb[0].mxu0
    %8178 = vmatprep.mubr.f32.mxu0 0.0
    %8179 = vmatmul.mubr.f32.gmra.mrb[0].mxu0 %v7780
    %v8180 = vpop.f32.mrb[0].mxu0
    %v8181 = vadd.f32 %v7961, %v8180
    %v8182 = vpop.f32.mrb[0].mxu0
    %8183 = vmatprep.mubr.f32.mxu0 0.0
    %8184 = vmatmul.mubr.f32.gmra.mrb[0].mxu0 %v7783
    %v8185 = vpop.f32.mrb[0].mxu0
    %v8186 = vadd.f32 %v7966, %v8185
    %v8187 = vpop.f32.mrb[0].mxu0
    %8188 = vmatprep.mubr.f32.mxu0 0.0
    %8189 = vmatmul.mubr.f32.gmra.mrb[0].mxu0 %v7786
    %v8190 = vpop.f32.mrb[0].mxu0
    %v8191 = vadd.f32 %v7971, %v8190
    %v8192 = vpop.f32.mrb[0].mxu0
    %8193 = vmatprep.mubr.f32.mxu0 0.0
    %8194 = vmatmul.mubr.f32.gmra.mrb[0].mxu0 %v7789
    %v8195 = vpop.f32.mrb[0].mxu0
    %v8196 = vadd.f32 %v7976, %v8195
    %v8197 = vpop.f32.mrb[0].mxu0
    %8198 = vmatprep.mubr.f32.mxu0 0.0
    %8199 = vmatmul.mubr.f32.gmra.mrb[0].mxu0 %v7792
    %v8200 = vpop.f32.mrb[0].mxu0
    %v8201 = vadd.f32 %v7981, %v8200
    %v8202 = vpop.f32.mrb[0].mxu0
    %8203 = vmatprep.mubr.f32.mxu0 0.0
    %8204 = vmatmul.mubr.f32.gmra.mrb[0].mxu0 %v7795
    %v8205 = vpop.f32.mrb[0].mxu0
    %v8206 = vadd.f32 %v7986, %v8205
    %v8207 = vpop.f32.mrb[0].mxu0
    %8208 = vmatprep.mubr.f32.mxu0 0.0
    %8209 = vmatmul.mubr.f32.gmra.mrb[0].mxu0 %v7798
    %v8210 = vpop.f32.mrb[0].mxu0
    %v8211 = vadd.f32 %v7991, %v8210
    %v8212 = vpop.f32.mrb[0].mxu0
    %8213 = vmatprep.mubr.f32.mxu0 0.0
    %8214 = vmatmul.mubr.f32.gmra.mrb[0].mxu0 %v7801
    %v8215 = vpop.f32.mrb[0].mxu0
    %v8216 = vadd.f32 %v7996, %v8215
    %v8217 = vpop.f32.mrb[0].mxu0
    %8218 = vmatprep.mubr.f32.mxu0 0.0
    %8219 = vmatmul.mubr.f32.gmra.mrb[0].mxu0 %v7804
    %v8220 = vpop.f32.mrb[0].mxu0
    %v8221 = vadd.f32 %v8001, %v8220
    %v8222 = vpop.f32.mrb[0].mxu0
    %8223 = vmatprep.mubr.f32.mxu0 0.0
    %8224 = vmatmul.mubr.f32.gmra.mrb[0].mxu0 %v7807
    %v8225 = vpop.f32.mrb[0].mxu0
    %v8226 = vadd.f32 %v8006, %v8225
    %v8227 = vpop.f32.mrb[0].mxu0
    %8228 = vmatprep.mubr.f32.mxu0 0.0
    %8229 = vmatmul.mubr.f32.gmra.mrb[0].mxu0 %v7810
    %v8230 = vpop.f32.mrb[0].mxu0
    %v8231 = vadd.f32 %v8011, %v8230
    %v8232 = vpop.f32.mrb[0].mxu0
    %8233 = vmatprep.mubr.f32.mxu0 0.0
    %8234 = vmatmul.mubr.f32.gmra.mrb[0].mxu0 %v7813
    %v8235 = vpop.f32.mrb[0].mxu0
    %v8236 = vadd.f32 %v8016, %v8235
    %v8237 = vpop.f32.mrb[0].mxu0
    %8238 = vmatprep.mubr.f32.mxu0 0.0
    %8239 = vmatmul.mubr.f32.gmra.mrb[0].mxu0 %v7816
    %v8240 = vpop.f32.mrb[0].mxu0
    %v8241 = vadd.f32 %v8021, %v8240
    %v8242 = vpop.f32.mrb[0].mxu0
    %8243 = vmatprep.mubr.f32.mxu0 0.0
    %8244 = vmatmul.mubr.f32.gmra.mrb[0].mxu0 %v7819
    %v8245 = vpop.f32.mrb[0].mxu0
    %v8246 = vadd.f32 %v8026, %v8245
    %v8247 = vpop.f32.mrb[0].mxu0
    %8248 = vmatprep.mubr.f32.mxu0 0.0
    %8249 = vmatmul.mubr.f32.gmra.mrb[0].mxu0 %v7822
    %v8250 = vpop.f32.mrb[0].mxu0
    %v8251 = vadd.f32 %v8031, %v8250
    %v8252 = vpop.f32.mrb[0].mxu0
    %8253 = vmatprep.mubr.f32.mxu0 0.0
    %8254 = vmatmul.mubr.f32.gmra.mrb[0].mxu0 %v7825
    %v8255 = vpop.f32.mrb[0].mxu0
    %v8256 = vadd.f32 %v8036, %v8255
    %v8257 = vpop.f32.mrb[0].mxu0
    %8258 = vmatprep.mubr.f32.mxu0 0.0
    %8259 = vmatmul.mubr.f32.gmra.mrb[0].mxu0 %v7828
    %v8260 = vpop.f32.mrb[0].mxu0
    %v8261 = vadd.f32 %v8041, %v8260
    %v8262 = vpop.f32.mrb[0].mxu0
    %8263 = vmatprep.mubr.f32.mxu0 0.0
    %8264 = vmatmul.mubr.f32.gmra.mrb[0].mxu0 %v7831
    %v8265 = vpop.f32.mrb[0].mxu0
    %v8266 = vadd.f32 %v8046, %v8265
    %v8267 = vpop.f32.mrb[0].mxu0
    %8268 = vmatprep.mubr.f32.mxu0 0.0
    %8269 = vmatmul.mubr.f32.gmra.mrb[0].mxu0 %v7834
    %v8270 = vpop.f32.mrb[0].mxu0
    %v8271 = vadd.f32 %v8051, %v8270
    %v8272 = vpop.f32.mrb[0].mxu0
    %8273 = vmatprep.mubr.f32.mxu0 0.0
    %8274 = vmatmul.mubr.f32.gmra.mrb[0].mxu0 %v7837
    %v8275 = vpop.f32.mrb[0].mxu0
    %v8276 = vadd.f32 %v8056, %v8275
    %v8277 = vpop.f32.mrb[0].mxu0
    %8278 = vdwg.mxu0
    %8279 = vset.pattern.permute.xlu0 3
    %8280 = vperm.xlu0 %8279, %v50
    %v8281 = vpop.permute.xlu0 %8280
    %8283 = vset.pattern.permute.xlu0 3
    %8284 = vperm.xlu0 %8283, %v51
    %v8285 = vpop.permute.xlu0 %8284
    %8287 = vset.pattern.permute.xlu0 3
    %8288 = vperm.xlu0 %8287, %v52
    %v8289 = vpop.permute.xlu0 %8288
    %8291 = vset.pattern.permute.xlu0 3
    %8292 = vperm.xlu0 %8291, %v53
    %v8293 = vpop.permute.xlu0 %8292
    %8295 = vset.pattern.permute.xlu0 3
    %8296 = vperm.xlu0 %8295, %v54
    %v8297 = vpop.permute.xlu0 %8296
    %8299 = vset.pattern.permute.xlu0 3
    %8300 = vperm.xlu0 %8299, %v55
    %v8301 = vpop.permute.xlu0 %8300
    %8303 = vset.pattern.permute.xlu0 3
    %8304 = vperm.xlu0 %8303, %v56
    %v8305 = vpop.permute.xlu0 %8304
    %8307 = vset.pattern.permute.xlu0 3
    %8308 = vperm.xlu0 %8307, %v57
    %v8309 = vpop.permute.xlu0 %8308
    %8311 = vset.pattern.permute.xlu0 3
    %8312 = vperm.xlu0 %8311, %v58
    %v8313 = vpop.permute.xlu0 %8312
    %8315 = vset.pattern.permute.xlu0 3
    %8316 = vperm.xlu0 %8315, %v59
    %v8317 = vpop.permute.xlu0 %8316
    %8319 = vset.pattern.permute.xlu0 3
    %8320 = vperm.xlu0 %8319, %v60
    %v8321 = vpop.permute.xlu0 %8320
    %8323 = vset.pattern.permute.xlu0 3
    %8324 = vperm.xlu0 %8323, %v61
    %v8325 = vpop.permute.xlu0 %8324
    %8327 = vset.pattern.permute.xlu0 3
    %8328 = vperm.xlu0 %8327, %v62
    %v8329 = vpop.permute.xlu0 %8328
    %8331 = vset.pattern.permute.xlu0 3
    %8332 = vperm.xlu0 %8331, %v63
    %v8333 = vpop.permute.xlu0 %8332
    %8335 = vset.pattern.permute.xlu0 3
    %8336 = vperm.xlu0 %8335, %v64
    %v8337 = vpop.permute.xlu0 %8336
    %8339 = vset.pattern.permute.xlu0 3
    %8340 = vperm.xlu0 %8339, %v65
    %v8341 = vpop.permute.xlu0 %8340
    %8343 = vset.pattern.permute.xlu0 3
    %8344 = vperm.xlu0 %8343, %v66
    %v8345 = vpop.permute.xlu0 %8344
    %8347 = vset.pattern.permute.xlu0 3
    %8348 = vperm.xlu0 %8347, %v67
    %v8349 = vpop.permute.xlu0 %8348
    %8351 = vset.pattern.permute.xlu0 3
    %8352 = vperm.xlu0 %8351, %v68
    %v8353 = vpop.permute.xlu0 %8352
    %8355 = vset.pattern.permute.xlu0 3
    %8356 = vperm.xlu0 %8355, %v69
    %v8357 = vpop.permute.xlu0 %8356
    %8359 = vset.pattern.permute.xlu0 3
    %8360 = vperm.xlu0 %8359, %v70
    %v8361 = vpop.permute.xlu0 %8360
    %8363 = vset.pattern.permute.xlu0 3
    %8364 = vperm.xlu0 %8363, %v71
    %v8365 = vpop.permute.xlu0 %8364
    %8367 = vset.pattern.permute.xlu0 3
    %8368 = vperm.xlu0 %8367, %v72
    %v8369 = vpop.permute.xlu0 %8368
    %8371 = vset.pattern.permute.xlu0 3
    %8372 = vperm.xlu0 %8371, %v73
    %v8373 = vpop.permute.xlu0 %8372
    %8375 = vset.pattern.permute.xlu0 3
    %8376 = vperm.xlu0 %8375, %v74
    %v8377 = vpop.permute.xlu0 %8376
    %8379 = vset.pattern.permute.xlu0 3
    %8380 = vperm.xlu0 %8379, %v75
    %v8381 = vpop.permute.xlu0 %8380
    %8383 = vset.pattern.permute.xlu0 3
    %8384 = vperm.xlu0 %8383, %v76
    %v8385 = vpop.permute.xlu0 %8384
    %8387 = vset.pattern.permute.xlu0 3
    %8388 = vperm.xlu0 %8387, %v77
    %v8389 = vpop.permute.xlu0 %8388
    %8391 = vset.pattern.permute.xlu0 3
    %8392 = vperm.xlu0 %8391, %v78
    %v8393 = vpop.permute.xlu0 %8392
    %8395 = vset.pattern.permute.xlu0 3
    %8396 = vperm.xlu0 %8395, %v79
    %v8397 = vpop.permute.xlu0 %8396
    %8399 = vset.pattern.permute.xlu0 3
    %8400 = vperm.xlu0 %8399, %v80
    %v8401 = vpop.permute.xlu0 %8400
    %v8403 = vmul.f32 %v8126, %v8281
    %v8404 = vmul.f32 %v8131, %v8285
    %v8405 = vmul.f32 %v8136, %v8289
    %v8406 = vmul.f32 %v8141, %v8293
    %v8407 = vmul.f32 %v8146, %v8297
    %v8408 = vmul.f32 %v8151, %v8301
    %v8409 = vmul.f32 %v8156, %v8305
    %v8410 = vmul.f32 %v8161, %v8309
    %v8411 = vmul.f32 %v8166, %v8313
    %v8412 = vmul.f32 %v8171, %v8317
    %v8413 = vmul.f32 %v8176, %v8321
    %v8414 = vmul.f32 %v8181, %v8325
    %v8415 = vmul.f32 %v8186, %v8329
    %v8416 = vmul.f32 %v8191, %v8333
    %v8417 = vmul.f32 %v8196, %v8337
    %v8418 = vmul.f32 %v8201, %v8341
    %v8419 = vmul.f32 %v8206, %v8345
    %v8420 = vmul.f32 %v8211, %v8349
    %v8421 = vmul.f32 %v8216, %v8353
    %v8422 = vmul.f32 %v8221, %v8357
    %v8423 = vmul.f32 %v8226, %v8361
    %v8424 = vmul.f32 %v8231, %v8365
    %v8425 = vmul.f32 %v8236, %v8369
    %v8426 = vmul.f32 %v8241, %v8373
    %v8427 = vmul.f32 %v8246, %v8377
    %v8428 = vmul.f32 %v8251, %v8381
    %v8429 = vmul.f32 %v8256, %v8385
    %v8430 = vmul.f32 %v8261, %v8389
    %v8431 = vmul.f32 %v8266, %v8393
    %v8432 = vmul.f32 %v8271, %v8397
    %v8433 = vmul.f32 %v8276, %v8401
    %v8434 = vmul.f32 %v8403, %v8403
    %v8435 = vmul.f32 %v8404, %v8404
    %v8436 = vmul.f32 %v8405, %v8405
    %v8437 = vmul.f32 %v8406, %v8406
    %v8438 = vmul.f32 %v8407, %v8407
    %v8439 = vmul.f32 %v8408, %v8408
    %v8440 = vmul.f32 %v8409, %v8409
    %v8441 = vmul.f32 %v8410, %v8410
    %v8442 = vmul.f32 %v8411, %v8411
    %v8443 = vmul.f32 %v8412, %v8412
    %v8444 = vmul.f32 %v8413, %v8413
    %v8445 = vmul.f32 %v8414, %v8414
    %v8446 = vmul.f32 %v8415, %v8415
    %v8447 = vmul.f32 %v8416, %v8416
    %v8448 = vmul.f32 %v8417, %v8417
    %v8449 = vmul.f32 %v8418, %v8418
    %v8450 = vmul.f32 %v8419, %v8419
    %v8451 = vmul.f32 %v8420, %v8420
    %v8452 = vmul.f32 %v8421, %v8421
    %v8453 = vmul.f32 %v8422, %v8422
    %v8454 = vmul.f32 %v8423, %v8423
    %v8455 = vmul.f32 %v8424, %v8424
    %v8456 = vmul.f32 %v8425, %v8425
    %v8457 = vmul.f32 %v8426, %v8426
    %v8458 = vmul.f32 %v8427, %v8427
    %v8459 = vmul.f32 %v8428, %v8428
    %v8460 = vmul.f32 %v8429, %v8429
    %v8461 = vmul.f32 %v8430, %v8430
    %v8462 = vmul.f32 %v8431, %v8431
    %v8463 = vmul.f32 %v8432, %v8432
    %v8464 = vmul.f32 %v8433, %v8433
    %8496 = vrot.lane.b32.xlu0 %v8434, 8
    %v8497 = vpop.permute.xlu0 %8496
    %8498 = vrot.lane.b32.xlu0 %v8435, 8
    %v8499 = vpop.permute.xlu0 %8498
    %8500 = vrot.lane.b32.xlu0 %v8436, 8
    %v8501 = vpop.permute.xlu0 %8500
    %8502 = vrot.lane.b32.xlu0 %v8437, 8
    %v8503 = vpop.permute.xlu0 %8502
    %8504 = vrot.lane.b32.xlu0 %v8438, 8
    %v8505 = vpop.permute.xlu0 %8504
    %8506 = vrot.lane.b32.xlu0 %v8439, 8
    %v8507 = vpop.permute.xlu0 %8506
    %8508 = vrot.lane.b32.xlu0 %v8440, 8
    %v8509 = vpop.permute.xlu0 %8508
    %8510 = vrot.lane.b32.xlu0 %v8441, 8
    %v8511 = vpop.permute.xlu0 %8510
    %8512 = vrot.lane.b32.xlu0 %v8442, 8
    %v8513 = vpop.permute.xlu0 %8512
    %8514 = vrot.lane.b32.xlu0 %v8443, 8
    %v8515 = vpop.permute.xlu0 %8514
    %8516 = vrot.lane.b32.xlu0 %v8444, 8
    %v8517 = vpop.permute.xlu0 %8516
    %8518 = vrot.lane.b32.xlu0 %v8445, 8
    %v8519 = vpop.permute.xlu0 %8518
    %8520 = vrot.lane.b32.xlu0 %v8446, 8
    %v8521 = vpop.permute.xlu0 %8520
    %8522 = vrot.lane.b32.xlu0 %v8447, 8
    %v8523 = vpop.permute.xlu0 %8522
    %8524 = vrot.lane.b32.xlu0 %v8448, 8
    %v8525 = vpop.permute.xlu0 %8524
    %8526 = vrot.lane.b32.xlu0 %v8449, 8
    %v8527 = vpop.permute.xlu0 %8526
    %8528 = vrot.lane.b32.xlu0 %v8450, 8
    %v8529 = vpop.permute.xlu0 %8528
    %8530 = vrot.lane.b32.xlu0 %v8451, 8
    %v8531 = vpop.permute.xlu0 %8530
    %8532 = vrot.lane.b32.xlu0 %v8452, 8
    %v8533 = vpop.permute.xlu0 %8532
    %8534 = vrot.lane.b32.xlu0 %v8453, 8
    %v8535 = vpop.permute.xlu0 %8534
    %8536 = vrot.lane.b32.xlu0 %v8454, 8
    %v8537 = vpop.permute.xlu0 %8536
    %8538 = vrot.lane.b32.xlu0 %v8455, 8
    %v8539 = vpop.permute.xlu0 %8538
    %8540 = vrot.lane.b32.xlu0 %v8456, 8
    %v8541 = vpop.permute.xlu0 %8540
    %8542 = vrot.lane.b32.xlu0 %v8457, 8
    %v8543 = vpop.permute.xlu0 %8542
    %8544 = vrot.lane.b32.xlu0 %v8458, 8
    %v8545 = vpop.permute.xlu0 %8544
    %8546 = vrot.lane.b32.xlu0 %v8459, 8
    %v8547 = vpop.permute.xlu0 %8546
    %8548 = vrot.lane.b32.xlu0 %v8460, 8
    %v8549 = vpop.permute.xlu0 %8548
    %8550 = vrot.lane.b32.xlu0 %v8461, 8
    %v8551 = vpop.permute.xlu0 %8550
    %8552 = vrot.lane.b32.xlu0 %v8462, 8
    %v8553 = vpop.permute.xlu0 %8552
    %8554 = vrot.lane.b32.xlu0 %v8463, 8
    %v8555 = vpop.permute.xlu0 %8554
    %8556 = vrot.lane.b32.xlu0 %v8464, 8
    %v8557 = vpop.permute.xlu0 %8556
    %v8589 = vsel %vm1518, %v8403, %v8497
    %v8590 = vsel %vm1518, %v8404, %v8499
    %v8591 = vsel %vm1518, %v8405, %v8501
    %v8592 = vsel %vm1518, %v8406, %v8503
    %v8593 = vsel %vm1518, %v8407, %v8505
    %v8594 = vsel %vm1518, %v8408, %v8507
    %v8595 = vsel %vm1518, %v8409, %v8509
    %v8596 = vsel %vm1518, %v8410, %v8511
    %v8597 = vsel %vm1518, %v8411, %v8513
    %v8598 = vsel %vm1518, %v8412, %v8515
    %v8599 = vsel %vm1518, %v8413, %v8517
    %v8600 = vsel %vm1518, %v8414, %v8519
    %v8601 = vsel %vm1518, %v8415, %v8521
    %v8602 = vsel %vm1518, %v8416, %v8523
    %v8603 = vsel %vm1518, %v8417, %v8525
    %v8604 = vsel %vm1518, %v8418, %v8527
    %v8605 = vsel %vm1518, %v8419, %v8529
    %v8606 = vsel %vm1518, %v8420, %v8531
    %v8607 = vsel %vm1518, %v8421, %v8533
    %v8608 = vsel %vm1518, %v8422, %v8535
    %v8609 = vsel %vm1518, %v8423, %v8537
    %v8610 = vsel %vm1518, %v8424, %v8539
    %v8611 = vsel %vm1518, %v8425, %v8541
    %v8612 = vsel %vm1518, %v8426, %v8543
    %v8613 = vsel %vm1518, %v8427, %v8545
    %v8614 = vsel %vm1518, %v8428, %v8547
    %v8615 = vsel %vm1518, %v8429, %v8549
    %v8616 = vsel %vm1518, %v8430, %v8551
    %v8617 = vsel %vm1518, %v8431, %v8553
    %v8618 = vsel %vm1518, %v8432, %v8555
    %v8619 = vsel %vm1518, %v8433, %v8557
    %v8620 = vsel %vm5402, %v8589, 0.0
    %v8621 = vsel %vm5402, %v8590, 0.0
    %v8622 = vadd.f32 %v8620, %v8621
    %v8623 = vsel %vm5402, %v8591, 0.0
    %v8624 = vadd.f32 %v8622, %v8623
    %v8625 = vsel %vm5402, %v8592, 0.0
    %v8626 = vadd.f32 %v8624, %v8625
    %v8627 = vsel %vm5402, %v8593, 0.0
    %v8628 = vadd.f32 %v8626, %v8627
    %v8629 = vsel %vm5402, %v8594, 0.0
    %v8630 = vadd.f32 %v8628, %v8629
    %v8631 = vsel %vm5402, %v8595, 0.0
    %v8632 = vadd.f32 %v8630, %v8631
    %v8633 = vsel %vm5402, %v8596, 0.0
    %v8634 = vadd.f32 %v8632, %v8633
    %v8635 = vsel %vm5402, %v8597, 0.0
    %v8636 = vadd.f32 %v8634, %v8635
    %v8637 = vsel %vm5402, %v8598, 0.0
    %v8638 = vadd.f32 %v8636, %v8637
    %v8639 = vsel %vm5402, %v8599, 0.0
    %v8640 = vadd.f32 %v8638, %v8639
    %v8641 = vsel %vm5402, %v8600, 0.0
    %v8642 = vadd.f32 %v8640, %v8641
    %v8643 = vsel %vm5402, %v8601, 0.0
    %v8644 = vadd.f32 %v8642, %v8643
    %v8645 = vsel %vm5402, %v8602, 0.0
    %v8646 = vadd.f32 %v8644, %v8645
    %v8647 = vsel %vm5402, %v8603, 0.0
    %v8648 = vadd.f32 %v8646, %v8647
    %v8649 = vsel %vm5402, %v8604, 0.0
    %v8650 = vadd.f32 %v8648, %v8649
    %v8651 = vsel %vm5402, %v8605, 0.0
    %v8652 = vadd.f32 %v8650, %v8651
    %v8653 = vsel %vm5402, %v8606, 0.0
    %v8654 = vadd.f32 %v8652, %v8653
    %v8655 = vsel %vm5402, %v8607, 0.0
    %v8656 = vadd.f32 %v8654, %v8655
    %v8657 = vsel %vm5402, %v8608, 0.0
    %v8658 = vadd.f32 %v8656, %v8657
    %v8659 = vsel %vm5402, %v8609, 0.0
    %v8660 = vadd.f32 %v8658, %v8659
    %v8661 = vsel %vm5402, %v8610, 0.0
    %v8662 = vadd.f32 %v8660, %v8661
    %v8663 = vsel %vm5402, %v8611, 0.0
    %v8664 = vadd.f32 %v8662, %v8663
    %v8665 = vsel %vm5402, %v8612, 0.0
    %v8666 = vadd.f32 %v8664, %v8665
    %v8667 = vsel %vm5402, %v8613, 0.0
    %v8668 = vadd.f32 %v8666, %v8667
    %v8669 = vsel %vm5402, %v8614, 0.0
    %v8670 = vadd.f32 %v8668, %v8669
    %v8671 = vsel %vm5402, %v8615, 0.0
    %v8672 = vadd.f32 %v8670, %v8671
    %v8673 = vsel %vm5402, %v8616, 0.0
    %v8674 = vadd.f32 %v8672, %v8673
    %v8675 = vsel %vm5402, %v8617, 0.0
    %v8676 = vadd.f32 %v8674, %v8675
    %v8677 = vsel %vm5402, %v8618, 0.0
    %v8678 = vadd.f32 %v8676, %v8677
    %vm8679 = vcmask 123904
    %v8680 = vsel %vm8679, %v8619, 0.0
    %v8681 = vadd.f32 %v8678, %v8680
    %v8682 = vrot.slane %v8681, 4
    %v8683 = vadd.f32 %v8681, %v8682
    %v8684 = vrot.slane %v8683, 2
    %v8685 = vadd.f32 %v8683, %v8684
    %v8686 = vrot.slane %v8685, 1
    %v8687 = vadd.f32 %v8685, %v8686
    %v8688 = vmul.f32 %v8687, 0.02
    %v8689 = vmul.f32 %v8688, %v8688
    %8691 = vrot.lane.b32.xlu0 %v8689, 8
    %v8692 = vpop.permute.xlu0 %8691
    %v8694 = vsub.f32 %v8688, %v8692
    %v8695 = vmax.f32 %v8694, 0.0
    %v8696 = vsub.f32 %v8126, %v8688
    %v8697 = vsub.f32 %v8131, %v8688
    %v8698 = vsub.f32 %v8136, %v8688
    %v8699 = vsub.f32 %v8141, %v8688
    %v8700 = vsub.f32 %v8146, %v8688
    %v8701 = vsub.f32 %v8151, %v8688
    %v8702 = vsub.f32 %v8156, %v8688
    %v8703 = vsub.f32 %v8161, %v8688
    %v8704 = vsub.f32 %v8166, %v8688
    %v8705 = vsub.f32 %v8171, %v8688
    %v8706 = vsub.f32 %v8176, %v8688
    %v8707 = vsub.f32 %v8181, %v8688
    %v8708 = vsub.f32 %v8186, %v8688
    %v8709 = vsub.f32 %v8191, %v8688
    %v8710 = vsub.f32 %v8196, %v8688
    %v8711 = vsub.f32 %v8201, %v8688
    %v8712 = vsub.f32 %v8206, %v8688
    %v8713 = vsub.f32 %v8211, %v8688
    %v8714 = vsub.f32 %v8216, %v8688
    %v8715 = vsub.f32 %v8221, %v8688
    %v8716 = vsub.f32 %v8226, %v8688
    %v8717 = vsub.f32 %v8231, %v8688
    %v8718 = vsub.f32 %v8236, %v8688
    %v8719 = vsub.f32 %v8241, %v8688
    %v8720 = vsub.f32 %v8246, %v8688
    %v8721 = vsub.f32 %v8251, %v8688
    %v8722 = vsub.f32 %v8256, %v8688
    %v8723 = vsub.f32 %v8261, %v8688
    %v8724 = vsub.f32 %v8266, %v8688
    %v8725 = vsub.f32 %v8271, %v8688
    %v8726 = vsub.f32 %v8276, %v8688
    %v8727 = vadd.f32 %v8695, 1e-05
    %v8728 = vrsqrt.pop %v8727
    %v8729 = vlaneseq
    %v8730 = vshrl.u32 %v8729, 7
    %v8731 = vsub.s32 0, %v8730
    %v8732 = vrot.slane %v8728, %v8731
    %8734 = vrot.lane.b32.xlu0 %v8732, 120
    %v8735 = vpop.permute.xlu0 %8734
    %v8737 = vmul.f32 %v8696, %v8735
    %v8738 = vmul.f32 %v8697, %v8735
    %v8739 = vmul.f32 %v8698, %v8735
    %v8740 = vmul.f32 %v8699, %v8735
    %v8741 = vmul.f32 %v8700, %v8735
    %v8742 = vmul.f32 %v8701, %v8735
    %v8743 = vmul.f32 %v8702, %v8735
    %v8744 = vmul.f32 %v8703, %v8735
    %v8745 = vmul.f32 %v8704, %v8735
    %v8746 = vmul.f32 %v8705, %v8735
    %v8747 = vmul.f32 %v8706, %v8735
    %v8748 = vmul.f32 %v8707, %v8735
    %v8749 = vmul.f32 %v8708, %v8735
    %v8750 = vmul.f32 %v8709, %v8735
    %v8751 = vmul.f32 %v8710, %v8735
    %v8752 = vmul.f32 %v8711, %v8735
    %v8753 = vmul.f32 %v8712, %v8735
    %v8754 = vmul.f32 %v8713, %v8735
    %v8755 = vmul.f32 %v8714, %v8735
    %v8756 = vmul.f32 %v8715, %v8735
    %v8757 = vmul.f32 %v8716, %v8735
    %v8758 = vmul.f32 %v8717, %v8735
    %v8759 = vmul.f32 %v8718, %v8735
    %v8760 = vmul.f32 %v8719, %v8735
    %v8761 = vmul.f32 %v8720, %v8735
    %v8762 = vmul.f32 %v8721, %v8735
    %v8763 = vmul.f32 %v8722, %v8735
    %v8764 = vmul.f32 %v8723, %v8735
    %v8765 = vmul.f32 %v8724, %v8735
    %v8766 = vmul.f32 %v8725, %v8735
    %v8767 = vmul.f32 %v8726, %v8735
    %vm8768 = vcmp.ge.f32.partialorder %v8737, 0.0
    %vm8769 = vcmp.ge.f32.partialorder %v8738, 0.0
    %vm8770 = vcmp.ge.f32.partialorder %v8739, 0.0
    %vm8771 = vcmp.ge.f32.partialorder %v8740, 0.0
    %vm8772 = vcmp.ge.f32.partialorder %v8741, 0.0
    %vm8773 = vcmp.ge.f32.partialorder %v8742, 0.0
    %vm8774 = vcmp.ge.f32.partialorder %v8743, 0.0
    %vm8775 = vcmp.ge.f32.partialorder %v8744, 0.0
    %vm8776 = vcmp.ge.f32.partialorder %v8745, 0.0
    %vm8777 = vcmp.ge.f32.partialorder %v8746, 0.0
    %vm8778 = vcmp.ge.f32.partialorder %v8747, 0.0
    %vm8779 = vcmp.ge.f32.partialorder %v8748, 0.0
    %vm8780 = vcmp.ge.f32.partialorder %v8749, 0.0
    %vm8781 = vcmp.ge.f32.partialorder %v8750, 0.0
    %vm8782 = vcmp.ge.f32.partialorder %v8751, 0.0
    %vm8783 = vcmp.ge.f32.partialorder %v8752, 0.0
    %vm8784 = vcmp.ge.f32.partialorder %v8753, 0.0
    %vm8785 = vcmp.ge.f32.partialorder %v8754, 0.0
    %vm8786 = vcmp.ge.f32.partialorder %v8755, 0.0
    %vm8787 = vcmp.ge.f32.partialorder %v8756, 0.0
    %vm8788 = vcmp.ge.f32.partialorder %v8757, 0.0
    %vm8789 = vcmp.ge.f32.partialorder %v8758, 0.0
    %vm8790 = vcmp.ge.f32.partialorder %v8759, 0.0
    %vm8791 = vcmp.ge.f32.partialorder %v8760, 0.0
    %vm8792 = vcmp.ge.f32.partialorder %v8761, 0.0
    %vm8793 = vcmp.ge.f32.partialorder %v8762, 0.0
    %vm8794 = vcmp.ge.f32.partialorder %v8763, 0.0
    %vm8795 = vcmp.ge.f32.partialorder %v8764, 0.0
    %vm8796 = vcmp.ge.f32.partialorder %v8765, 0.0
    %vm8797 = vcmp.ge.f32.partialorder %v8766, 0.0
    %vm8798 = vcmp.ge.f32.partialorder %v8767, 0.0
    %v8799 = vmul.f32 %v8737, 0.01
    %v8800 = vmul.f32 %v8738, 0.01
    %v8801 = vmul.f32 %v8739, 0.01
    %v8802 = vmul.f32 %v8740, 0.01
    %v8803 = vmul.f32 %v8741, 0.01
    %v8804 = vmul.f32 %v8742, 0.01
    %v8805 = vmul.f32 %v8743, 0.01
    %v8806 = vmul.f32 %v8744, 0.01
    %v8807 = vmul.f32 %v8745, 0.01
    %v8808 = vmul.f32 %v8746, 0.01
    %v8809 = vmul.f32 %v8747, 0.01
    %v8810 = vmul.f32 %v8748, 0.01
    %v8811 = vmul.f32 %v8749, 0.01
    %v8812 = vmul.f32 %v8750, 0.01
    %v8813 = vmul.f32 %v8751, 0.01
    %v8814 = vmul.f32 %v8752, 0.01
    %v8815 = vmul.f32 %v8753, 0.01
    %v8816 = vmul.f32 %v8754, 0.01
    %v8817 = vmul.f32 %v8755, 0.01
    %v8818 = vmul.f32 %v8756, 0.01
    %v8819 = vmul.f32 %v8757, 0.01
    %v8820 = vmul.f32 %v8758, 0.01
    %v8821 = vmul.f32 %v8759, 0.01
    %v8822 = vmul.f32 %v8760, 0.01
    %v8823 = vmul.f32 %v8761, 0.01
    %v8824 = vmul.f32 %v8762, 0.01
    %v8825 = vmul.f32 %v8763, 0.01
    %v8826 = vmul.f32 %v8764, 0.01
    %v8827 = vmul.f32 %v8765, 0.01
    %v8828 = vmul.f32 %v8766, 0.01
    %v8829 = vmul.f32 %v8767, 0.01
    %v8830 = vsel %vm8768, %v8737, %v8799
    %v8831 = vsel %vm8769, %v8738, %v8800
    %v8832 = vsel %vm8770, %v8739, %v8801
    %v8833 = vsel %vm8771, %v8740, %v8802
    %v8834 = vsel %vm8772, %v8741, %v8803
    %v8835 = vsel %vm8773, %v8742, %v8804
    %v8836 = vsel %vm8774, %v8743, %v8805
    %v8837 = vsel %vm8775, %v8744, %v8806
    %v8838 = vsel %vm8776, %v8745, %v8807
    %v8839 = vsel %vm8777, %v8746, %v8808
    %v8840 = vsel %vm8778, %v8747, %v8809
    %v8841 = vsel %vm8779, %v8748, %v8810
    %v8842 = vsel %vm8780, %v8749, %v8811
    %v8843 = vsel %vm8781, %v8750, %v8812
    %v8844 = vsel %vm8782, %v8751, %v8813
    %v8845 = vsel %vm8783, %v8752, %v8814
    %v8846 = vsel %vm8784, %v8753, %v8815
    %v8847 = vsel %vm8785, %v8754, %v8816
    %v8848 = vsel %vm8786, %v8755, %v8817
    %v8849 = vsel %vm8787, %v8756, %v8818
    %v8850 = vsel %vm8788, %v8757, %v8819
    %v8851 = vsel %vm8789, %v8758, %v8820
    %v8852 = vsel %vm8790, %v8759, %v8821
    %v8853 = vsel %vm8791, %v8760, %v8822
    %v8854 = vsel %vm8792, %v8761, %v8823
    %v8855 = vsel %vm8793, %v8762, %v8824
    %v8856 = vsel %vm8794, %v8763, %v8825
    %v8857 = vsel %vm8795, %v8764, %v8826
    %v8858 = vsel %vm8796, %v8765, %v8827
    %v8859 = vsel %vm8797, %v8766, %v8828
    %v8860 = vsel %vm8798, %v8767, %v8829
    %v8861 = vmul.f32 %v8830, %v8281
    %v8862 = vmul.f32 %v8831, %v8285
    %v8863 = vmul.f32 %v8832, %v8289
    %v8864 = vmul.f32 %v8833, %v8293
    %v8865 = vmul.f32 %v8834, %v8297
    %v8866 = vmul.f32 %v8835, %v8301
    %v8867 = vmul.f32 %v8836, %v8305
    %v8868 = vmul.f32 %v8837, %v8309
    %v8869 = vmul.f32 %v8838, %v8313
    %v8870 = vmul.f32 %v8839, %v8317
    %v8871 = vmul.f32 %v8840, %v8321
    %v8872 = vmul.f32 %v8841, %v8325
    %v8873 = vmul.f32 %v8842, %v8329
    %v8874 = vmul.f32 %v8843, %v8333
    %v8875 = vmul.f32 %v8844, %v8337
    %v8876 = vmul.f32 %v8845, %v8341
    %v8877 = vmul.f32 %v8846, %v8345
    %v8878 = vmul.f32 %v8847, %v8349
    %v8879 = vmul.f32 %v8848, %v8353
    %v8880 = vmul.f32 %v8849, %v8357
    %v8881 = vmul.f32 %v8850, %v8361
    %v8882 = vmul.f32 %v8851, %v8365
    %v8883 = vmul.f32 %v8852, %v8369
    %v8884 = vmul.f32 %v8853, %v8373
    %v8885 = vmul.f32 %v8854, %v8377
    %v8886 = vmul.f32 %v8855, %v8381
    %v8887 = vmul.f32 %v8856, %v8385
    %v8888 = vmul.f32 %v8857, %v8389
    %v8889 = vmul.f32 %v8858, %v8393
    %v8890 = vmul.f32 %v8859, %v8397
    %v8891 = vmul.f32 %v8860, %v8401
    %8892 = vst.msk [vmem:[#allocation2] sm:$0xff] %vm1518, %v8861
    %8893 = vst.msk [vmem:[#allocation2 + $0x8] sm:$0xff] %vm1518, %v8862
    %8894 = vst.msk [vmem:[#allocation2 + $0x10] sm:$0xff] %vm1518, %v8863
    %8895 = vst.msk [vmem:[#allocation2 + $0x18] sm:$0xff] %vm1518, %v8864
    %8896 = vst.msk [vmem:[#allocation2 + $0x20] sm:$0xff] %vm1518, %v8865
    %8897 = vst.msk [vmem:[#allocation2 + $0x28] sm:$0xff] %vm1518, %v8866
    %8898 = vst.msk [vmem:[#allocation2 + $0x30] sm:$0xff] %vm1518, %v8867
    %8899 = vst.msk [vmem:[#allocation2 + $0x38] sm:$0xff] %vm1518, %v8868
    %8900 = vst.msk [vmem:[#allocation2 + $0x40] sm:$0xff] %vm1518, %v8869
    %8901 = vst.msk [vmem:[#allocation2 + $0x48] sm:$0xff] %vm1518, %v8870
    %8902 = vst.msk [vmem:[#allocation2 + $0x50] sm:$0xff] %vm1518, %v8871
    %8903 = vst.msk [vmem:[#allocation2 + $0x58] sm:$0xff] %vm1518, %v8872
    %8904 = vst.msk [vmem:[#allocation2 + $0x60] sm:$0xff] %vm1518, %v8873
    %8905 = vst.msk [vmem:[#allocation2 + $0x68] sm:$0xff] %vm1518, %v8874
    %8906 = vst.msk [vmem:[#allocation2 + $0x70] sm:$0xff] %vm1518, %v8875
    %8907 = vst.msk [vmem:[#allocation2 + $0x78] sm:$0xff] %vm1518, %v8876
    %8908 = vst.msk [vmem:[#allocation2 + $0x80] sm:$0xff] %vm1518, %v8877
    %8909 = vst.msk [vmem:[#allocation2 + $0x88] sm:$0xff] %vm1518, %v8878
    %8910 = vst.msk [vmem:[#allocation2 + $0x90] sm:$0xff] %vm1518, %v8879
    %8911 = vst.msk [vmem:[#allocation2 + $0x98] sm:$0xff] %vm1518, %v8880
    %8912 = vst.msk [vmem:[#allocation2 + $0xa0] sm:$0xff] %vm1518, %v8881
    %8913 = vst.msk [vmem:[#allocation2 + $0xa8] sm:$0xff] %vm1518, %v8882
    %8914 = vst.msk [vmem:[#allocation2 + $0xb0] sm:$0xff] %vm1518, %v8883
    %8915 = vst.msk [vmem:[#allocation2 + $0xb8] sm:$0xff] %vm1518, %v8884
    %8916 = vst.msk [vmem:[#allocation2 + $0xc0] sm:$0xff] %vm1518, %v8885
    %8917 = vst.msk [vmem:[#allocation2 + $0xc8] sm:$0xff] %vm1518, %v8886
    %8918 = vst.msk [vmem:[#allocation2 + $0xd0] sm:$0xff] %vm1518, %v8887
    %8919 = vst.msk [vmem:[#allocation2 + $0xd8] sm:$0xff] %vm1518, %v8888
    %8920 = vst.msk [vmem:[#allocation2 + $0xe0] sm:$0xff] %vm1518, %v8889
    %8921 = vst.msk [vmem:[#allocation2 + $0xe8] sm:$0xff] %vm1518, %v8890
    %8922 = vst.msk [vmem:[#allocation2 + $0xf0] sm:$0x3] %vm3819, %v8891
    %v8923 = vld [vmem:[#allocation2] sm:$0xff]
    %v8924 = vld [vmem:[#allocation2 + $0x8] sm:$0xff]
    %v8925 = vld [vmem:[#allocation2 + $0x10] sm:$0xff]
    %v8926 = vld [vmem:[#allocation2 + $0x18] sm:$0xff]
    %v8927 = vld [vmem:[#allocation2 + $0x20] sm:$0xff]
    %v8928 = vld [vmem:[#allocation2 + $0x28] sm:$0xff]
    %v8929 = vld [vmem:[#allocation2 + $0x30] sm:$0xff]
    %v8930 = vld [vmem:[#allocation2 + $0x38] sm:$0xff]
    %v8931 = vld [vmem:[#allocation2 + $0x40] sm:$0xff]
    %v8932 = vld [vmem:[#allocation2 + $0x48] sm:$0xff]
    %v8933 = vld [vmem:[#allocation2 + $0x50] sm:$0xff]
    %v8934 = vld [vmem:[#allocation2 + $0x58] sm:$0xff]
    %v8935 = vld [vmem:[#allocation2 + $0x60] sm:$0xff]
    %v8936 = vld [vmem:[#allocation2 + $0x68] sm:$0xff]
    %v8937 = vld [vmem:[#allocation2 + $0x70] sm:$0xff]
    %v8938 = vld [vmem:[#allocation2 + $0x78] sm:$0xff]
    %v8939 = vld [vmem:[#allocation2 + $0x80] sm:$0xff]
    %v8940 = vld [vmem:[#allocation2 + $0x88] sm:$0xff]
    %v8941 = vld [vmem:[#allocation2 + $0x90] sm:$0xff]
    %v8942 = vld [vmem:[#allocation2 + $0x98] sm:$0xff]
    %v8943 = vld [vmem:[#allocation2 + $0xa0] sm:$0xff]
    %v8944 = vld [vmem:[#allocation2 + $0xa8] sm:$0xff]
    %v8945 = vld [vmem:[#allocation2 + $0xb0] sm:$0xff]
    %v8946 = vld [vmem:[#allocation2 + $0xb8] sm:$0xff]
    %v8947 = vld [vmem:[#allocation2 + $0xc0] sm:$0xff]
    %v8948 = vld [vmem:[#allocation2 + $0xc8] sm:$0xff]
    %v8949 = vld [vmem:[#allocation2 + $0xd0] sm:$0xff]
    %v8950 = vld [vmem:[#allocation2 + $0xd8] sm:$0xff]
    %v8951 = vld [vmem:[#allocation2 + $0xe0] sm:$0xff]
    %v8952 = vld [vmem:[#allocation2 + $0xe8] sm:$0xff]
    %v8953 = vld [vmem:[#allocation2 + $0xf0] sm:$0x3]
    %v8954 = vld [vmem:[#allocation2 + $0x1] sm:$0xff]
    %v8955 = vld [vmem:[#allocation2 + $0x9] sm:$0xff]
    %v8956 = vld [vmem:[#allocation2 + $0x11] sm:$0xff]
    %v8957 = vld [vmem:[#allocation2 + $0x19] sm:$0xff]
    %v8958 = vld [vmem:[#allocation2 + $0x21] sm:$0xff]
    %v8959 = vld [vmem:[#allocation2 + $0x29] sm:$0xff]
    %v8960 = vld [vmem:[#allocation2 + $0x31] sm:$0xff]
    %v8961 = vld [vmem:[#allocation2 + $0x39] sm:$0xff]
    %v8962 = vld [vmem:[#allocation2 + $0x41] sm:$0xff]
    %v8963 = vld [vmem:[#allocation2 + $0x49] sm:$0xff]
    %v8964 = vld [vmem:[#allocation2 + $0x51] sm:$0xff]
    %v8965 = vld [vmem:[#allocation2 + $0x59] sm:$0xff]
    %v8966 = vld [vmem:[#allocation2 + $0x61] sm:$0xff]
    %v8967 = vld [vmem:[#allocation2 + $0x69] sm:$0xff]
    %v8968 = vld [vmem:[#allocation2 + $0x71] sm:$0xff]
    %v8969 = vld [vmem:[#allocation2 + $0x79] sm:$0xff]
    %v8970 = vld [vmem:[#allocation2 + $0x81] sm:$0xff]
    %v8971 = vld [vmem:[#allocation2 + $0x89] sm:$0xff]
    %v8972 = vld [vmem:[#allocation2 + $0x91] sm:$0xff]
    %v8973 = vld [vmem:[#allocation2 + $0x99] sm:$0xff]
    %v8974 = vld [vmem:[#allocation2 + $0xa1] sm:$0xff]
    %v8975 = vld [vmem:[#allocation2 + $0xa9] sm:$0xff]
    %v8976 = vld [vmem:[#allocation2 + $0xb1] sm:$0xff]
    %v8977 = vld [vmem:[#allocation2 + $0xb9] sm:$0xff]
    %v8978 = vld [vmem:[#allocation2 + $0xc1] sm:$0xff]
    %v8979 = vld [vmem:[#allocation2 + $0xc9] sm:$0xff]
    %v8980 = vld [vmem:[#allocation2 + $0xd1] sm:$0xff]
    %v8981 = vld [vmem:[#allocation2 + $0xd9] sm:$0xff]
    %v8982 = vld [vmem:[#allocation2 + $0xe1] sm:$0xff]
    %v8983 = vld [vmem:[#allocation2 + $0xe9] sm:$0xff]
    %v8984 = vld [vmem:[#allocation2 + $0xf1] sm:$0x3]
    %v8985 = vld [vmem:[#allocation2 + $0x2] sm:$0xff]
    %v8986 = vld [vmem:[#allocation2 + $0xa] sm:$0xff]
    %v8987 = vld [vmem:[#allocation2 + $0x12] sm:$0xff]
    %v8988 = vld [vmem:[#allocation2 + $0x1a] sm:$0xff]
    %v8989 = vld [vmem:[#allocation2 + $0x22] sm:$0xff]
    %v8990 = vld [vmem:[#allocation2 + $0x2a] sm:$0xff]
    %v8991 = vld [vmem:[#allocation2 + $0x32] sm:$0xff]
    %v8992 = vld [vmem:[#allocation2 + $0x3a] sm:$0xff]
    %v8993 = vld [vmem:[#allocation2 + $0x42] sm:$0xff]
    %v8994 = vld [vmem:[#allocation2 + $0x4a] sm:$0xff]
    %v8995 = vld [vmem:[#allocation2 + $0x52] sm:$0xff]
    %v8996 = vld [vmem:[#allocation2 + $0x5a] sm:$0xff]
    %v8997 = vld [vmem:[#allocation2 + $0x62] sm:$0xff]
    %v8998 = vld [vmem:[#allocation2 + $0x6a] sm:$0xff]
    %v8999 = vld [vmem:[#allocation2 + $0x72] sm:$0xff]
    %v9000 = vld [vmem:[#allocation2 + $0x7a] sm:$0xff]
    %v9001 = vld [vmem:[#allocation2 + $0x82] sm:$0xff]
    %v9002 = vld [vmem:[#allocation2 + $0x8a] sm:$0xff]
    %v9003 = vld [vmem:[#allocation2 + $0x92] sm:$0xff]
    %v9004 = vld [vmem:[#allocation2 + $0x9a] sm:$0xff]
    %v9005 = vld [vmem:[#allocation2 + $0xa2] sm:$0xff]
    %v9006 = vld [vmem:[#allocation2 + $0xaa] sm:$0xff]
    %v9007 = vld [vmem:[#allocation2 + $0xb2] sm:$0xff]
    %v9008 = vld [vmem:[#allocation2 + $0xba] sm:$0xff]
    %v9009 = vld [vmem:[#allocation2 + $0xc2] sm:$0xff]
    %v9010 = vld [vmem:[#allocation2 + $0xca] sm:$0xff]
    %v9011 = vld [vmem:[#allocation2 + $0xd2] sm:$0xff]
    %v9012 = vld [vmem:[#allocation2 + $0xda] sm:$0xff]
    %v9013 = vld [vmem:[#allocation2 + $0xe2] sm:$0xff]
    %v9014 = vld [vmem:[#allocation2 + $0xea] sm:$0xff]
    %v9015 = vld [vmem:[#allocation2 + $0xf2] sm:$0x3]
    %v9016 = vld [vmem:[#allocation2 + $0xb] sm:$0xff]
    %v9017 = vld [vmem:[#allocation2 + $0x13] sm:$0xff]
    %v9018 = vld [vmem:[#allocation2 + $0x1b] sm:$0xff]
    %v9019 = vld [vmem:[#allocation2 + $0x23] sm:$0xff]
    %v9020 = vld [vmem:[#allocation2 + $0x2b] sm:$0xff]
    %v9021 = vld [vmem:[#allocation2 + $0x33] sm:$0xff]
    %v9022 = vld [vmem:[#allocation2 + $0x3b] sm:$0xff]
    %v9023 = vld [vmem:[#allocation2 + $0x43] sm:$0xff]
    %v9024 = vld [vmem:[#allocation2 + $0x4b] sm:$0xff]
    %v9025 = vld [vmem:[#allocation2 + $0x53] sm:$0xff]
    %v9026 = vld [vmem:[#allocation2 + $0x5b] sm:$0xff]
    %v9027 = vld [vmem:[#allocation2 + $0x63] sm:$0xff]
    %v9028 = vld [vmem:[#allocation2 + $0x6b] sm:$0xff]
    %v9029 = vld [vmem:[#allocation2 + $0x73] sm:$0xff]
    %v9030 = vld [vmem:[#allocation2 + $0x7b] sm:$0xff]
    %v9031 = vld [vmem:[#allocation2 + $0x83] sm:$0xff]
    %v9032 = vld [vmem:[#allocation2 + $0x8b] sm:$0xff]
    %v9033 = vld [vmem:[#allocation2 + $0x93] sm:$0xff]
    %v9034 = vld [vmem:[#allocation2 + $0x9b] sm:$0xff]
    %v9035 = vld [vmem:[#allocation2 + $0xa3] sm:$0xff]
    %v9036 = vld [vmem:[#allocation2 + $0xab] sm:$0xff]
    %v9037 = vld [vmem:[#allocation2 + $0xb3] sm:$0xff]
    %v9038 = vld [vmem:[#allocation2 + $0xbb] sm:$0xff]
    %v9039 = vld [vmem:[#allocation2 + $0xc3] sm:$0xff]
    %v9040 = vld [vmem:[#allocation2 + $0xcb] sm:$0xff]
    %v9041 = vld [vmem:[#allocation2 + $0xd3] sm:$0xff]
    %v9042 = vld [vmem:[#allocation2 + $0xdb] sm:$0xff]
    %v9043 = vld [vmem:[#allocation2 + $0xe3] sm:$0xff]
    %v9044 = vld [vmem:[#allocation2 + $0xeb] sm:$0xff]
    %v9045 = vld [vmem:[#allocation2 + $0xf3] sm:$0xff]
    %v9046 = vld [vmem:[#allocation2 + $0xfb] sm:$0x3]
    %v9047 = vld [vmem:[#allocation2 + $0xc] sm:$0xff]
    %v9048 = vld [vmem:[#allocation2 + $0x14] sm:$0xff]
    %v9049 = vld [vmem:[#allocation2 + $0x1c] sm:$0xff]
    %v9050 = vld [vmem:[#allocation2 + $0x24] sm:$0xff]
    %v9051 = vld [vmem:[#allocation2 + $0x2c] sm:$0xff]
    %v9052 = vld [vmem:[#allocation2 + $0x34] sm:$0xff]
    %v9053 = vld [vmem:[#allocation2 + $0x3c] sm:$0xff]
    %v9054 = vld [vmem:[#allocation2 + $0x44] sm:$0xff]
    %v9055 = vld [vmem:[#allocation2 + $0x4c] sm:$0xff]
    %v9056 = vld [vmem:[#allocation2 + $0x54] sm:$0xff]
    %v9057 = vld [vmem:[#allocation2 + $0x5c] sm:$0xff]
    %v9058 = vld [vmem:[#allocation2 + $0x64] sm:$0xff]
    %v9059 = vld [vmem:[#allocation2 + $0x6c] sm:$0xff]
    %v9060 = vld [vmem:[#allocation2 + $0x74] sm:$0xff]
    %v9061 = vld [vmem:[#allocation2 + $0x7c] sm:$0xff]
    %v9062 = vld [vmem:[#allocation2 + $0x84] sm:$0xff]
    %v9063 = vld [vmem:[#allocation2 + $0x8c] sm:$0xff]
    %v9064 = vld [vmem:[#allocation2 + $0x94] sm:$0xff]
    %v9065 = vld [vmem:[#allocation2 + $0x9c] sm:$0xff]
    %v9066 = vld [vmem:[#allocation2 + $0xa4] sm:$0xff]
    %v9067 = vld [vmem:[#allocation2 + $0xac] sm:$0xff]
    %v9068 = vld [vmem:[#allocation2 + $0xb4] sm:$0xff]
    %v9069 = vld [vmem:[#allocation2 + $0xbc] sm:$0xff]
    %v9070 = vld [vmem:[#allocation2 + $0xc4] sm:$0xff]
    %v9071 = vld [vmem:[#allocation2 + $0xcc] sm:$0xff]
    %v9072 = vld [vmem:[#allocation2 + $0xd4] sm:$0xff]
    %v9073 = vld [vmem:[#allocation2 + $0xdc] sm:$0xff]
    %v9074 = vld [vmem:[#allocation2 + $0xe4] sm:$0xff]
    %v9075 = vld [vmem:[#allocation2 + $0xec] sm:$0xff]
    %v9076 = vld [vmem:[#allocation2 + $0xf4] sm:$0xff]
    %v9077 = vld [vmem:[#allocation2 + $0xfc] sm:$0x3]
    %v9078 = vld [vmem:[#allocation2 + $0xd] sm:$0xff]
    %v9079 = vld [vmem:[#allocation2 + $0x15] sm:$0xff]
    %v9080 = vld [vmem:[#allocation2 + $0x1d] sm:$0xff]
    %v9081 = vld [vmem:[#allocation2 + $0x25] sm:$0xff]
    %v9082 = vld [vmem:[#allocation2 + $0x2d] sm:$0xff]
    %v9083 = vld [vmem:[#allocation2 + $0x35] sm:$0xff]
    %v9084 = vld [vmem:[#allocation2 + $0x3d] sm:$0xff]
    %v9085 = vld [vmem:[#allocation2 + $0x45] sm:$0xff]
    %v9086 = vld [vmem:[#allocation2 + $0x4d] sm:$0xff]
    %v9087 = vld [vmem:[#allocation2 + $0x55] sm:$0xff]
    %v9088 = vld [vmem:[#allocation2 + $0x5d] sm:$0xff]
    %v9089 = vld [vmem:[#allocation2 + $0x65] sm:$0xff]
    %v9090 = vld [vmem:[#allocation2 + $0x6d] sm:$0xff]
    %v9091 = vld [vmem:[#allocation2 + $0x75] sm:$0xff]
    %v9092 = vld [vmem:[#allocation2 + $0x7d] sm:$0xff]
    %v9093 = vld [vmem:[#allocation2 + $0x85] sm:$0xff]
    %v9094 = vld [vmem:[#allocation2 + $0x8d] sm:$0xff]
    %v9095 = vld [vmem:[#allocation2 + $0x95] sm:$0xff]
    %v9096 = vld [vmem:[#allocation2 + $0x9d] sm:$0xff]
    %v9097 = vld [vmem:[#allocation2 + $0xa5] sm:$0xff]
    %v9098 = vld [vmem:[#allocation2 + $0xad] sm:$0xff]
    %v9099 = vld [vmem:[#allocation2 + $0xb5] sm:$0xff]
    %v9100 = vld [vmem:[#allocation2 + $0xbd] sm:$0xff]
    %v9101 = vld [vmem:[#allocation2 + $0xc5] sm:$0xff]
    %v9102 = vld [vmem:[#allocation2 + $0xcd] sm:$0xff]
    %v9103 = vld [vmem:[#allocation2 + $0xd5] sm:$0xff]
    %v9104 = vld [vmem:[#allocation2 + $0xdd] sm:$0xff]
    %v9105 = vld [vmem:[#allocation2 + $0xe5] sm:$0xff]
    %v9106 = vld [vmem:[#allocation2 + $0xed] sm:$0xff]
    %v9107 = vld [vmem:[#allocation2 + $0xf5] sm:$0xff]
    %v9108 = vld [vmem:[#allocation2 + $0xfd] sm:$0x3]
    %v9109 = vld [vmem:[#allocation2 + $0x16] sm:$0xff]
    %v9110 = vld [vmem:[#allocation2 + $0x1e] sm:$0xff]
    %v9111 = vld [vmem:[#allocation2 + $0x26] sm:$0xff]
    %v9112 = vld [vmem:[#allocation2 + $0x2e] sm:$0xff]
    %v9113 = vld [vmem:[#allocation2 + $0x36] sm:$0xff]
    %v9114 = vld [vmem:[#allocation2 + $0x3e] sm:$0xff]
    %v9115 = vld [vmem:[#allocation2 + $0x46] sm:$0xff]
    %v9116 = vld [vmem:[#allocation2 + $0x4e] sm:$0xff]
    %v9117 = vld [vmem:[#allocation2 + $0x56] sm:$0xff]
    %v9118 = vld [vmem:[#allocation2 + $0x5e] sm:$0xff]
    %v9119 = vld [vmem:[#allocation2 + $0x66] sm:$0xff]
    %v9120 = vld [vmem:[#allocation2 + $0x6e] sm:$0xff]
    %v9121 = vld [vmem:[#allocation2 + $0x76] sm:$0xff]
    %v9122 = vld [vmem:[#allocation2 + $0x7e] sm:$0xff]
    %v9123 = vld [vmem:[#allocation2 + $0x86] sm:$0xff]
    %v9124 = vld [vmem:[#allocation2 + $0x8e] sm:$0xff]
    %v9125 = vld [vmem:[#allocation2 + $0x96] sm:$0xff]
    %v9126 = vld [vmem:[#allocation2 + $0x9e] sm:$0xff]
    %v9127 = vld [vmem:[#allocation2 + $0xa6] sm:$0xff]
    %v9128 = vld [vmem:[#allocation2 + $0xae] sm:$0xff]
    %v9129 = vld [vmem:[#allocation2 + $0xb6] sm:$0xff]
    %v9130 = vld [vmem:[#allocation2 + $0xbe] sm:$0xff]
    %v9131 = vld [vmem:[#allocation2 + $0xc6] sm:$0xff]
    %v9132 = vld [vmem:[#allocation2 + $0xce] sm:$0xff]
    %v9133 = vld [vmem:[#allocation2 + $0xd6] sm:$0xff]
    %v9134 = vld [vmem:[#allocation2 + $0xde] sm:$0xff]
    %v9135 = vld [vmem:[#allocation2 + $0xe6] sm:$0xff]
    %v9136 = vld [vmem:[#allocation2 + $0xee] sm:$0xff]
    %v9137 = vld [vmem:[#allocation2 + $0xf6] sm:$0xff]
    %v9138 = vld [vmem:[#allocation2 + $0xfe] sm:$0xff]
    %v9139 = vld [vmem:[#allocation2 + $0x106] sm:$0x3]
    %v9140 = vld [vmem:[#allocation2 + $0x17] sm:$0xff]
    %v9141 = vld [vmem:[#allocation2 + $0x1f] sm:$0xff]
    %v9142 = vld [vmem:[#allocation2 + $0x27] sm:$0xff]
    %v9143 = vld [vmem:[#allocation2 + $0x2f] sm:$0xff]
    %v9144 = vld [vmem:[#allocation2 + $0x37] sm:$0xff]
    %v9145 = vld [vmem:[#allocation2 + $0x3f] sm:$0xff]
    %v9146 = vld [vmem:[#allocation2 + $0x47] sm:$0xff]
    %v9147 = vld [vmem:[#allocation2 + $0x4f] sm:$0xff]
    %v9148 = vld [vmem:[#allocation2 + $0x57] sm:$0xff]
    %v9149 = vld [vmem:[#allocation2 + $0x5f] sm:$0xff]
    %v9150 = vld [vmem:[#allocation2 + $0x67] sm:$0xff]
    %v9151 = vld [vmem:[#allocation2 + $0x6f] sm:$0xff]
    %v9152 = vld [vmem:[#allocation2 + $0x77] sm:$0xff]
    %v9153 = vld [vmem:[#allocation2 + $0x7f] sm:$0xff]
    %v9154 = vld [vmem:[#allocation2 + $0x87] sm:$0xff]
    %v9155 = vld [vmem:[#allocation2 + $0x8f] sm:$0xff]
    %v9156 = vld [vmem:[#allocation2 + $0x97] sm:$0xff]
    %v9157 = vld [vmem:[#allocation2 + $0x9f] sm:$0xff]
    %v9158 = vld [vmem:[#allocation2 + $0xa7] sm:$0xff]
    %v9159 = vld [vmem:[#allocation2 + $0xaf] sm:$0xff]
    %v9160 = vld [vmem:[#allocation2 + $0xb7] sm:$0xff]
    %v9161 = vld [vmem:[#allocation2 + $0xbf] sm:$0xff]
    %v9162 = vld [vmem:[#allocation2 + $0xc7] sm:$0xff]
    %v9163 = vld [vmem:[#allocation2 + $0xcf] sm:$0xff]
    %v9164 = vld [vmem:[#allocation2 + $0xd7] sm:$0xff]
    %v9165 = vld [vmem:[#allocation2 + $0xdf] sm:$0xff]
    %v9166 = vld [vmem:[#allocation2 + $0xe7] sm:$0xff]
    %v9167 = vld [vmem:[#allocation2 + $0xef] sm:$0xff]
    %v9168 = vld [vmem:[#allocation2 + $0xf7] sm:$0xff]
    %v9169 = vld [vmem:[#allocation2 + $0xff] sm:$0xff]
    %v9170 = vld [vmem:[#allocation2 + $0x107] sm:$0x3]
    %v9171 = vld [vmem:[#allocation2 + $0xf0] sm:$0xff]
    %v9172 = vld [vmem:[#allocation2 + $0xf8] sm:$0xff]
    %v9173 = vld [vmem:[#allocation2 + $0x100] sm:$0xff]
    %v9174 = vld [vmem:[#allocation2 + $0x108] sm:$0x3]
    %9206 = vrot.lane.b32.xlu0 %v8954, 8
    %v9207 = vpop.permute.xlu0 %9206
    %9208 = vrot.lane.b32.xlu0 %v8955, 8
    %v9209 = vpop.permute.xlu0 %9208
    %9210 = vrot.lane.b32.xlu0 %v8956, 8
    %v9211 = vpop.permute.xlu0 %9210
    %9212 = vrot.lane.b32.xlu0 %v8957, 8
    %v9213 = vpop.permute.xlu0 %9212
    %9214 = vrot.lane.b32.xlu0 %v8958, 8
    %v9215 = vpop.permute.xlu0 %9214
    %9216 = vrot.lane.b32.xlu0 %v8959, 8
    %v9217 = vpop.permute.xlu0 %9216
    %9218 = vrot.lane.b32.xlu0 %v8960, 8
    %v9219 = vpop.permute.xlu0 %9218
    %9220 = vrot.lane.b32.xlu0 %v8961, 8
    %v9221 = vpop.permute.xlu0 %9220
    %9222 = vrot.lane.b32.xlu0 %v8962, 8
    %v9223 = vpop.permute.xlu0 %9222
    %9224 = vrot.lane.b32.xlu0 %v8963, 8
    %v9225 = vpop.permute.xlu0 %9224
    %9226 = vrot.lane.b32.xlu0 %v8964, 8
    %v9227 = vpop.permute.xlu0 %9226
    %9228 = vrot.lane.b32.xlu0 %v8965, 8
    %v9229 = vpop.permute.xlu0 %9228
    %9230 = vrot.lane.b32.xlu0 %v8966, 8
    %v9231 = vpop.permute.xlu0 %9230
    %9232 = vrot.lane.b32.xlu0 %v8967, 8
    %v9233 = vpop.permute.xlu0 %9232
    %9234 = vrot.lane.b32.xlu0 %v8968, 8
    %v9235 = vpop.permute.xlu0 %9234
    %9236 = vrot.lane.b32.xlu0 %v8969, 8
    %v9237 = vpop.permute.xlu0 %9236
    %9238 = vrot.lane.b32.xlu0 %v8970, 8
    %v9239 = vpop.permute.xlu0 %9238
    %9240 = vrot.lane.b32.xlu0 %v8971, 8
    %v9241 = vpop.permute.xlu0 %9240
    %9242 = vrot.lane.b32.xlu0 %v8972, 8
    %v9243 = vpop.permute.xlu0 %9242
    %9244 = vrot.lane.b32.xlu0 %v8973, 8
    %v9245 = vpop.permute.xlu0 %9244
    %9246 = vrot.lane.b32.xlu0 %v8974, 8
    %v9247 = vpop.permute.xlu0 %9246
    %9248 = vrot.lane.b32.xlu0 %v8975, 8
    %v9249 = vpop.permute.xlu0 %9248
    %9250 = vrot.lane.b32.xlu0 %v8976, 8
    %v9251 = vpop.permute.xlu0 %9250
    %9252 = vrot.lane.b32.xlu0 %v8977, 8
    %v9253 = vpop.permute.xlu0 %9252
    %9254 = vrot.lane.b32.xlu0 %v8978, 8
    %v9255 = vpop.permute.xlu0 %9254
    %9256 = vrot.lane.b32.xlu0 %v8979, 8
    %v9257 = vpop.permute.xlu0 %9256
    %9258 = vrot.lane.b32.xlu0 %v8980, 8
    %v9259 = vpop.permute.xlu0 %9258
    %9260 = vrot.lane.b32.xlu0 %v8981, 8
    %v9261 = vpop.permute.xlu0 %9260
    %9262 = vrot.lane.b32.xlu0 %v8982, 8
    %v9263 = vpop.permute.xlu0 %9262
    %9264 = vrot.lane.b32.xlu0 %v8983, 8
    %v9265 = vpop.permute.xlu0 %9264
    %9266 = vrot.lane.b32.xlu0 %v8984, 8
    %v9267 = vpop.permute.xlu0 %9266
    %9330 = vrot.lane.b32.xlu0 %v8985, 16
    %v9331 = vpop.permute.xlu0 %9330
    %9332 = vrot.lane.b32.xlu0 %v8986, 16
    %v9333 = vpop.permute.xlu0 %9332
    %9334 = vrot.lane.b32.xlu0 %v8987, 16
    %v9335 = vpop.permute.xlu0 %9334
    %9336 = vrot.lane.b32.xlu0 %v8988, 16
    %v9337 = vpop.permute.xlu0 %9336
    %9338 = vrot.lane.b32.xlu0 %v8989, 16
    %v9339 = vpop.permute.xlu0 %9338
    %9340 = vrot.lane.b32.xlu0 %v8990, 16
    %v9341 = vpop.permute.xlu0 %9340
    %9342 = vrot.lane.b32.xlu0 %v8991, 16
    %v9343 = vpop.permute.xlu0 %9342
    %9344 = vrot.lane.b32.xlu0 %v8992, 16
    %v9345 = vpop.permute.xlu0 %9344
    %9346 = vrot.lane.b32.xlu0 %v8993, 16
    %v9347 = vpop.permute.xlu0 %9346
    %9348 = vrot.lane.b32.xlu0 %v8994, 16
    %v9349 = vpop.permute.xlu0 %9348
    %9350 = vrot.lane.b32.xlu0 %v8995, 16
    %v9351 = vpop.permute.xlu0 %9350
    %9352 = vrot.lane.b32.xlu0 %v8996, 16
    %v9353 = vpop.permute.xlu0 %9352
    %9354 = vrot.lane.b32.xlu0 %v8997, 16
    %v9355 = vpop.permute.xlu0 %9354
    %9356 = vrot.lane.b32.xlu0 %v8998, 16
    %v9357 = vpop.permute.xlu0 %9356
    %9358 = vrot.lane.b32.xlu0 %v8999, 16
    %v9359 = vpop.permute.xlu0 %9358
    %9360 = vrot.lane.b32.xlu0 %v9000, 16
    %v9361 = vpop.permute.xlu0 %9360
    %9362 = vrot.lane.b32.xlu0 %v9001, 16
    %v9363 = vpop.permute.xlu0 %9362
    %9364 = vrot.lane.b32.xlu0 %v9002, 16
    %v9365 = vpop.permute.xlu0 %9364
    %9366 = vrot.lane.b32.xlu0 %v9003, 16
    %v9367 = vpop.permute.xlu0 %9366
    %9368 = vrot.lane.b32.xlu0 %v9004, 16
    %v9369 = vpop.permute.xlu0 %9368
    %9370 = vrot.lane.b32.xlu0 %v9005, 16
    %v9371 = vpop.permute.xlu0 %9370
    %9372 = vrot.lane.b32.xlu0 %v9006, 16
    %v9373 = vpop.permute.xlu0 %9372
    %9374 = vrot.lane.b32.xlu0 %v9007, 16
    %v9375 = vpop.permute.xlu0 %9374
    %9376 = vrot.lane.b32.xlu0 %v9008, 16
    %v9377 = vpop.permute.xlu0 %9376
    %9378 = vrot.lane.b32.xlu0 %v9009, 16
    %v9379 = vpop.permute.xlu0 %9378
    %9380 = vrot.lane.b32.xlu0 %v9010, 16
    %v9381 = vpop.permute.xlu0 %9380
    %9382 = vrot.lane.b32.xlu0 %v9011, 16
    %v9383 = vpop.permute.xlu0 %9382
    %9384 = vrot.lane.b32.xlu0 %v9012, 16
    %v9385 = vpop.permute.xlu0 %9384
    %9386 = vrot.lane.b32.xlu0 %v9013, 16
    %v9387 = vpop.permute.xlu0 %9386
    %9388 = vrot.lane.b32.xlu0 %v9014, 16
    %v9389 = vpop.permute.xlu0 %9388
    %9390 = vrot.lane.b32.xlu0 %v9015, 16
    %v9391 = vpop.permute.xlu0 %9390
    %9454 = vrot.lane.b32.xlu0 %v9016, 24
    %v9455 = vpop.permute.xlu0 %9454
    %9456 = vrot.lane.b32.xlu0 %v9017, 24
    %v9457 = vpop.permute.xlu0 %9456
    %9458 = vrot.lane.b32.xlu0 %v9018, 24
    %v9459 = vpop.permute.xlu0 %9458
    %9460 = vrot.lane.b32.xlu0 %v9019, 24
    %v9461 = vpop.permute.xlu0 %9460
    %9462 = vrot.lane.b32.xlu0 %v9020, 24
    %v9463 = vpop.permute.xlu0 %9462
    %9464 = vrot.lane.b32.xlu0 %v9021, 24
    %v9465 = vpop.permute.xlu0 %9464
    %9466 = vrot.lane.b32.xlu0 %v9022, 24
    %v9467 = vpop.permute.xlu0 %9466
    %9468 = vrot.lane.b32.xlu0 %v9023, 24
    %v9469 = vpop.permute.xlu0 %9468
    %9470 = vrot.lane.b32.xlu0 %v9024, 24
    %v9471 = vpop.permute.xlu0 %9470
    %9472 = vrot.lane.b32.xlu0 %v9025, 24
    %v9473 = vpop.permute.xlu0 %9472
    %9474 = vrot.lane.b32.xlu0 %v9026, 24
    %v9475 = vpop.permute.xlu0 %9474
    %9476 = vrot.lane.b32.xlu0 %v9027, 24
    %v9477 = vpop.permute.xlu0 %9476
    %9478 = vrot.lane.b32.xlu0 %v9028, 24
    %v9479 = vpop.permute.xlu0 %9478
    %9480 = vrot.lane.b32.xlu0 %v9029, 24
    %v9481 = vpop.permute.xlu0 %9480
    %9482 = vrot.lane.b32.xlu0 %v9030, 24
    %v9483 = vpop.permute.xlu0 %9482
    %9484 = vrot.lane.b32.xlu0 %v9031, 24
    %v9485 = vpop.permute.xlu0 %9484
    %9486 = vrot.lane.b32.xlu0 %v9032, 24
    %v9487 = vpop.permute.xlu0 %9486
    %9488 = vrot.lane.b32.xlu0 %v9033, 24
    %v9489 = vpop.permute.xlu0 %9488
    %9490 = vrot.lane.b32.xlu0 %v9034, 24
    %v9491 = vpop.permute.xlu0 %9490
    %9492 = vrot.lane.b32.xlu0 %v9035, 24
    %v9493 = vpop.permute.xlu0 %9492
    %9494 = vrot.lane.b32.xlu0 %v9036, 24
    %v9495 = vpop.permute.xlu0 %9494
    %9496 = vrot.lane.b32.xlu0 %v9037, 24
    %v9497 = vpop.permute.xlu0 %9496
    %9498 = vrot.lane.b32.xlu0 %v9038, 24
    %v9499 = vpop.permute.xlu0 %9498
    %9500 = vrot.lane.b32.xlu0 %v9039, 24
    %v9501 = vpop.permute.xlu0 %9500
    %9502 = vrot.lane.b32.xlu0 %v9040, 24
    %v9503 = vpop.permute.xlu0 %9502
    %9504 = vrot.lane.b32.xlu0 %v9041, 24
    %v9505 = vpop.permute.xlu0 %9504
    %9506 = vrot.lane.b32.xlu0 %v9042, 24
    %v9507 = vpop.permute.xlu0 %9506
    %9508 = vrot.lane.b32.xlu0 %v9043, 24
    %v9509 = vpop.permute.xlu0 %9508
    %9510 = vrot.lane.b32.xlu0 %v9044, 24
    %v9511 = vpop.permute.xlu0 %9510
    %9512 = vrot.lane.b32.xlu0 %v9045, 24
    %v9513 = vpop.permute.xlu0 %9512
    %9514 = vrot.lane.b32.xlu0 %v9046, 24
    %v9515 = vpop.permute.xlu0 %9514
    %9578 = vrot.lane.b32.xlu0 %v9047, 32
    %v9579 = vpop.permute.xlu0 %9578
    %9580 = vrot.lane.b32.xlu0 %v9048, 32
    %v9581 = vpop.permute.xlu0 %9580
    %9582 = vrot.lane.b32.xlu0 %v9049, 32
    %v9583 = vpop.permute.xlu0 %9582
    %9584 = vrot.lane.b32.xlu0 %v9050, 32
    %v9585 = vpop.permute.xlu0 %9584
    %9586 = vrot.lane.b32.xlu0 %v9051, 32
    %v9587 = vpop.permute.xlu0 %9586
    %9588 = vrot.lane.b32.xlu0 %v9052, 32
    %v9589 = vpop.permute.xlu0 %9588
    %9590 = vrot.lane.b32.xlu0 %v9053, 32
    %v9591 = vpop.permute.xlu0 %9590
    %9592 = vrot.lane.b32.xlu0 %v9054, 32
    %v9593 = vpop.permute.xlu0 %9592
    %9594 = vrot.lane.b32.xlu0 %v9055, 32
    %v9595 = vpop.permute.xlu0 %9594
    %9596 = vrot.lane.b32.xlu0 %v9056, 32
    %v9597 = vpop.permute.xlu0 %9596
    %9598 = vrot.lane.b32.xlu0 %v9057, 32
    %v9599 = vpop.permute.xlu0 %9598
    %9600 = vrot.lane.b32.xlu0 %v9058, 32
    %v9601 = vpop.permute.xlu0 %9600
    %9602 = vrot.lane.b32.xlu0 %v9059, 32
    %v9603 = vpop.permute.xlu0 %9602
    %9604 = vrot.lane.b32.xlu0 %v9060, 32
    %v9605 = vpop.permute.xlu0 %9604
    %9606 = vrot.lane.b32.xlu0 %v9061, 32
    %v9607 = vpop.permute.xlu0 %9606
    %9608 = vrot.lane.b32.xlu0 %v9062, 32
    %v9609 = vpop.permute.xlu0 %9608
    %9610 = vrot.lane.b32.xlu0 %v9063, 32
    %v9611 = vpop.permute.xlu0 %9610
    %9612 = vrot.lane.b32.xlu0 %v9064, 32
    %v9613 = vpop.permute.xlu0 %9612
    %9614 = vrot.lane.b32.xlu0 %v9065, 32
    %v9615 = vpop.permute.xlu0 %9614
    %9616 = vrot.lane.b32.xlu0 %v9066, 32
    %v9617 = vpop.permute.xlu0 %9616
    %9618 = vrot.lane.b32.xlu0 %v9067, 32
    %v9619 = vpop.permute.xlu0 %9618
    %9620 = vrot.lane.b32.xlu0 %v9068, 32
    %v9621 = vpop.permute.xlu0 %9620
    %9622 = vrot.lane.b32.xlu0 %v9069, 32
    %v9623 = vpop.permute.xlu0 %9622
    %9624 = vrot.lane.b32.xlu0 %v9070, 32
    %v9625 = vpop.permute.xlu0 %9624
    %9626 = vrot.lane.b32.xlu0 %v9071, 32
    %v9627 = vpop.permute.xlu0 %9626
    %9628 = vrot.lane.b32.xlu0 %v9072, 32
    %v9629 = vpop.permute.xlu0 %9628
    %9630 = vrot.lane.b32.xlu0 %v9073, 32
    %v9631 = vpop.permute.xlu0 %9630
    %9632 = vrot.lane.b32.xlu0 %v9074, 32
    %v9633 = vpop.permute.xlu0 %9632
    %9634 = vrot.lane.b32.xlu0 %v9075, 32
    %v9635 = vpop.permute.xlu0 %9634
    %9636 = vrot.lane.b32.xlu0 %v9076, 32
    %v9637 = vpop.permute.xlu0 %9636
    %9638 = vrot.lane.b32.xlu0 %v9077, 32
    %v9639 = vpop.permute.xlu0 %9638
    %9702 = vrot.lane.b32.xlu0 %v9078, 40
    %v9703 = vpop.permute.xlu0 %9702
    %9704 = vrot.lane.b32.xlu0 %v9079, 40
    %v9705 = vpop.permute.xlu0 %9704
    %9706 = vrot.lane.b32.xlu0 %v9080, 40
    %v9707 = vpop.permute.xlu0 %9706
    %9708 = vrot.lane.b32.xlu0 %v9081, 40
    %v9709 = vpop.permute.xlu0 %9708
    %9710 = vrot.lane.b32.xlu0 %v9082, 40
    %v9711 = vpop.permute.xlu0 %9710
    %9712 = vrot.lane.b32.xlu0 %v9083, 40
    %v9713 = vpop.permute.xlu0 %9712
    %9714 = vrot.lane.b32.xlu0 %v9084, 40
    %v9715 = vpop.permute.xlu0 %9714
    %9716 = vrot.lane.b32.xlu0 %v9085, 40
    %v9717 = vpop.permute.xlu0 %9716
    %9718 = vrot.lane.b32.xlu0 %v9086, 40
    %v9719 = vpop.permute.xlu0 %9718
    %9720 = vrot.lane.b32.xlu0 %v9087, 40
    %v9721 = vpop.permute.xlu0 %9720
    %9722 = vrot.lane.b32.xlu0 %v9088, 40
    %v9723 = vpop.permute.xlu0 %9722
    %9724 = vrot.lane.b32.xlu0 %v9089, 40
    %v9725 = vpop.permute.xlu0 %9724
    %9726 = vrot.lane.b32.xlu0 %v9090, 40
    %v9727 = vpop.permute.xlu0 %9726
    %9728 = vrot.lane.b32.xlu0 %v9091, 40
    %v9729 = vpop.permute.xlu0 %9728
    %9730 = vrot.lane.b32.xlu0 %v9092, 40
    %v9731 = vpop.permute.xlu0 %9730
    %9732 = vrot.lane.b32.xlu0 %v9093, 40
    %v9733 = vpop.permute.xlu0 %9732
    %9734 = vrot.lane.b32.xlu0 %v9094, 40
    %v9735 = vpop.permute.xlu0 %9734
    %9736 = vrot.lane.b32.xlu0 %v9095, 40
    %v9737 = vpop.permute.xlu0 %9736
    %9738 = vrot.lane.b32.xlu0 %v9096, 40
    %v9739 = vpop.permute.xlu0 %9738
    %9740 = vrot.lane.b32.xlu0 %v9097, 40
    %v9741 = vpop.permute.xlu0 %9740
    %9742 = vrot.lane.b32.xlu0 %v9098, 40
    %v9743 = vpop.permute.xlu0 %9742
    %9744 = vrot.lane.b32.xlu0 %v9099, 40
    %v9745 = vpop.permute.xlu0 %9744
    %9746 = vrot.lane.b32.xlu0 %v9100, 40
    %v9747 = vpop.permute.xlu0 %9746
    %9748 = vrot.lane.b32.xlu0 %v9101, 40
    %v9749 = vpop.permute.xlu0 %9748
    %9750 = vrot.lane.b32.xlu0 %v9102, 40
    %v9751 = vpop.permute.xlu0 %9750
    %9752 = vrot.lane.b32.xlu0 %v9103, 40
    %v9753 = vpop.permute.xlu0 %9752
    %9754 = vrot.lane.b32.xlu0 %v9104, 40
    %v9755 = vpop.permute.xlu0 %9754
    %9756 = vrot.lane.b32.xlu0 %v9105, 40
    %v9757 = vpop.permute.xlu0 %9756
    %9758 = vrot.lane.b32.xlu0 %v9106, 40
    %v9759 = vpop.permute.xlu0 %9758
    %9760 = vrot.lane.b32.xlu0 %v9107, 40
    %v9761 = vpop.permute.xlu0 %9760
    %9762 = vrot.lane.b32.xlu0 %v9108, 40
    %v9763 = vpop.permute.xlu0 %9762
    %9826 = vrot.lane.b32.xlu0 %v9109, 48
    %v9827 = vpop.permute.xlu0 %9826
    %9828 = vrot.lane.b32.xlu0 %v9110, 48
    %v9829 = vpop.permute.xlu0 %9828
    %9830 = vrot.lane.b32.xlu0 %v9111, 48
    %v9831 = vpop.permute.xlu0 %9830
    %9832 = vrot.lane.b32.xlu0 %v9112, 48
    %v9833 = vpop.permute.xlu0 %9832
    %9834 = vrot.lane.b32.xlu0 %v9113, 48
    %v9835 = vpop.permute.xlu0 %9834
    %9836 = vrot.lane.b32.xlu0 %v9114, 48
    %v9837 = vpop.permute.xlu0 %9836
    %9838 = vrot.lane.b32.xlu0 %v9115, 48
    %v9839 = vpop.permute.xlu0 %9838
    %9840 = vrot.lane.b32.xlu0 %v9116, 48
    %v9841 = vpop.permute.xlu0 %9840
    %9842 = vrot.lane.b32.xlu0 %v9117, 48
    %v9843 = vpop.permute.xlu0 %9842
    %9844 = vrot.lane.b32.xlu0 %v9118, 48
    %v9845 = vpop.permute.xlu0 %9844
    %9846 = vrot.lane.b32.xlu0 %v9119, 48
    %v9847 = vpop.permute.xlu0 %9846
    %9848 = vrot.lane.b32.xlu0 %v9120, 48
    %v9849 = vpop.permute.xlu0 %9848
    %9850 = vrot.lane.b32.xlu0 %v9121, 48
    %v9851 = vpop.permute.xlu0 %9850
    %9852 = vrot.lane.b32.xlu0 %v9122, 48
    %v9853 = vpop.permute.xlu0 %9852
    %9854 = vrot.lane.b32.xlu0 %v9123, 48
    %v9855 = vpop.permute.xlu0 %9854
    %9856 = vrot.lane.b32.xlu0 %v9124, 48
    %v9857 = vpop.permute.xlu0 %9856
    %9858 = vrot.lane.b32.xlu0 %v9125, 48
    %v9859 = vpop.permute.xlu0 %9858
    %9860 = vrot.lane.b32.xlu0 %v9126, 48
    %v9861 = vpop.permute.xlu0 %9860
    %9862 = vrot.lane.b32.xlu0 %v9127, 48
    %v9863 = vpop.permute.xlu0 %9862
    %9864 = vrot.lane.b32.xlu0 %v9128, 48
    %v9865 = vpop.permute.xlu0 %9864
    %9866 = vrot.lane.b32.xlu0 %v9129, 48
    %v9867 = vpop.permute.xlu0 %9866
    %9868 = vrot.lane.b32.xlu0 %v9130, 48
    %v9869 = vpop.permute.xlu0 %9868
    %9870 = vrot.lane.b32.xlu0 %v9131, 48
    %v9871 = vpop.permute.xlu0 %9870
    %9872 = vrot.lane.b32.xlu0 %v9132, 48
    %v9873 = vpop.permute.xlu0 %9872
    %9874 = vrot.lane.b32.xlu0 %v9133, 48
    %v9875 = vpop.permute.xlu0 %9874
    %9876 = vrot.lane.b32.xlu0 %v9134, 48
    %v9877 = vpop.permute.xlu0 %9876
    %9878 = vrot.lane.b32.xlu0 %v9135, 48
    %v9879 = vpop.permute.xlu0 %9878
    %9880 = vrot.lane.b32.xlu0 %v9136, 48
    %v9881 = vpop.permute.xlu0 %9880
    %9882 = vrot.lane.b32.xlu0 %v9137, 48
    %v9883 = vpop.permute.xlu0 %9882
    %9884 = vrot.lane.b32.xlu0 %v9138, 48
    %v9885 = vpop.permute.xlu0 %9884
    %9886 = vrot.lane.b32.xlu0 %v9139, 48
    %v9887 = vpop.permute.xlu0 %9886
    %9950 = vrot.lane.b32.xlu0 %v9140, 56
    %v9951 = vpop.permute.xlu0 %9950
    %9952 = vrot.lane.b32.xlu0 %v9141, 56
    %v9953 = vpop.permute.xlu0 %9952
    %9954 = vrot.lane.b32.xlu0 %v9142, 56
    %v9955 = vpop.permute.xlu0 %9954
    %9956 = vrot.lane.b32.xlu0 %v9143, 56
    %v9957 = vpop.permute.xlu0 %9956
    %9958 = vrot.lane.b32.xlu0 %v9144, 56
    %v9959 = vpop.permute.xlu0 %9958
    %9960 = vrot.lane.b32.xlu0 %v9145, 56
    %v9961 = vpop.permute.xlu0 %9960
    %9962 = vrot.lane.b32.xlu0 %v9146, 56
    %v9963 = vpop.permute.xlu0 %9962
    %9964 = vrot.lane.b32.xlu0 %v9147, 56
    %v9965 = vpop.permute.xlu0 %9964
    %9966 = vrot.lane.b32.xlu0 %v9148, 56
    %v9967 = vpop.permute.xlu0 %9966
    %9968 = vrot.lane.b32.xlu0 %v9149, 56
    %v9969 = vpop.permute.xlu0 %9968
    %9970 = vrot.lane.b32.xlu0 %v9150, 56
    %v9971 = vpop.permute.xlu0 %9970
    %9972 = vrot.lane.b32.xlu0 %v9151, 56
    %v9973 = vpop.permute.xlu0 %9972
    %9974 = vrot.lane.b32.xlu0 %v9152, 56
    %v9975 = vpop.permute.xlu0 %9974
    %9976 = vrot.lane.b32.xlu0 %v9153, 56
    %v9977 = vpop.permute.xlu0 %9976
    %9978 = vrot.lane.b32.xlu0 %v9154, 56
    %v9979 = vpop.permute.xlu0 %9978
    %9980 = vrot.lane.b32.xlu0 %v9155, 56
    %v9981 = vpop.permute.xlu0 %9980
    %9982 = vrot.lane.b32.xlu0 %v9156, 56
    %v9983 = vpop.permute.xlu0 %9982
    %9984 = vrot.lane.b32.xlu0 %v9157, 56
    %v9985 = vpop.permute.xlu0 %9984
    %9986 = vrot.lane.b32.xlu0 %v9158, 56
    %v9987 = vpop.permute.xlu0 %9986
    %9988 = vrot.lane.b32.xlu0 %v9159, 56
    %v9989 = vpop.permute.xlu0 %9988
    %9990 = vrot.lane.b32.xlu0 %v9160, 56
    %v9991 = vpop.permute.xlu0 %9990
    %9992 = vrot.lane.b32.xlu0 %v9161, 56
    %v9993 = vpop.permute.xlu0 %9992
    %9994 = vrot.lane.b32.xlu0 %v9162, 56
    %v9995 = vpop.permute.xlu0 %9994
    %9996 = vrot.lane.b32.xlu0 %v9163, 56
    %v9997 = vpop.permute.xlu0 %9996
    %9998 = vrot.lane.b32.xlu0 %v9164, 56
    %v9999 = vpop.permute.xlu0 %9998
    %10000 = vrot.lane.b32.xlu0 %v9165, 56
    %v10001 = vpop.permute.xlu0 %10000
    %10002 = vrot.lane.b32.xlu0 %v9166, 56
    %v10003 = vpop.permute.xlu0 %10002
    %10004 = vrot.lane.b32.xlu0 %v9167, 56
    %v10005 = vpop.permute.xlu0 %10004
    %10006 = vrot.lane.b32.xlu0 %v9168, 56
    %v10007 = vpop.permute.xlu0 %10006
    %10008 = vrot.lane.b32.xlu0 %v9169, 56
    %v10009 = vpop.permute.xlu0 %10008
    %10010 = vrot.lane.b32.xlu0 %v9170, 56
    %v10011 = vpop.permute.xlu0 %10010
    %10074 = vrot.lane.b32.xlu0 %v8926, 64
    %v10075 = vpop.permute.xlu0 %10074
    %10076 = vrot.lane.b32.xlu0 %v8927, 64
    %v10077 = vpop.permute.xlu0 %10076
    %10078 = vrot.lane.b32.xlu0 %v8928, 64
    %v10079 = vpop.permute.xlu0 %10078
    %10080 = vrot.lane.b32.xlu0 %v8929, 64
    %v10081 = vpop.permute.xlu0 %10080
    %10082 = vrot.lane.b32.xlu0 %v8930, 64
    %v10083 = vpop.permute.xlu0 %10082
    %10084 = vrot.lane.b32.xlu0 %v8931, 64
    %v10085 = vpop.permute.xlu0 %10084
    %10086 = vrot.lane.b32.xlu0 %v8932, 64
    %v10087 = vpop.permute.xlu0 %10086
    %10088 = vrot.lane.b32.xlu0 %v8933, 64
    %v10089 = vpop.permute.xlu0 %10088
    %10090 = vrot.lane.b32.xlu0 %v8934, 64
    %v10091 = vpop.permute.xlu0 %10090
    %10092 = vrot.lane.b32.xlu0 %v8935, 64
    %v10093 = vpop.permute.xlu0 %10092
    %10094 = vrot.lane.b32.xlu0 %v8936, 64
    %v10095 = vpop.permute.xlu0 %10094
    %10096 = vrot.lane.b32.xlu0 %v8937, 64
    %v10097 = vpop.permute.xlu0 %10096
    %10098 = vrot.lane.b32.xlu0 %v8938, 64
    %v10099 = vpop.permute.xlu0 %10098
    %10100 = vrot.lane.b32.xlu0 %v8939, 64
    %v10101 = vpop.permute.xlu0 %10100
    %10102 = vrot.lane.b32.xlu0 %v8940, 64
    %v10103 = vpop.permute.xlu0 %10102
    %10104 = vrot.lane.b32.xlu0 %v8941, 64
    %v10105 = vpop.permute.xlu0 %10104
    %10106 = vrot.lane.b32.xlu0 %v8942, 64
    %v10107 = vpop.permute.xlu0 %10106
    %10108 = vrot.lane.b32.xlu0 %v8943, 64
    %v10109 = vpop.permute.xlu0 %10108
    %10110 = vrot.lane.b32.xlu0 %v8944, 64
    %v10111 = vpop.permute.xlu0 %10110
    %10112 = vrot.lane.b32.xlu0 %v8945, 64
    %v10113 = vpop.permute.xlu0 %10112
    %10114 = vrot.lane.b32.xlu0 %v8946, 64
    %v10115 = vpop.permute.xlu0 %10114
    %10116 = vrot.lane.b32.xlu0 %v8947, 64
    %v10117 = vpop.permute.xlu0 %10116
    %10118 = vrot.lane.b32.xlu0 %v8948, 64
    %v10119 = vpop.permute.xlu0 %10118
    %10120 = vrot.lane.b32.xlu0 %v8949, 64
    %v10121 = vpop.permute.xlu0 %10120
    %10122 = vrot.lane.b32.xlu0 %v8950, 64
    %v10123 = vpop.permute.xlu0 %10122
    %10124 = vrot.lane.b32.xlu0 %v8951, 64
    %v10125 = vpop.permute.xlu0 %10124
    %10126 = vrot.lane.b32.xlu0 %v8952, 64
    %v10127 = vpop.permute.xlu0 %10126
    %10128 = vrot.lane.b32.xlu0 %v9171, 64
    %v10129 = vpop.permute.xlu0 %10128
    %10130 = vrot.lane.b32.xlu0 %v9172, 64
    %v10131 = vpop.permute.xlu0 %10130
    %10132 = vrot.lane.b32.xlu0 %v9173, 64
    %v10133 = vpop.permute.xlu0 %10132
    %10134 = vrot.lane.b32.xlu0 %v9174, 64
    %v10135 = vpop.permute.xlu0 %10134
    %v10167 = vsel %vm1518, %v8923, %v9207
    %v10168 = vsel %vm1518, %v8924, %v9209
    %v10169 = vsel %vm1518, %v8925, %v9211
    %v10170 = vsel %vm1518, %v8926, %v9213
    %v10171 = vsel %vm1518, %v8927, %v9215
    %v10172 = vsel %vm1518, %v8928, %v9217
    %v10173 = vsel %vm1518, %v8929, %v9219
    %v10174 = vsel %vm1518, %v8930, %v9221
    %v10175 = vsel %vm1518, %v8931, %v9223
    %v10176 = vsel %vm1518, %v8932, %v9225
    %v10177 = vsel %vm1518, %v8933, %v9227
    %v10178 = vsel %vm1518, %v8934, %v9229
    %v10179 = vsel %vm1518, %v8935, %v9231
    %v10180 = vsel %vm1518, %v8936, %v9233
    %v10181 = vsel %vm1518, %v8937, %v9235
    %v10182 = vsel %vm1518, %v8938, %v9237
    %v10183 = vsel %vm1518, %v8939, %v9239
    %v10184 = vsel %vm1518, %v8940, %v9241
    %v10185 = vsel %vm1518, %v8941, %v9243
    %v10186 = vsel %vm1518, %v8942, %v9245
    %v10187 = vsel %vm1518, %v8943, %v9247
    %v10188 = vsel %vm1518, %v8944, %v9249
    %v10189 = vsel %vm1518, %v8945, %v9251
    %v10190 = vsel %vm1518, %v8946, %v9253
    %v10191 = vsel %vm1518, %v8947, %v9255
    %v10192 = vsel %vm1518, %v8948, %v9257
    %v10193 = vsel %vm1518, %v8949, %v9259
    %v10194 = vsel %vm1518, %v8950, %v9261
    %v10195 = vsel %vm1518, %v8951, %v9263
    %v10196 = vsel %vm1518, %v8952, %v9265
    %v10197 = vsel %vm1518, %v8953, %v9267
    %v10198 = vsel %vm5402, %v10167, %v9331
    %v10199 = vsel %vm5402, %v10168, %v9333
    %v10200 = vsel %vm5402, %v10169, %v9335
    %v10201 = vsel %vm5402, %v10170, %v9337
    %v10202 = vsel %vm5402, %v10171, %v9339
    %v10203 = vsel %vm5402, %v10172, %v9341
    %v10204 = vsel %vm5402, %v10173, %v9343
    %v10205 = vsel %vm5402, %v10174, %v9345
    %v10206 = vsel %vm5402, %v10175, %v9347
    %v10207 = vsel %vm5402, %v10176, %v9349
    %v10208 = vsel %vm5402, %v10177, %v9351
    %v10209 = vsel %vm5402, %v10178, %v9353
    %v10210 = vsel %vm5402, %v10179, %v9355
    %v10211 = vsel %vm5402, %v10180, %v9357
    %v10212 = vsel %vm5402, %v10181, %v9359
    %v10213 = vsel %vm5402, %v10182, %v9361
    %v10214 = vsel %vm5402, %v10183, %v9363
    %v10215 = vsel %vm5402, %v10184, %v9365
    %v10216 = vsel %vm5402, %v10185, %v9367
    %v10217 = vsel %vm5402, %v10186, %v9369
    %v10218 = vsel %vm5402, %v10187, %v9371
    %v10219 = vsel %vm5402, %v10188, %v9373
    %v10220 = vsel %vm5402, %v10189, %v9375
    %v10221 = vsel %vm5402, %v10190, %v9377
    %v10222 = vsel %vm5402, %v10191, %v9379
    %v10223 = vsel %vm5402, %v10192, %v9381
    %v10224 = vsel %vm5402, %v10193, %v9383
    %v10225 = vsel %vm5402, %v10194, %v9385
    %v10226 = vsel %vm5402, %v10195, %v9387
    %v10227 = vsel %vm5402, %v10196, %v9389
    %v10228 = vsel %vm5402, %v10197, %v9391
    %v10229 = vsel %vm5466, %v10198, %v9455
    %v10230 = vsel %vm5466, %v10199, %v9457
    %v10231 = vsel %vm5466, %v10200, %v9459
    %v10232 = vsel %vm5466, %v10201, %v9461
    %v10233 = vsel %vm5466, %v10202, %v9463
    %v10234 = vsel %vm5466, %v10203, %v9465
    %v10235 = vsel %vm5466, %v10204, %v9467
    %v10236 = vsel %vm5466, %v10205, %v9469
    %v10237 = vsel %vm5466, %v10206, %v9471
    %v10238 = vsel %vm5466, %v10207, %v9473
    %v10239 = vsel %vm5466, %v10208, %v9475
    %v10240 = vsel %vm5466, %v10209, %v9477
    %v10241 = vsel %vm5466, %v10210, %v9479
    %v10242 = vsel %vm5466, %v10211, %v9481
    %v10243 = vsel %vm5466, %v10212, %v9483
    %v10244 = vsel %vm5466, %v10213, %v9485
    %v10245 = vsel %vm5466, %v10214, %v9487
    %v10246 = vsel %vm5466, %v10215, %v9489
    %v10247 = vsel %vm5466, %v10216, %v9491
    %v10248 = vsel %vm5466, %v10217, %v9493
    %v10249 = vsel %vm5466, %v10218, %v9495
    %v10250 = vsel %vm5466, %v10219, %v9497
    %v10251 = vsel %vm5466, %v10220, %v9499
    %v10252 = vsel %vm5466, %v10221, %v9501
    %v10253 = vsel %vm5466, %v10222, %v9503
    %v10254 = vsel %vm5466, %v10223, %v9505
    %v10255 = vsel %vm5466, %v10224, %v9507
    %v10256 = vsel %vm5466, %v10225, %v9509
    %v10257 = vsel %vm5466, %v10226, %v9511
    %v10258 = vsel %vm5466, %v10227, %v9513
    %v10259 = vsel %vm5466, %v10228, %v9515
    %v10260 = vsel %vm2043, %v10229, %v9579
    %v10261 = vsel %vm2043, %v10230, %v9581
    %v10262 = vsel %vm2043, %v10231, %v9583
    %v10263 = vsel %vm2043, %v10232, %v9585
    %v10264 = vsel %vm2043, %v10233, %v9587
    %v10265 = vsel %vm2043, %v10234, %v9589
    %v10266 = vsel %vm2043, %v10235, %v9591
    %v10267 = vsel %vm2043, %v10236, %v9593
    %v10268 = vsel %vm2043, %v10237, %v9595
    %v10269 = vsel %vm2043, %v10238, %v9597
    %v10270 = vsel %vm2043, %v10239, %v9599
    %v10271 = vsel %vm2043, %v10240, %v9601
    %v10272 = vsel %vm2043, %v10241, %v9603
    %v10273 = vsel %vm2043, %v10242, %v9605
    %v10274 = vsel %vm2043, %v10243, %v9607
    %v10275 = vsel %vm2043, %v10244, %v9609
    %v10276 = vsel %vm2043, %v10245, %v9611
    %v10277 = vsel %vm2043, %v10246, %v9613
    %v10278 = vsel %vm2043, %v10247, %v9615
    %v10279 = vsel %vm2043, %v10248, %v9617
    %v10280 = vsel %vm2043, %v10249, %v9619
    %v10281 = vsel %vm2043, %v10250, %v9621
    %v10282 = vsel %vm2043, %v10251, %v9623
    %v10283 = vsel %vm2043, %v10252, %v9625
    %v10284 = vsel %vm2043, %v10253, %v9627
    %v10285 = vsel %vm2043, %v10254, %v9629
    %v10286 = vsel %vm2043, %v10255, %v9631
    %v10287 = vsel %vm2043, %v10256, %v9633
    %v10288 = vsel %vm2043, %v10257, %v9635
    %v10289 = vsel %vm2043, %v10258, %v9637
    %v10290 = vsel %vm2043, %v10259, %v9639
    %vm10291 = vcmask 326656
    %v10292 = vsel %vm10291, %v10260, %v9703
    %v10293 = vsel %vm10291, %v10261, %v9705
    %v10294 = vsel %vm10291, %v10262, %v9707
    %v10295 = vsel %vm10291, %v10263, %v9709
    %v10296 = vsel %vm10291, %v10264, %v9711
    %v10297 = vsel %vm10291, %v10265, %v9713
    %v10298 = vsel %vm10291, %v10266, %v9715
    %v10299 = vsel %vm10291, %v10267, %v9717
    %v10300 = vsel %vm10291, %v10268, %v9719
    %v10301 = vsel %vm10291, %v10269, %v9721
    %v10302 = vsel %vm10291, %v10270, %v9723
    %v10303 = vsel %vm10291, %v10271, %v9725
    %v10304 = vsel %vm10291, %v10272, %v9727
    %v10305 = vsel %vm10291, %v10273, %v9729
    %v10306 = vsel %vm10291, %v10274, %v9731
    %v10307 = vsel %vm10291, %v10275, %v9733
    %v10308 = vsel %vm10291, %v10276, %v9735
    %v10309 = vsel %vm10291, %v10277, %v9737
    %v10310 = vsel %vm10291, %v10278, %v9739
    %v10311 = vsel %vm10291, %v10279, %v9741
    %v10312 = vsel %vm10291, %v10280, %v9743
    %v10313 = vsel %vm10291, %v10281, %v9745
    %v10314 = vsel %vm10291, %v10282, %v9747
    %v10315 = vsel %vm10291, %v10283, %v9749
    %v10316 = vsel %vm10291, %v10284, %v9751
    %v10317 = vsel %vm10291, %v10285, %v9753
    %v10318 = vsel %vm10291, %v10286, %v9755
    %v10319 = vsel %vm10291, %v10287, %v9757
    %v10320 = vsel %vm10291, %v10288, %v9759
    %v10321 = vsel %vm10291, %v10289, %v9761
    %v10322 = vsel %vm10291, %v10290, %v9763
    %vm10323 = vcmask 392192
    %v10324 = vsel %vm10323, %v10292, %v9827
    %v10325 = vsel %vm10323, %v10293, %v9829
    %v10326 = vsel %vm10323, %v10294, %v9831
    %v10327 = vsel %vm10323, %v10295, %v9833
    %v10328 = vsel %vm10323, %v10296, %v9835
    %v10329 = vsel %vm10323, %v10297, %v9837
    %v10330 = vsel %vm10323, %v10298, %v9839
    %v10331 = vsel %vm10323, %v10299, %v9841
    %v10332 = vsel %vm10323, %v10300, %v9843
    %v10333 = vsel %vm10323, %v10301, %v9845
    %v10334 = vsel %vm10323, %v10302, %v9847
    %v10335 = vsel %vm10323, %v10303, %v9849
    %v10336 = vsel %vm10323, %v10304, %v9851
    %v10337 = vsel %vm10323, %v10305, %v9853
    %v10338 = vsel %vm10323, %v10306, %v9855
    %v10339 = vsel %vm10323, %v10307, %v9857
    %v10340 = vsel %vm10323, %v10308, %v9859
    %v10341 = vsel %vm10323, %v10309, %v9861
    %v10342 = vsel %vm10323, %v10310, %v9863
    %v10343 = vsel %vm10323, %v10311, %v9865
    %v10344 = vsel %vm10323, %v10312, %v9867
    %v10345 = vsel %vm10323, %v10313, %v9869
    %v10346 = vsel %vm10323, %v10314, %v9871
    %v10347 = vsel %vm10323, %v10315, %v9873
    %v10348 = vsel %vm10323, %v10316, %v9875
    %v10349 = vsel %vm10323, %v10317, %v9877
    %v10350 = vsel %vm10323, %v10318, %v9879
    %v10351 = vsel %vm10323, %v10319, %v9881
    %v10352 = vsel %vm10323, %v10320, %v9883
    %v10353 = vsel %vm10323, %v10321, %v9885
    %v10354 = vsel %vm10323, %v10322, %v9887
    %vm10355 = vcmask 457728
    %v10356 = vsel %vm10355, %v10324, %v9951
    %v10357 = vsel %vm10355, %v10325, %v9953
    %v10358 = vsel %vm10355, %v10326, %v9955
    %v10359 = vsel %vm10355, %v10327, %v9957
    %v10360 = vsel %vm10355, %v10328, %v9959
    %v10361 = vsel %vm10355, %v10329, %v9961
    %v10362 = vsel %vm10355, %v10330, %v9963
    %v10363 = vsel %vm10355, %v10331, %v9965
    %v10364 = vsel %vm10355, %v10332, %v9967
    %v10365 = vsel %vm10355, %v10333, %v9969
    %v10366 = vsel %vm10355, %v10334, %v9971
    %v10367 = vsel %vm10355, %v10335, %v9973
    %v10368 = vsel %vm10355, %v10336, %v9975
    %v10369 = vsel %vm10355, %v10337, %v9977
    %v10370 = vsel %vm10355, %v10338, %v9979
    %v10371 = vsel %vm10355, %v10339, %v9981
    %v10372 = vsel %vm10355, %v10340, %v9983
    %v10373 = vsel %vm10355, %v10341, %v9985
    %v10374 = vsel %vm10355, %v10342, %v9987
    %v10375 = vsel %vm10355, %v10343, %v9989
    %v10376 = vsel %vm10355, %v10344, %v9991
    %v10377 = vsel %vm10355, %v10345, %v9993
    %v10378 = vsel %vm10355, %v10346, %v9995
    %v10379 = vsel %vm10355, %v10347, %v9997
    %v10380 = vsel %vm10355, %v10348, %v9999
    %v10381 = vsel %vm10355, %v10349, %v10001
    %v10382 = vsel %vm10355, %v10350, %v10003
    %v10383 = vsel %vm10355, %v10351, %v10005
    %v10384 = vsel %vm10355, %v10352, %v10007
    %v10385 = vsel %vm10355, %v10353, %v10009
    %v10386 = vsel %vm10355, %v10354, %v10011
    %v10387 = vsel %vm15, %v10356, %v10075
    %v10388 = vsel %vm15, %v10357, %v10077
    %v10389 = vsel %vm15, %v10358, %v10079
    %v10390 = vsel %vm15, %v10359, %v10081
    %v10391 = vsel %vm15, %v10360, %v10083
    %v10392 = vsel %vm15, %v10361, %v10085
    %v10393 = vsel %vm15, %v10362, %v10087
    %v10394 = vsel %vm15, %v10363, %v10089
    %v10395 = vsel %vm15, %v10364, %v10091
    %v10396 = vsel %vm15, %v10365, %v10093
    %v10397 = vsel %vm15, %v10366, %v10095
    %v10398 = vsel %vm15, %v10367, %v10097
    %v10399 = vsel %vm15, %v10368, %v10099
    %v10400 = vsel %vm15, %v10369, %v10101
    %v10401 = vsel %vm15, %v10370, %v10103
    %v10402 = vsel %vm15, %v10371, %v10105
    %v10403 = vsel %vm15, %v10372, %v10107
    %v10404 = vsel %vm15, %v10373, %v10109
    %v10405 = vsel %vm15, %v10374, %v10111
    %v10406 = vsel %vm15, %v10375, %v10113
    %v10407 = vsel %vm15, %v10376, %v10115
    %v10408 = vsel %vm15, %v10377, %v10117
    %v10409 = vsel %vm15, %v10378, %v10119
    %v10410 = vsel %vm15, %v10379, %v10121
    %v10411 = vsel %vm15, %v10380, %v10123
    %v10412 = vsel %vm15, %v10381, %v10125
    %v10413 = vsel %vm15, %v10382, %v10127
    %v10414 = vsel %vm15, %v10383, %v10129
    %v10415 = vsel %vm15, %v10384, %v10131
    %v10416 = vsel %vm15, %v10385, %v10133
    %v10417 = vsel %vm15, %v10386, %v10135
    %v10418 = vld [vmem:[%s1 + $0x48] sm:$0xff]
    %v10419 = vld [vmem:[%s1 + $0x50] sm:$0xff]
    %v10420 = vld [vmem:[%s1 + $0x58] sm:$0xff]
    %v10421 = vld [vmem:[%s1 + $0x60] sm:$0xff]
    %v10422 = vld [vmem:[%s1 + $0x68] sm:$0xff]
    %v10423 = vld [vmem:[%s1 + $0x70] sm:$0xff]
    %v10424 = vld [vmem:[%s1 + $0x78] sm:$0xff]
    %v10425 = vld [vmem:[%s1 + $0x80] sm:$0xff]
    %v10426 = vld [vmem:[%s1 + $0x88] sm:$0xff]
    %v10427 = vld [vmem:[%s1 + $0x90] sm:$0x1]
    %v10428 = vlaneseq
    %v10429 = vshrl.u32 %v10428, 7
    %v10430 = vsub.s32 0, %v10429
    %v10431 = vrot.slane %v10427, %v10430
    %vm10432 = vcmask 588800
    %v10434 = vsel %vm10432, %v10387, 0
    %v10437 = vsel %vm10432, %v10388, 0
    %v10440 = vsel %vm10432, %v10389, 0
    %v10443 = vsel %vm10432, %v10390, 0
    %v10446 = vsel %vm10432, %v10391, 0
    %v10449 = vsel %vm10432, %v10392, 0
    %v10452 = vsel %vm10432, %v10393, 0
    %v10455 = vsel %vm10432, %v10394, 0
    %v10458 = vsel %vm10432, %v10395, 0
    %v10461 = vsel %vm10432, %v10396, 0
    %v10464 = vsel %vm10432, %v10397, 0
    %v10467 = vsel %vm10432, %v10398, 0
    %v10470 = vsel %vm10432, %v10399, 0
    %v10473 = vsel %vm10432, %v10400, 0
    %v10476 = vsel %vm10432, %v10401, 0
    %v10479 = vsel %vm10432, %v10402, 0
    %v10482 = vsel %vm10432, %v10403, 0
    %v10485 = vsel %vm10432, %v10404, 0
    %v10488 = vsel %vm10432, %v10405, 0
    %v10491 = vsel %vm10432, %v10406, 0
    %v10494 = vsel %vm10432, %v10407, 0
    %v10497 = vsel %vm10432, %v10408, 0
    %v10500 = vsel %vm10432, %v10409, 0
    %v10503 = vsel %vm10432, %v10410, 0
    %v10506 = vsel %vm10432, %v10411, 0
    %v10509 = vsel %vm10432, %v10412, 0
    %v10512 = vsel %vm10432, %v10413, 0
    %v10515 = vsel %vm10432, %v10414, 0
    %v10518 = vsel %vm10432, %v10415, 0
    %v10521 = vsel %vm10432, %v10416, 0
    %v10524 = vsel %vm10432, %v10417, 0
    %10526 = vmatprep.subr.mxu0 0.0
    %10527 = vmatpush1.msra.mxu0 %v10418
    %10528 = vmatprep.subr.mxu0 0.0
    %10529 = vmatpush1.msra.mxu0 %v10419
    %10530 = vmatprep.subr.mxu0 0.0
    %10531 = vmatpush1.msra.mxu0 %v10420
    %10532 = vmatprep.subr.mxu0 0.0
    %10533 = vmatpush1.msra.mxu0 %v10421
    %10534 = vmatprep.subr.mxu0 0.0
    %10535 = vmatpush1.msra.mxu0 %v10422
    %10536 = vmatprep.subr.mxu0 0.0
    %10537 = vmatpush1.msra.mxu0 %v10423
    %10538 = vmatprep.subr.mxu0 0.0
    %10539 = vmatpush1.msra.mxu0 %v10424
    %10540 = vmatprep.subr.mxu0 0.0
    %10541 = vmatpush1.msra.mxu0 %v10425
    %10542 = vmatprep.subr.mxu0 0.0
    %10543 = vmatpush1.msra.mxu0 %v10426
    %10544 = vmatprep.subr.mxu0 0.0
    %10545 = vmatpush1.msra.mxu0 0.0
    %10546 = vmatprep.subr.mxu0 0.0
    %10547 = vmatpush1.msra.mxu0 0.0
    %10548 = vmatprep.subr.mxu0 0.0
    %10549 = vmatpush1.msra.mxu0 0.0
    %10550 = vmatprep.subr.mxu0 0.0
    %10551 = vmatpush1.msra.mxu0 0.0
    %10552 = vmatprep.subr.mxu0 0.0
    %10553 = vmatpush1.msra.mxu0 0.0
    %10554 = vmatprep.subr.mxu0 0.0
    %10555 = vmatpush1.msra.mxu0 0.0
    %10556 = vmatprep.subr.mxu0 0.0
    %10557 = vmatpush1.msra.mxu0 0.0
    %10558 = vmatprep.subr.mxu0 0.0
    %10559 = vmatpush1.msra.mxu0 0.0
    %10560 = vmatprep.subr.mxu0 0.0
    %10561 = vmatpush1.msra.mxu0 0.0
    %10562 = vmatprep.subr.mxu0 0.0
    %10563 = vmatpush1.msra.mxu0 0.0
    %10564 = vmatprep.subr.mxu0 0.0
    %10565 = vmatpush1.msra.mxu0 0.0
    %10566 = vmatprep.subr.mxu0 0.0
    %10567 = vmatpush1.msra.mxu0 0.0
    %10568 = vmatprep.subr.mxu0 0.0
    %10569 = vmatpush1.msra.mxu0 0.0
    %10570 = vmatprep.subr.mxu0 0.0
    %10571 = vmatpush1.msra.mxu0 0.0
    %10572 = vmatprep.subr.mxu0 0.0
    %10573 = vmatpush1.msra.mxu0 0.0
    %10574 = vmatprep.subr.mxu0 0.0
    %10575 = vmatpush1.msra.mxu0 0.0
    %10576 = vmatprep.subr.mxu0 0.0
    %10577 = vmatpush1.msra.mxu0 0.0
    %10578 = vmatprep.subr.mxu0 0.0
    %10579 = vmatpush1.msra.mxu0 0.0
    %10580 = vmatprep.subr.mxu0 0.0
    %10581 = vmatpush1.msra.mxu0 0.0
    %10582 = vmatprep.subr.mxu0 0.0
    %10583 = vmatpush1.msra.mxu0 0.0
    %10584 = vmatprep.subr.mxu0 0.0
    %10585 = vmatpush1.msra.mxu0 0.0
    %10586 = vmatprep.subr.mxu0 0.0
    %10587 = vmatpush1.msra.mxu0 0.0
    %10588 = vmatprep.subr.mxu0 0.0
    %10589 = vmatpush1.msra.mxu0 0.0
    %10590 = vmatprep.mubr.f32.mxu0 0.0
    %10591 = vmatmul.mubr.f32.gmra.mrb[0].mxu0 %v10434
    %v10592 = vpop.f32.mrb[0].mxu0
    %v10593 = vadd.f32 %v10431, %v10592
    %v10594 = vpop.f32.mrb[0].mxu0
    %10595 = vmatprep.mubr.f32.mxu0 0.0
    %10596 = vmatmul.mubr.f32.gmra.mrb[0].mxu0 %v10437
    %v10597 = vpop.f32.mrb[0].mxu0
    %v10598 = vadd.f32 %v10431, %v10597
    %v10599 = vpop.f32.mrb[0].mxu0
    %10600 = vmatprep.mubr.f32.mxu0 0.0
    %10601 = vmatmul.mubr.f32.gmra.mrb[0].mxu0 %v10440
    %v10602 = vpop.f32.mrb[0].mxu0
    %v10603 = vadd.f32 %v10431, %v10602
    %v10604 = vpop.f32.mrb[0].mxu0
    %10605 = vmatprep.mubr.f32.mxu0 0.0
    %10606 = vmatmul.mubr.f32.gmra.mrb[0].mxu0 %v10443
    %v10607 = vpop.f32.mrb[0].mxu0
    %v10608 = vadd.f32 %v10431, %v10607
    %v10609 = vpop.f32.mrb[0].mxu0
    %10610 = vmatprep.mubr.f32.mxu0 0.0
    %10611 = vmatmul.mubr.f32.gmra.mrb[0].mxu0 %v10446
    %v10612 = vpop.f32.mrb[0].mxu0
    %v10613 = vadd.f32 %v10431, %v10612
    %v10614 = vpop.f32.mrb[0].mxu0
    %10615 = vmatprep.mubr.f32.mxu0 0.0
    %10616 = vmatmul.mubr.f32.gmra.mrb[0].mxu0 %v10449
    %v10617 = vpop.f32.mrb[0].mxu0
    %v10618 = vadd.f32 %v10431, %v10617
    %v10619 = vpop.f32.mrb[0].mxu0
    %10620 = vmatprep.mubr.f32.mxu0 0.0
    %10621 = vmatmul.mubr.f32.gmra.mrb[0].mxu0 %v10452
    %v10622 = vpop.f32.mrb[0].mxu0
    %v10623 = vadd.f32 %v10431, %v10622
    %v10624 = vpop.f32.mrb[0].mxu0
    %10625 = vmatprep.mubr.f32.mxu0 0.0
    %10626 = vmatmul.mubr.f32.gmra.mrb[0].mxu0 %v10455
    %v10627 = vpop.f32.mrb[0].mxu0
    %v10628 = vadd.f32 %v10431, %v10627
    %v10629 = vpop.f32.mrb[0].mxu0
    %10630 = vmatprep.mubr.f32.mxu0 0.0
    %10631 = vmatmul.mubr.f32.gmra.mrb[0].mxu0 %v10458
    %v10632 = vpop.f32.mrb[0].mxu0
    %v10633 = vadd.f32 %v10431, %v10632
    %v10634 = vpop.f32.mrb[0].mxu0
    %10635 = vmatprep.mubr.f32.mxu0 0.0
    %10636 = vmatmul.mubr.f32.gmra.mrb[0].mxu0 %v10461
    %v10637 = vpop.f32.mrb[0].mxu0
    %v10638 = vadd.f32 %v10431, %v10637
    %v10639 = vpop.f32.mrb[0].mxu0
    %10640 = vmatprep.mubr.f32.mxu0 0.0
    %10641 = vmatmul.mubr.f32.gmra.mrb[0].mxu0 %v10464
    %v10642 = vpop.f32.mrb[0].mxu0
    %v10643 = vadd.f32 %v10431, %v10642
    %v10644 = vpop.f32.mrb[0].mxu0
    %10645 = vmatprep.mubr.f32.mxu0 0.0
    %10646 = vmatmul.mubr.f32.gmra.mrb[0].mxu0 %v10467
    %v10647 = vpop.f32.mrb[0].mxu0
    %v10648 = vadd.f32 %v10431, %v10647
    %v10649 = vpop.f32.mrb[0].mxu0
    %10650 = vmatprep.mubr.f32.mxu0 0.0
    %10651 = vmatmul.mubr.f32.gmra.mrb[0].mxu0 %v10470
    %v10652 = vpop.f32.mrb[0].mxu0
    %v10653 = vadd.f32 %v10431, %v10652
    %v10654 = vpop.f32.mrb[0].mxu0
    %10655 = vmatprep.mubr.f32.mxu0 0.0
    %10656 = vmatmul.mubr.f32.gmra.mrb[0].mxu0 %v10473
    %v10657 = vpop.f32.mrb[0].mxu0
    %v10658 = vadd.f32 %v10431, %v10657
    %v10659 = vpop.f32.mrb[0].mxu0
    %10660 = vmatprep.mubr.f32.mxu0 0.0
    %10661 = vmatmul.mubr.f32.gmra.mrb[0].mxu0 %v10476
    %v10662 = vpop.f32.mrb[0].mxu0
    %v10663 = vadd.f32 %v10431, %v10662
    %v10664 = vpop.f32.mrb[0].mxu0
    %10665 = vmatprep.mubr.f32.mxu0 0.0
    %10666 = vmatmul.mubr.f32.gmra.mrb[0].mxu0 %v10479
    %v10667 = vpop.f32.mrb[0].mxu0
    %v10668 = vadd.f32 %v10431, %v10667
    %v10669 = vpop.f32.mrb[0].mxu0
    %10670 = vmatprep.mubr.f32.mxu0 0.0
    %10671 = vmatmul.mubr.f32.gmra.mrb[0].mxu0 %v10482
    %v10672 = vpop.f32.mrb[0].mxu0
    %v10673 = vadd.f32 %v10431, %v10672
    %v10674 = vpop.f32.mrb[0].mxu0
    %10675 = vmatprep.mubr.f32.mxu0 0.0
    %10676 = vmatmul.mubr.f32.gmra.mrb[0].mxu0 %v10485
    %v10677 = vpop.f32.mrb[0].mxu0
    %v10678 = vadd.f32 %v10431, %v10677
    %v10679 = vpop.f32.mrb[0].mxu0
    %10680 = vmatprep.mubr.f32.mxu0 0.0
    %10681 = vmatmul.mubr.f32.gmra.mrb[0].mxu0 %v10488
    %v10682 = vpop.f32.mrb[0].mxu0
    %v10683 = vadd.f32 %v10431, %v10682
    %v10684 = vpop.f32.mrb[0].mxu0
    %10685 = vmatprep.mubr.f32.mxu0 0.0
    %10686 = vmatmul.mubr.f32.gmra.mrb[0].mxu0 %v10491
    %v10687 = vpop.f32.mrb[0].mxu0
    %v10688 = vadd.f32 %v10431, %v10687
    %v10689 = vpop.f32.mrb[0].mxu0
    %10690 = vmatprep.mubr.f32.mxu0 0.0
    %10691 = vmatmul.mubr.f32.gmra.mrb[0].mxu0 %v10494
    %v10692 = vpop.f32.mrb[0].mxu0
    %v10693 = vadd.f32 %v10431, %v10692
    %v10694 = vpop.f32.mrb[0].mxu0
    %10695 = vmatprep.mubr.f32.mxu0 0.0
    %10696 = vmatmul.mubr.f32.gmra.mrb[0].mxu0 %v10497
    %v10697 = vpop.f32.mrb[0].mxu0
    %v10698 = vadd.f32 %v10431, %v10697
    %v10699 = vpop.f32.mrb[0].mxu0
    %10700 = vmatprep.mubr.f32.mxu0 0.0
    %10701 = vmatmul.mubr.f32.gmra.mrb[0].mxu0 %v10500
    %v10702 = vpop.f32.mrb[0].mxu0
    %v10703 = vadd.f32 %v10431, %v10702
    %v10704 = vpop.f32.mrb[0].mxu0
    %10705 = vmatprep.mubr.f32.mxu0 0.0
    %10706 = vmatmul.mubr.f32.gmra.mrb[0].mxu0 %v10503
    %v10707 = vpop.f32.mrb[0].mxu0
    %v10708 = vadd.f32 %v10431, %v10707
    %v10709 = vpop.f32.mrb[0].mxu0
    %10710 = vmatprep.mubr.f32.mxu0 0.0
    %10711 = vmatmul.mubr.f32.gmra.mrb[0].mxu0 %v10506
    %v10712 = vpop.f32.mrb[0].mxu0
    %v10713 = vadd.f32 %v10431, %v10712
    %v10714 = vpop.f32.mrb[0].mxu0
    %10715 = vmatprep.mubr.f32.mxu0 0.0
    %10716 = vmatmul.mubr.f32.gmra.mrb[0].mxu0 %v10509
    %v10717 = vpop.f32.mrb[0].mxu0
    %v10718 = vadd.f32 %v10431, %v10717
    %v10719 = vpop.f32.mrb[0].mxu0
    %10720 = vmatprep.mubr.f32.mxu0 0.0
    %10721 = vmatmul.mubr.f32.gmra.mrb[0].mxu0 %v10512
    %v10722 = vpop.f32.mrb[0].mxu0
    %v10723 = vadd.f32 %v10431, %v10722
    %v10724 = vpop.f32.mrb[0].mxu0
    %10725 = vmatprep.mubr.f32.mxu0 0.0
    %10726 = vmatmul.mubr.f32.gmra.mrb[0].mxu0 %v10515
    %v10727 = vpop.f32.mrb[0].mxu0
    %v10728 = vadd.f32 %v10431, %v10727
    %v10729 = vpop.f32.mrb[0].mxu0
    %10730 = vmatprep.mubr.f32.mxu0 0.0
    %10731 = vmatmul.mubr.f32.gmra.mrb[0].mxu0 %v10518
    %v10732 = vpop.f32.mrb[0].mxu0
    %v10733 = vadd.f32 %v10431, %v10732
    %v10734 = vpop.f32.mrb[0].mxu0
    %10735 = vmatprep.mubr.f32.mxu0 0.0
    %10736 = vmatmul.mubr.f32.gmra.mrb[0].mxu0 %v10521
    %v10737 = vpop.f32.mrb[0].mxu0
    %v10738 = vadd.f32 %v10431, %v10737
    %v10739 = vpop.f32.mrb[0].mxu0
    %10740 = vmatprep.mubr.f32.mxu0 0.0
    %10741 = vmatmul.mubr.f32.gmra.mrb[0].mxu0 %v10524
    %v10742 = vpop.f32.mrb[0].mxu0
    %v10743 = vadd.f32 %v10431, %v10742
    %v10744 = vpop.f32.mrb[0].mxu0
    %10745 = vdwg.mxu0
    %10746 = vst.msk [vmem:[#allocation2] sm:$0xff] %vm15, %v10593
    %10747 = vst.msk [vmem:[#allocation2 + $0x8] sm:$0xff] %vm15, %v10598
    %10748 = vst.msk [vmem:[#allocation2 + $0x10] sm:$0xff] %vm15, %v10603
    %10749 = vst.msk [vmem:[#allocation2 + $0x18] sm:$0xff] %vm15, %v10608
    %10750 = vst.msk [vmem:[#allocation2 + $0x20] sm:$0xff] %vm15, %v10613
    %10751 = vst.msk [vmem:[#allocation2 + $0x28] sm:$0xff] %vm15, %v10618
    %10752 = vst.msk [vmem:[#allocation2 + $0x30] sm:$0xff] %vm15, %v10623
    %10753 = vst.msk [vmem:[#allocation2 + $0x38] sm:$0xff] %vm15, %v10628
    %10754 = vst.msk [vmem:[#allocation2 + $0x40] sm:$0xff] %vm15, %v10633
    %10755 = vst.msk [vmem:[#allocation2 + $0x48] sm:$0xff] %vm15, %v10638
    %10756 = vst.msk [vmem:[#allocation2 + $0x50] sm:$0xff] %vm15, %v10643
    %10757 = vst.msk [vmem:[#allocation2 + $0x58] sm:$0xff] %vm15, %v10648
    %10758 = vst.msk [vmem:[#allocation2 + $0x60] sm:$0xff] %vm15, %v10653
    %10759 = vst.msk [vmem:[#allocation2 + $0x68] sm:$0xff] %vm15, %v10658
    %10760 = vst.msk [vmem:[#allocation2 + $0x70] sm:$0xff] %vm15, %v10663
    %10761 = vst.msk [vmem:[#allocation2 + $0x78] sm:$0xff] %vm15, %v10668
    %10762 = vst.msk [vmem:[#allocation2 + $0x80] sm:$0xff] %vm15, %v10673
    %10763 = vst.msk [vmem:[#allocation2 + $0x88] sm:$0xff] %vm15, %v10678
    %10764 = vst.msk [vmem:[#allocation2 + $0x90] sm:$0xff] %vm15, %v10683
    %10765 = vst.msk [vmem:[#allocation2 + $0x98] sm:$0xff] %vm15, %v10688
    %10766 = vst.msk [vmem:[#allocation2 + $0xa0] sm:$0xff] %vm15, %v10693
    %10767 = vst.msk [vmem:[#allocation2 + $0xa8] sm:$0xff] %vm15, %v10698
    %10768 = vst.msk [vmem:[#allocation2 + $0xb0] sm:$0xff] %vm15, %v10703
    %10769 = vst.msk [vmem:[#allocation2 + $0xb8] sm:$0xff] %vm15, %v10708
    %10770 = vst.msk [vmem:[#allocation2 + $0xc0] sm:$0xff] %vm15, %v10713
    %10771 = vst.msk [vmem:[#allocation2 + $0xc8] sm:$0xff] %vm15, %v10718
    %10772 = vst.msk [vmem:[#allocation2 + $0xd0] sm:$0xff] %vm15, %v10723
    %10773 = vst.msk [vmem:[#allocation2 + $0xd8] sm:$0xff] %vm15, %v10728
    %10774 = vst.msk [vmem:[#allocation2 + $0xe0] sm:$0xff] %vm15, %v10733
    %10775 = vst.msk [vmem:[#allocation2 + $0xe8] sm:$0xff] %vm15, %v10738
    %10776 = vst.msk [vmem:[#allocation2 + $0xf0] sm:$0x3] %vm3013, %v10743
    %v10777 = vld [vmem:[#allocation2] sm:$0x1]
    %v10778 = vld [vmem:[#allocation2 + $0x79] sm:$0x1]
    %v10780 = vrot.slane %v10778, 7
    %v10782 = vsel %vm1651, %v10777, %v10780
    %v10783 = vld [vmem:[#allocation2 + $0x1] sm:$0x1]
    %v10784 = vld [vmem:[#allocation2 + $0x7a] sm:$0x1]
    %v10786 = vrot.slane %v10784, 7
    %v10788 = vsel %vm1651, %v10783, %v10786
    %v10789 = vld [vmem:[#allocation2 + $0x2] sm:$0x1]
    %v10790 = vld [vmem:[#allocation2 + $0x7b] sm:$0x1]
    %v10792 = vrot.slane %v10790, 7
    %v10794 = vsel %vm1651, %v10789, %v10792
    %v10795 = vld [vmem:[#allocation2 + $0xb] sm:$0x1]
    %v10796 = vld [vmem:[#allocation2 + $0x84] sm:$0x1]
    %v10798 = vrot.slane %v10796, 7
    %v10800 = vsel %vm1651, %v10795, %v10798
    %v10801 = vld [vmem:[#allocation2 + $0xc] sm:$0x1]
    %v10802 = vld [vmem:[#allocation2 + $0x85] sm:$0x1]
    %v10804 = vrot.slane %v10802, 7
    %v10806 = vsel %vm1651, %v10801, %v10804
    %v10807 = vld [vmem:[#allocation2 + $0xd] sm:$0x1]
    %v10808 = vld [vmem:[#allocation2 + $0x86] sm:$0x1]
    %v10810 = vrot.slane %v10808, 7
    %v10812 = vsel %vm1651, %v10807, %v10810
    %v10813 = vld [vmem:[#allocation2 + $0x16] sm:$0x1]
    %v10814 = vld [vmem:[#allocation2 + $0x8f] sm:$0x1]
    %v10816 = vrot.slane %v10814, 7
    %v10818 = vsel %vm1651, %v10813, %v10816
    %v10819 = vld [vmem:[#allocation2 + $0x17] sm:$0x1]
    %v10820 = vld [vmem:[#allocation2 + $0x90] sm:$0x1]
    %v10822 = vrot.slane %v10820, 7
    %v10824 = vsel %vm1651, %v10819, %v10822
    %v10825 = vld [vmem:[#allocation2 + $0x18] sm:$0x1]
    %v10826 = vld [vmem:[#allocation2 + $0x91] sm:$0x1]
    %v10828 = vrot.slane %v10826, 7
    %v10830 = vsel %vm1651, %v10825, %v10828
    %10832 = vrot.lane.b32.xlu0 %v10788, 64
    %v10833 = vpop.permute.xlu0 %10832
    %10836 = vrot.lane.b32.xlu0 %v10800, 64
    %v10837 = vpop.permute.xlu0 %10836
    %10840 = vrot.lane.b32.xlu0 %v10812, 64
    %v10841 = vpop.permute.xlu0 %10840
    %10844 = vrot.lane.b32.xlu0 %v10824, 64
    %v10845 = vpop.permute.xlu0 %10844
    %v10847 = vsel %vm15, %v10782, %v10833
    %v10848 = vsel %vm15, %v10794, %v10837
    %v10849 = vsel %vm15, %v10806, %v10841
    %v10850 = vsel %vm15, %v10818, %v10845
    %v10851 = vld [vmem:[%s2 + $0x168] sm:$0xff]
    %v10852 = vld [vmem:[%s2 + $0x170] sm:$0xff]
    %v10853 = vld [vmem:[%s2 + $0x178] sm:$0xff]
    %v10854 = vld [vmem:[%s2 + $0x180] sm:$0xff]
    %v10855 = vld [vmem:[%s2 + $0x188] sm:$0xff]
    %v10856 = vld [vmem:[%s2 + $0x190] sm:$0xff]
    %v10857 = vld [vmem:[%s2 + $0x198] sm:$0xff]
    %v10858 = vld [vmem:[%s2 + $0x1a0] sm:$0xff]
    %v10859 = vld [vmem:[%s2 + $0x1a8] sm:$0xff]
    %v10860 = vld [vmem:[%s2 + $0x1b0] sm:$0xff]
    %v10861 = vld [vmem:[%s2 + $0x1b8] sm:$0xff]
    %v10862 = vld [vmem:[%s2 + $0x1c0] sm:$0xff]
    %v10863 = vld [vmem:[%s2 + $0x1c8] sm:$0xff]
    %v10864 = vld [vmem:[%s2 + $0x1d0] sm:$0xff]
    %v10865 = vld [vmem:[%s2 + $0x1d8] sm:$0xff]
    %v10866 = vld [vmem:[%s2 + $0x1e0] sm:$0xff]
    %v10867 = vld [vmem:[%s2 + $0x1e8] sm:$0xff]
    %v10868 = vld [vmem:[%s2 + $0x1f0] sm:$0xff]
    %v10869 = vld [vmem:[%s2 + $0x1f8] sm:$0xff]
    %v10870 = vld [vmem:[%s2 + $0x200] sm:$0xff]
    %v10871 = vld [vmem:[%s2 + $0x208] sm:$0xff]
    %v10872 = vld [vmem:[%s2 + $0x210] sm:$0xff]
    %v10873 = vld [vmem:[%s2 + $0x218] sm:$0xff]
    %v10874 = vld [vmem:[%s2 + $0x220] sm:$0xff]
    %v10875 = vld [vmem:[%s2 + $0x228] sm:$0xff]
    %v10876 = vld [vmem:[%s2 + $0x230] sm:$0xff]
    %v10877 = vld [vmem:[%s2 + $0x238] sm:$0xff]
    %v10878 = vld [vmem:[%s2 + $0x240] sm:$0xff]
    %v10879 = vld [vmem:[%s2 + $0x248] sm:$0xff]
    %v10880 = vld [vmem:[%s2 + $0x250] sm:$0xff]
    %v10881 = vld [vmem:[%s2 + $0x258] sm:$0xff]
    %v10882 = vld [vmem:[%s2 + $0x260] sm:$0xff]
    %v10883 = vld [vmem:[%s2 + $0x268] sm:$0xff]
    %v10884 = vld [vmem:[%s2 + $0x270] sm:$0xff]
    %v10885 = vld [vmem:[%s2 + $0x278] sm:$0xff]
    %v10886 = vld [vmem:[%s2 + $0x280] sm:$0xff]
    %v10887 = vld [vmem:[%s2 + $0x288] sm:$0xff]
    %v10888 = vld [vmem:[%s2 + $0x290] sm:$0xff]
    %v10889 = vld [vmem:[%s2 + $0x298] sm:$0xff]
    %v10890 = vld [vmem:[%s2 + $0x2a0] sm:$0xff]
    %v10891 = vld [vmem:[%s2 + $0x2a8] sm:$0xff]
    %v10892 = vld [vmem:[%s2 + $0x2b0] sm:$0xff]
    %v10893 = vld [vmem:[%s2 + $0x2b8] sm:$0xff]
    %v10894 = vld [vmem:[%s2 + $0x2c0] sm:$0xff]
    %v10895 = vld [vmem:[%s2 + $0x2c8] sm:$0xff]
    %v10896 = vld [vmem:[%s2 + $0x2d0] sm:$0xff]
    %v10897 = vld [vmem:[%s2 + $0x2d8] sm:$0xff]
    %v10898 = vld [vmem:[%s2 + $0x2e0] sm:$0xff]
    %v10899 = vld [vmem:[%s2 + $0x2e8] sm:$0xff]
    %v10900 = vld [vmem:[%s2 + $0x2f0] sm:$0xff]
    %v10901 = vld [vmem:[%s2 + $0x2f8] sm:$0xff]
    %v10902 = vld [vmem:[%s2 + $0x300] sm:$0xff]
    %v10903 = vld [vmem:[%s2 + $0x308] sm:$0xff]
    %v10904 = vld [vmem:[%s2 + $0x310] sm:$0xff]
    %v10905 = vld [vmem:[%s2 + $0x318] sm:$0xff]
    %v10906 = vld [vmem:[%s2 + $0x320] sm:$0xff]
    %v10907 = vld [vmem:[%s2 + $0x328] sm:$0xff]
    %v10908 = vld [vmem:[%s2 + $0x330] sm:$0xff]
    %v10909 = vld [vmem:[%s2 + $0x338] sm:$0xff]
    %v10910 = vld [vmem:[%s2 + $0x340] sm:$0xff]
    %v10911 = vld [vmem:[%s2 + $0x348] sm:$0xff]
    %v10912 = vld [vmem:[%s2 + $0x350] sm:$0xff]
    %v10913 = vld [vmem:[%s2 + $0x358] sm:$0xff]
    %v10914 = vld [vmem:[%s2 + $0x360] sm:$0xff]
    %v10915 = vld [vmem:[%s2 + $0x368] sm:$0xff]
    %v10916 = vld [vmem:[%s2 + $0x370] sm:$0xff]
    %v10917 = vld [vmem:[%s2 + $0x378] sm:$0xff]
    %v10918 = vld [vmem:[%s2 + $0x380] sm:$0xff]
    %v10919 = vld [vmem:[%s2 + $0x388] sm:$0xff]
    %v10920 = vld [vmem:[%s2 + $0x390] sm:$0xff]
    %v10921 = vld [vmem:[%s2 + $0x398] sm:$0xff]
    %v10922 = vld [vmem:[%s2 + $0x3a0] sm:$0xff]
    %v10924 = vsel %vm15, %v10830, 0
    %10926 = vmatprep.subr.mxu0 0.0
    %10927 = vmatpush1.msra.mxu0 %v10851
    %10928 = vmatprep.subr.mxu0 0.0
    %10929 = vmatpush1.msra.mxu0 %v10852
    %10930 = vmatprep.subr.mxu0 0.0
    %10931 = vmatpush1.msra.mxu0 %v10853
    %10932 = vmatprep.subr.mxu0 0.0
    %10933 = vmatpush1.msra.mxu0 %v10854
    %10934 = vmatprep.subr.mxu0 0.0
    %10935 = vmatpush1.msra.mxu0 %v10855
    %10936 = vmatprep.subr.mxu0 0.0
    %10937 = vmatpush1.msra.mxu0 %v10856
    %10938 = vmatprep.subr.mxu0 0.0
    %10939 = vmatpush1.msra.mxu0 %v10857
    %10940 = vmatprep.subr.mxu0 0.0
    %10941 = vmatpush1.msra.mxu0 %v10858
    %10942 = vmatprep.subr.mxu0 0.0
    %10943 = vmatpush1.msra.mxu0 %v10859
    %10944 = vmatprep.subr.mxu0 0.0
    %10945 = vmatpush1.msra.mxu0 %v10860
    %10946 = vmatprep.subr.mxu0 0.0
    %10947 = vmatpush1.msra.mxu0 %v10861
    %10948 = vmatprep.subr.mxu0 0.0
    %10949 = vmatpush1.msra.mxu0 %v10862
    %10950 = vmatprep.subr.mxu0 0.0
    %10951 = vmatpush1.msra.mxu0 %v10863
    %10952 = vmatprep.subr.mxu0 0.0
    %10953 = vmatpush1.msra.mxu0 %v10864
    %10954 = vmatprep.subr.mxu0 0.0
    %10955 = vmatpush1.msra.mxu0 %v10865
    %10956 = vmatprep.subr.mxu0 0.0
    %10957 = vmatpush1.msra.mxu0 %v10866
    %10958 = vmatprep.subr.mxu0 0.0
    %10959 = vmatpush1.msra.mxu0 %v10867
    %10960 = vmatprep.subr.mxu0 0.0
    %10961 = vmatpush1.msra.mxu0 %v10868
    %10962 = vmatprep.subr.mxu0 0.0
    %10963 = vmatpush1.msra.mxu0 %v10869
    %10964 = vmatprep.subr.mxu0 0.0
    %10965 = vmatpush1.msra.mxu0 %v10870
    %10966 = vmatprep.subr.mxu0 0.0
    %10967 = vmatpush1.msra.mxu0 %v10871
    %10968 = vmatprep.subr.mxu0 0.0
    %10969 = vmatpush1.msra.mxu0 %v10872
    %10970 = vmatprep.subr.mxu0 0.0
    %10971 = vmatpush1.msra.mxu0 %v10873
    %10972 = vmatprep.subr.mxu0 0.0
    %10973 = vmatpush1.msra.mxu0 %v10874
    %10974 = vmatprep.subr.mxu0 0.0
    %10975 = vmatpush1.msra.mxu0 %v10875
    %10976 = vmatprep.subr.mxu0 0.0
    %10977 = vmatpush1.msra.mxu0 %v10876
    %10978 = vmatprep.subr.mxu0 0.0
    %10979 = vmatpush1.msra.mxu0 %v10877
    %10980 = vmatprep.subr.mxu0 0.0
    %10981 = vmatpush1.msra.mxu0 %v10878
    %10982 = vmatprep.subr.mxu0 0.0
    %10983 = vmatpush1.msra.mxu0 %v10879
    %10984 = vmatprep.subr.mxu0 0.0
    %10985 = vmatpush1.msra.mxu0 %v10880
    %10986 = vmatprep.subr.mxu0 0.0
    %10987 = vmatpush1.msra.mxu0 %v10881
    %10988 = vmatprep.subr.mxu0 0.0
    %10989 = vmatpush1.msra.mxu0 %v10882
    %10990 = vmatprep.mubr.f32.mxu0 %v10848
    %10991 = vmatmul.mubr.f32.gmra.mrb[0].mxu0 %v10847
    %v10992 = vpop.f32.mrb[0].mxu0
    %v10993 = vadd.f32 0.0, %v10992
    %v10994 = vpop.f32.mrb[0].mxu0
    %10995 = vdwg.mxu0
    %10996 = vmatprep.subr.mxu0 0.0
    %10997 = vmatpush1.msra.mxu0 %v10883
    %10998 = vmatprep.subr.mxu0 0.0
    %10999 = vmatpush1.msra.mxu0 %v10884
    %11000 = vmatprep.subr.mxu0 0.0
    %11001 = vmatpush1.msra.mxu0 %v10885
    %11002 = vmatprep.subr.mxu0 0.0
    %11003 = vmatpush1.msra.mxu0 %v10886
    %11004 = vmatprep.subr.mxu0 0.0
    %11005 = vmatpush1.msra.mxu0 %v10887
    %11006 = vmatprep.subr.mxu0 0.0
    %11007 = vmatpush1.msra.mxu0 %v10888
    %11008 = vmatprep.subr.mxu0 0.0
    %11009 = vmatpush1.msra.mxu0 %v10889
    %11010 = vmatprep.subr.mxu0 0.0
    %11011 = vmatpush1.msra.mxu0 %v10890
    %11012 = vmatprep.subr.mxu0 0.0
    %11013 = vmatpush1.msra.mxu0 %v10891
    %11014 = vmatprep.subr.mxu0 0.0
    %11015 = vmatpush1.msra.mxu0 %v10892
    %11016 = vmatprep.subr.mxu0 0.0
    %11017 = vmatpush1.msra.mxu0 %v10893
    %11018 = vmatprep.subr.mxu0 0.0
    %11019 = vmatpush1.msra.mxu0 %v10894
    %11020 = vmatprep.subr.mxu0 0.0
    %11021 = vmatpush1.msra.mxu0 %v10895
    %11022 = vmatprep.subr.mxu0 0.0
    %11023 = vmatpush1.msra.mxu0 %v10896
    %11024 = vmatprep.subr.mxu0 0.0
    %11025 = vmatpush1.msra.mxu0 %v10897
    %11026 = vmatprep.subr.mxu0 0.0
    %11027 = vmatpush1.msra.mxu0 %v10898
    %11028 = vmatprep.subr.mxu0 0.0
    %11029 = vmatpush1.msra.mxu0 %v10899
    %11030 = vmatprep.subr.mxu0 0.0
    %11031 = vmatpush1.msra.mxu0 %v10900
    %11032 = vmatprep.subr.mxu0 0.0
    %11033 = vmatpush1.msra.mxu0 %v10901
    %11034 = vmatprep.subr.mxu0 0.0
    %11035 = vmatpush1.msra.mxu0 %v10902
    %11036 = vmatprep.subr.mxu0 0.0
    %11037 = vmatpush1.msra.mxu0 %v10903
    %11038 = vmatprep.subr.mxu0 0.0
    %11039 = vmatpush1.msra.mxu0 %v10904
    %11040 = vmatprep.subr.mxu0 0.0
    %11041 = vmatpush1.msra.mxu0 %v10905
    %11042 = vmatprep.subr.mxu0 0.0
    %11043 = vmatpush1.msra.mxu0 %v10906
    %11044 = vmatprep.subr.mxu0 0.0
    %11045 = vmatpush1.msra.mxu0 %v10907
    %11046 = vmatprep.subr.mxu0 0.0
    %11047 = vmatpush1.msra.mxu0 %v10908
    %11048 = vmatprep.subr.mxu0 0.0
    %11049 = vmatpush1.msra.mxu0 %v10909
    %11050 = vmatprep.subr.mxu0 0.0
    %11051 = vmatpush1.msra.mxu0 %v10910
    %11052 = vmatprep.subr.mxu0 0.0
    %11053 = vmatpush1.msra.mxu0 %v10911
    %11054 = vmatprep.subr.mxu0 0.0
    %11055 = vmatpush1.msra.mxu0 %v10912
    %11056 = vmatprep.subr.mxu0 0.0
    %11057 = vmatpush1.msra.mxu0 %v10913
    %11058 = vmatprep.subr.mxu0 0.0
    %11059 = vmatpush1.msra.mxu0 %v10914
    %11060 = vmatprep.mubr.f32.mxu0 %v10850
    %11061 = vmatmul.mubr.f32.gmra.mrb[0].mxu0 %v10849
    %v11062 = vpop.f32.mrb[0].mxu0
    %v11063 = vadd.f32 %v10993, %v11062
    %v11064 = vpop.f32.mrb[0].mxu0
    %11065 = vdwg.mxu0
    %11066 = vmatprep.subr.mxu0 0.0
    %11067 = vmatpush1.msra.mxu0 %v10915
    %11068 = vmatprep.subr.mxu0 0.0
    %11069 = vmatpush1.msra.mxu0 %v10916
    %11070 = vmatprep.subr.mxu0 0.0
    %11071 = vmatpush1.msra.mxu0 %v10917
    %11072 = vmatprep.subr.mxu0 0.0
    %11073 = vmatpush1.msra.mxu0 %v10918
    %11074 = vmatprep.subr.mxu0 0.0
    %11075 = vmatpush1.msra.mxu0 %v10919
    %11076 = vmatprep.subr.mxu0 0.0
    %11077 = vmatpush1.msra.mxu0 %v10920
    %11078 = vmatprep.subr.mxu0 0.0
    %11079 = vmatpush1.msra.mxu0 %v10921
    %11080 = vmatprep.subr.mxu0 0.0
    %11081 = vmatpush1.msra.mxu0 %v10922
    %11082 = vmatprep.subr.mxu0 0.0
    %11083 = vmatpush1.msra.mxu0 0.0
    %11084 = vmatprep.subr.mxu0 0.0
    %11085 = vmatpush1.msra.mxu0 0.0
    %11086 = vmatprep.subr.mxu0 0.0
    %11087 = vmatpush1.msra.mxu0 0.0
    %11088 = vmatprep.subr.mxu0 0.0
    %11089 = vmatpush1.msra.mxu0 0.0
    %11090 = vmatprep.subr.mxu0 0.0
    %11091 = vmatpush1.msra.mxu0 0.0
    %11092 = vmatprep.subr.mxu0 0.0
    %11093 = vmatpush1.msra.mxu0 0.0
    %11094 = vmatprep.subr.mxu0 0.0
    %11095 = vmatpush1.msra.mxu0 0.0
    %11096 = vmatprep.subr.mxu0 0.0
    %11097 = vmatpush1.msra.mxu0 0.0
    %11098 = vmatprep.subr.mxu0 0.0
    %11099 = vmatpush1.msra.mxu0 0.0
    %11100 = vmatprep.subr.mxu0 0.0
    %11101 = vmatpush1.msra.mxu0 0.0
    %11102 = vmatprep.subr.mxu0 0.0
    %11103 = vmatpush1.msra.mxu0 0.0
    %11104 = vmatprep.subr.mxu0 0.0
    %11105 = vmatpush1.msra.mxu0 0.0
    %11106 = vmatprep.subr.mxu0 0.0
    %11107 = vmatpush1.msra.mxu0 0.0
    %11108 = vmatprep.subr.mxu0 0.0
    %11109 = vmatpush1.msra.mxu0 0.0
    %11110 = vmatprep.subr.mxu0 0.0
    %11111 = vmatpush1.msra.mxu0 0.0
    %11112 = vmatprep.subr.mxu0 0.0
    %11113 = vmatpush1.msra.mxu0 0.0
    %11114 = vmatprep.subr.mxu0 0.0
    %11115 = vmatpush1.msra.mxu0 0.0
    %11116 = vmatprep.subr.mxu0 0.0
    %11117 = vmatpush1.msra.mxu0 0.0
    %11118 = vmatprep.subr.mxu0 0.0
    %11119 = vmatpush1.msra.mxu0 0.0
    %11120 = vmatprep.subr.mxu0 0.0
    %11121 = vmatpush1.msra.mxu0 0.0
    %11122 = vmatprep.subr.mxu0 0.0
    %11123 = vmatpush1.msra.mxu0 0.0
    %11124 = vmatprep.subr.mxu0 0.0
    %11125 = vmatpush1.msra.mxu0 0.0
    %11126 = vmatprep.subr.mxu0 0.0
    %11127 = vmatpush1.msra.mxu0 0.0
    %11128 = vmatprep.subr.mxu0 0.0
    %11129 = vmatpush1.msra.mxu0 0.0
    %11130 = vmatprep.mubr.f32.mxu0 0.0
    %11131 = vmatmul.mubr.f32.gmra.mrb[0].mxu0 %v10924
    %v11132 = vpop.f32.mrb[0].mxu0
    %v11133 = vadd.f32 %v11063, %v11132
    %v11134 = vpop.f32.mrb[0].mxu0
    %11135 = vdwg.mxu0
    %v11136 = vmul.f32 %v11133, %v11133
    %11138 = vrot.lane.b32.xlu0 %v11136, 8
    %v11139 = vpop.permute.xlu0 %11138
    %v11141 = vsel %vm1518, %v11133, %v11139
    %v11142 = vsel %vm8679, %v11141, 0.0
    %v11143 = vrot.slane %v11142, 4
    %v11144 = vadd.f32 %v11142, %v11143
    %v11145 = vrot.slane %v11144, 2
    %v11146 = vadd.f32 %v11144, %v11145
    %v11147 = vrot.slane %v11146, 1
    %v11148 = vadd.f32 %v11146, %v11147
    %v11149 = vmul.f32 %v11148, 0.5
    %v11150 = vmul.f32 %v11149, %v11149
    %11152 = vrot.lane.b32.xlu0 %v11150, 8
    %v11153 = vpop.permute.xlu0 %11152
    %v11155 = vsub.f32 %v11149, %v11153
    %v11156 = vmax.f32 %v11155, 0.0
    %v11157 = vsub.f32 %v11133, %v11149
    %v11158 = vadd.f32 %v11156, 1e-05
    %v11159 = vrsqrt.pop %v11158
    %v11160 = vlaneseq
    %v11161 = vshrl.u32 %v11160, 7
    %v11162 = vsub.s32 0, %v11161
    %v11163 = vrot.slane %v11159, %v11162
    %11165 = vrot.lane.b32.xlu0 %v11163, 120
    %v11166 = vpop.permute.xlu0 %11165
    %v11168 = vmul.f32 %v11157, %v11166
    %v11169 = vmax.f32 %v11168, 0.0
    %v11170 = vld [vmem:[%s2 + $0x3a8] sm:$0xff]
    %v11171 = vld [vmem:[%s2 + $0x3b0] sm:$0x1]
    %v11172 = vlaneseq
    %v11173 = vshrl.u32 %v11172, 7
    %v11174 = vsub.s32 0, %v11173
    %v11175 = vrot.slane %v11171, %v11174
    %v11177 = vsel %vm1518, %v11169, 0
    %11179 = vmatprep.subr.mxu0 0.0
    %11180 = vmatpush1.msra.mxu0 %v11170
    %11181 = vmatprep.subr.mxu0 0.0
    %11182 = vmatpush1.msra.mxu0 0.0
    %11183 = vmatprep.subr.mxu0 0.0
    %11184 = vmatpush1.msra.mxu0 0.0
    %11185 = vmatprep.subr.mxu0 0.0
    %11186 = vmatpush1.msra.mxu0 0.0
    %11187 = vmatprep.subr.mxu0 0.0
    %11188 = vmatpush1.msra.mxu0 0.0
    %11189 = vmatprep.subr.mxu0 0.0
    %11190 = vmatpush1.msra.mxu0 0.0
    %11191 = vmatprep.subr.mxu0 0.0
    %11192 = vmatpush1.msra.mxu0 0.0
    %11193 = vmatprep.subr.mxu0 0.0
    %11194 = vmatpush1.msra.mxu0 0.0
    %11195 = vmatprep.subr.mxu0 0.0
    %11196 = vmatpush1.msra.mxu0 0.0
    %11197 = vmatprep.subr.mxu0 0.0
    %11198 = vmatpush1.msra.mxu0 0.0
    %11199 = vmatprep.subr.mxu0 0.0
    %11200 = vmatpush1.msra.mxu0 0.0
    %11201 = vmatprep.subr.mxu0 0.0
    %11202 = vmatpush1.msra.mxu0 0.0
    %11203 = vmatprep.subr.mxu0 0.0
    %11204 = vmatpush1.msra.mxu0 0.0
    %11205 = vmatprep.subr.mxu0 0.0
    %11206 = vmatpush1.msra.mxu0 0.0
    %11207 = vmatprep.subr.mxu0 0.0
    %11208 = vmatpush1.msra.mxu0 0.0
    %11209 = vmatprep.subr.mxu0 0.0
    %11210 = vmatpush1.msra.mxu0 0.0
    %11211 = vmatprep.subr.mxu0 0.0
    %11212 = vmatpush1.msra.mxu0 0.0
    %11213 = vmatprep.subr.mxu0 0.0
    %11214 = vmatpush1.msra.mxu0 0.0
    %11215 = vmatprep.subr.mxu0 0.0
    %11216 = vmatpush1.msra.mxu0 0.0
    %11217 = vmatprep.subr.mxu0 0.0
    %11218 = vmatpush1.msra.mxu0 0.0
    %11219 = vmatprep.subr.mxu0 0.0
    %11220 = vmatpush1.msra.mxu0 0.0
    %11221 = vmatprep.subr.mxu0 0.0
    %11222 = vmatpush1.msra.mxu0 0.0
    %11223 = vmatprep.subr.mxu0 0.0
    %11224 = vmatpush1.msra.mxu0 0.0
    %11225 = vmatprep.subr.mxu0 0.0
    %11226 = vmatpush1.msra.mxu0 0.0
    %11227 = vmatprep.subr.mxu0 0.0
    %11228 = vmatpush1.msra.mxu0 0.0
    %11229 = vmatprep.subr.mxu0 0.0
    %11230 = vmatpush1.msra.mxu0 0.0
    %11231 = vmatprep.subr.mxu0 0.0
    %11232 = vmatpush1.msra.mxu0 0.0
    %11233 = vmatprep.subr.mxu0 0.0
    %11234 = vmatpush1.msra.mxu0 0.0
    %11235 = vmatprep.subr.mxu0 0.0
    %11236 = vmatpush1.msra.mxu0 0.0
    %11237 = vmatprep.subr.mxu0 0.0
    %11238 = vmatpush1.msra.mxu0 0.0
    %11239 = vmatprep.subr.mxu0 0.0
    %11240 = vmatpush1.msra.mxu0 0.0
    %11241 = vmatprep.subr.mxu0 0.0
    %11242 = vmatpush1.msra.mxu0 0.0
    %11243 = vmatprep.mubr.f32.mxu0 0.0
    %11244 = vmatmul.mubr.f32.gmra.mrb[0].mxu0 %v11177
    %v11245 = vpop.f32.mrb[0].mxu0
    %v11246 = vadd.f32 %v11175, %v11245
    %v11247 = vpop.f32.mrb[0].mxu0
    %11248 = vdwg.mxu0
    %vm11249 = vcmp.ge.f32.partialorder %v11246, 0.0
    %v11250 = vmul.f32 %v11246, 0.01
    %v11251 = vsel %vm11249, %v11246, %v11250
    %v11252 = vld [vmem:[%s2 + $0x3b8] sm:$0xf]
    %v11254 = vsel %vm1390, %v11251, 0
    %v11257 = vsel %vm2513, %v11252, 0
    %11259 = vmatprep.subr.mxu0 0.0
    %11260 = vmatpush1.msra.mxu0 %v11257
    %11261 = vmatprep.subr.mxu0 0.0
    %11262 = vmatpush1.msra.mxu0 0.0
    %11263 = vmatprep.subr.mxu0 0.0
    %11264 = vmatpush1.msra.mxu0 0.0
    %11265 = vmatprep.subr.mxu0 0.0
    %11266 = vmatpush1.msra.mxu0 0.0
    %11267 = vmatprep.subr.mxu0 0.0
    %11268 = vmatpush1.msra.mxu0 0.0
    %11269 = vmatprep.subr.mxu0 0.0
    %11270 = vmatpush1.msra.mxu0 0.0
    %11271 = vmatprep.subr.mxu0 0.0
    %11272 = vmatpush1.msra.mxu0 0.0
    %11273 = vmatprep.subr.mxu0 0.0
    %11274 = vmatpush1.msra.mxu0 0.0
    %11275 = vmatprep.subr.mxu0 0.0
    %11276 = vmatpush1.msra.mxu0 0.0
    %11277 = vmatprep.subr.mxu0 0.0
    %11278 = vmatpush1.msra.mxu0 0.0
    %11279 = vmatprep.subr.mxu0 0.0
    %11280 = vmatpush1.msra.mxu0 0.0
    %11281 = vmatprep.subr.mxu0 0.0
    %11282 = vmatpush1.msra.mxu0 0.0
    %11283 = vmatprep.subr.mxu0 0.0
    %11284 = vmatpush1.msra.mxu0 0.0
    %11285 = vmatprep.subr.mxu0 0.0
    %11286 = vmatpush1.msra.mxu0 0.0
    %11287 = vmatprep.subr.mxu0 0.0
    %11288 = vmatpush1.msra.mxu0 0.0
    %11289 = vmatprep.subr.mxu0 0.0
    %11290 = vmatpush1.msra.mxu0 0.0
    %11291 = vmatprep.subr.mxu0 0.0
    %11292 = vmatpush1.msra.mxu0 0.0
    %11293 = vmatprep.subr.mxu0 0.0
    %11294 = vmatpush1.msra.mxu0 0.0
    %11295 = vmatprep.subr.mxu0 0.0
    %11296 = vmatpush1.msra.mxu0 0.0
    %11297 = vmatprep.subr.mxu0 0.0
    %11298 = vmatpush1.msra.mxu0 0.0
    %11299 = vmatprep.subr.mxu0 0.0
    %11300 = vmatpush1.msra.mxu0 0.0
    %11301 = vmatprep.subr.mxu0 0.0
    %11302 = vmatpush1.msra.mxu0 0.0
    %11303 = vmatprep.subr.mxu0 0.0
    %11304 = vmatpush1.msra.mxu0 0.0
    %11305 = vmatprep.subr.mxu0 0.0
    %11306 = vmatpush1.msra.mxu0 0.0
    %11307 = vmatprep.subr.mxu0 0.0
    %11308 = vmatpush1.msra.mxu0 0.0
    %11309 = vmatprep.subr.mxu0 0.0
    %11310 = vmatpush1.msra.mxu0 0.0
    %11311 = vmatprep.subr.mxu0 0.0
    %11312 = vmatpush1.msra.mxu0 0.0
    %11313 = vmatprep.subr.mxu0 0.0
    %11314 = vmatpush1.msra.mxu0 0.0
    %11315 = vmatprep.subr.mxu0 0.0
    %11316 = vmatpush1.msra.mxu0 0.0
    %11317 = vmatprep.subr.mxu0 0.0
    %11318 = vmatpush1.msra.mxu0 0.0
    %11319 = vmatprep.subr.mxu0 0.0
    %11320 = vmatpush1.msra.mxu0 0.0
    %11321 = vmatprep.subr.mxu0 0.0
    %11322 = vmatpush1.msra.mxu0 0.0
    %11323 = vmatprep.mubr.f32.mxu0 0.0
    %11324 = vmatmul.mubr.f32.gmra.mrb[0].mxu0 %v11254
    %v11325 = vpop.f32.mrb[0].mxu0
    %v11326 = vadd.f32 0.0, %v11325
    %v11327 = vpop.f32.mrb[0].mxu0
    %11328 = vdwg.mxu0
    %v11329 = vmul.f32 %v11326, %v11326
    %11331 = vrot.lane.b32.xlu0 %v11329, 4
    %v11332 = vpop.permute.xlu0 %11331
    %v11334 = vsel %vm1390, %v11326, %v11332
    %v11335 = vsel %vm3819, %v11334, 0.0
    %v11336 = vrot.slane %v11335, 4
    %v11337 = vadd.f32 %v11335, %v11336
    %v11338 = vrot.slane %v11337, 2
    %v11339 = vadd.f32 %v11337, %v11338
    %v11340 = vrot.slane %v11339, 1
    %v11341 = vadd.f32 %v11339, %v11340
    %v11342 = vmul.f32 %v11341, 0.5
    %v11343 = vmul.f32 %v11342, %v11342
    %11345 = vrot.lane.b32.xlu0 %v11343, 4
    %v11346 = vpop.permute.xlu0 %11345
    %v11348 = vsub.f32 %v11342, %v11346
    %v11349 = vmax.f32 %v11348, 0.0
    %v11350 = vsub.f32 %v11326, %v11342
    %v11351 = vadd.f32 %v11349, 1e-05
    %v11352 = vrsqrt.pop %v11351
    %v11353 = vlaneseq
    %v11354 = vshrl.u32 %v11353, 7
    %v11355 = vsub.s32 0, %v11354
    %v11356 = vrot.slane %v11352, %v11355
    %11358 = vrot.lane.b32.xlu0 %v11356, 124
    %v11359 = vpop.permute.xlu0 %11358
    %v11361 = vmul.f32 %v11350, %v11359
    %vm11362 = vcmp.ge.f32.partialorder %v11361, 0.0
    %v11363 = vmul.f32 %v11361, 0.01
    %v11364 = vsel %vm11362, %v11361, %v11363
    %v11365 = vld [vmem:[%s2 + $0x3c0] sm:$0xf]
    %v11366 = vld [vmem:[%s2 + $0x3c8] sm:$0x1]
    %v11367 = vlaneseq
    %v11368 = vshrl.u32 %v11367, 7
    %v11369 = vsub.s32 0, %v11368
    %v11370 = vrot.slane %v11366, %v11369
    %v11372 = vsel %vm1390, %v11364, 0
    %v11375 = vsel %vm2513, %v11365, 0
    %11377 = vmatprep.subr.mxu0 0.0
    %11378 = vmatpush1.msra.mxu0 %v11375
    %11379 = vmatprep.subr.mxu0 0.0
    %11380 = vmatpush1.msra.mxu0 0.0
    %11381 = vmatprep.subr.mxu0 0.0
    %11382 = vmatpush1.msra.mxu0 0.0
    %11383 = vmatprep.subr.mxu0 0.0
    %11384 = vmatpush1.msra.mxu0 0.0
    %11385 = vmatprep.subr.mxu0 0.0
    %11386 = vmatpush1.msra.mxu0 0.0
    %11387 = vmatprep.subr.mxu0 0.0
    %11388 = vmatpush1.msra.mxu0 0.0
    %11389 = vmatprep.subr.mxu0 0.0
    %11390 = vmatpush1.msra.mxu0 0.0
    %11391 = vmatprep.subr.mxu0 0.0
    %11392 = vmatpush1.msra.mxu0 0.0
    %11393 = vmatprep.subr.mxu0 0.0
    %11394 = vmatpush1.msra.mxu0 0.0
    %11395 = vmatprep.subr.mxu0 0.0
    %11396 = vmatpush1.msra.mxu0 0.0
    %11397 = vmatprep.subr.mxu0 0.0
    %11398 = vmatpush1.msra.mxu0 0.0
    %11399 = vmatprep.subr.mxu0 0.0
    %11400 = vmatpush1.msra.mxu0 0.0
    %11401 = vmatprep.subr.mxu0 0.0
    %11402 = vmatpush1.msra.mxu0 0.0
    %11403 = vmatprep.subr.mxu0 0.0
    %11404 = vmatpush1.msra.mxu0 0.0
    %11405 = vmatprep.subr.mxu0 0.0
    %11406 = vmatpush1.msra.mxu0 0.0
    %11407 = vmatprep.subr.mxu0 0.0
    %11408 = vmatpush1.msra.mxu0 0.0
    %11409 = vmatprep.subr.mxu0 0.0
    %11410 = vmatpush1.msra.mxu0 0.0
    %11411 = vmatprep.subr.mxu0 0.0
    %11412 = vmatpush1.msra.mxu0 0.0
    %11413 = vmatprep.subr.mxu0 0.0
    %11414 = vmatpush1.msra.mxu0 0.0
    %11415 = vmatprep.subr.mxu0 0.0
    %11416 = vmatpush1.msra.mxu0 0.0
    %11417 = vmatprep.subr.mxu0 0.0
    %11418 = vmatpush1.msra.mxu0 0.0
    %11419 = vmatprep.subr.mxu0 0.0
    %11420 = vmatpush1.msra.mxu0 0.0
    %11421 = vmatprep.subr.mxu0 0.0
    %11422 = vmatpush1.msra.mxu0 0.0
    %11423 = vmatprep.subr.mxu0 0.0
    %11424 = vmatpush1.msra.mxu0 0.0
    %11425 = vmatprep.subr.mxu0 0.0
    %11426 = vmatpush1.msra.mxu0 0.0
    %11427 = vmatprep.subr.mxu0 0.0
    %11428 = vmatpush1.msra.mxu0 0.0
    %11429 = vmatprep.subr.mxu0 0.0
    %11430 = vmatpush1.msra.mxu0 0.0
    %11431 = vmatprep.subr.mxu0 0.0
    %11432 = vmatpush1.msra.mxu0 0.0
    %11433 = vmatprep.subr.mxu0 0.0
    %11434 = vmatpush1.msra.mxu0 0.0
    %11435 = vmatprep.subr.mxu0 0.0
    %11436 = vmatpush1.msra.mxu0 0.0
    %11437 = vmatprep.subr.mxu0 0.0
    %11438 = vmatpush1.msra.mxu0 0.0
    %11439 = vmatprep.subr.mxu0 0.0
    %11440 = vmatpush1.msra.mxu0 0.0
    %11441 = vmatprep.mubr.f32.mxu0 0.0
    %11442 = vmatmul.mubr.f32.gmra.mrb[0].mxu0 %v11372
    %v11443 = vpop.f32.mrb[0].mxu0
    %v11444 = vadd.f32 %v11370, %v11443
    %v11445 = vpop.f32.mrb[0].mxu0
    %11446 = vdwg.mxu0
    %vm11447 = vcmask 9216
    %11448 = vst.msk [vmem:[#allocation3] sm:$0x3] %vm11447, %v11444
    // Predicated region
    $region14: #{nac_forward.1} parent=1 // pred_check
      _
    $region15: #{nac_forward.1} parent=1 // pred_check_branch
      %11450 = sbr.rel (0) target = $region17
    $region16: #{nac_forward.1} parent=1 // pred_region
      %s11452 = ssub.s32 32, 32
      %11453 = vsyncadd [#allocation4], %s11452
      %s11455 = sshll.u32 [#allocation3], 4
      %s11456 = int_to_ptr.vmem [resolvable:$true] %s11455
      %11458 = dma.vmem_to_hbm [thread:$0]  %s11456, 32, %s3, [#allocation4]
    $region17: #{nac_forward.1} parent=1 // pred_fallthru
      _
    // Predicated region
    $region18: #{nac_forward.1} parent=1 // pred_check
      _
    $region19: #{nac_forward.1} parent=1 // pred_check_branch
      %11460 = sbr.rel (0) target = $region21
    $region20: #{nac_forward.1} parent=1 // pred_region
      %11461 = dma.done [#allocation4], 32
    $region21: #{nac_forward.1} parent=1 // pred_fallthru
      _
    %11462 = vsyncpa [#allocation4], 1

</llo_original>
